<compile_context>
chip_gen: v6e
topology: v6e:2x2x1
jax: 0.10.0
libtpu: 0.0.40
codegen_flags: <defaults>
</compile_context>

<pallas_src>
import jax
import jax.numpy as jnp
from jax.experimental import pallas as pl
from jax.experimental.pallas import tpu as pltpu


# ------------------------------- constants ----------------------------------
# Input spatial size 30x30 so the flatten size is 48*5*5 = 1200, matching
# nn.Linear(1200, 512) in the reference module.
H_IN, C_IN = 30, 3
K1, C1 = 4, 36            # conv1
K2, C2 = 3, 48            # conv2
H1 = H_IN - K1 + 1        # 27  conv1 spatial output
P1 = H1 // 2              # 13  pool1 spatial output
H2 = P1 - K2 + 1          # 11  conv2 spatial output
P2 = H2 // 2              # 5   pool2 spatial output
FLAT = C2 * P2 * P2       # 1200
FC_H = 512
N_OUT = 4
OUT_PAD = 128             # lane-dense padded FC output width

# Flat-grid extents (flat spatial index d = h*stride + w).  Rows whose window
# crosses the right image edge are computed but NEVER selected by the pool
# selection matrices (see asserts below tying the ranges together).
N1 = (H1 - 1) * H_IN + (H1 - 1) + 1          # 807 conv1 rows computed
L1 = 2 * (P1 - 1) * H_IN + 2 * (P1 - 1) + 1  # 745 pool1 window-max rows
N2 = (H2 - 1) * P1 + (H2 - 1) + 1            # 141 conv2 rows computed
L2 = 2 * (P2 - 1) * P1 + 2 * (P2 - 1) + 1    # 113 pool2 window-max rows

# Static invariants: selection indices stay inside the window-max extents and
# the shifted tap reads stay inside the source arrays.
assert 2 * (P1 - 1) * H_IN + 2 * (P1 - 1) == L1 - 1
assert 2 * (P2 - 1) * P1 + 2 * (P2 - 1) == L2 - 1
assert (K1 - 1) * H_IN + (K1 - 1) + N1 <= H_IN * H_IN      # conv1 taps in-bounds
assert (K2 - 1) * P1 + (K2 - 1) + N2 <= P1 * P1            # conv2 taps in-bounds
assert H_IN + 1 + L1 <= N1 and P1 + 1 + L2 <= N2           # pool shifts in-bounds


# ----------------------------- Pallas kernels --------------------------------

def _make_conv_kernel(tb):
    """Conv stage kernel for a batch tile of `tb` images (all in VMEM)."""

    def kernel(x_ref, w1_ref, b1_ref, s1_ref, w2_ref, b2_ref, s2_ref,
               o_ref, col1_scr, col2_scr):
        w1 = w1_ref[...]            # (36, 48)   bf16  conv1 weights (im2col order)
        b1 = b1_ref[...]            # (36, 1)    f32
        s1 = s1_ref[...]            # (745, 169) bf16  0/1 pool1 stride-2 select
        w2 = w2_ref[...]            # (48, 324)  bf16
        b2 = b2_ref[...]            # (48, 1)    f32
        s2 = s2_ref[...]            # (113, 25)  bf16

        for b in range(tb):         # static unroll over the batch tile
            # ---- conv1 (k=4) as ONE MXU dot via im2col -----------------------
            # col1[(kh*4+kw)*3+ci, d] = x[ci, d + kh*30 + kw]; the 16 writes are
            # cheap lane-dense sublane-offset stores (channel-major layout).
            for kh in range(K1):
                for kw in range(K1):
                    t = kh * K1 + kw
                    col1_scr[t * C_IN:(t + 1) * C_IN, :] = (
                        x_ref[b, :, pl.ds(kh * H_IN + kw, N1)])
            c1 = jnp.dot(w1, col1_scr[...],
                         preferred_element_type=jnp.float32)        # (36, 807)
            c1 = jnp.maximum(c1 + b1, 0.0).astype(jnp.bfloat16)

            # ---- 2x2 max-pool: window max (lane shifts) + stride-2 select ----
            m1 = jnp.maximum(
                jnp.maximum(c1[:, 0:L1], c1[:, 1:1 + L1]),
                jnp.maximum(c1[:, H_IN:H_IN + L1],
                            c1[:, H_IN + 1:H_IN + 1 + L1]))         # (36, 745)
            p1 = jnp.dot(m1, s1, preferred_element_type=jnp.float32
                         ).astype(jnp.bfloat16)                     # (36, 169)

            # ---- conv2 (k=3) as ONE MXU dot via im2col ------------------------
            for kh in range(K2):
                for kw in range(K2):
                    t = kh * K2 + kw
                    d = kh * P1 + kw
                    col2_scr[t * C1:(t + 1) * C1, :] = p1[:, d:d + N2]
            c2 = jnp.dot(w2, col2_scr[...],
                         preferred_element_type=jnp.float32)        # (48, 141)
            c2 = jnp.maximum(c2 + b2, 0.0).astype(jnp.bfloat16)

            # ---- 2x2 max-pool -> (48, 25) == NCHW-flattened (48, 5, 5) -------
            m2 = jnp.maximum(
                jnp.maximum(c2[:, 0:L2], c2[:, 1:1 + L2]),
                jnp.maximum(c2[:, P1:P1 + L2],
                            c2[:, P1 + 1:P1 + 1 + L2]))             # (48, 113)
            o_ref[b] = jnp.dot(m2, s2, preferred_element_type=jnp.float32
                               ).astype(jnp.bfloat16)               # (48, 25)

    return kernel


def _fc_kernel(x_ref, w1_ref, b1_ref, w2_ref, b2_ref, w3_ref, b3_ref, o_ref):
    """fc1+relu -> fc2+relu -> out, fused; weights resident in VMEM."""
    h = jnp.dot(x_ref[...], w1_ref[...], preferred_element_type=jnp.float32)
    h = jnp.maximum(h + b1_ref[...], 0.0)
    # TODO(synk): functional.dropout is identity in eval mode; omitted here.
    h = jnp.dot(h.astype(jnp.bfloat16), w2_ref[...],
                preferred_element_type=jnp.float32)
    h = jnp.maximum(h + b2_ref[...], 0.0)
    o = jnp.dot(h.astype(jnp.bfloat16), w3_ref[...],
                preferred_element_type=jnp.float32)
    o_ref[...] = o + b3_ref[...]                                    # (tm, 128)


# -------------------------------- wrappers -----------------------------------

def _pick_tb(batch, tb_max=8):
    """Batch-tile size: amortize grid overhead, keep >=2 steps when possible
    (v7x megacore balance).  On v6e/v5e feel free to raise tb_max."""
    if batch >= 2 * tb_max:
        return tb_max
    return max(1, batch // 2) if batch > 1 else 1


def conv_stage(x_cm, prep, tb):
    """x_cm: (B, 3, 900) bf16 channel-major input -> (B, 48, 25) bf16."""
    B = x_cm.shape[0]
    Bp = ((B + tb - 1) // tb) * tb
    if Bp != B:
        x_cm = jnp.pad(x_cm, ((0, Bp - B), (0, 0), (0, 0)))
    out = pl.pallas_call(
        _make_conv_kernel(tb),
        out_shape=jax.ShapeDtypeStruct((Bp, C2, P2 * P2), jnp.bfloat16),
        grid=(Bp // tb,),
        in_specs=[
            pl.BlockSpec((tb, C_IN, H_IN * H_IN), lambda i: (i, 0, 0)),
            pl.BlockSpec((C1, K1 * K1 * C_IN), lambda i: (0, 0)),
            pl.BlockSpec((C1, 1), lambda i: (0, 0)),
            pl.BlockSpec((L1, P1 * P1), lambda i: (0, 0)),
            pl.BlockSpec((C2, K2 * K2 * C1), lambda i: (0, 0)),
            pl.BlockSpec((C2, 1), lambda i: (0, 0)),
            pl.BlockSpec((L2, P2 * P2), lambda i: (0, 0)),
        ],
        out_specs=pl.BlockSpec((tb, C2, P2 * P2), lambda i: (i, 0, 0)),
        scratch_shapes=[
            pltpu.VMEM((K1 * K1 * C_IN, N1), jnp.bfloat16),   # conv1 im2col (48, 807)
            pltpu.VMEM((K2 * K2 * C1, N2), jnp.bfloat16),     # conv2 im2col (324, 141)
        ],
        compiler_params=pltpu.CompilerParams(
            dimension_semantics=("parallel",)),
    )(x_cm, prep["conv1_w"], prep["conv1_b"], prep["pool1_sel"],
      prep["conv2_w"], prep["conv2_b"], prep["pool2_sel"])
    return out[:B]


def fc_stage(flat, prep, tile_m=256):
    """flat: (B, 1200) bf16 (NCHW flatten order) -> (B, 4) f32."""
    B = flat.shape[0]
    Bp = ((B + 7) // 8) * 8
    tm = min(tile_m, Bp)          # v6e/v5e: tile_m up to 512 also fine
    Bp = ((Bp + tm - 1) // tm) * tm
    if Bp != B:
        flat = jnp.pad(flat, ((0, Bp - B), (0, 0)))
    out = pl.pallas_call(
        _fc_kernel,
        out_shape=jax.ShapeDtypeStruct((Bp, OUT_PAD), jnp.float32),
        grid=(Bp // tm,),
        in_specs=[
            pl.BlockSpec((tm, FLAT), lambda m: (m, 0)),
            pl.BlockSpec((FLAT, FC_H), lambda m: (0, 0)),
            pl.BlockSpec((1, FC_H), lambda m: (0, 0)),
            pl.BlockSpec((FC_H, FC_H), lambda m: (0, 0)),
            pl.BlockSpec((1, FC_H), lambda m: (0, 0)),
            pl.BlockSpec((FC_H, OUT_PAD), lambda m: (0, 0)),
            pl.BlockSpec((1, OUT_PAD), lambda m: (0, 0)),
        ],
        out_specs=pl.BlockSpec((tm, OUT_PAD), lambda m: (m, 0)),
        compiler_params=pltpu.CompilerParams(
            dimension_semantics=("parallel",)),
    )(flat, prep["fc1_w"], prep["fc1_b"], prep["fc2_w"], prep["fc2_b"],
      prep["out_w"], prep["out_b"])
    return out[:B, :N_OUT]


def forward(prep, x_nchw, conv_tb_max=8, fc_tile_m=256):
    """x_nchw: (B, 3, 30, 30) float32 (PyTorch NCHW). Returns (B, 4) f32."""
    B = x_nchw.shape[0]
    assert x_nchw.shape[1:] == (C_IN, H_IN, H_IN)
    # Single upfront bf16 cast; NCHW -> (B, C, H*W) is a free reshape.
    x = x_nchw.reshape(B, C_IN, H_IN * H_IN).astype(jnp.bfloat16)
    tb = _pick_tb(B, conv_tb_max)
    p2 = conv_stage(x, prep, tb)          # (B, 48, 25) bf16, rows = channel
    flat = p2.reshape(B, FLAT)            # c*25 + h*5 + w == PyTorch view(-1,1200)
    return fc_stage(flat, prep, fc_tile_m)


# ---------------------------- parameter handling -----------------------------

def init_params(key):
    """Parameters in PyTorch layouts (Conv2d: (Cout,Cin,kH,kW); Linear: (out,in))."""
    ks = jax.random.split(key, 10)
    s = 0.05
    return {
        "conv1_w": s * jax.random.normal(ks[0], (C1, C_IN, K1, K1), jnp.float32),
        "conv1_b": s * jax.random.normal(ks[1], (C1,), jnp.float32),
        "conv2_w": s * jax.random.normal(ks[2], (C2, C1, K2, K2), jnp.float32),
        "conv2_b": s * jax.random.normal(ks[3], (C2,), jnp.float32),
        "fc1_w": s * jax.random.normal(ks[4], (FC_H, FLAT), jnp.float32),
        "fc1_b": s * jax.random.normal(ks[5], (FC_H,), jnp.float32),
        "fc2_w": s * jax.random.normal(ks[6], (FC_H, FC_H), jnp.float32),
        "fc2_b": s * jax.random.normal(ks[7], (FC_H,), jnp.float32),
        "out_w": s * jax.random.normal(ks[8], (N_OUT, FC_H), jnp.float32),
        "out_b": s * jax.random.normal(ks[9], (N_OUT,), jnp.float32),
    }


def prepare_params(params):
    """One-time layout / dtype prep so the jitted forward does no weight glue."""
    # Conv weights -> (Cout, taps*Cin) matching the kernel's im2col row order
    # (row index = (kh*K + kw)*Cin + ci), bf16 for the MXU.
    w1 = jnp.transpose(params["conv1_w"], (0, 2, 3, 1)).reshape(C1, K1 * K1 * C_IN)
    w2 = jnp.transpose(params["conv2_w"], (0, 2, 3, 1)).reshape(C2, K2 * K2 * C1)
    # 0/1 selection matrices performing the stride-2 pool subsample on the MXU.
    # bf16 is exact for 0/1 and the selected values are already bf16.
    p = jnp.arange(P1 * P1)
    s1 = jax.nn.one_hot(2 * (p // P1) * H_IN + 2 * (p % P1), L1,
                        dtype=jnp.bfloat16).T                  # (745, 169)
    q = jnp.arange(P2 * P2)
    s2 = jax.nn.one_hot(2 * (q // P2) * P1 + 2 * (q % P2), L2,
                        dtype=jnp.bfloat16).T                  # (113, 25)
    # FC weights -> (in, out).  The conv-stage flatten order (c*25+h*5+w) is
    # exactly PyTorch's NCHW flatten, so fc1 needs no row permutation.
    out_w = jnp.zeros((FC_H, OUT_PAD), jnp.float32).at[:, :N_OUT].set(
        params["out_w"].T)
    out_b = jnp.zeros((1, OUT_PAD), jnp.float32).at[:, :N_OUT].set(
        params["out_b"].reshape(1, N_OUT))
    return {
        "conv1_w": w1.astype(jnp.bfloat16),
        "conv1_b": params["conv1_b"].reshape(C1, 1).astype(jnp.float32),
        "conv2_w": w2.astype(jnp.bfloat16),
        "conv2_b": params["conv2_b"].reshape(C2, 1).astype(jnp.float32),
        "pool1_sel": s1,
        "pool2_sel": s2,
        "fc1_w": params["fc1_w"].T.astype(jnp.bfloat16),
        "fc1_b": params["fc1_b"].reshape(1, FC_H).astype(jnp.float32),
        "fc2_w": params["fc2_w"].T.astype(jnp.bfloat16),
        "fc2_b": params["fc2_b"].reshape(1, FC_H).astype(jnp.float32),
        "out_w": out_w.astype(jnp.bfloat16),
        "out_b": out_b,
    }


if __name__ == "__main__":
    key = jax.random.PRNGKey(0)
    pkey, xkey = jax.random.split(key)
    params = init_params(pkey)
    prep = prepare_params(params)     # one-time weight re-layout + bf16 cast
    x = jax.random.normal(xkey, (2, C_IN, H_IN, H_IN), jnp.float32)
    y = jax.jit(forward)(prep, x)
    y = jax.block_until_ready(y)
    assert y.shape == (2, N_OUT) and y.dtype == jnp.float32
    assert bool(jnp.all(jnp.isfinite(y)))
    print("KERNEL_OK")
</pallas_src>

<mosaic_0001>
module attributes {stable_mosaic.version = 11 : i64} {
  func.func @_fc_kernel(%arg0: i32, %arg1: memref<8x1200xbf16, #tpu.memory_space<vmem>>, %arg2: memref<1200x512xbf16, #tpu.memory_space<vmem>>, %arg3: memref<1x512xf32, #tpu.memory_space<vmem>>, %arg4: memref<512x512xbf16, #tpu.memory_space<vmem>>, %arg5: memref<1x512xf32, #tpu.memory_space<vmem>>, %arg6: memref<512x128xbf16, #tpu.memory_space<vmem>>, %arg7: memref<1x128xf32, #tpu.memory_space<vmem>>, %arg8: memref<8x128xf32, #tpu.memory_space<vmem>>) attributes {dimension_semantics = [#tpu.dimension_semantics<parallel>], iteration_bounds = array<i64: 1>, scalar_prefetch = 0 : i64, scratch_operands = 0 : i64, tpu.core_type = #tpu.core_type<tc>, window_params = [{transform_indices = @transform_0, window_bounds = array<i64: 8, 1200>}, {pipeline_mode = #tpu.pipeline_mode<synchronous>, transform_indices = @transform_1, window_bounds = array<i64: 1200, 512>}, {pipeline_mode = #tpu.pipeline_mode<synchronous>, transform_indices = @transform_2, window_bounds = array<i64: 1, 512>}, {pipeline_mode = #tpu.pipeline_mode<synchronous>, transform_indices = @transform_3, window_bounds = array<i64: 512, 512>}, {pipeline_mode = #tpu.pipeline_mode<synchronous>, transform_indices = @transform_4, window_bounds = array<i64: 1, 512>}, {pipeline_mode = #tpu.pipeline_mode<synchronous>, transform_indices = @transform_5, window_bounds = array<i64: 512, 128>}, {pipeline_mode = #tpu.pipeline_mode<synchronous>, transform_indices = @transform_6, window_bounds = array<i64: 1, 128>}, {transform_indices = @transform_7, window_bounds = array<i64: 8, 128>}]} {
    %c0 = arith.constant 0 : index
    %c0_0 = arith.constant 0 : index
    %0 = vector.load %arg1[%c0, %c0_0] : memref<8x1200xbf16, #tpu.memory_space<vmem>>, vector<8x1200xbf16>
    %c0_1 = arith.constant 0 : index
    %c0_2 = arith.constant 0 : index
    %1 = vector.load %arg2[%c0_1, %c0_2] : memref<1200x512xbf16, #tpu.memory_space<vmem>>, vector<1200x512xbf16>
    %cst = arith.constant dense<0.000000e+00> : vector<8x512xf32>
    %2 = tpu.matmul %0, %1, %cst {dimension_numbers = #tpu.dot_dimension_numbers<[1], [0], [0], [1], [0, 0, 1, 1], [], []>} : vector<8x1200xbf16>, vector<1200x512xbf16>, vector<8x512xf32> -> vector<8x512xf32>
    %c0_3 = arith.constant 0 : index
    %c0_4 = arith.constant 0 : index
    %3 = vector.load %arg3[%c0_3, %c0_4] : memref<1x512xf32, #tpu.memory_space<vmem>>, vector<1x512xf32>
    %4 = vector.broadcast %3 : vector<1x512xf32> to vector<8x512xf32>
    %5 = arith.addf %2, %4 : vector<8x512xf32>
    %cst_5 = arith.constant 0.000000e+00 : f32
    %6 = vector.broadcast %cst_5 : f32 to vector<8x512xf32>
    %7 = arith.maximumf %5, %6 : vector<8x512xf32>
    %8 = arith.truncf %7 : vector<8x512xf32> to vector<8x512xbf16>
    %c0_6 = arith.constant 0 : index
    %c0_7 = arith.constant 0 : index
    %9 = vector.load %arg4[%c0_6, %c0_7] : memref<512x512xbf16, #tpu.memory_space<vmem>>, vector<512x512xbf16>
    %cst_8 = arith.constant dense<0.000000e+00> : vector<8x512xf32>
    %10 = tpu.matmul %8, %9, %cst_8 {dimension_numbers = #tpu.dot_dimension_numbers<[1], [0], [0], [1], [0, 0, 1, 1], [], []>} : vector<8x512xbf16>, vector<512x512xbf16>, vector<8x512xf32> -> vector<8x512xf32>
    %c0_9 = arith.constant 0 : index
    %c0_10 = arith.constant 0 : index
    %11 = vector.load %arg5[%c0_9, %c0_10] : memref<1x512xf32, #tpu.memory_space<vmem>>, vector<1x512xf32>
    %12 = vector.broadcast %11 : vector<1x512xf32> to vector<8x512xf32>
    %13 = arith.addf %10, %12 : vector<8x512xf32>
    %cst_11 = arith.constant 0.000000e+00 : f32
    %14 = vector.broadcast %cst_11 : f32 to vector<8x512xf32>
    %15 = arith.maximumf %13, %14 : vector<8x512xf32>
    %16 = arith.truncf %15 : vector<8x512xf32> to vector<8x512xbf16>
    %c0_12 = arith.constant 0 : index
    %c0_13 = arith.constant 0 : index
    %17 = vector.load %arg6[%c0_12, %c0_13] : memref<512x128xbf16, #tpu.memory_space<vmem>>, vector<512x128xbf16>
    %cst_14 = arith.constant dense<0.000000e+00> : vector<8x128xf32>
    %18 = tpu.matmul %16, %17, %cst_14 {dimension_numbers = #tpu.dot_dimension_numbers<[1], [0], [0], [1], [0, 0, 1, 1], [], []>} : vector<8x512xbf16>, vector<512x128xbf16>, vector<8x128xf32> -> vector<8x128xf32>
    %c0_15 = arith.constant 0 : index
    %c0_16 = arith.constant 0 : index
    %19 = vector.load %arg7[%c0_15, %c0_16] : memref<1x128xf32, #tpu.memory_space<vmem>>, vector<1x128xf32>
    %20 = vector.broadcast %19 : vector<1x128xf32> to vector<8x128xf32>
    %21 = arith.addf %18, %20 : vector<8x128xf32>
    %c0_17 = arith.constant 0 : index
    %c0_18 = arith.constant 0 : index
    %22 = vector.load %arg8[%c0_17, %c0_18] : memref<8x128xf32, #tpu.memory_space<vmem>>, vector<8x128xf32>
    tpu.vector_store %arg8[%c0_17, %c0_18], %21 {strides = array<i32>} : memref<8x128xf32, #tpu.memory_space<vmem>>, vector<8x128xf32>,
    return
  }
  func.func @transform_0(%arg0: i32) -> (i32, i32) {
    %c0_i32 = arith.constant 0 : i32
    %c0_i32_0 = arith.constant 0 : i32
    return %arg0, %c0_i32 : i32, i32
  }
  func.func @transform_1(%arg0: i32) -> (i32, i32) {
    %c0_i32 = arith.constant 0 : i32
    %c0_i32_0 = arith.constant 0 : i32
    %c0_i32_1 = arith.constant 0 : i32
    return %c0_i32, %c0_i32_0 : i32, i32
  }
  func.func @transform_2(%arg0: i32) -> (i32, i32) {
    %c0_i32 = arith.constant 0 : i32
    %c0_i32_0 = arith.constant 0 : i32
    %c0_i32_1 = arith.constant 0 : i32
    return %c0_i32, %c0_i32_0 : i32, i32
  }
  func.func @transform_3(%arg0: i32) -> (i32, i32) {
    %c0_i32 = arith.constant 0 : i32
    %c0_i32_0 = arith.constant 0 : i32
    %c0_i32_1 = arith.constant 0 : i32
    return %c0_i32, %c0_i32_0 : i32, i32
  }
  func.func @transform_4(%arg0: i32) -> (i32, i32) {
    %c0_i32 = arith.constant 0 : i32
    %c0_i32_0 = arith.constant 0 : i32
    %c0_i32_1 = arith.constant 0 : i32
    return %c0_i32, %c0_i32_0 : i32, i32
  }
  func.func @transform_5(%arg0: i32) -> (i32, i32) {
    %c0_i32 = arith.constant 0 : i32
    %c0_i32_0 = arith.constant 0 : i32
    %c0_i32_1 = arith.constant 0 : i32
    return %c0_i32, %c0_i32_0 : i32, i32
  }
  func.func @transform_6(%arg0: i32) -> (i32, i32) {
    %c0_i32 = arith.constant 0 : i32
    %c0_i32_0 = arith.constant 0 : i32
    %c0_i32_1 = arith.constant 0 : i32
    return %c0_i32, %c0_i32_0 : i32, i32
  }
  func.func @transform_7(%arg0: i32) -> (i32, i32) {
    %c0_i32 = arith.constant 0 : i32
    %c0_i32_0 = arith.constant 0 : i32
    return %arg0, %c0_i32 : i32, i32
  }
}

module attributes {stable_mosaic.version = 11 : i64} {
  func.func @kernel(%arg0: i32, %arg1: memref<1x3x900xbf16, #tpu.memory_space<vmem>>, %arg2: memref<36x48xbf16, #tpu.memory_space<vmem>>, %arg3: memref<36x1xf32, #tpu.memory_space<vmem>>, %arg4: memref<745x169xbf16, #tpu.memory_space<vmem>>, %arg5: memref<48x324xbf16, #tpu.memory_space<vmem>>, %arg6: memref<48x1xf32, #tpu.memory_space<vmem>>, %arg7: memref<113x25xbf16, #tpu.memory_space<vmem>>, %arg8: memref<1x48x25xbf16, #tpu.memory_space<vmem>>, %arg9: memref<48x807xbf16, #tpu.memory_space<vmem>>, %arg10: memref<324x141xbf16, #tpu.memory_space<vmem>>) attributes {dimension_semantics = [#tpu.dimension_semantics<parallel>], iteration_bounds = array<i64: 2>, scalar_prefetch = 0 : i64, scratch_operands = 2 : i64, tpu.core_type = #tpu.core_type<tc>, window_params = [{transform_indices = @transform_0, window_bounds = array<i64: 1, 3, 900>}, {pipeline_mode = #tpu.pipeline_mode<synchronous>, transform_indices = @transform_1, window_bounds = array<i64: 36, 48>}, {pipeline_mode = #tpu.pipeline_mode<synchronous>, transform_indices = @transform_2, window_bounds = array<i64: 36, 1>}, {pipeline_mode = #tpu.pipeline_mode<synchronous>, transform_indices = @transform_3, window_bounds = array<i64: 745, 169>}, {pipeline_mode = #tpu.pipeline_mode<synchronous>, transform_indices = @transform_4, window_bounds = array<i64: 48, 324>}, {pipeline_mode = #tpu.pipeline_mode<synchronous>, transform_indices = @transform_5, window_bounds = array<i64: 48, 1>}, {pipeline_mode = #tpu.pipeline_mode<synchronous>, transform_indices = @transform_6, window_bounds = array<i64: 113, 25>}, {transform_indices = @transform_7, window_bounds = array<i64: 1, 48, 25>}]} {
    %c0 = arith.constant 0 : index
    %c0_0 = arith.constant 0 : index
    %0 = vector.load %arg2[%c0, %c0_0] : memref<36x48xbf16, #tpu.memory_space<vmem>>, vector<36x48xbf16>
    %c0_1 = arith.constant 0 : index
    %c0_2 = arith.constant 0 : index
    %1 = vector.load %arg3[%c0_1, %c0_2] : memref<36x1xf32, #tpu.memory_space<vmem>>, vector<36x1xf32>
    %c0_3 = arith.constant 0 : index
    %c0_4 = arith.constant 0 : index
    %2 = vector.load %arg4[%c0_3, %c0_4] : memref<745x169xbf16, #tpu.memory_space<vmem>>, vector<745x169xbf16>
    %c0_5 = arith.constant 0 : index
    %c0_6 = arith.constant 0 : index
    %3 = vector.load %arg5[%c0_5, %c0_6] : memref<48x324xbf16, #tpu.memory_space<vmem>>, vector<48x324xbf16>
    %c0_7 = arith.constant 0 : index
    %c0_8 = arith.constant 0 : index
    %4 = vector.load %arg6[%c0_7, %c0_8] : memref<48x1xf32, #tpu.memory_space<vmem>>, vector<48x1xf32>
    %c0_9 = arith.constant 0 : index
    %c0_10 = arith.constant 0 : index
    %5 = vector.load %arg7[%c0_9, %c0_10] : memref<113x25xbf16, #tpu.memory_space<vmem>>, vector<113x25xbf16>
    %c0_11 = arith.constant 0 : index
    %c0_12 = arith.constant 0 : index
    %c0_13 = arith.constant 0 : index
    %6 = vector.load %arg1[%c0_11, %c0_12, %c0_13] : memref<1x3x900xbf16, #tpu.memory_space<vmem>>, vector<1x3x807xbf16>
    %7 = vector.shape_cast %6 : vector<1x3x807xbf16> to vector<3x807xbf16>
    %c0_14 = arith.constant 0 : index
    %c0_15 = arith.constant 0 : index
    %8 = vector.load %arg9[%c0_14, %c0_15] : memref<48x807xbf16, #tpu.memory_space<vmem>>, vector<3x807xbf16>
    tpu.vector_store %arg9[%c0_14, %c0_15], %7 {strides = array<i32>} : memref<48x807xbf16, #tpu.memory_space<vmem>>, vector<3x807xbf16>,
    %c0_16 = arith.constant 0 : index
    %c0_17 = arith.constant 0 : index
    %c1 = arith.constant 1 : index
    %9 = vector.load %arg1[%c0_16, %c0_17, %c1] : memref<1x3x900xbf16, #tpu.memory_space<vmem>>, vector<1x3x807xbf16>
    %10 = vector.shape_cast %9 : vector<1x3x807xbf16> to vector<3x807xbf16>
    %c3 = arith.constant 3 : index
    %c0_18 = arith.constant 0 : index
    %11 = vector.load %arg9[%c3, %c0_18] : memref<48x807xbf16, #tpu.memory_space<vmem>>, vector<3x807xbf16>
    tpu.vector_store %arg9[%c3, %c0_18], %10 {strides = array<i32>} : memref<48x807xbf16, #tpu.memory_space<vmem>>, vector<3x807xbf16>,
    %c0_19 = arith.constant 0 : index
    %c0_20 = arith.constant 0 : index
    %c2 = arith.constant 2 : index
    %12 = vector.load %arg1[%c0_19, %c0_20, %c2] : memref<1x3x900xbf16, #tpu.memory_space<vmem>>, vector<1x3x807xbf16>
    %13 = vector.shape_cast %12 : vector<1x3x807xbf16> to vector<3x807xbf16>
    %c6 = arith.constant 6 : index
    %c0_21 = arith.constant 0 : index
    %14 = vector.load %arg9[%c6, %c0_21] : memref<48x807xbf16, #tpu.memory_space<vmem>>, vector<3x807xbf16>
    tpu.vector_store %arg9[%c6, %c0_21], %13 {strides = array<i32>} : memref<48x807xbf16, #tpu.memory_space<vmem>>, vector<3x807xbf16>,
    %c0_22 = arith.constant 0 : index
    %c0_23 = arith.constant 0 : index
    %c3_24 = arith.constant 3 : index
    %15 = vector.load %arg1[%c0_22, %c0_23, %c3_24] : memref<1x3x900xbf16, #tpu.memory_space<vmem>>, vector<1x3x807xbf16>
    %16 = vector.shape_cast %15 : vector<1x3x807xbf16> to vector<3x807xbf16>
    %c9 = arith.constant 9 : index
    %c0_25 = arith.constant 0 : index
    %17 = vector.load %arg9[%c9, %c0_25] : memref<48x807xbf16, #tpu.memory_space<vmem>>, vector<3x807xbf16>
    tpu.vector_store %arg9[%c9, %c0_25], %16 {strides = array<i32>} : memref<48x807xbf16, #tpu.memory_space<vmem>>, vector<3x807xbf16>,
    %c0_26 = arith.constant 0 : index
    %c0_27 = arith.constant 0 : index
    %c30 = arith.constant 30 : index
    %18 = vector.load %arg1[%c0_26, %c0_27, %c30] : memref<1x3x900xbf16, #tpu.memory_space<vmem>>, vector<1x3x807xbf16>
    %19 = vector.shape_cast %18 : vector<1x3x807xbf16> to vector<3x807xbf16>
    %c12 = arith.constant 12 : index
    %c0_28 = arith.constant 0 : index
    %20 = vector.load %arg9[%c12, %c0_28] : memref<48x807xbf16, #tpu.memory_space<vmem>>, vector<3x807xbf16>
    tpu.vector_store %arg9[%c12, %c0_28], %19 {strides = array<i32>} : memref<48x807xbf16, #tpu.memory_space<vmem>>, vector<3x807xbf16>,
    %c0_29 = arith.constant 0 : index
    %c0_30 = arith.constant 0 : index
    %c31 = arith.constant 31 : index
    %21 = vector.load %arg1[%c0_29, %c0_30, %c31] : memref<1x3x900xbf16, #tpu.memory_space<vmem>>, vector<1x3x807xbf16>
    %22 = vector.shape_cast %21 : vector<1x3x807xbf16> to vector<3x807xbf16>
    %c15 = arith.constant 15 : index
    %c0_31 = arith.constant 0 : index
    %23 = vector.load %arg9[%c15, %c0_31] : memref<48x807xbf16, #tpu.memory_space<vmem>>, vector<3x807xbf16>
    tpu.vector_store %arg9[%c15, %c0_31], %22 {strides = array<i32>} : memref<48x807xbf16, #tpu.memory_space<vmem>>, vector<3x807xbf16>,
    %c0_32 = arith.constant 0 : index
    %c0_33 = arith.constant 0 : index
    %c32 = arith.constant 32 : index
    %24 = vector.load %arg1[%c0_32, %c0_33, %c32] : memref<1x3x900xbf16, #tpu.memory_space<vmem>>, vector<1x3x807xbf16>
    %25 = vector.shape_cast %24 : vector<1x3x807xbf16> to vector<3x807xbf16>
    %c18 = arith.constant 18 : index
    %c0_34 = arith.constant 0 : index
    %26 = vector.load %arg9[%c18, %c0_34] : memref<48x807xbf16, #tpu.memory_space<vmem>>, vector<3x807xbf16>
    tpu.vector_store %arg9[%c18, %c0_34], %25 {strides = array<i32>} : memref<48x807xbf16, #tpu.memory_space<vmem>>, vector<3x807xbf16>,
    %c0_35 = arith.constant 0 : index
    %c0_36 = arith.constant 0 : index
    %c33 = arith.constant 33 : index
    %27 = vector.load %arg1[%c0_35, %c0_36, %c33] : memref<1x3x900xbf16, #tpu.memory_space<vmem>>, vector<1x3x807xbf16>
    %28 = vector.shape_cast %27 : vector<1x3x807xbf16> to vector<3x807xbf16>
    %c21 = arith.constant 21 : index
    %c0_37 = arith.constant 0 : index
    %29 = vector.load %arg9[%c21, %c0_37] : memref<48x807xbf16, #tpu.memory_space<vmem>>, vector<3x807xbf16>
    tpu.vector_store %arg9[%c21, %c0_37], %28 {strides = array<i32>} : memref<48x807xbf16, #tpu.memory_space<vmem>>, vector<3x807xbf16>,
    %c0_38 = arith.constant 0 : index
    %c0_39 = arith.constant 0 : index
    %c60 = arith.constant 60 : index
    %30 = vector.load %arg1[%c0_38, %c0_39, %c60] : memref<1x3x900xbf16, #tpu.memory_space<vmem>>, vector<1x3x807xbf16>
    %31 = vector.shape_cast %30 : vector<1x3x807xbf16> to vector<3x807xbf16>
    %c24 = arith.constant 24 : index
    %c0_40 = arith.constant 0 : index
    %32 = vector.load %arg9[%c24, %c0_40] : memref<48x807xbf16, #tpu.memory_space<vmem>>, vector<3x807xbf16>
    tpu.vector_store %arg9[%c24, %c0_40], %31 {strides = array<i32>} : memref<48x807xbf16, #tpu.memory_space<vmem>>, vector<3x807xbf16>,
    %c0_41 = arith.constant 0 : index
    %c0_42 = arith.constant 0 : index
    %c61 = arith.constant 61 : index
    %33 = vector.load %arg1[%c0_41, %c0_42, %c61] : memref<1x3x900xbf16, #tpu.memory_space<vmem>>, vector<1x3x807xbf16>
    %34 = vector.shape_cast %33 : vector<1x3x807xbf16> to vector<3x807xbf16>
    %c27 = arith.constant 27 : index
    %c0_43 = arith.constant 0 : index
    %35 = vector.load %arg9[%c27, %c0_43] : memref<48x807xbf16, #tpu.memory_space<vmem>>, vector<3x807xbf16>
    tpu.vector_store %arg9[%c27, %c0_43], %34 {strides = array<i32>} : memref<48x807xbf16, #tpu.memory_space<vmem>>, vector<3x807xbf16>,
    %c0_44 = arith.constant 0 : index
    %c0_45 = arith.constant 0 : index
    %c62 = arith.constant 62 : index
    %36 = vector.load %arg1[%c0_44, %c0_45, %c62] : memref<1x3x900xbf16, #tpu.memory_space<vmem>>, vector<1x3x807xbf16>
    %37 = vector.shape_cast %36 : vector<1x3x807xbf16> to vector<3x807xbf16>
    %c30_46 = arith.constant 30 : index
    %c0_47 = arith.constant 0 : index
    %38 = vector.load %arg9[%c30_46, %c0_47] : memref<48x807xbf16, #tpu.memory_space<vmem>>, vector<3x807xbf16>
    tpu.vector_store %arg9[%c30_46, %c0_47], %37 {strides = array<i32>} : memref<48x807xbf16, #tpu.memory_space<vmem>>, vector<3x807xbf16>,
    %c0_48 = arith.constant 0 : index
    %c0_49 = arith.constant 0 : index
    %c63 = arith.constant 63 : index
    %39 = vector.load %arg1[%c0_48, %c0_49, %c63] : memref<1x3x900xbf16, #tpu.memory_space<vmem>>, vector<1x3x807xbf16>
    %40 = vector.shape_cast %39 : vector<1x3x807xbf16> to vector<3x807xbf16>
    %c33_50 = arith.constant 33 : index
    %c0_51 = arith.constant 0 : index
    %41 = vector.load %arg9[%c33_50, %c0_51] : memref<48x807xbf16, #tpu.memory_space<vmem>>, vector<3x807xbf16>
    tpu.vector_store %arg9[%c33_50, %c0_51], %40 {strides = array<i32>} : memref<48x807xbf16, #tpu.memory_space<vmem>>, vector<3x807xbf16>,
    %c0_52 = arith.constant 0 : index
    %c0_53 = arith.constant 0 : index
    %c90 = arith.constant 90 : index
    %42 = vector.load %arg1[%c0_52, %c0_53, %c90] : memref<1x3x900xbf16, #tpu.memory_space<vmem>>, vector<1x3x807xbf16>
    %43 = vector.shape_cast %42 : vector<1x3x807xbf16> to vector<3x807xbf16>
    %c36 = arith.constant 36 : index
    %c0_54 = arith.constant 0 : index
    %44 = vector.load %arg9[%c36, %c0_54] : memref<48x807xbf16, #tpu.memory_space<vmem>>, vector<3x807xbf16>
    tpu.vector_store %arg9[%c36, %c0_54], %43 {strides = array<i32>} : memref<48x807xbf16, #tpu.memory_space<vmem>>, vector<3x807xbf16>,
    %c0_55 = arith.constant 0 : index
    %c0_56 = arith.constant 0 : index
    %c91 = arith.constant 91 : index
    %45 = vector.load %arg1[%c0_55, %c0_56, %c91] : memref<1x3x900xbf16, #tpu.memory_space<vmem>>, vector<1x3x807xbf16>
    %46 = vector.shape_cast %45 : vector<1x3x807xbf16> to vector<3x807xbf16>
    %c39 = arith.constant 39 : index
    %c0_57 = arith.constant 0 : index
    %47 = vector.load %arg9[%c39, %c0_57] : memref<48x807xbf16, #tpu.memory_space<vmem>>, vector<3x807xbf16>
    tpu.vector_store %arg9[%c39, %c0_57], %46 {strides = array<i32>} : memref<48x807xbf16, #tpu.memory_space<vmem>>, vector<3x807xbf16>,
    %c0_58 = arith.constant 0 : index
    %c0_59 = arith.constant 0 : index
    %c92 = arith.constant 92 : index
    %48 = vector.load %arg1[%c0_58, %c0_59, %c92] : memref<1x3x900xbf16, #tpu.memory_space<vmem>>, vector<1x3x807xbf16>
    %49 = vector.shape_cast %48 : vector<1x3x807xbf16> to vector<3x807xbf16>
    %c42 = arith.constant 42 : index
    %c0_60 = arith.constant 0 : index
    %50 = vector.load %arg9[%c42, %c0_60] : memref<48x807xbf16, #tpu.memory_space<vmem>>, vector<3x807xbf16>
    tpu.vector_store %arg9[%c42, %c0_60], %49 {strides = array<i32>} : memref<48x807xbf16, #tpu.memory_space<vmem>>, vector<3x807xbf16>,
    %c0_61 = arith.constant 0 : index
    %c0_62 = arith.constant 0 : index
    %c93 = arith.constant 93 : index
    %51 = vector.load %arg1[%c0_61, %c0_62, %c93] : memref<1x3x900xbf16, #tpu.memory_space<vmem>>, vector<1x3x807xbf16>
    %52 = vector.shape_cast %51 : vector<1x3x807xbf16> to vector<3x807xbf16>
    %c45 = arith.constant 45 : index
    %c0_63 = arith.constant 0 : index
    %53 = vector.load %arg9[%c45, %c0_63] : memref<48x807xbf16, #tpu.memory_space<vmem>>, vector<3x807xbf16>
    tpu.vector_store %arg9[%c45, %c0_63], %52 {strides = array<i32>} : memref<48x807xbf16, #tpu.memory_space<vmem>>, vector<3x807xbf16>,
    %c0_64 = arith.constant 0 : index
    %c0_65 = arith.constant 0 : index
    %54 = vector.load %arg9[%c0_64, %c0_65] : memref<48x807xbf16, #tpu.memory_space<vmem>>, vector<48x807xbf16>
    %cst = arith.constant dense<0.000000e+00> : vector<36x807xf32>
    %55 = tpu.matmul %0, %54, %cst {dimension_numbers = #tpu.dot_dimension_numbers<[1], [0], [0], [1], [0, 0, 1, 1], [], []>} : vector<36x48xbf16>, vector<48x807xbf16>, vector<36x807xf32> -> vector<36x807xf32>
    %56 = vector.broadcast %1 : vector<36x1xf32> to vector<36x807xf32>
    %57 = arith.addf %55, %56 : vector<36x807xf32>
    %cst_66 = arith.constant 0.000000e+00 : f32
    %58 = vector.broadcast %cst_66 : f32 to vector<36x807xf32>
    %59 = arith.maximumf %57, %58 : vector<36x807xf32>
    %60 = arith.truncf %59 : vector<36x807xf32> to vector<36x807xbf16>
    %61 = vector.extract_strided_slice %60 {offsets = [0, 0], sizes = [36, 745], strides = [1, 1]} : vector<36x807xbf16> to vector<36x745xbf16>
    %62 = vector.extract_strided_slice %60 {offsets = [0, 1], sizes = [36, 745], strides = [1, 1]} : vector<36x807xbf16> to vector<36x745xbf16>
    %63 = arith.maximumf %61, %62 : vector<36x745xbf16>
    %64 = vector.extract_strided_slice %60 {offsets = [0, 30], sizes = [36, 745], strides = [1, 1]} : vector<36x807xbf16> to vector<36x745xbf16>
    %65 = vector.extract_strided_slice %60 {offsets = [0, 31], sizes = [36, 745], strides = [1, 1]} : vector<36x807xbf16> to vector<36x745xbf16>
    %66 = arith.maximumf %64, %65 : vector<36x745xbf16>
    %67 = arith.maximumf %63, %66 : vector<36x745xbf16>
    %cst_67 = arith.constant dense<0.000000e+00> : vector<36x169xf32>
    %68 = tpu.matmul %67, %2, %cst_67 {dimension_numbers = #tpu.dot_dimension_numbers<[1], [0], [0], [1], [0, 0, 1, 1], [], []>} : vector<36x745xbf16>, vector<745x169xbf16>, vector<36x169xf32> -> vector<36x169xf32>
    %69 = arith.truncf %68 : vector<36x169xf32> to vector<36x169xbf16>
    %70 = vector.extract_strided_slice %69 {offsets = [0, 0], sizes = [36, 141], strides = [1, 1]} : vector<36x169xbf16> to vector<36x141xbf16>
    %c0_68 = arith.constant 0 : index
    %c0_69 = arith.constant 0 : index
    %71 = vector.load %arg10[%c0_68, %c0_69] : memref<324x141xbf16, #tpu.memory_space<vmem>>, vector<36x141xbf16>
    tpu.vector_store %arg10[%c0_68, %c0_69], %70 {strides = array<i32>} : memref<324x141xbf16, #tpu.memory_space<vmem>>, vector<36x141xbf16>,
    %72 = vector.extract_strided_slice %69 {offsets = [0, 1], sizes = [36, 141], strides = [1, 1]} : vector<36x169xbf16> to vector<36x141xbf16>
    %c36_70 = arith.constant 36 : index
    %c0_71 = arith.constant 0 : index
    %73 = vector.load %arg10[%c36_70, %c0_71] : memref<324x141xbf16, #tpu.memory_space<vmem>>, vector<36x141xbf16>
    tpu.vector_store %arg10[%c36_70, %c0_71], %72 {strides = array<i32>} : memref<324x141xbf16, #tpu.memory_space<vmem>>, vector<36x141xbf16>,
    %74 = vector.extract_strided_slice %69 {offsets = [0, 2], sizes = [36, 141], strides = [1, 1]} : vector<36x169xbf16> to vector<36x141xbf16>
    %c72 = arith.constant 72 : index
    %c0_72 = arith.constant 0 : index
    %75 = vector.load %arg10[%c72, %c0_72] : memref<324x141xbf16, #tpu.memory_space<vmem>>, vector<36x141xbf16>
    tpu.vector_store %arg10[%c72, %c0_72], %74 {strides = array<i32>} : memref<324x141xbf16, #tpu.memory_space<vmem>>, vector<36x141xbf16>,
    %76 = vector.extract_strided_slice %69 {offsets = [0, 13], sizes = [36, 141], strides = [1, 1]} : vector<36x169xbf16> to vector<36x141xbf16>
    %c108 = arith.constant 108 : index
    %c0_73 = arith.constant 0 : index
    %77 = vector.load %arg10[%c108, %c0_73] : memref<324x141xbf16, #tpu.memory_space<vmem>>, vector<36x141xbf16>
    tpu.vector_store %arg10[%c108, %c0_73], %76 {strides = array<i32>} : memref<324x141xbf16, #tpu.memory_space<vmem>>, vector<36x141xbf16>,
    %78 = vector.extract_strided_slice %69 {offsets = [0, 14], sizes = [36, 141], strides = [1, 1]} : vector<36x169xbf16> to vector<36x141xbf16>
    %c144 = arith.constant 144 : index
    %c0_74 = arith.constant 0 : index
    %79 = vector.load %arg10[%c144, %c0_74] : memref<324x141xbf16, #tpu.memory_space<vmem>>, vector<36x141xbf16>
    tpu.vector_store %arg10[%c144, %c0_74], %78 {strides = array<i32>} : memref<324x141xbf16, #tpu.memory_space<vmem>>, vector<36x141xbf16>,
    %80 = vector.extract_strided_slice %69 {offsets = [0, 15], sizes = [36, 141], strides = [1, 1]} : vector<36x169xbf16> to vector<36x141xbf16>
    %c180 = arith.constant 180 : index
    %c0_75 = arith.constant 0 : index
    %81 = vector.load %arg10[%c180, %c0_75] : memref<324x141xbf16, #tpu.memory_space<vmem>>, vector<36x141xbf16>
    tpu.vector_store %arg10[%c180, %c0_75], %80 {strides = array<i32>} : memref<324x141xbf16, #tpu.memory_space<vmem>>, vector<36x141xbf16>,
    %82 = vector.extract_strided_slice %69 {offsets = [0, 26], sizes = [36, 141], strides = [1, 1]} : vector<36x169xbf16> to vector<36x141xbf16>
    %c216 = arith.constant 216 : index
    %c0_76 = arith.constant 0 : index
    %83 = vector.load %arg10[%c216, %c0_76] : memref<324x141xbf16, #tpu.memory_space<vmem>>, vector<36x141xbf16>
    tpu.vector_store %arg10[%c216, %c0_76], %82 {strides = array<i32>} : memref<324x141xbf16, #tpu.memory_space<vmem>>, vector<36x141xbf16>,
    %84 = vector.extract_strided_slice %69 {offsets = [0, 27], sizes = [36, 141], strides = [1, 1]} : vector<36x169xbf16> to vector<36x141xbf16>
    %c252 = arith.constant 252 : index
    %c0_77 = arith.constant 0 : index
    %85 = vector.load %arg10[%c252, %c0_77] : memref<324x141xbf16, #tpu.memory_space<vmem>>, vector<36x141xbf16>
    tpu.vector_store %arg10[%c252, %c0_77], %84 {strides = array<i32>} : memref<324x141xbf16, #tpu.memory_space<vmem>>, vector<36x141xbf16>,
    %86 = vector.extract_strided_slice %69 {offsets = [0, 28], sizes = [36, 141], strides = [1, 1]} : vector<36x169xbf16> to vector<36x141xbf16>
    %c288 = arith.constant 288 : index
    %c0_78 = arith.constant 0 : index
    %87 = vector.load %arg10[%c288, %c0_78] : memref<324x141xbf16, #tpu.memory_space<vmem>>, vector<36x141xbf16>
    tpu.vector_store %arg10[%c288, %c0_78], %86 {strides = array<i32>} : memref<324x141xbf16, #tpu.memory_space<vmem>>, vector<36x141xbf16>,
    %c0_79 = arith.constant 0 : index
    %c0_80 = arith.constant 0 : index
    %88 = vector.load %arg10[%c0_79, %c0_80] : memref<324x141xbf16, #tpu.memory_space<vmem>>, vector<324x141xbf16>
    %cst_81 = arith.constant dense<0.000000e+00> : vector<48x141xf32>
    %89 = tpu.matmul %3, %88, %cst_81 {dimension_numbers = #tpu.dot_dimension_numbers<[1], [0], [0], [1], [0, 0, 1, 1], [], []>} : vector<48x324xbf16>, vector<324x141xbf16>, vector<48x141xf32> -> vector<48x141xf32>
    %90 = vector.broadcast %4 : vector<48x1xf32> to vector<48x141xf32>
    %91 = arith.addf %89, %90 : vector<48x141xf32>
    %cst_82 = arith.constant 0.000000e+00 : f32
    %92 = vector.broadcast %cst_82 : f32 to vector<48x141xf32>
    %93 = arith.maximumf %91, %92 : vector<48x141xf32>
    %94 = arith.truncf %93 : vector<48x141xf32> to vector<48x141xbf16>
    %95 = vector.extract_strided_slice %94 {offsets = [0, 0], sizes = [48, 113], strides = [1, 1]} : vector<48x141xbf16> to vector<48x113xbf16>
    %96 = vector.extract_strided_slice %94 {offsets = [0, 1], sizes = [48, 113], strides = [1, 1]} : vector<48x141xbf16> to vector<48x113xbf16>
    %97 = arith.maximumf %95, %96 : vector<48x113xbf16>
    %98 = vector.extract_strided_slice %94 {offsets = [0, 13], sizes = [48, 113], strides = [1, 1]} : vector<48x141xbf16> to vector<48x113xbf16>
    %99 = vector.extract_strided_slice %94 {offsets = [0, 14], sizes = [48, 113], strides = [1, 1]} : vector<48x141xbf16> to vector<48x113xbf16>
    %100 = arith.maximumf %98, %99 : vector<48x113xbf16>
    %101 = arith.maximumf %97, %100 : vector<48x113xbf16>
    %cst_83 = arith.constant dense<0.000000e+00> : vector<48x25xf32>
    %102 = tpu.matmul %101, %5, %cst_83 {dimension_numbers = #tpu.dot_dimension_numbers<[1], [0], [0], [1], [0, 0, 1, 1], [], []>} : vector<48x113xbf16>, vector<113x25xbf16>, vector<48x25xf32> -> vector<48x25xf32>
    %103 = arith.truncf %102 : vector<48x25xf32> to vector<48x25xbf16>
    %c0_84 = arith.constant 0 : index
    %c0_85 = arith.constant 0 : index
    %c0_86 = arith.constant 0 : index
    %104 = vector.load %arg8[%c0_84, %c0_85, %c0_86] : memref<1x48x25xbf16, #tpu.memory_space<vmem>>, vector<1x48x25xbf16>
    %105 = vector.shape_cast %104 : vector<1x48x25xbf16> to vector<48x25xbf16>
    %106 = vector.shape_cast %103 : vector<48x25xbf16> to vector<1x48x25xbf16>
    tpu.vector_store %arg8[%c0_84, %c0_85, %c0_86], %106 {strides = array<i32>} : memref<1x48x25xbf16, #tpu.memory_space<vmem>>, vector<1x48x25xbf16>,
    return
  }
  func.func @transform_0(%arg0: i32) -> (i32, i32, i32) {
    %c0_i32 = arith.constant 0 : i32
    %c0_i32_0 = arith.constant 0 : i32
    %c0_i32_1 = arith.constant 0 : i32
    return %arg0, %c0_i32, %c0_i32_0 : i32, i32, i32
  }
  func.func @transform_1(%arg0: i32) -> (i32, i32) {
    %c0_i32 = arith.constant 0 : i32
    %c0_i32_0 = arith.constant 0 : i32
    %c0_i32_1 = arith.constant 0 : i32
    return %c0_i32, %c0_i32_0 : i32, i32
  }
  func.func @transform_2(%arg0: i32) -> (i32, i32) {
    %c0_i32 = arith.constant 0 : i32
    %c0_i32_0 = arith.constant 0 : i32
    %c0_i32_1 = arith.constant 0 : i32
    return %c0_i32, %c0_i32_0 : i32, i32
  }
  func.func @transform_3(%arg0: i32) -> (i32, i32) {
    %c0_i32 = arith.constant 0 : i32
    %c0_i32_0 = arith.constant 0 : i32
    %c0_i32_1 = arith.constant 0 : i32
    return %c0_i32, %c0_i32_0 : i32, i32
  }
  func.func @transform_4(%arg0: i32) -> (i32, i32) {
    %c0_i32 = arith.constant 0 : i32
    %c0_i32_0 = arith.constant 0 : i32
    %c0_i32_1 = arith.constant 0 : i32
    return %c0_i32, %c0_i32_0 : i32, i32
  }
  func.func @transform_5(%arg0: i32) -> (i32, i32) {
    %c0_i32 = arith.constant 0 : i32
    %c0_i32_0 = arith.constant 0 : i32
    %c0_i32_1 = arith.constant 0 : i32
    return %c0_i32, %c0_i32_0 : i32, i32
  }
  func.func @transform_6(%arg0: i32) -> (i32, i32) {
    %c0_i32 = arith.constant 0 : i32
    %c0_i32_0 = arith.constant 0 : i32
    %c0_i32_1 = arith.constant 0 : i32
    return %c0_i32, %c0_i32_0 : i32, i32
  }
  func.func @transform_7(%arg0: i32) -> (i32, i32, i32) {
    %c0_i32 = arith.constant 0 : i32
    %c0_i32_0 = arith.constant 0 : i32
    %c0_i32_1 = arith.constant 0 : i32
    return %arg0, %c0_i32, %c0_i32_0 : i32, i32, i32
  }
}

</mosaic_0001>

<llo_original>
// kernel: forward.3
$region0: #{forward.3}
  #allocation0 [shape = 'u32[]', space=smem, size = 0x4, offset = 0x4, fixed_abs, tag = 'smem constant byte address 0x4 - core index']
  #allocation1 [shape = 'u32[144,128]{1,0:T(1,128)}', space=vmem, size = 0x12000, scoped, tag = 'internal scratch']
  %s0 = inlined_call_operand.vmem [shape: bf16[8,1200], index: 0, kind: input, shape index: {}]
  %s1 = inlined_call_operand.vmem [shape: bf16[1200,512], index: 1, kind: input, shape index: {}]
  %s2 = inlined_call_operand.vmem [shape: f32[1,512], index: 2, kind: input, shape index: {}]
  %s3 = inlined_call_operand.hbm [shape: bf16[512,512], index: 3, kind: input, shape index: {}]
  %s4 = inlined_call_operand.vmem [shape: f32[1,512], index: 4, kind: input, shape index: {}]
  %s5 = inlined_call_operand.vmem [shape: bf16[512,128], index: 5, kind: input, shape index: {}]
  %s6 = inlined_call_operand.vmem [shape: f32[1,128], index: 6, kind: input, shape index: {}]
  %s7 = inlined_call_operand.vmem [shape: f32[8,128], index: 7, kind: output, shape index: {}]
  %s8 = sld [smem:[#allocation0]]
  $region42: #{forward.3} parent=0
    _
  %s10 = ssub.s32 1, %s8
  %s11 = scalar_select 0, %s10, %s8
  $region1: #{forward.3} parent=0
    #allocation2 [shape = 'u8[524288]{0}', space=vmem, size = 0x80000, scoped, tag = 'input window, operand 3, single buffered']
    #allocation3 [shape = 's32[1]{0}', space=sflag, size = 0x4, scoped, tag = 'scoped memory for forward.3']
    %12 = vsyncpa [#allocation3], 0
    // Predicated region
    $region2: #{forward.3} parent=1 // pred_check
      _
    $region3: #{forward.3} parent=1 // pred_check_branch
      %14 = sbr.rel (0) target = $region5
    $region4: #{forward.3} parent=1 // pred_region
      _
    $region5: #{forward.3} parent=1 // pred_fallthru
      _
    // Predicated region
    $region6: #{forward.3} parent=1 // pred_check
      _
    $region7: #{forward.3} parent=1 // pred_check_branch
      %16 = sbr.rel (0) target = $region9
    $region8: #{forward.3} parent=1 // pred_region
      _
    $region9: #{forward.3} parent=1 // pred_fallthru
      _
    // Predicated region
    $region10: #{forward.3} parent=1 // pred_check
      _
    $region11: #{forward.3} parent=1 // pred_check_branch
      %18 = sbr.rel (0) target = $region13
    $region12: #{forward.3} parent=1 // pred_region
      _
    $region13: #{forward.3} parent=1 // pred_fallthru
      _
    // Predicated region
    $region14: #{forward.3} parent=1 // pred_check
      _
    $region15: #{forward.3} parent=1 // pred_check_branch
      %20 = sbr.rel (0) target = $region17
    $region16: #{forward.3} parent=1 // pred_region
      %s22 = ssub.s32 16384, 16384
      %23 = vsyncadd [#allocation3], %s22
      %s24 = sshll.u32 [#allocation2], 4
      %s25 = int_to_ptr.vmem [resolvable:$true] %s24
      %30 = dma.hbm_to_vmem [thread:$0]  %s3, 16384, %s25, [#allocation3], 256, 256, 16
    $region17: #{forward.3} parent=1 // pred_fallthru
      _
    // Predicated region
    $region18: #{forward.3} parent=1 // pred_check
      _
    $region19: #{forward.3} parent=1 // pred_check_branch
      %32 = sbr.rel (0) target = $region21
    $region20: #{forward.3} parent=1 // pred_region
      _
    $region21: #{forward.3} parent=1 // pred_fallthru
      _
    // Predicated region
    $region22: #{forward.3} parent=1 // pred_check
      _
    $region23: #{forward.3} parent=1 // pred_check_branch
      %34 = sbr.rel (0) target = $region25
    $region24: #{forward.3} parent=1 // pred_region
      _
    $region25: #{forward.3} parent=1 // pred_fallthru
      _
    // Predicated region
    $region26: #{forward.3} parent=1 // pred_check
      _
    $region27: #{forward.3} parent=1 // pred_check_branch
      %36 = sbr.rel (0) target = $region29
    $region28: #{forward.3} parent=1 // pred_region
      _
    $region29: #{forward.3} parent=1 // pred_fallthru
      _
    // Predicated region
    $region30: #{forward.3} parent=1 // pred_check
      _
    $region31: #{forward.3} parent=1 // pred_check_branch
      %38 = sbr.rel (0) target = $region33
    $region32: #{forward.3} parent=1 // pred_region
      %39 = dma.done [#allocation3], 16384
    $region33: #{forward.3} parent=1 // pred_fallthru
      _
    %v41 = vld [vmem:[%s0] sm:$0xff]
    %v42 = vld [vmem:[%s0 + $0x8] sm:$0xff]
    %v43 = vld [vmem:[%s0 + $0x10] sm:$0xff]
    %v44 = vld [vmem:[%s0 + $0x18] sm:$0xff]
    %v45 = vld [vmem:[%s0 + $0x20] sm:$0xff]
    %v46 = vld [vmem:[%s1] sm:$0xff]
    %v47 = vld [vmem:[%s1 + $0x8] sm:$0xff]
    %v48 = vld [vmem:[%s1 + $0x10] sm:$0xff]
    %v49 = vld [vmem:[%s1 + $0x18] sm:$0xff]
    %v50 = vld [vmem:[%s1 + $0x20] sm:$0xff]
    %v51 = vld [vmem:[%s1 + $0x28] sm:$0xff]
    %v52 = vld [vmem:[%s1 + $0x30] sm:$0xff]
    %v53 = vld [vmem:[%s1 + $0x38] sm:$0xff]
    %v54 = vld [vmem:[%s1 + $0x40] sm:$0xff]
    %v55 = vld [vmem:[%s1 + $0x48] sm:$0xff]
    %v56 = vld [vmem:[%s1 + $0x50] sm:$0xff]
    %v57 = vld [vmem:[%s1 + $0x58] sm:$0xff]
    %v58 = vld [vmem:[%s1 + $0x60] sm:$0xff]
    %v59 = vld [vmem:[%s1 + $0x68] sm:$0xff]
    %v60 = vld [vmem:[%s1 + $0x70] sm:$0xff]
    %v61 = vld [vmem:[%s1 + $0x78] sm:$0xff]
    %v62 = vld [vmem:[%s1 + $0x80] sm:$0xff]
    %v63 = vld [vmem:[%s1 + $0x88] sm:$0xff]
    %v64 = vld [vmem:[%s1 + $0x90] sm:$0xff]
    %v65 = vld [vmem:[%s1 + $0x98] sm:$0xff]
    %v66 = vld [vmem:[%s1 + $0xa0] sm:$0xff]
    %v67 = vld [vmem:[%s1 + $0xa8] sm:$0xff]
    %v68 = vld [vmem:[%s1 + $0xb0] sm:$0xff]
    %v69 = vld [vmem:[%s1 + $0xb8] sm:$0xff]
    %v70 = vld [vmem:[%s1 + $0xc0] sm:$0xff]
    %v71 = vld [vmem:[%s1 + $0xc8] sm:$0xff]
    %v72 = vld [vmem:[%s1 + $0xd0] sm:$0xff]
    %v73 = vld [vmem:[%s1 + $0xd8] sm:$0xff]
    %v74 = vld [vmem:[%s1 + $0xe0] sm:$0xff]
    %v75 = vld [vmem:[%s1 + $0xe8] sm:$0xff]
    %v76 = vld [vmem:[%s1 + $0xf0] sm:$0xff]
    %v77 = vld [vmem:[%s1 + $0xf8] sm:$0xff]
    %v78 = vld [vmem:[%s1 + $0x100] sm:$0xff]
    %v79 = vld [vmem:[%s1 + $0x108] sm:$0xff]
    %v80 = vld [vmem:[%s1 + $0x110] sm:$0xff]
    %v81 = vld [vmem:[%s1 + $0x118] sm:$0xff]
    %v82 = vld [vmem:[%s1 + $0x120] sm:$0xff]
    %v83 = vld [vmem:[%s1 + $0x128] sm:$0xff]
    %v84 = vld [vmem:[%s1 + $0x130] sm:$0xff]
    %v85 = vld [vmem:[%s1 + $0x138] sm:$0xff]
    %v86 = vld [vmem:[%s1 + $0x140] sm:$0xff]
    %v87 = vld [vmem:[%s1 + $0x148] sm:$0xff]
    %v88 = vld [vmem:[%s1 + $0x150] sm:$0xff]
    %v89 = vld [vmem:[%s1 + $0x158] sm:$0xff]
    %v90 = vld [vmem:[%s1 + $0x160] sm:$0xff]
    %v91 = vld [vmem:[%s1 + $0x168] sm:$0xff]
    %v92 = vld [vmem:[%s1 + $0x170] sm:$0xff]
    %v93 = vld [vmem:[%s1 + $0x178] sm:$0xff]
    %v94 = vld [vmem:[%s1 + $0x180] sm:$0xff]
    %v95 = vld [vmem:[%s1 + $0x188] sm:$0xff]
    %v96 = vld [vmem:[%s1 + $0x190] sm:$0xff]
    %v97 = vld [vmem:[%s1 + $0x198] sm:$0xff]
    %v98 = vld [vmem:[%s1 + $0x1a0] sm:$0xff]
    %v99 = vld [vmem:[%s1 + $0x1a8] sm:$0xff]
    %v100 = vld [vmem:[%s1 + $0x1b0] sm:$0xff]
    %v101 = vld [vmem:[%s1 + $0x1b8] sm:$0xff]
    %v102 = vld [vmem:[%s1 + $0x1c0] sm:$0xff]
    %v103 = vld [vmem:[%s1 + $0x1c8] sm:$0xff]
    %v104 = vld [vmem:[%s1 + $0x1d0] sm:$0xff]
    %v105 = vld [vmem:[%s1 + $0x1d8] sm:$0xff]
    %v106 = vld [vmem:[%s1 + $0x1e0] sm:$0xff]
    %v107 = vld [vmem:[%s1 + $0x1e8] sm:$0xff]
    %v108 = vld [vmem:[%s1 + $0x1f0] sm:$0xff]
    %v109 = vld [vmem:[%s1 + $0x1f8] sm:$0xff]
    %v110 = vld [vmem:[%s1 + $0x200] sm:$0xff]
    %v111 = vld [vmem:[%s1 + $0x208] sm:$0xff]
    %v112 = vld [vmem:[%s1 + $0x210] sm:$0xff]
    %v113 = vld [vmem:[%s1 + $0x218] sm:$0xff]
    %v114 = vld [vmem:[%s1 + $0x220] sm:$0xff]
    %v115 = vld [vmem:[%s1 + $0x228] sm:$0xff]
    %v116 = vld [vmem:[%s1 + $0x230] sm:$0xff]
    %v117 = vld [vmem:[%s1 + $0x238] sm:$0xff]
    %v118 = vld [vmem:[%s1 + $0x240] sm:$0xff]
    %v119 = vld [vmem:[%s1 + $0x248] sm:$0xff]
    %v120 = vld [vmem:[%s1 + $0x250] sm:$0xff]
    %v121 = vld [vmem:[%s1 + $0x258] sm:$0xff]
    %v122 = vld [vmem:[%s1 + $0x260] sm:$0xff]
    %v123 = vld [vmem:[%s1 + $0x268] sm:$0xff]
    %v124 = vld [vmem:[%s1 + $0x270] sm:$0xff]
    %v125 = vld [vmem:[%s1 + $0x278] sm:$0xff]
    %v126 = vld [vmem:[%s1 + $0x280] sm:$0xff]
    %v127 = vld [vmem:[%s1 + $0x288] sm:$0xff]
    %v128 = vld [vmem:[%s1 + $0x290] sm:$0xff]
    %v129 = vld [vmem:[%s1 + $0x298] sm:$0xff]
    %v130 = vld [vmem:[%s1 + $0x2a0] sm:$0xff]
    %v131 = vld [vmem:[%s1 + $0x2a8] sm:$0xff]
    %v132 = vld [vmem:[%s1 + $0x2b0] sm:$0xff]
    %v133 = vld [vmem:[%s1 + $0x2b8] sm:$0xff]
    %v134 = vld [vmem:[%s1 + $0x2c0] sm:$0xff]
    %v135 = vld [vmem:[%s1 + $0x2c8] sm:$0xff]
    %v136 = vld [vmem:[%s1 + $0x2d0] sm:$0xff]
    %v137 = vld [vmem:[%s1 + $0x2d8] sm:$0xff]
    %v138 = vld [vmem:[%s1 + $0x2e0] sm:$0xff]
    %v139 = vld [vmem:[%s1 + $0x2e8] sm:$0xff]
    %v140 = vld [vmem:[%s1 + $0x2f0] sm:$0xff]
    %v141 = vld [vmem:[%s1 + $0x2f8] sm:$0xff]
    %v142 = vld [vmem:[%s1 + $0x300] sm:$0xff]
    %v143 = vld [vmem:[%s1 + $0x308] sm:$0xff]
    %v144 = vld [vmem:[%s1 + $0x310] sm:$0xff]
    %v145 = vld [vmem:[%s1 + $0x318] sm:$0xff]
    %v146 = vld [vmem:[%s1 + $0x320] sm:$0xff]
    %v147 = vld [vmem:[%s1 + $0x328] sm:$0xff]
    %v148 = vld [vmem:[%s1 + $0x330] sm:$0xff]
    %v149 = vld [vmem:[%s1 + $0x338] sm:$0xff]
    %v150 = vld [vmem:[%s1 + $0x340] sm:$0xff]
    %v151 = vld [vmem:[%s1 + $0x348] sm:$0xff]
    %v152 = vld [vmem:[%s1 + $0x350] sm:$0xff]
    %v153 = vld [vmem:[%s1 + $0x358] sm:$0xff]
    %v154 = vld [vmem:[%s1 + $0x360] sm:$0xff]
    %v155 = vld [vmem:[%s1 + $0x368] sm:$0xff]
    %v156 = vld [vmem:[%s1 + $0x370] sm:$0xff]
    %v157 = vld [vmem:[%s1 + $0x378] sm:$0xff]
    %v158 = vld [vmem:[%s1 + $0x380] sm:$0xff]
    %v159 = vld [vmem:[%s1 + $0x388] sm:$0xff]
    %v160 = vld [vmem:[%s1 + $0x390] sm:$0xff]
    %v161 = vld [vmem:[%s1 + $0x398] sm:$0xff]
    %v162 = vld [vmem:[%s1 + $0x3a0] sm:$0xff]
    %v163 = vld [vmem:[%s1 + $0x3a8] sm:$0xff]
    %v164 = vld [vmem:[%s1 + $0x3b0] sm:$0xff]
    %v165 = vld [vmem:[%s1 + $0x3b8] sm:$0xff]
    %v166 = vld [vmem:[%s1 + $0x3c0] sm:$0xff]
    %v167 = vld [vmem:[%s1 + $0x3c8] sm:$0xff]
    %v168 = vld [vmem:[%s1 + $0x3d0] sm:$0xff]
    %v169 = vld [vmem:[%s1 + $0x3d8] sm:$0xff]
    %v170 = vld [vmem:[%s1 + $0x3e0] sm:$0xff]
    %v171 = vld [vmem:[%s1 + $0x3e8] sm:$0xff]
    %v172 = vld [vmem:[%s1 + $0x3f0] sm:$0xff]
    %v173 = vld [vmem:[%s1 + $0x3f8] sm:$0xff]
    %v174 = vld [vmem:[%s1 + $0x400] sm:$0xff]
    %v175 = vld [vmem:[%s1 + $0x408] sm:$0xff]
    %v176 = vld [vmem:[%s1 + $0x410] sm:$0xff]
    %v177 = vld [vmem:[%s1 + $0x418] sm:$0xff]
    %v178 = vld [vmem:[%s1 + $0x420] sm:$0xff]
    %v179 = vld [vmem:[%s1 + $0x428] sm:$0xff]
    %v180 = vld [vmem:[%s1 + $0x430] sm:$0xff]
    %v181 = vld [vmem:[%s1 + $0x438] sm:$0xff]
    %v182 = vld [vmem:[%s1 + $0x440] sm:$0xff]
    %v183 = vld [vmem:[%s1 + $0x448] sm:$0xff]
    %v184 = vld [vmem:[%s1 + $0x450] sm:$0xff]
    %v185 = vld [vmem:[%s1 + $0x458] sm:$0xff]
    %v186 = vld [vmem:[%s1 + $0x460] sm:$0xff]
    %v187 = vld [vmem:[%s1 + $0x468] sm:$0xff]
    %v188 = vld [vmem:[%s1 + $0x470] sm:$0xff]
    %v189 = vld [vmem:[%s1 + $0x478] sm:$0xff]
    %v190 = vld [vmem:[%s1 + $0x480] sm:$0xff]
    %v191 = vld [vmem:[%s1 + $0x488] sm:$0xff]
    %v192 = vld [vmem:[%s1 + $0x490] sm:$0xff]
    %v193 = vld [vmem:[%s1 + $0x498] sm:$0xff]
    %v194 = vld [vmem:[%s1 + $0x4a0] sm:$0xff]
    %v195 = vld [vmem:[%s1 + $0x4a8] sm:$0xff]
    %v196 = vld [vmem:[%s1 + $0x4b0] sm:$0xff]
    %v197 = vld [vmem:[%s1 + $0x4b8] sm:$0xff]
    %v198 = vld [vmem:[%s1 + $0x4c0] sm:$0xff]
    %v199 = vld [vmem:[%s1 + $0x4c8] sm:$0xff]
    %v200 = vld [vmem:[%s1 + $0x4d0] sm:$0xff]
    %v201 = vld [vmem:[%s1 + $0x4d8] sm:$0xff]
    %v202 = vld [vmem:[%s1 + $0x4e0] sm:$0xff]
    %v203 = vld [vmem:[%s1 + $0x4e8] sm:$0xff]
    %v204 = vld [vmem:[%s1 + $0x4f0] sm:$0xff]
    %v205 = vld [vmem:[%s1 + $0x4f8] sm:$0xff]
    %v206 = vld [vmem:[%s1 + $0x500] sm:$0xff]
    %v207 = vld [vmem:[%s1 + $0x508] sm:$0xff]
    %v208 = vld [vmem:[%s1 + $0x510] sm:$0xff]
    %v209 = vld [vmem:[%s1 + $0x518] sm:$0xff]
    %v210 = vld [vmem:[%s1 + $0x520] sm:$0xff]
    %v211 = vld [vmem:[%s1 + $0x528] sm:$0xff]
    %v212 = vld [vmem:[%s1 + $0x530] sm:$0xff]
    %v213 = vld [vmem:[%s1 + $0x538] sm:$0xff]
    %v214 = vld [vmem:[%s1 + $0x540] sm:$0xff]
    %v215 = vld [vmem:[%s1 + $0x548] sm:$0xff]
    %v216 = vld [vmem:[%s1 + $0x550] sm:$0xff]
    %v217 = vld [vmem:[%s1 + $0x558] sm:$0xff]
    %v218 = vld [vmem:[%s1 + $0x560] sm:$0xff]
    %v219 = vld [vmem:[%s1 + $0x568] sm:$0xff]
    %v220 = vld [vmem:[%s1 + $0x570] sm:$0xff]
    %v221 = vld [vmem:[%s1 + $0x578] sm:$0xff]
    %v222 = vld [vmem:[%s1 + $0x580] sm:$0xff]
    %v223 = vld [vmem:[%s1 + $0x588] sm:$0xff]
    %v224 = vld [vmem:[%s1 + $0x590] sm:$0xff]
    %v225 = vld [vmem:[%s1 + $0x598] sm:$0xff]
    %v226 = vld [vmem:[%s1 + $0x5a0] sm:$0xff]
    %v227 = vld [vmem:[%s1 + $0x5a8] sm:$0xff]
    %v228 = vld [vmem:[%s1 + $0x5b0] sm:$0xff]
    %v229 = vld [vmem:[%s1 + $0x5b8] sm:$0xff]
    %v230 = vld [vmem:[%s1 + $0x5c0] sm:$0xff]
    %v231 = vld [vmem:[%s1 + $0x5c8] sm:$0xff]
    %v232 = vld [vmem:[%s1 + $0x5d0] sm:$0xff]
    %v233 = vld [vmem:[%s1 + $0x5d8] sm:$0xff]
    %v234 = vld [vmem:[%s1 + $0x5e0] sm:$0xff]
    %v235 = vld [vmem:[%s1 + $0x5e8] sm:$0xff]
    %v236 = vld [vmem:[%s1 + $0x5f0] sm:$0xff]
    %v237 = vld [vmem:[%s1 + $0x5f8] sm:$0xff]
    %v238 = vld [vmem:[%s1 + $0x600] sm:$0xff]
    %v239 = vld [vmem:[%s1 + $0x608] sm:$0xff]
    %v240 = vld [vmem:[%s1 + $0x610] sm:$0xff]
    %v241 = vld [vmem:[%s1 + $0x618] sm:$0xff]
    %v242 = vld [vmem:[%s1 + $0x620] sm:$0xff]
    %v243 = vld [vmem:[%s1 + $0x628] sm:$0xff]
    %v244 = vld [vmem:[%s1 + $0x630] sm:$0xff]
    %v245 = vld [vmem:[%s1 + $0x638] sm:$0xff]
    %v246 = vld [vmem:[%s1 + $0x640] sm:$0xff]
    %v247 = vld [vmem:[%s1 + $0x648] sm:$0xff]
    %v248 = vld [vmem:[%s1 + $0x650] sm:$0xff]
    %v249 = vld [vmem:[%s1 + $0x658] sm:$0xff]
    %v250 = vld [vmem:[%s1 + $0x660] sm:$0xff]
    %v251 = vld [vmem:[%s1 + $0x668] sm:$0xff]
    %v252 = vld [vmem:[%s1 + $0x670] sm:$0xff]
    %v253 = vld [vmem:[%s1 + $0x678] sm:$0xff]
    %v254 = vld [vmem:[%s1 + $0x680] sm:$0xff]
    %v255 = vld [vmem:[%s1 + $0x688] sm:$0xff]
    %v256 = vld [vmem:[%s1 + $0x690] sm:$0xff]
    %v257 = vld [vmem:[%s1 + $0x698] sm:$0xff]
    %v258 = vld [vmem:[%s1 + $0x6a0] sm:$0xff]
    %v259 = vld [vmem:[%s1 + $0x6a8] sm:$0xff]
    %v260 = vld [vmem:[%s1 + $0x6b0] sm:$0xff]
    %v261 = vld [vmem:[%s1 + $0x6b8] sm:$0xff]
    %v262 = vld [vmem:[%s1 + $0x6c0] sm:$0xff]
    %v263 = vld [vmem:[%s1 + $0x6c8] sm:$0xff]
    %v264 = vld [vmem:[%s1 + $0x6d0] sm:$0xff]
    %v265 = vld [vmem:[%s1 + $0x6d8] sm:$0xff]
    %v266 = vld [vmem:[%s1 + $0x6e0] sm:$0xff]
    %v267 = vld [vmem:[%s1 + $0x6e8] sm:$0xff]
    %v268 = vld [vmem:[%s1 + $0x6f0] sm:$0xff]
    %v269 = vld [vmem:[%s1 + $0x6f8] sm:$0xff]
    %v270 = vld [vmem:[%s1 + $0x700] sm:$0xff]
    %v271 = vld [vmem:[%s1 + $0x708] sm:$0xff]
    %v272 = vld [vmem:[%s1 + $0x710] sm:$0xff]
    %v273 = vld [vmem:[%s1 + $0x718] sm:$0xff]
    %v274 = vld [vmem:[%s1 + $0x720] sm:$0xff]
    %v275 = vld [vmem:[%s1 + $0x728] sm:$0xff]
    %v276 = vld [vmem:[%s1 + $0x730] sm:$0xff]
    %v277 = vld [vmem:[%s1 + $0x738] sm:$0xff]
    %v278 = vld [vmem:[%s1 + $0x740] sm:$0xff]
    %v279 = vld [vmem:[%s1 + $0x748] sm:$0xff]
    %v280 = vld [vmem:[%s1 + $0x750] sm:$0xff]
    %v281 = vld [vmem:[%s1 + $0x758] sm:$0xff]
    %v282 = vld [vmem:[%s1 + $0x760] sm:$0xff]
    %v283 = vld [vmem:[%s1 + $0x768] sm:$0xff]
    %v284 = vld [vmem:[%s1 + $0x770] sm:$0xff]
    %v285 = vld [vmem:[%s1 + $0x778] sm:$0xff]
    %v286 = vld [vmem:[%s1 + $0x780] sm:$0xff]
    %v287 = vld [vmem:[%s1 + $0x788] sm:$0xff]
    %v288 = vld [vmem:[%s1 + $0x790] sm:$0xff]
    %v289 = vld [vmem:[%s1 + $0x798] sm:$0xff]
    %v290 = vld [vmem:[%s1 + $0x7a0] sm:$0xff]
    %v291 = vld [vmem:[%s1 + $0x7a8] sm:$0xff]
    %v292 = vld [vmem:[%s1 + $0x7b0] sm:$0xff]
    %v293 = vld [vmem:[%s1 + $0x7b8] sm:$0xff]
    %v294 = vld [vmem:[%s1 + $0x7c0] sm:$0xff]
    %v295 = vld [vmem:[%s1 + $0x7c8] sm:$0xff]
    %v296 = vld [vmem:[%s1 + $0x7d0] sm:$0xff]
    %v297 = vld [vmem:[%s1 + $0x7d8] sm:$0xff]
    %v298 = vld [vmem:[%s1 + $0x7e0] sm:$0xff]
    %v299 = vld [vmem:[%s1 + $0x7e8] sm:$0xff]
    %v300 = vld [vmem:[%s1 + $0x7f0] sm:$0xff]
    %v301 = vld [vmem:[%s1 + $0x7f8] sm:$0xff]
    %v302 = vld [vmem:[%s1 + $0x800] sm:$0xff]
    %v303 = vld [vmem:[%s1 + $0x808] sm:$0xff]
    %v304 = vld [vmem:[%s1 + $0x810] sm:$0xff]
    %v305 = vld [vmem:[%s1 + $0x818] sm:$0xff]
    %v306 = vld [vmem:[%s1 + $0x820] sm:$0xff]
    %v307 = vld [vmem:[%s1 + $0x828] sm:$0xff]
    %v308 = vld [vmem:[%s1 + $0x830] sm:$0xff]
    %v309 = vld [vmem:[%s1 + $0x838] sm:$0xff]
    %v310 = vld [vmem:[%s1 + $0x840] sm:$0xff]
    %v311 = vld [vmem:[%s1 + $0x848] sm:$0xff]
    %v312 = vld [vmem:[%s1 + $0x850] sm:$0xff]
    %v313 = vld [vmem:[%s1 + $0x858] sm:$0xff]
    %v314 = vld [vmem:[%s1 + $0x860] sm:$0xff]
    %v315 = vld [vmem:[%s1 + $0x868] sm:$0xff]
    %v316 = vld [vmem:[%s1 + $0x870] sm:$0xff]
    %v317 = vld [vmem:[%s1 + $0x878] sm:$0xff]
    %v318 = vld [vmem:[%s1 + $0x880] sm:$0xff]
    %v319 = vld [vmem:[%s1 + $0x888] sm:$0xff]
    %v320 = vld [vmem:[%s1 + $0x890] sm:$0xff]
    %v321 = vld [vmem:[%s1 + $0x898] sm:$0xff]
    %v322 = vld [vmem:[%s1 + $0x8a0] sm:$0xff]
    %v323 = vld [vmem:[%s1 + $0x8a8] sm:$0xff]
    %v324 = vld [vmem:[%s1 + $0x8b0] sm:$0xff]
    %v325 = vld [vmem:[%s1 + $0x8b8] sm:$0xff]
    %v326 = vld [vmem:[%s1 + $0x8c0] sm:$0xff]
    %v327 = vld [vmem:[%s1 + $0x8c8] sm:$0xff]
    %v328 = vld [vmem:[%s1 + $0x8d0] sm:$0xff]
    %v329 = vld [vmem:[%s1 + $0x8d8] sm:$0xff]
    %v330 = vld [vmem:[%s1 + $0x8e0] sm:$0xff]
    %v331 = vld [vmem:[%s1 + $0x8e8] sm:$0xff]
    %v332 = vld [vmem:[%s1 + $0x8f0] sm:$0xff]
    %v333 = vld [vmem:[%s1 + $0x8f8] sm:$0xff]
    %v334 = vld [vmem:[%s1 + $0x900] sm:$0xff]
    %v335 = vld [vmem:[%s1 + $0x908] sm:$0xff]
    %v336 = vld [vmem:[%s1 + $0x910] sm:$0xff]
    %v337 = vld [vmem:[%s1 + $0x918] sm:$0xff]
    %v338 = vld [vmem:[%s1 + $0x920] sm:$0xff]
    %v339 = vld [vmem:[%s1 + $0x928] sm:$0xff]
    %v340 = vld [vmem:[%s1 + $0x930] sm:$0xff]
    %v341 = vld [vmem:[%s1 + $0x938] sm:$0xff]
    %v342 = vld [vmem:[%s1 + $0x940] sm:$0xff]
    %v343 = vld [vmem:[%s1 + $0x948] sm:$0xff]
    %v344 = vld [vmem:[%s1 + $0x950] sm:$0xff]
    %v345 = vld [vmem:[%s1 + $0x958] sm:$0xff]
    %v346 = vld [vmem:[%s2] sm:$0xf]
    %v348 = vlaneseq
    %v349 = vshrl.u32 %v348, 7
    %v350 = vsub.s32 0, %v349
    %v351 = vrot.slane %v346, %v350
    %v352 = vlaneseq
    %v353 = vshrl.u32 %v352, 7
    %v354 = vsub.s32 1, %v353
    %v355 = vrot.slane %v346, %v354
    %v356 = vlaneseq
    %v357 = vshrl.u32 %v356, 7
    %v358 = vsub.s32 2, %v357
    %v359 = vrot.slane %v346, %v358
    %v360 = vlaneseq
    %v361 = vshrl.u32 %v360, 7
    %v362 = vsub.s32 3, %v361
    %v363 = vrot.slane %v346, %v362
    %v373 = vunpack.c.l.b16 %v41
    %v374 = vunpack.c.h.b16 %v41
    %v375 = vunpack.c.l.b16 %v42
    %v376 = vunpack.c.h.b16 %v42
    %v377 = vunpack.c.l.b16 %v43
    %v378 = vunpack.c.h.b16 %v43
    %v379 = vunpack.c.l.b16 %v44
    %v380 = vunpack.c.h.b16 %v44
    %v381 = vunpack.c.l.b16 %v45
    %v382 = vunpack.c.h.b16 %v45
    %v383 = vpack.c.b16 %v373, %v373
    %v384 = vpack.c.b16 %v374, %v374
    %v385 = vpack.c.b16 %v375, %v375
    %v386 = vpack.c.b16 %v376, %v376
    %v387 = vpack.c.b16 %v377, %v377
    %v388 = vpack.c.b16 %v378, %v378
    %v389 = vpack.c.b16 %v379, %v379
    %v390 = vpack.c.b16 %v380, %v380
    %v391 = vpack.c.b16 %v381, %v381
    %v392 = vpack.c.b16 %v382, %v382
    %v702 = vunpack.c.l.b16 %v46
    %v703 = vunpack.c.h.b16 %v46
    %v704 = vunpack.c.l.b16 %v47
    %v705 = vunpack.c.h.b16 %v47
    %v706 = vunpack.c.l.b16 %v48
    %v707 = vunpack.c.h.b16 %v48
    %v708 = vunpack.c.l.b16 %v49
    %v709 = vunpack.c.h.b16 %v49
    %v710 = vunpack.c.l.b16 %v50
    %v711 = vunpack.c.h.b16 %v50
    %v712 = vunpack.c.l.b16 %v51
    %v713 = vunpack.c.h.b16 %v51
    %v714 = vunpack.c.l.b16 %v52
    %v715 = vunpack.c.h.b16 %v52
    %v716 = vunpack.c.l.b16 %v53
    %v717 = vunpack.c.h.b16 %v53
    %v718 = vunpack.c.l.b16 %v54
    %v719 = vunpack.c.h.b16 %v54
    %v720 = vunpack.c.l.b16 %v55
    %v721 = vunpack.c.h.b16 %v55
    %v722 = vunpack.c.l.b16 %v56
    %v723 = vunpack.c.h.b16 %v56
    %v724 = vunpack.c.l.b16 %v57
    %v725 = vunpack.c.h.b16 %v57
    %v726 = vunpack.c.l.b16 %v58
    %v727 = vunpack.c.h.b16 %v58
    %v728 = vunpack.c.l.b16 %v59
    %v729 = vunpack.c.h.b16 %v59
    %v730 = vunpack.c.l.b16 %v60
    %v731 = vunpack.c.h.b16 %v60
    %v732 = vunpack.c.l.b16 %v61
    %v733 = vunpack.c.h.b16 %v61
    %v734 = vunpack.c.l.b16 %v62
    %v735 = vunpack.c.h.b16 %v62
    %v736 = vunpack.c.l.b16 %v63
    %v737 = vunpack.c.h.b16 %v63
    %v738 = vunpack.c.l.b16 %v64
    %v739 = vunpack.c.h.b16 %v64
    %v740 = vunpack.c.l.b16 %v65
    %v741 = vunpack.c.h.b16 %v65
    %v742 = vunpack.c.l.b16 %v66
    %v743 = vunpack.c.h.b16 %v66
    %v744 = vunpack.c.l.b16 %v67
    %v745 = vunpack.c.h.b16 %v67
    %v746 = vunpack.c.l.b16 %v68
    %v747 = vunpack.c.h.b16 %v68
    %v748 = vunpack.c.l.b16 %v69
    %v749 = vunpack.c.h.b16 %v69
    %v750 = vunpack.c.l.b16 %v70
    %v751 = vunpack.c.h.b16 %v70
    %v752 = vunpack.c.l.b16 %v71
    %v753 = vunpack.c.h.b16 %v71
    %v754 = vunpack.c.l.b16 %v72
    %v755 = vunpack.c.h.b16 %v72
    %v756 = vunpack.c.l.b16 %v73
    %v757 = vunpack.c.h.b16 %v73
    %v758 = vunpack.c.l.b16 %v74
    %v759 = vunpack.c.h.b16 %v74
    %v760 = vunpack.c.l.b16 %v75
    %v761 = vunpack.c.h.b16 %v75
    %v762 = vunpack.c.l.b16 %v76
    %v763 = vunpack.c.h.b16 %v76
    %v764 = vunpack.c.l.b16 %v77
    %v765 = vunpack.c.h.b16 %v77
    %v766 = vunpack.c.l.b16 %v78
    %v767 = vunpack.c.h.b16 %v78
    %v768 = vunpack.c.l.b16 %v79
    %v769 = vunpack.c.h.b16 %v79
    %v770 = vunpack.c.l.b16 %v80
    %v771 = vunpack.c.h.b16 %v80
    %v772 = vunpack.c.l.b16 %v81
    %v773 = vunpack.c.h.b16 %v81
    %v774 = vunpack.c.l.b16 %v82
    %v775 = vunpack.c.h.b16 %v82
    %v776 = vunpack.c.l.b16 %v83
    %v777 = vunpack.c.h.b16 %v83
    %v778 = vunpack.c.l.b16 %v84
    %v779 = vunpack.c.h.b16 %v84
    %v780 = vunpack.c.l.b16 %v85
    %v781 = vunpack.c.h.b16 %v85
    %v782 = vunpack.c.l.b16 %v86
    %v783 = vunpack.c.h.b16 %v86
    %v784 = vunpack.c.l.b16 %v87
    %v785 = vunpack.c.h.b16 %v87
    %v786 = vunpack.c.l.b16 %v88
    %v787 = vunpack.c.h.b16 %v88
    %v788 = vunpack.c.l.b16 %v89
    %v789 = vunpack.c.h.b16 %v89
    %v790 = vunpack.c.l.b16 %v90
    %v791 = vunpack.c.h.b16 %v90
    %v792 = vunpack.c.l.b16 %v91
    %v793 = vunpack.c.h.b16 %v91
    %v794 = vunpack.c.l.b16 %v92
    %v795 = vunpack.c.h.b16 %v92
    %v796 = vunpack.c.l.b16 %v93
    %v797 = vunpack.c.h.b16 %v93
    %v798 = vunpack.c.l.b16 %v94
    %v799 = vunpack.c.h.b16 %v94
    %v800 = vunpack.c.l.b16 %v95
    %v801 = vunpack.c.h.b16 %v95
    %v802 = vunpack.c.l.b16 %v96
    %v803 = vunpack.c.h.b16 %v96
    %v804 = vunpack.c.l.b16 %v97
    %v805 = vunpack.c.h.b16 %v97
    %v806 = vunpack.c.l.b16 %v98
    %v807 = vunpack.c.h.b16 %v98
    %v808 = vunpack.c.l.b16 %v99
    %v809 = vunpack.c.h.b16 %v99
    %v810 = vunpack.c.l.b16 %v100
    %v811 = vunpack.c.h.b16 %v100
    %v812 = vunpack.c.l.b16 %v101
    %v813 = vunpack.c.h.b16 %v101
    %v814 = vunpack.c.l.b16 %v102
    %v815 = vunpack.c.h.b16 %v102
    %v816 = vunpack.c.l.b16 %v103
    %v817 = vunpack.c.h.b16 %v103
    %v818 = vunpack.c.l.b16 %v104
    %v819 = vunpack.c.h.b16 %v104
    %v820 = vunpack.c.l.b16 %v105
    %v821 = vunpack.c.h.b16 %v105
    %v822 = vunpack.c.l.b16 %v106
    %v823 = vunpack.c.h.b16 %v106
    %v824 = vunpack.c.l.b16 %v107
    %v825 = vunpack.c.h.b16 %v107
    %v826 = vunpack.c.l.b16 %v108
    %v827 = vunpack.c.h.b16 %v108
    %v828 = vunpack.c.l.b16 %v109
    %v829 = vunpack.c.h.b16 %v109
    %v830 = vunpack.c.l.b16 %v110
    %v831 = vunpack.c.h.b16 %v110
    %v832 = vunpack.c.l.b16 %v111
    %v833 = vunpack.c.h.b16 %v111
    %v834 = vunpack.c.l.b16 %v112
    %v835 = vunpack.c.h.b16 %v112
    %v836 = vunpack.c.l.b16 %v113
    %v837 = vunpack.c.h.b16 %v113
    %v838 = vunpack.c.l.b16 %v114
    %v839 = vunpack.c.h.b16 %v114
    %v840 = vunpack.c.l.b16 %v115
    %v841 = vunpack.c.h.b16 %v115
    %v842 = vunpack.c.l.b16 %v116
    %v843 = vunpack.c.h.b16 %v116
    %v844 = vunpack.c.l.b16 %v117
    %v845 = vunpack.c.h.b16 %v117
    %v846 = vunpack.c.l.b16 %v118
    %v847 = vunpack.c.h.b16 %v118
    %v848 = vunpack.c.l.b16 %v119
    %v849 = vunpack.c.h.b16 %v119
    %v850 = vunpack.c.l.b16 %v120
    %v851 = vunpack.c.h.b16 %v120
    %v852 = vunpack.c.l.b16 %v121
    %v853 = vunpack.c.h.b16 %v121
    %v854 = vunpack.c.l.b16 %v122
    %v855 = vunpack.c.h.b16 %v122
    %v856 = vunpack.c.l.b16 %v123
    %v857 = vunpack.c.h.b16 %v123
    %v858 = vunpack.c.l.b16 %v124
    %v859 = vunpack.c.h.b16 %v124
    %v860 = vunpack.c.l.b16 %v125
    %v861 = vunpack.c.h.b16 %v125
    %v862 = vunpack.c.l.b16 %v126
    %v863 = vunpack.c.h.b16 %v126
    %v864 = vunpack.c.l.b16 %v127
    %v865 = vunpack.c.h.b16 %v127
    %v866 = vunpack.c.l.b16 %v128
    %v867 = vunpack.c.h.b16 %v128
    %v868 = vunpack.c.l.b16 %v129
    %v869 = vunpack.c.h.b16 %v129
    %v870 = vunpack.c.l.b16 %v130
    %v871 = vunpack.c.h.b16 %v130
    %v872 = vunpack.c.l.b16 %v131
    %v873 = vunpack.c.h.b16 %v131
    %v874 = vunpack.c.l.b16 %v132
    %v875 = vunpack.c.h.b16 %v132
    %v876 = vunpack.c.l.b16 %v133
    %v877 = vunpack.c.h.b16 %v133
    %v878 = vunpack.c.l.b16 %v134
    %v879 = vunpack.c.h.b16 %v134
    %v880 = vunpack.c.l.b16 %v135
    %v881 = vunpack.c.h.b16 %v135
    %v882 = vunpack.c.l.b16 %v136
    %v883 = vunpack.c.h.b16 %v136
    %v884 = vunpack.c.l.b16 %v137
    %v885 = vunpack.c.h.b16 %v137
    %v886 = vunpack.c.l.b16 %v138
    %v887 = vunpack.c.h.b16 %v138
    %v888 = vunpack.c.l.b16 %v139
    %v889 = vunpack.c.h.b16 %v139
    %v890 = vunpack.c.l.b16 %v140
    %v891 = vunpack.c.h.b16 %v140
    %v892 = vunpack.c.l.b16 %v141
    %v893 = vunpack.c.h.b16 %v141
    %v894 = vunpack.c.l.b16 %v142
    %v895 = vunpack.c.h.b16 %v142
    %v896 = vunpack.c.l.b16 %v143
    %v897 = vunpack.c.h.b16 %v143
    %v898 = vunpack.c.l.b16 %v144
    %v899 = vunpack.c.h.b16 %v144
    %v900 = vunpack.c.l.b16 %v145
    %v901 = vunpack.c.h.b16 %v145
    %v902 = vunpack.c.l.b16 %v146
    %v903 = vunpack.c.h.b16 %v146
    %v904 = vunpack.c.l.b16 %v147
    %v905 = vunpack.c.h.b16 %v147
    %v906 = vunpack.c.l.b16 %v148
    %v907 = vunpack.c.h.b16 %v148
    %v908 = vunpack.c.l.b16 %v149
    %v909 = vunpack.c.h.b16 %v149
    %v910 = vunpack.c.l.b16 %v150
    %v911 = vunpack.c.h.b16 %v150
    %v912 = vunpack.c.l.b16 %v151
    %v913 = vunpack.c.h.b16 %v151
    %v914 = vunpack.c.l.b16 %v152
    %v915 = vunpack.c.h.b16 %v152
    %v916 = vunpack.c.l.b16 %v153
    %v917 = vunpack.c.h.b16 %v153
    %v918 = vunpack.c.l.b16 %v154
    %v919 = vunpack.c.h.b16 %v154
    %v920 = vunpack.c.l.b16 %v155
    %v921 = vunpack.c.h.b16 %v155
    %v922 = vunpack.c.l.b16 %v156
    %v923 = vunpack.c.h.b16 %v156
    %v924 = vunpack.c.l.b16 %v157
    %v925 = vunpack.c.h.b16 %v157
    %v926 = vunpack.c.l.b16 %v158
    %v927 = vunpack.c.h.b16 %v158
    %v928 = vunpack.c.l.b16 %v159
    %v929 = vunpack.c.h.b16 %v159
    %v930 = vunpack.c.l.b16 %v160
    %v931 = vunpack.c.h.b16 %v160
    %v932 = vunpack.c.l.b16 %v161
    %v933 = vunpack.c.h.b16 %v161
    %v934 = vunpack.c.l.b16 %v162
    %v935 = vunpack.c.h.b16 %v162
    %v936 = vunpack.c.l.b16 %v163
    %v937 = vunpack.c.h.b16 %v163
    %v938 = vunpack.c.l.b16 %v164
    %v939 = vunpack.c.h.b16 %v164
    %v940 = vunpack.c.l.b16 %v165
    %v941 = vunpack.c.h.b16 %v165
    %v942 = vunpack.c.l.b16 %v166
    %v943 = vunpack.c.h.b16 %v166
    %v944 = vunpack.c.l.b16 %v167
    %v945 = vunpack.c.h.b16 %v167
    %v946 = vunpack.c.l.b16 %v168
    %v947 = vunpack.c.h.b16 %v168
    %v948 = vunpack.c.l.b16 %v169
    %v949 = vunpack.c.h.b16 %v169
    %v950 = vunpack.c.l.b16 %v170
    %v951 = vunpack.c.h.b16 %v170
    %v952 = vunpack.c.l.b16 %v171
    %v953 = vunpack.c.h.b16 %v171
    %v954 = vunpack.c.l.b16 %v172
    %v955 = vunpack.c.h.b16 %v172
    %v956 = vunpack.c.l.b16 %v173
    %v957 = vunpack.c.h.b16 %v173
    %v958 = vunpack.c.l.b16 %v174
    %v959 = vunpack.c.h.b16 %v174
    %v960 = vunpack.c.l.b16 %v175
    %v961 = vunpack.c.h.b16 %v175
    %v962 = vunpack.c.l.b16 %v176
    %v963 = vunpack.c.h.b16 %v176
    %v964 = vunpack.c.l.b16 %v177
    %v965 = vunpack.c.h.b16 %v177
    %v966 = vunpack.c.l.b16 %v178
    %v967 = vunpack.c.h.b16 %v178
    %v968 = vunpack.c.l.b16 %v179
    %v969 = vunpack.c.h.b16 %v179
    %v970 = vunpack.c.l.b16 %v180
    %v971 = vunpack.c.h.b16 %v180
    %v972 = vunpack.c.l.b16 %v181
    %v973 = vunpack.c.h.b16 %v181
    %v974 = vunpack.c.l.b16 %v182
    %v975 = vunpack.c.h.b16 %v182
    %v976 = vunpack.c.l.b16 %v183
    %v977 = vunpack.c.h.b16 %v183
    %v978 = vunpack.c.l.b16 %v184
    %v979 = vunpack.c.h.b16 %v184
    %v980 = vunpack.c.l.b16 %v185
    %v981 = vunpack.c.h.b16 %v185
    %v982 = vunpack.c.l.b16 %v186
    %v983 = vunpack.c.h.b16 %v186
    %v984 = vunpack.c.l.b16 %v187
    %v985 = vunpack.c.h.b16 %v187
    %v986 = vunpack.c.l.b16 %v188
    %v987 = vunpack.c.h.b16 %v188
    %v988 = vunpack.c.l.b16 %v189
    %v989 = vunpack.c.h.b16 %v189
    %v990 = vunpack.c.l.b16 %v190
    %v991 = vunpack.c.h.b16 %v190
    %v992 = vunpack.c.l.b16 %v191
    %v993 = vunpack.c.h.b16 %v191
    %v994 = vunpack.c.l.b16 %v192
    %v995 = vunpack.c.h.b16 %v192
    %v996 = vunpack.c.l.b16 %v193
    %v997 = vunpack.c.h.b16 %v193
    %v998 = vunpack.c.l.b16 %v194
    %v999 = vunpack.c.h.b16 %v194
    %v1000 = vunpack.c.l.b16 %v195
    %v1001 = vunpack.c.h.b16 %v195
    %v1002 = vunpack.c.l.b16 %v196
    %v1003 = vunpack.c.h.b16 %v196
    %v1004 = vunpack.c.l.b16 %v197
    %v1005 = vunpack.c.h.b16 %v197
    %v1006 = vunpack.c.l.b16 %v198
    %v1007 = vunpack.c.h.b16 %v198
    %v1008 = vunpack.c.l.b16 %v199
    %v1009 = vunpack.c.h.b16 %v199
    %v1010 = vunpack.c.l.b16 %v200
    %v1011 = vunpack.c.h.b16 %v200
    %v1012 = vunpack.c.l.b16 %v201
    %v1013 = vunpack.c.h.b16 %v201
    %v1014 = vunpack.c.l.b16 %v202
    %v1015 = vunpack.c.h.b16 %v202
    %v1016 = vunpack.c.l.b16 %v203
    %v1017 = vunpack.c.h.b16 %v203
    %v1018 = vunpack.c.l.b16 %v204
    %v1019 = vunpack.c.h.b16 %v204
    %v1020 = vunpack.c.l.b16 %v205
    %v1021 = vunpack.c.h.b16 %v205
    %v1022 = vunpack.c.l.b16 %v206
    %v1023 = vunpack.c.h.b16 %v206
    %v1024 = vunpack.c.l.b16 %v207
    %v1025 = vunpack.c.h.b16 %v207
    %v1026 = vunpack.c.l.b16 %v208
    %v1027 = vunpack.c.h.b16 %v208
    %v1028 = vunpack.c.l.b16 %v209
    %v1029 = vunpack.c.h.b16 %v209
    %v1030 = vunpack.c.l.b16 %v210
    %v1031 = vunpack.c.h.b16 %v210
    %v1032 = vunpack.c.l.b16 %v211
    %v1033 = vunpack.c.h.b16 %v211
    %v1034 = vunpack.c.l.b16 %v212
    %v1035 = vunpack.c.h.b16 %v212
    %v1036 = vunpack.c.l.b16 %v213
    %v1037 = vunpack.c.h.b16 %v213
    %v1038 = vunpack.c.l.b16 %v214
    %v1039 = vunpack.c.h.b16 %v214
    %v1040 = vunpack.c.l.b16 %v215
    %v1041 = vunpack.c.h.b16 %v215
    %v1042 = vunpack.c.l.b16 %v216
    %v1043 = vunpack.c.h.b16 %v216
    %v1044 = vunpack.c.l.b16 %v217
    %v1045 = vunpack.c.h.b16 %v217
    %v1046 = vunpack.c.l.b16 %v218
    %v1047 = vunpack.c.h.b16 %v218
    %v1048 = vunpack.c.l.b16 %v219
    %v1049 = vunpack.c.h.b16 %v219
    %v1050 = vunpack.c.l.b16 %v220
    %v1051 = vunpack.c.h.b16 %v220
    %v1052 = vunpack.c.l.b16 %v221
    %v1053 = vunpack.c.h.b16 %v221
    %v1054 = vunpack.c.l.b16 %v222
    %v1055 = vunpack.c.h.b16 %v222
    %v1056 = vunpack.c.l.b16 %v223
    %v1057 = vunpack.c.h.b16 %v223
    %v1058 = vunpack.c.l.b16 %v224
    %v1059 = vunpack.c.h.b16 %v224
    %v1060 = vunpack.c.l.b16 %v225
    %v1061 = vunpack.c.h.b16 %v225
    %v1062 = vunpack.c.l.b16 %v226
    %v1063 = vunpack.c.h.b16 %v226
    %v1064 = vunpack.c.l.b16 %v227
    %v1065 = vunpack.c.h.b16 %v227
    %v1066 = vunpack.c.l.b16 %v228
    %v1067 = vunpack.c.h.b16 %v228
    %v1068 = vunpack.c.l.b16 %v229
    %v1069 = vunpack.c.h.b16 %v229
    %v1070 = vunpack.c.l.b16 %v230
    %v1071 = vunpack.c.h.b16 %v230
    %v1072 = vunpack.c.l.b16 %v231
    %v1073 = vunpack.c.h.b16 %v231
    %v1074 = vunpack.c.l.b16 %v232
    %v1075 = vunpack.c.h.b16 %v232
    %v1076 = vunpack.c.l.b16 %v233
    %v1077 = vunpack.c.h.b16 %v233
    %v1078 = vunpack.c.l.b16 %v234
    %v1079 = vunpack.c.h.b16 %v234
    %v1080 = vunpack.c.l.b16 %v235
    %v1081 = vunpack.c.h.b16 %v235
    %v1082 = vunpack.c.l.b16 %v236
    %v1083 = vunpack.c.h.b16 %v236
    %v1084 = vunpack.c.l.b16 %v237
    %v1085 = vunpack.c.h.b16 %v237
    %v1086 = vunpack.c.l.b16 %v238
    %v1087 = vunpack.c.h.b16 %v238
    %v1088 = vunpack.c.l.b16 %v239
    %v1089 = vunpack.c.h.b16 %v239
    %v1090 = vunpack.c.l.b16 %v240
    %v1091 = vunpack.c.h.b16 %v240
    %v1092 = vunpack.c.l.b16 %v241
    %v1093 = vunpack.c.h.b16 %v241
    %v1094 = vunpack.c.l.b16 %v242
    %v1095 = vunpack.c.h.b16 %v242
    %v1096 = vunpack.c.l.b16 %v243
    %v1097 = vunpack.c.h.b16 %v243
    %v1098 = vunpack.c.l.b16 %v244
    %v1099 = vunpack.c.h.b16 %v244
    %v1100 = vunpack.c.l.b16 %v245
    %v1101 = vunpack.c.h.b16 %v245
    %v1102 = vunpack.c.l.b16 %v246
    %v1103 = vunpack.c.h.b16 %v246
    %v1104 = vunpack.c.l.b16 %v247
    %v1105 = vunpack.c.h.b16 %v247
    %v1106 = vunpack.c.l.b16 %v248
    %v1107 = vunpack.c.h.b16 %v248
    %v1108 = vunpack.c.l.b16 %v249
    %v1109 = vunpack.c.h.b16 %v249
    %v1110 = vunpack.c.l.b16 %v250
    %v1111 = vunpack.c.h.b16 %v250
    %v1112 = vunpack.c.l.b16 %v251
    %v1113 = vunpack.c.h.b16 %v251
    %v1114 = vunpack.c.l.b16 %v252
    %v1115 = vunpack.c.h.b16 %v252
    %v1116 = vunpack.c.l.b16 %v253
    %v1117 = vunpack.c.h.b16 %v253
    %v1118 = vunpack.c.l.b16 %v254
    %v1119 = vunpack.c.h.b16 %v254
    %v1120 = vunpack.c.l.b16 %v255
    %v1121 = vunpack.c.h.b16 %v255
    %v1122 = vunpack.c.l.b16 %v256
    %v1123 = vunpack.c.h.b16 %v256
    %v1124 = vunpack.c.l.b16 %v257
    %v1125 = vunpack.c.h.b16 %v257
    %v1126 = vunpack.c.l.b16 %v258
    %v1127 = vunpack.c.h.b16 %v258
    %v1128 = vunpack.c.l.b16 %v259
    %v1129 = vunpack.c.h.b16 %v259
    %v1130 = vunpack.c.l.b16 %v260
    %v1131 = vunpack.c.h.b16 %v260
    %v1132 = vunpack.c.l.b16 %v261
    %v1133 = vunpack.c.h.b16 %v261
    %v1134 = vunpack.c.l.b16 %v262
    %v1135 = vunpack.c.h.b16 %v262
    %v1136 = vunpack.c.l.b16 %v263
    %v1137 = vunpack.c.h.b16 %v263
    %v1138 = vunpack.c.l.b16 %v264
    %v1139 = vunpack.c.h.b16 %v264
    %v1140 = vunpack.c.l.b16 %v265
    %v1141 = vunpack.c.h.b16 %v265
    %v1142 = vunpack.c.l.b16 %v266
    %v1143 = vunpack.c.h.b16 %v266
    %v1144 = vunpack.c.l.b16 %v267
    %v1145 = vunpack.c.h.b16 %v267
    %v1146 = vunpack.c.l.b16 %v268
    %v1147 = vunpack.c.h.b16 %v268
    %v1148 = vunpack.c.l.b16 %v269
    %v1149 = vunpack.c.h.b16 %v269
    %v1150 = vunpack.c.l.b16 %v270
    %v1151 = vunpack.c.h.b16 %v270
    %v1152 = vunpack.c.l.b16 %v271
    %v1153 = vunpack.c.h.b16 %v271
    %v1154 = vunpack.c.l.b16 %v272
    %v1155 = vunpack.c.h.b16 %v272
    %v1156 = vunpack.c.l.b16 %v273
    %v1157 = vunpack.c.h.b16 %v273
    %v1158 = vunpack.c.l.b16 %v274
    %v1159 = vunpack.c.h.b16 %v274
    %v1160 = vunpack.c.l.b16 %v275
    %v1161 = vunpack.c.h.b16 %v275
    %v1162 = vunpack.c.l.b16 %v276
    %v1163 = vunpack.c.h.b16 %v276
    %v1164 = vunpack.c.l.b16 %v277
    %v1165 = vunpack.c.h.b16 %v277
    %v1166 = vunpack.c.l.b16 %v278
    %v1167 = vunpack.c.h.b16 %v278
    %v1168 = vunpack.c.l.b16 %v279
    %v1169 = vunpack.c.h.b16 %v279
    %v1170 = vunpack.c.l.b16 %v280
    %v1171 = vunpack.c.h.b16 %v280
    %v1172 = vunpack.c.l.b16 %v281
    %v1173 = vunpack.c.h.b16 %v281
    %v1174 = vunpack.c.l.b16 %v282
    %v1175 = vunpack.c.h.b16 %v282
    %v1176 = vunpack.c.l.b16 %v283
    %v1177 = vunpack.c.h.b16 %v283
    %v1178 = vunpack.c.l.b16 %v284
    %v1179 = vunpack.c.h.b16 %v284
    %v1180 = vunpack.c.l.b16 %v285
    %v1181 = vunpack.c.h.b16 %v285
    %v1182 = vunpack.c.l.b16 %v286
    %v1183 = vunpack.c.h.b16 %v286
    %v1184 = vunpack.c.l.b16 %v287
    %v1185 = vunpack.c.h.b16 %v287
    %v1186 = vunpack.c.l.b16 %v288
    %v1187 = vunpack.c.h.b16 %v288
    %v1188 = vunpack.c.l.b16 %v289
    %v1189 = vunpack.c.h.b16 %v289
    %v1190 = vunpack.c.l.b16 %v290
    %v1191 = vunpack.c.h.b16 %v290
    %v1192 = vunpack.c.l.b16 %v291
    %v1193 = vunpack.c.h.b16 %v291
    %v1194 = vunpack.c.l.b16 %v292
    %v1195 = vunpack.c.h.b16 %v292
    %v1196 = vunpack.c.l.b16 %v293
    %v1197 = vunpack.c.h.b16 %v293
    %v1198 = vunpack.c.l.b16 %v294
    %v1199 = vunpack.c.h.b16 %v294
    %v1200 = vunpack.c.l.b16 %v295
    %v1201 = vunpack.c.h.b16 %v295
    %v1202 = vunpack.c.l.b16 %v296
    %v1203 = vunpack.c.h.b16 %v296
    %v1204 = vunpack.c.l.b16 %v297
    %v1205 = vunpack.c.h.b16 %v297
    %v1206 = vunpack.c.l.b16 %v298
    %v1207 = vunpack.c.h.b16 %v298
    %v1208 = vunpack.c.l.b16 %v299
    %v1209 = vunpack.c.h.b16 %v299
    %v1210 = vunpack.c.l.b16 %v300
    %v1211 = vunpack.c.h.b16 %v300
    %v1212 = vunpack.c.l.b16 %v301
    %v1213 = vunpack.c.h.b16 %v301
    %v1214 = vunpack.c.l.b16 %v302
    %v1215 = vunpack.c.h.b16 %v302
    %v1216 = vunpack.c.l.b16 %v303
    %v1217 = vunpack.c.h.b16 %v303
    %v1218 = vunpack.c.l.b16 %v304
    %v1219 = vunpack.c.h.b16 %v304
    %v1220 = vunpack.c.l.b16 %v305
    %v1221 = vunpack.c.h.b16 %v305
    %v1222 = vunpack.c.l.b16 %v306
    %v1223 = vunpack.c.h.b16 %v306
    %v1224 = vunpack.c.l.b16 %v307
    %v1225 = vunpack.c.h.b16 %v307
    %v1226 = vunpack.c.l.b16 %v308
    %v1227 = vunpack.c.h.b16 %v308
    %v1228 = vunpack.c.l.b16 %v309
    %v1229 = vunpack.c.h.b16 %v309
    %v1230 = vunpack.c.l.b16 %v310
    %v1231 = vunpack.c.h.b16 %v310
    %v1232 = vunpack.c.l.b16 %v311
    %v1233 = vunpack.c.h.b16 %v311
    %v1234 = vunpack.c.l.b16 %v312
    %v1235 = vunpack.c.h.b16 %v312
    %v1236 = vunpack.c.l.b16 %v313
    %v1237 = vunpack.c.h.b16 %v313
    %v1238 = vunpack.c.l.b16 %v314
    %v1239 = vunpack.c.h.b16 %v314
    %v1240 = vunpack.c.l.b16 %v315
    %v1241 = vunpack.c.h.b16 %v315
    %v1242 = vunpack.c.l.b16 %v316
    %v1243 = vunpack.c.h.b16 %v316
    %v1244 = vunpack.c.l.b16 %v317
    %v1245 = vunpack.c.h.b16 %v317
    %v1246 = vunpack.c.l.b16 %v318
    %v1247 = vunpack.c.h.b16 %v318
    %v1248 = vunpack.c.l.b16 %v319
    %v1249 = vunpack.c.h.b16 %v319
    %v1250 = vunpack.c.l.b16 %v320
    %v1251 = vunpack.c.h.b16 %v320
    %v1252 = vunpack.c.l.b16 %v321
    %v1253 = vunpack.c.h.b16 %v321
    %v1254 = vunpack.c.l.b16 %v322
    %v1255 = vunpack.c.h.b16 %v322
    %v1256 = vunpack.c.l.b16 %v323
    %v1257 = vunpack.c.h.b16 %v323
    %v1258 = vunpack.c.l.b16 %v324
    %v1259 = vunpack.c.h.b16 %v324
    %v1260 = vunpack.c.l.b16 %v325
    %v1261 = vunpack.c.h.b16 %v325
    %v1262 = vunpack.c.l.b16 %v326
    %v1263 = vunpack.c.h.b16 %v326
    %v1264 = vunpack.c.l.b16 %v327
    %v1265 = vunpack.c.h.b16 %v327
    %v1266 = vunpack.c.l.b16 %v328
    %v1267 = vunpack.c.h.b16 %v328
    %v1268 = vunpack.c.l.b16 %v329
    %v1269 = vunpack.c.h.b16 %v329
    %v1270 = vunpack.c.l.b16 %v330
    %v1271 = vunpack.c.h.b16 %v330
    %v1272 = vunpack.c.l.b16 %v331
    %v1273 = vunpack.c.h.b16 %v331
    %v1274 = vunpack.c.l.b16 %v332
    %v1275 = vunpack.c.h.b16 %v332
    %v1276 = vunpack.c.l.b16 %v333
    %v1277 = vunpack.c.h.b16 %v333
    %v1278 = vunpack.c.l.b16 %v334
    %v1279 = vunpack.c.h.b16 %v334
    %v1280 = vunpack.c.l.b16 %v335
    %v1281 = vunpack.c.h.b16 %v335
    %v1282 = vunpack.c.l.b16 %v336
    %v1283 = vunpack.c.h.b16 %v336
    %v1284 = vunpack.c.l.b16 %v337
    %v1285 = vunpack.c.h.b16 %v337
    %v1286 = vunpack.c.l.b16 %v338
    %v1287 = vunpack.c.h.b16 %v338
    %v1288 = vunpack.c.l.b16 %v339
    %v1289 = vunpack.c.h.b16 %v339
    %v1290 = vunpack.c.l.b16 %v340
    %v1291 = vunpack.c.h.b16 %v340
    %v1292 = vunpack.c.l.b16 %v341
    %v1293 = vunpack.c.h.b16 %v341
    %v1294 = vunpack.c.l.b16 %v342
    %v1295 = vunpack.c.h.b16 %v342
    %v1296 = vunpack.c.l.b16 %v343
    %v1297 = vunpack.c.h.b16 %v343
    %v1298 = vunpack.c.l.b16 %v344
    %v1299 = vunpack.c.h.b16 %v344
    %v1300 = vunpack.c.l.b16 %v345
    %v1301 = vunpack.c.h.b16 %v345
    %v1302 = vpack.c.b16 %v706, %v702
    %v1303 = vpack.c.b16 %v707, %v703
    %v1304 = vpack.c.b16 %v708, %v704
    %v1305 = vpack.c.b16 %v709, %v705
    %v1306 = vpack.c.b16 %v714, %v710
    %v1307 = vpack.c.b16 %v715, %v711
    %v1308 = vpack.c.b16 %v716, %v712
    %v1309 = vpack.c.b16 %v717, %v713
    %v1310 = vpack.c.b16 %v722, %v718
    %v1311 = vpack.c.b16 %v723, %v719
    %v1312 = vpack.c.b16 %v724, %v720
    %v1313 = vpack.c.b16 %v725, %v721
    %v1314 = vpack.c.b16 %v730, %v726
    %v1315 = vpack.c.b16 %v731, %v727
    %v1316 = vpack.c.b16 %v732, %v728
    %v1317 = vpack.c.b16 %v733, %v729
    %v1318 = vpack.c.b16 %v738, %v734
    %v1319 = vpack.c.b16 %v739, %v735
    %v1320 = vpack.c.b16 %v740, %v736
    %v1321 = vpack.c.b16 %v741, %v737
    %v1322 = vpack.c.b16 %v746, %v742
    %v1323 = vpack.c.b16 %v747, %v743
    %v1324 = vpack.c.b16 %v748, %v744
    %v1325 = vpack.c.b16 %v749, %v745
    %v1326 = vpack.c.b16 %v754, %v750
    %v1327 = vpack.c.b16 %v755, %v751
    %v1328 = vpack.c.b16 %v756, %v752
    %v1329 = vpack.c.b16 %v757, %v753
    %v1330 = vpack.c.b16 %v762, %v758
    %v1331 = vpack.c.b16 %v763, %v759
    %v1332 = vpack.c.b16 %v764, %v760
    %v1333 = vpack.c.b16 %v765, %v761
    %v1334 = vpack.c.b16 %v770, %v766
    %v1335 = vpack.c.b16 %v771, %v767
    %v1336 = vpack.c.b16 %v772, %v768
    %v1337 = vpack.c.b16 %v773, %v769
    %v1338 = vpack.c.b16 %v778, %v774
    %v1339 = vpack.c.b16 %v779, %v775
    %v1340 = vpack.c.b16 %v780, %v776
    %v1341 = vpack.c.b16 %v781, %v777
    %v1342 = vpack.c.b16 %v786, %v782
    %v1343 = vpack.c.b16 %v787, %v783
    %v1344 = vpack.c.b16 %v788, %v784
    %v1345 = vpack.c.b16 %v789, %v785
    %v1346 = vpack.c.b16 %v794, %v790
    %v1347 = vpack.c.b16 %v795, %v791
    %v1348 = vpack.c.b16 %v796, %v792
    %v1349 = vpack.c.b16 %v797, %v793
    %v1350 = vpack.c.b16 %v802, %v798
    %v1351 = vpack.c.b16 %v803, %v799
    %v1352 = vpack.c.b16 %v804, %v800
    %v1353 = vpack.c.b16 %v805, %v801
    %v1354 = vpack.c.b16 %v810, %v806
    %v1355 = vpack.c.b16 %v811, %v807
    %v1356 = vpack.c.b16 %v812, %v808
    %v1357 = vpack.c.b16 %v813, %v809
    %v1358 = vpack.c.b16 %v818, %v814
    %v1359 = vpack.c.b16 %v819, %v815
    %v1360 = vpack.c.b16 %v820, %v816
    %v1361 = vpack.c.b16 %v821, %v817
    %v1362 = vpack.c.b16 %v826, %v822
    %v1363 = vpack.c.b16 %v827, %v823
    %v1364 = vpack.c.b16 %v828, %v824
    %v1365 = vpack.c.b16 %v829, %v825
    %v1366 = vpack.c.b16 %v834, %v830
    %v1367 = vpack.c.b16 %v835, %v831
    %v1368 = vpack.c.b16 %v836, %v832
    %v1369 = vpack.c.b16 %v837, %v833
    %v1370 = vpack.c.b16 %v842, %v838
    %v1371 = vpack.c.b16 %v843, %v839
    %v1372 = vpack.c.b16 %v844, %v840
    %v1373 = vpack.c.b16 %v845, %v841
    %v1374 = vpack.c.b16 %v850, %v846
    %v1375 = vpack.c.b16 %v851, %v847
    %v1376 = vpack.c.b16 %v852, %v848
    %v1377 = vpack.c.b16 %v853, %v849
    %v1378 = vpack.c.b16 %v858, %v854
    %v1379 = vpack.c.b16 %v859, %v855
    %v1380 = vpack.c.b16 %v860, %v856
    %v1381 = vpack.c.b16 %v861, %v857
    %v1382 = vpack.c.b16 %v866, %v862
    %v1383 = vpack.c.b16 %v867, %v863
    %v1384 = vpack.c.b16 %v868, %v864
    %v1385 = vpack.c.b16 %v869, %v865
    %v1386 = vpack.c.b16 %v874, %v870
    %v1387 = vpack.c.b16 %v875, %v871
    %v1388 = vpack.c.b16 %v876, %v872
    %v1389 = vpack.c.b16 %v877, %v873
    %v1390 = vpack.c.b16 %v882, %v878
    %v1391 = vpack.c.b16 %v883, %v879
    %v1392 = vpack.c.b16 %v884, %v880
    %v1393 = vpack.c.b16 %v885, %v881
    %v1394 = vpack.c.b16 %v890, %v886
    %v1395 = vpack.c.b16 %v891, %v887
    %v1396 = vpack.c.b16 %v892, %v888
    %v1397 = vpack.c.b16 %v893, %v889
    %v1398 = vpack.c.b16 %v898, %v894
    %v1399 = vpack.c.b16 %v899, %v895
    %v1400 = vpack.c.b16 %v900, %v896
    %v1401 = vpack.c.b16 %v901, %v897
    %v1402 = vpack.c.b16 %v906, %v902
    %v1403 = vpack.c.b16 %v907, %v903
    %v1404 = vpack.c.b16 %v908, %v904
    %v1405 = vpack.c.b16 %v909, %v905
    %v1406 = vpack.c.b16 %v914, %v910
    %v1407 = vpack.c.b16 %v915, %v911
    %v1408 = vpack.c.b16 %v916, %v912
    %v1409 = vpack.c.b16 %v917, %v913
    %v1410 = vpack.c.b16 %v922, %v918
    %v1411 = vpack.c.b16 %v923, %v919
    %v1412 = vpack.c.b16 %v924, %v920
    %v1413 = vpack.c.b16 %v925, %v921
    %v1414 = vpack.c.b16 %v930, %v926
    %v1415 = vpack.c.b16 %v931, %v927
    %v1416 = vpack.c.b16 %v932, %v928
    %v1417 = vpack.c.b16 %v933, %v929
    %v1418 = vpack.c.b16 %v938, %v934
    %v1419 = vpack.c.b16 %v939, %v935
    %v1420 = vpack.c.b16 %v940, %v936
    %v1421 = vpack.c.b16 %v941, %v937
    %v1422 = vpack.c.b16 %v946, %v942
    %v1423 = vpack.c.b16 %v947, %v943
    %v1424 = vpack.c.b16 %v948, %v944
    %v1425 = vpack.c.b16 %v949, %v945
    %v1426 = vpack.c.b16 %v954, %v950
    %v1427 = vpack.c.b16 %v955, %v951
    %v1428 = vpack.c.b16 %v956, %v952
    %v1429 = vpack.c.b16 %v957, %v953
    %v1430 = vpack.c.b16 %v962, %v958
    %v1431 = vpack.c.b16 %v963, %v959
    %v1432 = vpack.c.b16 %v964, %v960
    %v1433 = vpack.c.b16 %v965, %v961
    %v1434 = vpack.c.b16 %v970, %v966
    %v1435 = vpack.c.b16 %v971, %v967
    %v1436 = vpack.c.b16 %v972, %v968
    %v1437 = vpack.c.b16 %v973, %v969
    %v1438 = vpack.c.b16 %v978, %v974
    %v1439 = vpack.c.b16 %v979, %v975
    %v1440 = vpack.c.b16 %v980, %v976
    %v1441 = vpack.c.b16 %v981, %v977
    %v1442 = vpack.c.b16 %v986, %v982
    %v1443 = vpack.c.b16 %v987, %v983
    %v1444 = vpack.c.b16 %v988, %v984
    %v1445 = vpack.c.b16 %v989, %v985
    %v1446 = vpack.c.b16 %v994, %v990
    %v1447 = vpack.c.b16 %v995, %v991
    %v1448 = vpack.c.b16 %v996, %v992
    %v1449 = vpack.c.b16 %v997, %v993
    %v1450 = vpack.c.b16 %v1002, %v998
    %v1451 = vpack.c.b16 %v1003, %v999
    %v1452 = vpack.c.b16 %v1004, %v1000
    %v1453 = vpack.c.b16 %v1005, %v1001
    %v1454 = vpack.c.b16 %v1010, %v1006
    %v1455 = vpack.c.b16 %v1011, %v1007
    %v1456 = vpack.c.b16 %v1012, %v1008
    %v1457 = vpack.c.b16 %v1013, %v1009
    %v1458 = vpack.c.b16 %v1018, %v1014
    %v1459 = vpack.c.b16 %v1019, %v1015
    %v1460 = vpack.c.b16 %v1020, %v1016
    %v1461 = vpack.c.b16 %v1021, %v1017
    %v1462 = vpack.c.b16 %v1026, %v1022
    %v1463 = vpack.c.b16 %v1027, %v1023
    %v1464 = vpack.c.b16 %v1028, %v1024
    %v1465 = vpack.c.b16 %v1029, %v1025
    %v1466 = vpack.c.b16 %v1034, %v1030
    %v1467 = vpack.c.b16 %v1035, %v1031
    %v1468 = vpack.c.b16 %v1036, %v1032
    %v1469 = vpack.c.b16 %v1037, %v1033
    %v1470 = vpack.c.b16 %v1042, %v1038
    %v1471 = vpack.c.b16 %v1043, %v1039
    %v1472 = vpack.c.b16 %v1044, %v1040
    %v1473 = vpack.c.b16 %v1045, %v1041
    %v1474 = vpack.c.b16 %v1050, %v1046
    %v1475 = vpack.c.b16 %v1051, %v1047
    %v1476 = vpack.c.b16 %v1052, %v1048
    %v1477 = vpack.c.b16 %v1053, %v1049
    %v1478 = vpack.c.b16 %v1058, %v1054
    %v1479 = vpack.c.b16 %v1059, %v1055
    %v1480 = vpack.c.b16 %v1060, %v1056
    %v1481 = vpack.c.b16 %v1061, %v1057
    %v1482 = vpack.c.b16 %v1066, %v1062
    %v1483 = vpack.c.b16 %v1067, %v1063
    %v1484 = vpack.c.b16 %v1068, %v1064
    %v1485 = vpack.c.b16 %v1069, %v1065
    %v1486 = vpack.c.b16 %v1074, %v1070
    %v1487 = vpack.c.b16 %v1075, %v1071
    %v1488 = vpack.c.b16 %v1076, %v1072
    %v1489 = vpack.c.b16 %v1077, %v1073
    %v1490 = vpack.c.b16 %v1082, %v1078
    %v1491 = vpack.c.b16 %v1083, %v1079
    %v1492 = vpack.c.b16 %v1084, %v1080
    %v1493 = vpack.c.b16 %v1085, %v1081
    %v1494 = vpack.c.b16 %v1090, %v1086
    %v1495 = vpack.c.b16 %v1091, %v1087
    %v1496 = vpack.c.b16 %v1092, %v1088
    %v1497 = vpack.c.b16 %v1093, %v1089
    %v1498 = vpack.c.b16 %v1098, %v1094
    %v1499 = vpack.c.b16 %v1099, %v1095
    %v1500 = vpack.c.b16 %v1100, %v1096
    %v1501 = vpack.c.b16 %v1101, %v1097
    %v1502 = vpack.c.b16 %v1106, %v1102
    %v1503 = vpack.c.b16 %v1107, %v1103
    %v1504 = vpack.c.b16 %v1108, %v1104
    %v1505 = vpack.c.b16 %v1109, %v1105
    %v1506 = vpack.c.b16 %v1114, %v1110
    %v1507 = vpack.c.b16 %v1115, %v1111
    %v1508 = vpack.c.b16 %v1116, %v1112
    %v1509 = vpack.c.b16 %v1117, %v1113
    %v1510 = vpack.c.b16 %v1122, %v1118
    %v1511 = vpack.c.b16 %v1123, %v1119
    %v1512 = vpack.c.b16 %v1124, %v1120
    %v1513 = vpack.c.b16 %v1125, %v1121
    %v1514 = vpack.c.b16 %v1130, %v1126
    %v1515 = vpack.c.b16 %v1131, %v1127
    %v1516 = vpack.c.b16 %v1132, %v1128
    %v1517 = vpack.c.b16 %v1133, %v1129
    %v1518 = vpack.c.b16 %v1138, %v1134
    %v1519 = vpack.c.b16 %v1139, %v1135
    %v1520 = vpack.c.b16 %v1140, %v1136
    %v1521 = vpack.c.b16 %v1141, %v1137
    %v1522 = vpack.c.b16 %v1146, %v1142
    %v1523 = vpack.c.b16 %v1147, %v1143
    %v1524 = vpack.c.b16 %v1148, %v1144
    %v1525 = vpack.c.b16 %v1149, %v1145
    %v1526 = vpack.c.b16 %v1154, %v1150
    %v1527 = vpack.c.b16 %v1155, %v1151
    %v1528 = vpack.c.b16 %v1156, %v1152
    %v1529 = vpack.c.b16 %v1157, %v1153
    %v1530 = vpack.c.b16 %v1162, %v1158
    %v1531 = vpack.c.b16 %v1163, %v1159
    %v1532 = vpack.c.b16 %v1164, %v1160
    %v1533 = vpack.c.b16 %v1165, %v1161
    %v1534 = vpack.c.b16 %v1170, %v1166
    %v1535 = vpack.c.b16 %v1171, %v1167
    %v1536 = vpack.c.b16 %v1172, %v1168
    %v1537 = vpack.c.b16 %v1173, %v1169
    %v1538 = vpack.c.b16 %v1178, %v1174
    %v1539 = vpack.c.b16 %v1179, %v1175
    %v1540 = vpack.c.b16 %v1180, %v1176
    %v1541 = vpack.c.b16 %v1181, %v1177
    %v1542 = vpack.c.b16 %v1186, %v1182
    %v1543 = vpack.c.b16 %v1187, %v1183
    %v1544 = vpack.c.b16 %v1188, %v1184
    %v1545 = vpack.c.b16 %v1189, %v1185
    %v1546 = vpack.c.b16 %v1194, %v1190
    %v1547 = vpack.c.b16 %v1195, %v1191
    %v1548 = vpack.c.b16 %v1196, %v1192
    %v1549 = vpack.c.b16 %v1197, %v1193
    %v1550 = vpack.c.b16 %v1202, %v1198
    %v1551 = vpack.c.b16 %v1203, %v1199
    %v1552 = vpack.c.b16 %v1204, %v1200
    %v1553 = vpack.c.b16 %v1205, %v1201
    %v1554 = vpack.c.b16 %v1210, %v1206
    %v1555 = vpack.c.b16 %v1211, %v1207
    %v1556 = vpack.c.b16 %v1212, %v1208
    %v1557 = vpack.c.b16 %v1213, %v1209
    %v1558 = vpack.c.b16 %v1218, %v1214
    %v1559 = vpack.c.b16 %v1219, %v1215
    %v1560 = vpack.c.b16 %v1220, %v1216
    %v1561 = vpack.c.b16 %v1221, %v1217
    %v1562 = vpack.c.b16 %v1226, %v1222
    %v1563 = vpack.c.b16 %v1227, %v1223
    %v1564 = vpack.c.b16 %v1228, %v1224
    %v1565 = vpack.c.b16 %v1229, %v1225
    %v1566 = vpack.c.b16 %v1234, %v1230
    %v1567 = vpack.c.b16 %v1235, %v1231
    %v1568 = vpack.c.b16 %v1236, %v1232
    %v1569 = vpack.c.b16 %v1237, %v1233
    %v1570 = vpack.c.b16 %v1242, %v1238
    %v1571 = vpack.c.b16 %v1243, %v1239
    %v1572 = vpack.c.b16 %v1244, %v1240
    %v1573 = vpack.c.b16 %v1245, %v1241
    %v1574 = vpack.c.b16 %v1250, %v1246
    %v1575 = vpack.c.b16 %v1251, %v1247
    %v1576 = vpack.c.b16 %v1252, %v1248
    %v1577 = vpack.c.b16 %v1253, %v1249
    %v1578 = vpack.c.b16 %v1258, %v1254
    %v1579 = vpack.c.b16 %v1259, %v1255
    %v1580 = vpack.c.b16 %v1260, %v1256
    %v1581 = vpack.c.b16 %v1261, %v1257
    %v1582 = vpack.c.b16 %v1266, %v1262
    %v1583 = vpack.c.b16 %v1267, %v1263
    %v1584 = vpack.c.b16 %v1268, %v1264
    %v1585 = vpack.c.b16 %v1269, %v1265
    %v1586 = vpack.c.b16 %v1274, %v1270
    %v1587 = vpack.c.b16 %v1275, %v1271
    %v1588 = vpack.c.b16 %v1276, %v1272
    %v1589 = vpack.c.b16 %v1277, %v1273
    %v1590 = vpack.c.b16 %v1282, %v1278
    %v1591 = vpack.c.b16 %v1283, %v1279
    %v1592 = vpack.c.b16 %v1284, %v1280
    %v1593 = vpack.c.b16 %v1285, %v1281
    %v1594 = vpack.c.b16 %v1290, %v1286
    %v1595 = vpack.c.b16 %v1291, %v1287
    %v1596 = vpack.c.b16 %v1292, %v1288
    %v1597 = vpack.c.b16 %v1293, %v1289
    %v1598 = vpack.c.b16 %v1298, %v1294
    %v1599 = vpack.c.b16 %v1299, %v1295
    %v1600 = vpack.c.b16 %v1300, %v1296
    %v1601 = vpack.c.b16 %v1301, %v1297
    %vm1902 = vcmask 392192
    %v1904 = vsel %vm1902, %v392, 0
    %1906 = vmatprep.subr.bf16.mxu0 %v1331
    %1907 = vmatpush1.bf16.msra.mxu0 %v1330
    %1908 = vmatprep.subr.bf16.mxu0 %v1327
    %1909 = vmatpush1.bf16.msra.mxu0 %v1326
    %1910 = vmatprep.subr.bf16.mxu0 %v1323
    %1911 = vmatpush1.bf16.msra.mxu0 %v1322
    %1912 = vmatprep.subr.bf16.mxu0 %v1319
    %1913 = vmatpush1.bf16.msra.mxu0 %v1318
    %1914 = vmatprep.subr.bf16.mxu0 %v1315
    %1915 = vmatpush1.bf16.msra.mxu0 %v1314
    %1916 = vmatprep.subr.bf16.mxu0 %v1311
    %1917 = vmatpush1.bf16.msra.mxu0 %v1310
    %1918 = vmatprep.subr.bf16.mxu0 %v1307
    %1919 = vmatpush1.bf16.msra.mxu0 %v1306
    %1920 = vmatprep.subr.bf16.mxu0 %v1303
    %1921 = vmatpush1.bf16.msra.mxu0 %v1302
    %1922 = vmatprep.subr.bf16.mxu0 %v1363
    %1923 = vmatpush2.bf16.msra.mxu0 %v1362
    %1924 = vmatprep.subr.bf16.mxu0 %v1359
    %1925 = vmatpush2.bf16.msra.mxu0 %v1358
    %1926 = vmatprep.subr.bf16.mxu0 %v1355
    %1927 = vmatpush2.bf16.msra.mxu0 %v1354
    %1928 = vmatprep.subr.bf16.mxu0 %v1351
    %1929 = vmatpush2.bf16.msra.mxu0 %v1350
    %1930 = vmatprep.subr.bf16.mxu0 %v1347
    %1931 = vmatpush2.bf16.msra.mxu0 %v1346
    %1932 = vmatprep.subr.bf16.mxu0 %v1343
    %1933 = vmatpush2.bf16.msra.mxu0 %v1342
    %1934 = vmatprep.subr.bf16.mxu0 %v1339
    %1935 = vmatpush2.bf16.msra.mxu0 %v1338
    %1936 = vmatprep.subr.bf16.mxu0 %v1335
    %1937 = vmatpush2.bf16.msra.mxu0 %v1334
    %1938 = vmatprep.mubr.bf16.mxu0 %v384
    %1939 = vmatmul.mubr.bf16.gmra.mxu0 %v383
    %v1940 = vpop.f32.mrf.mxu0
    %v1941 = vadd.f32 %v351, %v1940
    %v1942 = vpop.f32.mrf.mxu0
    %v1943 = vadd.f32 %v355, %v1942
    %v1944 = vpop.f32.mrf.mxu0
    %v1945 = vpop.f32.mrf.mxu0
    %1946 = vdwg.mxu0
    %1947 = vmatprep.subr.bf16.mxu0 %v1395
    %1948 = vmatpush1.bf16.msra.mxu0 %v1394
    %1949 = vmatprep.subr.bf16.mxu0 %v1391
    %1950 = vmatpush1.bf16.msra.mxu0 %v1390
    %1951 = vmatprep.subr.bf16.mxu0 %v1387
    %1952 = vmatpush1.bf16.msra.mxu0 %v1386
    %1953 = vmatprep.subr.bf16.mxu0 %v1383
    %1954 = vmatpush1.bf16.msra.mxu0 %v1382
    %1955 = vmatprep.subr.bf16.mxu0 %v1379
    %1956 = vmatpush1.bf16.msra.mxu0 %v1378
    %1957 = vmatprep.subr.bf16.mxu0 %v1375
    %1958 = vmatpush1.bf16.msra.mxu0 %v1374
    %1959 = vmatprep.subr.bf16.mxu0 %v1371
    %1960 = vmatpush1.bf16.msra.mxu0 %v1370
    %1961 = vmatprep.subr.bf16.mxu0 %v1367
    %1962 = vmatpush1.bf16.msra.mxu0 %v1366
    %1963 = vmatprep.subr.bf16.mxu0 %v1427
    %1964 = vmatpush2.bf16.msra.mxu0 %v1426
    %1965 = vmatprep.subr.bf16.mxu0 %v1423
    %1966 = vmatpush2.bf16.msra.mxu0 %v1422
    %1967 = vmatprep.subr.bf16.mxu0 %v1419
    %1968 = vmatpush2.bf16.msra.mxu0 %v1418
    %1969 = vmatprep.subr.bf16.mxu0 %v1415
    %1970 = vmatpush2.bf16.msra.mxu0 %v1414
    %1971 = vmatprep.subr.bf16.mxu0 %v1411
    %1972 = vmatpush2.bf16.msra.mxu0 %v1410
    %1973 = vmatprep.subr.bf16.mxu0 %v1407
    %1974 = vmatpush2.bf16.msra.mxu0 %v1406
    %1975 = vmatprep.subr.bf16.mxu0 %v1403
    %1976 = vmatpush2.bf16.msra.mxu0 %v1402
    %1977 = vmatprep.subr.bf16.mxu0 %v1399
    %1978 = vmatpush2.bf16.msra.mxu0 %v1398
    %1979 = vmatprep.mubr.bf16.mxu0 %v386
    %1980 = vmatmul.mubr.bf16.gmra.mxu0 %v385
    %v1981 = vpop.f32.mrf.mxu0
    %v1982 = vadd.f32 %v1941, %v1981
    %v1983 = vpop.f32.mrf.mxu0
    %v1984 = vadd.f32 %v1943, %v1983
    %v1985 = vpop.f32.mrf.mxu0
    %v1986 = vpop.f32.mrf.mxu0
    %1987 = vdwg.mxu0
    %1988 = vmatprep.subr.bf16.mxu0 %v1459
    %1989 = vmatpush1.bf16.msra.mxu0 %v1458
    %1990 = vmatprep.subr.bf16.mxu0 %v1455
    %1991 = vmatpush1.bf16.msra.mxu0 %v1454
    %1992 = vmatprep.subr.bf16.mxu0 %v1451
    %1993 = vmatpush1.bf16.msra.mxu0 %v1450
    %1994 = vmatprep.subr.bf16.mxu0 %v1447
    %1995 = vmatpush1.bf16.msra.mxu0 %v1446
    %1996 = vmatprep.subr.bf16.mxu0 %v1443
    %1997 = vmatpush1.bf16.msra.mxu0 %v1442
    %1998 = vmatprep.subr.bf16.mxu0 %v1439
    %1999 = vmatpush1.bf16.msra.mxu0 %v1438
    %2000 = vmatprep.subr.bf16.mxu0 %v1435
    %2001 = vmatpush1.bf16.msra.mxu0 %v1434
    %2002 = vmatprep.subr.bf16.mxu0 %v1431
    %2003 = vmatpush1.bf16.msra.mxu0 %v1430
    %2004 = vmatprep.subr.bf16.mxu0 %v1491
    %2005 = vmatpush2.bf16.msra.mxu0 %v1490
    %2006 = vmatprep.subr.bf16.mxu0 %v1487
    %2007 = vmatpush2.bf16.msra.mxu0 %v1486
    %2008 = vmatprep.subr.bf16.mxu0 %v1483
    %2009 = vmatpush2.bf16.msra.mxu0 %v1482
    %2010 = vmatprep.subr.bf16.mxu0 %v1479
    %2011 = vmatpush2.bf16.msra.mxu0 %v1478
    %2012 = vmatprep.subr.bf16.mxu0 %v1475
    %2013 = vmatpush2.bf16.msra.mxu0 %v1474
    %2014 = vmatprep.subr.bf16.mxu0 %v1471
    %2015 = vmatpush2.bf16.msra.mxu0 %v1470
    %2016 = vmatprep.subr.bf16.mxu0 %v1467
    %2017 = vmatpush2.bf16.msra.mxu0 %v1466
    %2018 = vmatprep.subr.bf16.mxu0 %v1463
    %2019 = vmatpush2.bf16.msra.mxu0 %v1462
    %2020 = vmatprep.mubr.bf16.mxu0 %v388
    %2021 = vmatmul.mubr.bf16.gmra.mxu0 %v387
    %v2022 = vpop.f32.mrf.mxu0
    %v2023 = vadd.f32 %v1982, %v2022
    %v2024 = vpop.f32.mrf.mxu0
    %v2025 = vadd.f32 %v1984, %v2024
    %v2026 = vpop.f32.mrf.mxu0
    %v2027 = vpop.f32.mrf.mxu0
    %2028 = vdwg.mxu0
    %2029 = vmatprep.subr.bf16.mxu0 %v1523
    %2030 = vmatpush1.bf16.msra.mxu0 %v1522
    %2031 = vmatprep.subr.bf16.mxu0 %v1519
    %2032 = vmatpush1.bf16.msra.mxu0 %v1518
    %2033 = vmatprep.subr.bf16.mxu0 %v1515
    %2034 = vmatpush1.bf16.msra.mxu0 %v1514
    %2035 = vmatprep.subr.bf16.mxu0 %v1511
    %2036 = vmatpush1.bf16.msra.mxu0 %v1510
    %2037 = vmatprep.subr.bf16.mxu0 %v1507
    %2038 = vmatpush1.bf16.msra.mxu0 %v1506
    %2039 = vmatprep.subr.bf16.mxu0 %v1503
    %2040 = vmatpush1.bf16.msra.mxu0 %v1502
    %2041 = vmatprep.subr.bf16.mxu0 %v1499
    %2042 = vmatpush1.bf16.msra.mxu0 %v1498
    %2043 = vmatprep.subr.bf16.mxu0 %v1495
    %2044 = vmatpush1.bf16.msra.mxu0 %v1494
    %2045 = vmatprep.subr.bf16.mxu0 %v1555
    %2046 = vmatpush2.bf16.msra.mxu0 %v1554
    %2047 = vmatprep.subr.bf16.mxu0 %v1551
    %2048 = vmatpush2.bf16.msra.mxu0 %v1550
    %2049 = vmatprep.subr.bf16.mxu0 %v1547
    %2050 = vmatpush2.bf16.msra.mxu0 %v1546
    %2051 = vmatprep.subr.bf16.mxu0 %v1543
    %2052 = vmatpush2.bf16.msra.mxu0 %v1542
    %2053 = vmatprep.subr.bf16.mxu0 %v1539
    %2054 = vmatpush2.bf16.msra.mxu0 %v1538
    %2055 = vmatprep.subr.bf16.mxu0 %v1535
    %2056 = vmatpush2.bf16.msra.mxu0 %v1534
    %2057 = vmatprep.subr.bf16.mxu0 %v1531
    %2058 = vmatpush2.bf16.msra.mxu0 %v1530
    %2059 = vmatprep.subr.bf16.mxu0 %v1527
    %2060 = vmatpush2.bf16.msra.mxu0 %v1526
    %2061 = vmatprep.mubr.bf16.mxu0 %v390
    %2062 = vmatmul.mubr.bf16.gmra.mxu0 %v389
    %v2063 = vpop.f32.mrf.mxu0
    %v2064 = vadd.f32 %v2023, %v2063
    %v2065 = vpop.f32.mrf.mxu0
    %v2066 = vadd.f32 %v2025, %v2065
    %v2067 = vpop.f32.mrf.mxu0
    %v2068 = vpop.f32.mrf.mxu0
    %2069 = vdwg.mxu0
    %2070 = vmatprep.subr.bf16.mxu0 %v1587
    %2071 = vmatpush1.bf16.msra.mxu0 %v1586
    %2072 = vmatprep.subr.bf16.mxu0 %v1583
    %2073 = vmatpush1.bf16.msra.mxu0 %v1582
    %2074 = vmatprep.subr.bf16.mxu0 %v1579
    %2075 = vmatpush1.bf16.msra.mxu0 %v1578
    %2076 = vmatprep.subr.bf16.mxu0 %v1575
    %2077 = vmatpush1.bf16.msra.mxu0 %v1574
    %2078 = vmatprep.subr.bf16.mxu0 %v1571
    %2079 = vmatpush1.bf16.msra.mxu0 %v1570
    %2080 = vmatprep.subr.bf16.mxu0 %v1567
    %2081 = vmatpush1.bf16.msra.mxu0 %v1566
    %2082 = vmatprep.subr.bf16.mxu0 %v1563
    %2083 = vmatpush1.bf16.msra.mxu0 %v1562
    %2084 = vmatprep.subr.bf16.mxu0 %v1559
    %2085 = vmatpush1.bf16.msra.mxu0 %v1558
    %2086 = vmatprep.subr.bf16.mxu0 0
    %2087 = vmatpush2.bf16.msra.mxu0 0
    %2088 = vmatprep.subr.bf16.mxu0 0
    %2089 = vmatpush2.bf16.msra.mxu0 0
    %2090 = vmatprep.subr.bf16.mxu0 0
    %2091 = vmatpush2.bf16.msra.mxu0 0
    %2092 = vmatprep.subr.bf16.mxu0 0
    %2093 = vmatpush2.bf16.msra.mxu0 0
    %2094 = vmatprep.subr.bf16.mxu0 0
    %2095 = vmatpush2.bf16.msra.mxu0 0
    %2096 = vmatprep.subr.bf16.mxu0 %v1599
    %2097 = vmatpush2.bf16.msra.mxu0 %v1598
    %2098 = vmatprep.subr.bf16.mxu0 %v1595
    %2099 = vmatpush2.bf16.msra.mxu0 %v1594
    %2100 = vmatprep.subr.bf16.mxu0 %v1591
    %2101 = vmatpush2.bf16.msra.mxu0 %v1590
    %2102 = vmatprep.mubr.bf16.mxu0 %v1904
    %2103 = vmatmul.mubr.bf16.gmra.mxu0 %v391
    %v2104 = vpop.f32.mrf.mxu0
    %v2105 = vadd.f32 %v2064, %v2104
    %v2106 = vpop.f32.mrf.mxu0
    %v2107 = vadd.f32 %v2066, %v2106
    %v2108 = vpop.f32.mrf.mxu0
    %v2109 = vpop.f32.mrf.mxu0
    %2110 = vdwg.mxu0
    %2111 = vmatprep.subr.bf16.mxu0 %v1333
    %2112 = vmatpush1.bf16.msra.mxu0 %v1332
    %2113 = vmatprep.subr.bf16.mxu0 %v1329
    %2114 = vmatpush1.bf16.msra.mxu0 %v1328
    %2115 = vmatprep.subr.bf16.mxu0 %v1325
    %2116 = vmatpush1.bf16.msra.mxu0 %v1324
    %2117 = vmatprep.subr.bf16.mxu0 %v1321
    %2118 = vmatpush1.bf16.msra.mxu0 %v1320
    %2119 = vmatprep.subr.bf16.mxu0 %v1317
    %2120 = vmatpush1.bf16.msra.mxu0 %v1316
    %2121 = vmatprep.subr.bf16.mxu0 %v1313
    %2122 = vmatpush1.bf16.msra.mxu0 %v1312
    %2123 = vmatprep.subr.bf16.mxu0 %v1309
    %2124 = vmatpush1.bf16.msra.mxu0 %v1308
    %2125 = vmatprep.subr.bf16.mxu0 %v1305
    %2126 = vmatpush1.bf16.msra.mxu0 %v1304
    %2127 = vmatprep.subr.bf16.mxu0 %v1365
    %2128 = vmatpush2.bf16.msra.mxu0 %v1364
    %2129 = vmatprep.subr.bf16.mxu0 %v1361
    %2130 = vmatpush2.bf16.msra.mxu0 %v1360
    %2131 = vmatprep.subr.bf16.mxu0 %v1357
    %2132 = vmatpush2.bf16.msra.mxu0 %v1356
    %2133 = vmatprep.subr.bf16.mxu0 %v1353
    %2134 = vmatpush2.bf16.msra.mxu0 %v1352
    %2135 = vmatprep.subr.bf16.mxu0 %v1349
    %2136 = vmatpush2.bf16.msra.mxu0 %v1348
    %2137 = vmatprep.subr.bf16.mxu0 %v1345
    %2138 = vmatpush2.bf16.msra.mxu0 %v1344
    %2139 = vmatprep.subr.bf16.mxu0 %v1341
    %2140 = vmatpush2.bf16.msra.mxu0 %v1340
    %2141 = vmatprep.subr.bf16.mxu0 %v1337
    %2142 = vmatpush2.bf16.msra.mxu0 %v1336
    %2143 = vmatprep.mubr.bf16.mxu0 %v384
    %2144 = vmatmul.mubr.bf16.gmra.mxu0 %v383
    %v2145 = vpop.f32.mrf.mxu0
    %v2146 = vadd.f32 %v359, %v2145
    %v2147 = vpop.f32.mrf.mxu0
    %v2148 = vadd.f32 %v363, %v2147
    %v2149 = vpop.f32.mrf.mxu0
    %v2150 = vpop.f32.mrf.mxu0
    %2151 = vdwg.mxu0
    %2152 = vmatprep.subr.bf16.mxu0 %v1397
    %2153 = vmatpush1.bf16.msra.mxu0 %v1396
    %2154 = vmatprep.subr.bf16.mxu0 %v1393
    %2155 = vmatpush1.bf16.msra.mxu0 %v1392
    %2156 = vmatprep.subr.bf16.mxu0 %v1389
    %2157 = vmatpush1.bf16.msra.mxu0 %v1388
    %2158 = vmatprep.subr.bf16.mxu0 %v1385
    %2159 = vmatpush1.bf16.msra.mxu0 %v1384
    %2160 = vmatprep.subr.bf16.mxu0 %v1381
    %2161 = vmatpush1.bf16.msra.mxu0 %v1380
    %2162 = vmatprep.subr.bf16.mxu0 %v1377
    %2163 = vmatpush1.bf16.msra.mxu0 %v1376
    %2164 = vmatprep.subr.bf16.mxu0 %v1373
    %2165 = vmatpush1.bf16.msra.mxu0 %v1372
    %2166 = vmatprep.subr.bf16.mxu0 %v1369
    %2167 = vmatpush1.bf16.msra.mxu0 %v1368
    %2168 = vmatprep.subr.bf16.mxu0 %v1429
    %2169 = vmatpush2.bf16.msra.mxu0 %v1428
    %2170 = vmatprep.subr.bf16.mxu0 %v1425
    %2171 = vmatpush2.bf16.msra.mxu0 %v1424
    %2172 = vmatprep.subr.bf16.mxu0 %v1421
    %2173 = vmatpush2.bf16.msra.mxu0 %v1420
    %2174 = vmatprep.subr.bf16.mxu0 %v1417
    %2175 = vmatpush2.bf16.msra.mxu0 %v1416
    %2176 = vmatprep.subr.bf16.mxu0 %v1413
    %2177 = vmatpush2.bf16.msra.mxu0 %v1412
    %2178 = vmatprep.subr.bf16.mxu0 %v1409
    %2179 = vmatpush2.bf16.msra.mxu0 %v1408
    %2180 = vmatprep.subr.bf16.mxu0 %v1405
    %2181 = vmatpush2.bf16.msra.mxu0 %v1404
    %2182 = vmatprep.subr.bf16.mxu0 %v1401
    %2183 = vmatpush2.bf16.msra.mxu0 %v1400
    %2184 = vmatprep.mubr.bf16.mxu0 %v386
    %2185 = vmatmul.mubr.bf16.gmra.mxu0 %v385
    %v2186 = vpop.f32.mrf.mxu0
    %v2187 = vadd.f32 %v2146, %v2186
    %v2188 = vpop.f32.mrf.mxu0
    %v2189 = vadd.f32 %v2148, %v2188
    %v2190 = vpop.f32.mrf.mxu0
    %v2191 = vpop.f32.mrf.mxu0
    %2192 = vdwg.mxu0
    %2193 = vmatprep.subr.bf16.mxu0 %v1461
    %2194 = vmatpush1.bf16.msra.mxu0 %v1460
    %2195 = vmatprep.subr.bf16.mxu0 %v1457
    %2196 = vmatpush1.bf16.msra.mxu0 %v1456
    %2197 = vmatprep.subr.bf16.mxu0 %v1453
    %2198 = vmatpush1.bf16.msra.mxu0 %v1452
    %2199 = vmatprep.subr.bf16.mxu0 %v1449
    %2200 = vmatpush1.bf16.msra.mxu0 %v1448
    %2201 = vmatprep.subr.bf16.mxu0 %v1445
    %2202 = vmatpush1.bf16.msra.mxu0 %v1444
    %2203 = vmatprep.subr.bf16.mxu0 %v1441
    %2204 = vmatpush1.bf16.msra.mxu0 %v1440
    %2205 = vmatprep.subr.bf16.mxu0 %v1437
    %2206 = vmatpush1.bf16.msra.mxu0 %v1436
    %2207 = vmatprep.subr.bf16.mxu0 %v1433
    %2208 = vmatpush1.bf16.msra.mxu0 %v1432
    %2209 = vmatprep.subr.bf16.mxu0 %v1493
    %2210 = vmatpush2.bf16.msra.mxu0 %v1492
    %2211 = vmatprep.subr.bf16.mxu0 %v1489
    %2212 = vmatpush2.bf16.msra.mxu0 %v1488
    %2213 = vmatprep.subr.bf16.mxu0 %v1485
    %2214 = vmatpush2.bf16.msra.mxu0 %v1484
    %2215 = vmatprep.subr.bf16.mxu0 %v1481
    %2216 = vmatpush2.bf16.msra.mxu0 %v1480
    %2217 = vmatprep.subr.bf16.mxu0 %v1477
    %2218 = vmatpush2.bf16.msra.mxu0 %v1476
    %2219 = vmatprep.subr.bf16.mxu0 %v1473
    %2220 = vmatpush2.bf16.msra.mxu0 %v1472
    %2221 = vmatprep.subr.bf16.mxu0 %v1469
    %2222 = vmatpush2.bf16.msra.mxu0 %v1468
    %2223 = vmatprep.subr.bf16.mxu0 %v1465
    %2224 = vmatpush2.bf16.msra.mxu0 %v1464
    %2225 = vmatprep.mubr.bf16.mxu0 %v388
    %2226 = vmatmul.mubr.bf16.gmra.mxu0 %v387
    %v2227 = vpop.f32.mrf.mxu0
    %v2228 = vadd.f32 %v2187, %v2227
    %v2229 = vpop.f32.mrf.mxu0
    %v2230 = vadd.f32 %v2189, %v2229
    %v2231 = vpop.f32.mrf.mxu0
    %v2232 = vpop.f32.mrf.mxu0
    %2233 = vdwg.mxu0
    %2234 = vmatprep.subr.bf16.mxu0 %v1525
    %2235 = vmatpush1.bf16.msra.mxu0 %v1524
    %2236 = vmatprep.subr.bf16.mxu0 %v1521
    %2237 = vmatpush1.bf16.msra.mxu0 %v1520
    %2238 = vmatprep.subr.bf16.mxu0 %v1517
    %2239 = vmatpush1.bf16.msra.mxu0 %v1516
    %2240 = vmatprep.subr.bf16.mxu0 %v1513
    %2241 = vmatpush1.bf16.msra.mxu0 %v1512
    %2242 = vmatprep.subr.bf16.mxu0 %v1509
    %2243 = vmatpush1.bf16.msra.mxu0 %v1508
    %2244 = vmatprep.subr.bf16.mxu0 %v1505
    %2245 = vmatpush1.bf16.msra.mxu0 %v1504
    %2246 = vmatprep.subr.bf16.mxu0 %v1501
    %2247 = vmatpush1.bf16.msra.mxu0 %v1500
    %2248 = vmatprep.subr.bf16.mxu0 %v1497
    %2249 = vmatpush1.bf16.msra.mxu0 %v1496
    %2250 = vmatprep.subr.bf16.mxu0 %v1557
    %2251 = vmatpush2.bf16.msra.mxu0 %v1556
    %2252 = vmatprep.subr.bf16.mxu0 %v1553
    %2253 = vmatpush2.bf16.msra.mxu0 %v1552
    %2254 = vmatprep.subr.bf16.mxu0 %v1549
    %2255 = vmatpush2.bf16.msra.mxu0 %v1548
    %2256 = vmatprep.subr.bf16.mxu0 %v1545
    %2257 = vmatpush2.bf16.msra.mxu0 %v1544
    %2258 = vmatprep.subr.bf16.mxu0 %v1541
    %2259 = vmatpush2.bf16.msra.mxu0 %v1540
    %2260 = vmatprep.subr.bf16.mxu0 %v1537
    %2261 = vmatpush2.bf16.msra.mxu0 %v1536
    %2262 = vmatprep.subr.bf16.mxu0 %v1533
    %2263 = vmatpush2.bf16.msra.mxu0 %v1532
    %2264 = vmatprep.subr.bf16.mxu0 %v1529
    %2265 = vmatpush2.bf16.msra.mxu0 %v1528
    %2266 = vmatprep.mubr.bf16.mxu0 %v390
    %2267 = vmatmul.mubr.bf16.gmra.mxu0 %v389
    %v2268 = vpop.f32.mrf.mxu0
    %v2269 = vadd.f32 %v2228, %v2268
    %v2270 = vpop.f32.mrf.mxu0
    %v2271 = vadd.f32 %v2230, %v2270
    %v2272 = vpop.f32.mrf.mxu0
    %v2273 = vpop.f32.mrf.mxu0
    %2274 = vdwg.mxu0
    %2275 = vmatprep.subr.bf16.mxu0 %v1589
    %2276 = vmatpush1.bf16.msra.mxu0 %v1588
    %2277 = vmatprep.subr.bf16.mxu0 %v1585
    %2278 = vmatpush1.bf16.msra.mxu0 %v1584
    %2279 = vmatprep.subr.bf16.mxu0 %v1581
    %2280 = vmatpush1.bf16.msra.mxu0 %v1580
    %2281 = vmatprep.subr.bf16.mxu0 %v1577
    %2282 = vmatpush1.bf16.msra.mxu0 %v1576
    %2283 = vmatprep.subr.bf16.mxu0 %v1573
    %2284 = vmatpush1.bf16.msra.mxu0 %v1572
    %2285 = vmatprep.subr.bf16.mxu0 %v1569
    %2286 = vmatpush1.bf16.msra.mxu0 %v1568
    %2287 = vmatprep.subr.bf16.mxu0 %v1565
    %2288 = vmatpush1.bf16.msra.mxu0 %v1564
    %2289 = vmatprep.subr.bf16.mxu0 %v1561
    %2290 = vmatpush1.bf16.msra.mxu0 %v1560
    %2291 = vmatprep.subr.bf16.mxu0 0
    %2292 = vmatpush2.bf16.msra.mxu0 0
    %2293 = vmatprep.subr.bf16.mxu0 0
    %2294 = vmatpush2.bf16.msra.mxu0 0
    %2295 = vmatprep.subr.bf16.mxu0 0
    %2296 = vmatpush2.bf16.msra.mxu0 0
    %2297 = vmatprep.subr.bf16.mxu0 0
    %2298 = vmatpush2.bf16.msra.mxu0 0
    %2299 = vmatprep.subr.bf16.mxu0 0
    %2300 = vmatpush2.bf16.msra.mxu0 0
    %2301 = vmatprep.subr.bf16.mxu0 %v1601
    %2302 = vmatpush2.bf16.msra.mxu0 %v1600
    %2303 = vmatprep.subr.bf16.mxu0 %v1597
    %2304 = vmatpush2.bf16.msra.mxu0 %v1596
    %2305 = vmatprep.subr.bf16.mxu0 %v1593
    %2306 = vmatpush2.bf16.msra.mxu0 %v1592
    %2307 = vmatprep.mubr.bf16.mxu0 %v1904
    %2308 = vmatmul.mubr.bf16.gmra.mxu0 %v391
    %v2309 = vpop.f32.mrf.mxu0
    %v2310 = vadd.f32 %v2269, %v2309
    %v2311 = vpop.f32.mrf.mxu0
    %v2312 = vadd.f32 %v2271, %v2311
    %v2313 = vpop.f32.mrf.mxu0
    %v2314 = vpop.f32.mrf.mxu0
    %2315 = vdwg.mxu0
    %v2316 = vmax.f32 %v2105, 0.0
    %v2317 = vmax.f32 %v2107, 0.0
    %v2318 = vmax.f32 %v2310, 0.0
    %v2319 = vmax.f32 %v2312, 0.0
    %v2320 = vpack.c.bf16 %v2316, %v2316
    %v2321 = vpack.c.bf16 %v2317, %v2317
    %v2322 = vpack.c.bf16 %v2318, %v2318
    %v2323 = vpack.c.bf16 %v2319, %v2319
    %v2324 = vld [vmem:[#allocation2] sm:$0xff]
    %v2325 = vld [vmem:[#allocation2 + $0x8] sm:$0xff]
    %v2326 = vld [vmem:[#allocation2 + $0x10] sm:$0xff]
    %v2327 = vld [vmem:[#allocation2 + $0x18] sm:$0xff]
    %v2328 = vld [vmem:[#allocation2 + $0x20] sm:$0xff]
    %v2329 = vld [vmem:[#allocation2 + $0x28] sm:$0xff]
    %v2330 = vld [vmem:[#allocation2 + $0x30] sm:$0xff]
    %v2331 = vld [vmem:[#allocation2 + $0x38] sm:$0xff]
    %v2332 = vld [vmem:[#allocation2 + $0x40] sm:$0xff]
    %v2333 = vld [vmem:[#allocation2 + $0x48] sm:$0xff]
    %v2334 = vld [vmem:[#allocation2 + $0x50] sm:$0xff]
    %v2335 = vld [vmem:[#allocation2 + $0x58] sm:$0xff]
    %v2336 = vld [vmem:[#allocation2 + $0x60] sm:$0xff]
    %v2337 = vld [vmem:[#allocation2 + $0x68] sm:$0xff]
    %v2338 = vld [vmem:[#allocation2 + $0x70] sm:$0xff]
    %v2339 = vld [vmem:[#allocation2 + $0x78] sm:$0xff]
    %v2340 = vld [vmem:[#allocation2 + $0x80] sm:$0xff]
    %v2341 = vld [vmem:[#allocation2 + $0x88] sm:$0xff]
    %v2342 = vld [vmem:[#allocation2 + $0x90] sm:$0xff]
    %v2343 = vld [vmem:[#allocation2 + $0x98] sm:$0xff]
    %v2344 = vld [vmem:[#allocation2 + $0xa0] sm:$0xff]
    %v2345 = vld [vmem:[#allocation2 + $0xa8] sm:$0xff]
    %v2346 = vld [vmem:[#allocation2 + $0xb0] sm:$0xff]
    %v2347 = vld [vmem:[#allocation2 + $0xb8] sm:$0xff]
    %v2348 = vld [vmem:[#allocation2 + $0xc0] sm:$0xff]
    %v2349 = vld [vmem:[#allocation2 + $0xc8] sm:$0xff]
    %v2350 = vld [vmem:[#allocation2 + $0xd0] sm:$0xff]
    %v2351 = vld [vmem:[#allocation2 + $0xd8] sm:$0xff]
    %v2352 = vld [vmem:[#allocation2 + $0xe0] sm:$0xff]
    %v2353 = vld [vmem:[#allocation2 + $0xe8] sm:$0xff]
    %v2354 = vld [vmem:[#allocation2 + $0xf0] sm:$0xff]
    %v2355 = vld [vmem:[#allocation2 + $0xf8] sm:$0xff]
    %v2356 = vld [vmem:[#allocation2 + $0x100] sm:$0xff]
    %v2357 = vld [vmem:[#allocation2 + $0x108] sm:$0xff]
    %v2358 = vld [vmem:[#allocation2 + $0x110] sm:$0xff]
    %v2359 = vld [vmem:[#allocation2 + $0x118] sm:$0xff]
    %v2360 = vld [vmem:[#allocation2 + $0x120] sm:$0xff]
    %v2361 = vld [vmem:[#allocation2 + $0x128] sm:$0xff]
    %v2362 = vld [vmem:[#allocation2 + $0x130] sm:$0xff]
    %v2363 = vld [vmem:[#allocation2 + $0x138] sm:$0xff]
    %v2364 = vld [vmem:[#allocation2 + $0x140] sm:$0xff]
    %v2365 = vld [vmem:[#allocation2 + $0x148] sm:$0xff]
    %v2366 = vld [vmem:[#allocation2 + $0x150] sm:$0xff]
    %v2367 = vld [vmem:[#allocation2 + $0x158] sm:$0xff]
    %v2368 = vld [vmem:[#allocation2 + $0x160] sm:$0xff]
    %v2369 = vld [vmem:[#allocation2 + $0x168] sm:$0xff]
    %v2370 = vld [vmem:[#allocation2 + $0x170] sm:$0xff]
    %v2371 = vld [vmem:[#allocation2 + $0x178] sm:$0xff]
    %v2372 = vld [vmem:[#allocation2 + $0x180] sm:$0xff]
    %v2373 = vld [vmem:[#allocation2 + $0x188] sm:$0xff]
    %v2374 = vld [vmem:[#allocation2 + $0x190] sm:$0xff]
    %v2375 = vld [vmem:[#allocation2 + $0x198] sm:$0xff]
    %v2376 = vld [vmem:[#allocation2 + $0x1a0] sm:$0xff]
    %v2377 = vld [vmem:[#allocation2 + $0x1a8] sm:$0xff]
    %v2378 = vld [vmem:[#allocation2 + $0x1b0] sm:$0xff]
    %v2379 = vld [vmem:[#allocation2 + $0x1b8] sm:$0xff]
    %v2380 = vld [vmem:[#allocation2 + $0x1c0] sm:$0xff]
    %v2381 = vld [vmem:[#allocation2 + $0x1c8] sm:$0xff]
    %v2382 = vld [vmem:[#allocation2 + $0x1d0] sm:$0xff]
    %v2383 = vld [vmem:[#allocation2 + $0x1d8] sm:$0xff]
    %v2384 = vld [vmem:[#allocation2 + $0x1e0] sm:$0xff]
    %v2385 = vld [vmem:[#allocation2 + $0x1e8] sm:$0xff]
    %v2386 = vld [vmem:[#allocation2 + $0x1f0] sm:$0xff]
    %v2387 = vld [vmem:[#allocation2 + $0x1f8] sm:$0xff]
    %v2388 = vld [vmem:[#allocation2 + $0x200] sm:$0xff]
    %v2389 = vld [vmem:[#allocation2 + $0x208] sm:$0xff]
    %v2390 = vld [vmem:[#allocation2 + $0x210] sm:$0xff]
    %v2391 = vld [vmem:[#allocation2 + $0x218] sm:$0xff]
    %v2392 = vld [vmem:[#allocation2 + $0x220] sm:$0xff]
    %v2393 = vld [vmem:[#allocation2 + $0x228] sm:$0xff]
    %v2394 = vld [vmem:[#allocation2 + $0x230] sm:$0xff]
    %v2395 = vld [vmem:[#allocation2 + $0x238] sm:$0xff]
    %v2396 = vld [vmem:[#allocation2 + $0x240] sm:$0xff]
    %v2397 = vld [vmem:[#allocation2 + $0x248] sm:$0xff]
    %v2398 = vld [vmem:[#allocation2 + $0x250] sm:$0xff]
    %v2399 = vld [vmem:[#allocation2 + $0x258] sm:$0xff]
    %v2400 = vld [vmem:[#allocation2 + $0x260] sm:$0xff]
    %v2401 = vld [vmem:[#allocation2 + $0x268] sm:$0xff]
    %v2402 = vld [vmem:[#allocation2 + $0x270] sm:$0xff]
    %v2403 = vld [vmem:[#allocation2 + $0x278] sm:$0xff]
    %v2404 = vld [vmem:[#allocation2 + $0x280] sm:$0xff]
    %v2405 = vld [vmem:[#allocation2 + $0x288] sm:$0xff]
    %v2406 = vld [vmem:[#allocation2 + $0x290] sm:$0xff]
    %v2407 = vld [vmem:[#allocation2 + $0x298] sm:$0xff]
    %v2408 = vld [vmem:[#allocation2 + $0x2a0] sm:$0xff]
    %v2409 = vld [vmem:[#allocation2 + $0x2a8] sm:$0xff]
    %v2410 = vld [vmem:[#allocation2 + $0x2b0] sm:$0xff]
    %v2411 = vld [vmem:[#allocation2 + $0x2b8] sm:$0xff]
    %v2412 = vld [vmem:[#allocation2 + $0x2c0] sm:$0xff]
    %v2413 = vld [vmem:[#allocation2 + $0x2c8] sm:$0xff]
    %v2414 = vld [vmem:[#allocation2 + $0x2d0] sm:$0xff]
    %v2415 = vld [vmem:[#allocation2 + $0x2d8] sm:$0xff]
    %v2416 = vld [vmem:[#allocation2 + $0x2e0] sm:$0xff]
    %v2417 = vld [vmem:[#allocation2 + $0x2e8] sm:$0xff]
    %v2418 = vld [vmem:[#allocation2 + $0x2f0] sm:$0xff]
    %v2419 = vld [vmem:[#allocation2 + $0x2f8] sm:$0xff]
    %v2420 = vld [vmem:[#allocation2 + $0x300] sm:$0xff]
    %v2421 = vld [vmem:[#allocation2 + $0x308] sm:$0xff]
    %v2422 = vld [vmem:[#allocation2 + $0x310] sm:$0xff]
    %v2423 = vld [vmem:[#allocation2 + $0x318] sm:$0xff]
    %v2424 = vld [vmem:[#allocation2 + $0x320] sm:$0xff]
    %v2425 = vld [vmem:[#allocation2 + $0x328] sm:$0xff]
    %v2426 = vld [vmem:[#allocation2 + $0x330] sm:$0xff]
    %v2427 = vld [vmem:[#allocation2 + $0x338] sm:$0xff]
    %v2428 = vld [vmem:[#allocation2 + $0x340] sm:$0xff]
    %v2429 = vld [vmem:[#allocation2 + $0x348] sm:$0xff]
    %v2430 = vld [vmem:[#allocation2 + $0x350] sm:$0xff]
    %v2431 = vld [vmem:[#allocation2 + $0x358] sm:$0xff]
    %v2432 = vld [vmem:[#allocation2 + $0x360] sm:$0xff]
    %v2433 = vld [vmem:[#allocation2 + $0x368] sm:$0xff]
    %v2434 = vld [vmem:[#allocation2 + $0x370] sm:$0xff]
    %v2435 = vld [vmem:[#allocation2 + $0x378] sm:$0xff]
    %v2436 = vld [vmem:[#allocation2 + $0x380] sm:$0xff]
    %v2437 = vld [vmem:[#allocation2 + $0x388] sm:$0xff]
    %v2438 = vld [vmem:[#allocation2 + $0x390] sm:$0xff]
    %v2439 = vld [vmem:[#allocation2 + $0x398] sm:$0xff]
    %v2440 = vld [vmem:[#allocation2 + $0x3a0] sm:$0xff]
    %v2441 = vld [vmem:[#allocation2 + $0x3a8] sm:$0xff]
    %v2442 = vld [vmem:[#allocation2 + $0x3b0] sm:$0xff]
    %v2443 = vld [vmem:[#allocation2 + $0x3b8] sm:$0xff]
    %v2444 = vld [vmem:[#allocation2 + $0x3c0] sm:$0xff]
    %v2445 = vld [vmem:[#allocation2 + $0x3c8] sm:$0xff]
    %v2446 = vld [vmem:[#allocation2 + $0x3d0] sm:$0xff]
    %v2447 = vld [vmem:[#allocation2 + $0x3d8] sm:$0xff]
    %v2448 = vld [vmem:[#allocation2 + $0x3e0] sm:$0xff]
    %v2449 = vld [vmem:[#allocation2 + $0x3e8] sm:$0xff]
    %v2450 = vld [vmem:[#allocation2 + $0x3f0] sm:$0xff]
    %v2451 = vld [vmem:[#allocation2 + $0x3f8] sm:$0xff]
    %v2452 = vld [vmem:[%s4] sm:$0xf]
    %v2454 = vlaneseq
    %v2455 = vshrl.u32 %v2454, 7
    %v2456 = vsub.s32 0, %v2455
    %v2457 = vrot.slane %v2452, %v2456
    %v2458 = vlaneseq
    %v2459 = vshrl.u32 %v2458, 7
    %v2460 = vsub.s32 1, %v2459
    %v2461 = vrot.slane %v2452, %v2460
    %v2462 = vlaneseq
    %v2463 = vshrl.u32 %v2462, 7
    %v2464 = vsub.s32 2, %v2463
    %v2465 = vrot.slane %v2452, %v2464
    %v2466 = vlaneseq
    %v2467 = vshrl.u32 %v2466, 7
    %v2468 = vsub.s32 3, %v2467
    %v2469 = vrot.slane %v2452, %v2468
    %v2602 = vunpack.c.l.b16 %v2324
    %v2603 = vunpack.c.h.b16 %v2324
    %v2604 = vunpack.c.l.b16 %v2325
    %v2605 = vunpack.c.h.b16 %v2325
    %v2606 = vunpack.c.l.b16 %v2326
    %v2607 = vunpack.c.h.b16 %v2326
    %v2608 = vunpack.c.l.b16 %v2327
    %v2609 = vunpack.c.h.b16 %v2327
    %v2610 = vunpack.c.l.b16 %v2328
    %v2611 = vunpack.c.h.b16 %v2328
    %v2612 = vunpack.c.l.b16 %v2329
    %v2613 = vunpack.c.h.b16 %v2329
    %v2614 = vunpack.c.l.b16 %v2330
    %v2615 = vunpack.c.h.b16 %v2330
    %v2616 = vunpack.c.l.b16 %v2331
    %v2617 = vunpack.c.h.b16 %v2331
    %v2618 = vunpack.c.l.b16 %v2332
    %v2619 = vunpack.c.h.b16 %v2332
    %v2620 = vunpack.c.l.b16 %v2333
    %v2621 = vunpack.c.h.b16 %v2333
    %v2622 = vunpack.c.l.b16 %v2334
    %v2623 = vunpack.c.h.b16 %v2334
    %v2624 = vunpack.c.l.b16 %v2335
    %v2625 = vunpack.c.h.b16 %v2335
    %v2626 = vunpack.c.l.b16 %v2336
    %v2627 = vunpack.c.h.b16 %v2336
    %v2628 = vunpack.c.l.b16 %v2337
    %v2629 = vunpack.c.h.b16 %v2337
    %v2630 = vunpack.c.l.b16 %v2338
    %v2631 = vunpack.c.h.b16 %v2338
    %v2632 = vunpack.c.l.b16 %v2339
    %v2633 = vunpack.c.h.b16 %v2339
    %v2634 = vunpack.c.l.b16 %v2340
    %v2635 = vunpack.c.h.b16 %v2340
    %v2636 = vunpack.c.l.b16 %v2341
    %v2637 = vunpack.c.h.b16 %v2341
    %v2638 = vunpack.c.l.b16 %v2342
    %v2639 = vunpack.c.h.b16 %v2342
    %v2640 = vunpack.c.l.b16 %v2343
    %v2641 = vunpack.c.h.b16 %v2343
    %v2642 = vunpack.c.l.b16 %v2344
    %v2643 = vunpack.c.h.b16 %v2344
    %v2644 = vunpack.c.l.b16 %v2345
    %v2645 = vunpack.c.h.b16 %v2345
    %v2646 = vunpack.c.l.b16 %v2346
    %v2647 = vunpack.c.h.b16 %v2346
    %v2648 = vunpack.c.l.b16 %v2347
    %v2649 = vunpack.c.h.b16 %v2347
    %v2650 = vunpack.c.l.b16 %v2348
    %v2651 = vunpack.c.h.b16 %v2348
    %v2652 = vunpack.c.l.b16 %v2349
    %v2653 = vunpack.c.h.b16 %v2349
    %v2654 = vunpack.c.l.b16 %v2350
    %v2655 = vunpack.c.h.b16 %v2350
    %v2656 = vunpack.c.l.b16 %v2351
    %v2657 = vunpack.c.h.b16 %v2351
    %v2658 = vunpack.c.l.b16 %v2352
    %v2659 = vunpack.c.h.b16 %v2352
    %v2660 = vunpack.c.l.b16 %v2353
    %v2661 = vunpack.c.h.b16 %v2353
    %v2662 = vunpack.c.l.b16 %v2354
    %v2663 = vunpack.c.h.b16 %v2354
    %v2664 = vunpack.c.l.b16 %v2355
    %v2665 = vunpack.c.h.b16 %v2355
    %v2666 = vunpack.c.l.b16 %v2356
    %v2667 = vunpack.c.h.b16 %v2356
    %v2668 = vunpack.c.l.b16 %v2357
    %v2669 = vunpack.c.h.b16 %v2357
    %v2670 = vunpack.c.l.b16 %v2358
    %v2671 = vunpack.c.h.b16 %v2358
    %v2672 = vunpack.c.l.b16 %v2359
    %v2673 = vunpack.c.h.b16 %v2359
    %v2674 = vunpack.c.l.b16 %v2360
    %v2675 = vunpack.c.h.b16 %v2360
    %v2676 = vunpack.c.l.b16 %v2361
    %v2677 = vunpack.c.h.b16 %v2361
    %v2678 = vunpack.c.l.b16 %v2362
    %v2679 = vunpack.c.h.b16 %v2362
    %v2680 = vunpack.c.l.b16 %v2363
    %v2681 = vunpack.c.h.b16 %v2363
    %v2682 = vunpack.c.l.b16 %v2364
    %v2683 = vunpack.c.h.b16 %v2364
    %v2684 = vunpack.c.l.b16 %v2365
    %v2685 = vunpack.c.h.b16 %v2365
    %v2686 = vunpack.c.l.b16 %v2366
    %v2687 = vunpack.c.h.b16 %v2366
    %v2688 = vunpack.c.l.b16 %v2367
    %v2689 = vunpack.c.h.b16 %v2367
    %v2690 = vunpack.c.l.b16 %v2368
    %v2691 = vunpack.c.h.b16 %v2368
    %v2692 = vunpack.c.l.b16 %v2369
    %v2693 = vunpack.c.h.b16 %v2369
    %v2694 = vunpack.c.l.b16 %v2370
    %v2695 = vunpack.c.h.b16 %v2370
    %v2696 = vunpack.c.l.b16 %v2371
    %v2697 = vunpack.c.h.b16 %v2371
    %v2698 = vunpack.c.l.b16 %v2372
    %v2699 = vunpack.c.h.b16 %v2372
    %v2700 = vunpack.c.l.b16 %v2373
    %v2701 = vunpack.c.h.b16 %v2373
    %v2702 = vunpack.c.l.b16 %v2374
    %v2703 = vunpack.c.h.b16 %v2374
    %v2704 = vunpack.c.l.b16 %v2375
    %v2705 = vunpack.c.h.b16 %v2375
    %v2706 = vunpack.c.l.b16 %v2376
    %v2707 = vunpack.c.h.b16 %v2376
    %v2708 = vunpack.c.l.b16 %v2377
    %v2709 = vunpack.c.h.b16 %v2377
    %v2710 = vunpack.c.l.b16 %v2378
    %v2711 = vunpack.c.h.b16 %v2378
    %v2712 = vunpack.c.l.b16 %v2379
    %v2713 = vunpack.c.h.b16 %v2379
    %v2714 = vunpack.c.l.b16 %v2380
    %v2715 = vunpack.c.h.b16 %v2380
    %v2716 = vunpack.c.l.b16 %v2381
    %v2717 = vunpack.c.h.b16 %v2381
    %v2718 = vunpack.c.l.b16 %v2382
    %v2719 = vunpack.c.h.b16 %v2382
    %v2720 = vunpack.c.l.b16 %v2383
    %v2721 = vunpack.c.h.b16 %v2383
    %v2722 = vunpack.c.l.b16 %v2384
    %v2723 = vunpack.c.h.b16 %v2384
    %v2724 = vunpack.c.l.b16 %v2385
    %v2725 = vunpack.c.h.b16 %v2385
    %v2726 = vunpack.c.l.b16 %v2386
    %v2727 = vunpack.c.h.b16 %v2386
    %v2728 = vunpack.c.l.b16 %v2387
    %v2729 = vunpack.c.h.b16 %v2387
    %v2730 = vunpack.c.l.b16 %v2388
    %v2731 = vunpack.c.h.b16 %v2388
    %v2732 = vunpack.c.l.b16 %v2389
    %v2733 = vunpack.c.h.b16 %v2389
    %v2734 = vunpack.c.l.b16 %v2390
    %v2735 = vunpack.c.h.b16 %v2390
    %v2736 = vunpack.c.l.b16 %v2391
    %v2737 = vunpack.c.h.b16 %v2391
    %v2738 = vunpack.c.l.b16 %v2392
    %v2739 = vunpack.c.h.b16 %v2392
    %v2740 = vunpack.c.l.b16 %v2393
    %v2741 = vunpack.c.h.b16 %v2393
    %v2742 = vunpack.c.l.b16 %v2394
    %v2743 = vunpack.c.h.b16 %v2394
    %v2744 = vunpack.c.l.b16 %v2395
    %v2745 = vunpack.c.h.b16 %v2395
    %v2746 = vunpack.c.l.b16 %v2396
    %v2747 = vunpack.c.h.b16 %v2396
    %v2748 = vunpack.c.l.b16 %v2397
    %v2749 = vunpack.c.h.b16 %v2397
    %v2750 = vunpack.c.l.b16 %v2398
    %v2751 = vunpack.c.h.b16 %v2398
    %v2752 = vunpack.c.l.b16 %v2399
    %v2753 = vunpack.c.h.b16 %v2399
    %v2754 = vunpack.c.l.b16 %v2400
    %v2755 = vunpack.c.h.b16 %v2400
    %v2756 = vunpack.c.l.b16 %v2401
    %v2757 = vunpack.c.h.b16 %v2401
    %v2758 = vunpack.c.l.b16 %v2402
    %v2759 = vunpack.c.h.b16 %v2402
    %v2760 = vunpack.c.l.b16 %v2403
    %v2761 = vunpack.c.h.b16 %v2403
    %v2762 = vunpack.c.l.b16 %v2404
    %v2763 = vunpack.c.h.b16 %v2404
    %v2764 = vunpack.c.l.b16 %v2405
    %v2765 = vunpack.c.h.b16 %v2405
    %v2766 = vunpack.c.l.b16 %v2406
    %v2767 = vunpack.c.h.b16 %v2406
    %v2768 = vunpack.c.l.b16 %v2407
    %v2769 = vunpack.c.h.b16 %v2407
    %v2770 = vunpack.c.l.b16 %v2408
    %v2771 = vunpack.c.h.b16 %v2408
    %v2772 = vunpack.c.l.b16 %v2409
    %v2773 = vunpack.c.h.b16 %v2409
    %v2774 = vunpack.c.l.b16 %v2410
    %v2775 = vunpack.c.h.b16 %v2410
    %v2776 = vunpack.c.l.b16 %v2411
    %v2777 = vunpack.c.h.b16 %v2411
    %v2778 = vunpack.c.l.b16 %v2412
    %v2779 = vunpack.c.h.b16 %v2412
    %v2780 = vunpack.c.l.b16 %v2413
    %v2781 = vunpack.c.h.b16 %v2413
    %v2782 = vunpack.c.l.b16 %v2414
    %v2783 = vunpack.c.h.b16 %v2414
    %v2784 = vunpack.c.l.b16 %v2415
    %v2785 = vunpack.c.h.b16 %v2415
    %v2786 = vunpack.c.l.b16 %v2416
    %v2787 = vunpack.c.h.b16 %v2416
    %v2788 = vunpack.c.l.b16 %v2417
    %v2789 = vunpack.c.h.b16 %v2417
    %v2790 = vunpack.c.l.b16 %v2418
    %v2791 = vunpack.c.h.b16 %v2418
    %v2792 = vunpack.c.l.b16 %v2419
    %v2793 = vunpack.c.h.b16 %v2419
    %v2794 = vunpack.c.l.b16 %v2420
    %v2795 = vunpack.c.h.b16 %v2420
    %v2796 = vunpack.c.l.b16 %v2421
    %v2797 = vunpack.c.h.b16 %v2421
    %v2798 = vunpack.c.l.b16 %v2422
    %v2799 = vunpack.c.h.b16 %v2422
    %v2800 = vunpack.c.l.b16 %v2423
    %v2801 = vunpack.c.h.b16 %v2423
    %v2802 = vunpack.c.l.b16 %v2424
    %v2803 = vunpack.c.h.b16 %v2424
    %v2804 = vunpack.c.l.b16 %v2425
    %v2805 = vunpack.c.h.b16 %v2425
    %v2806 = vunpack.c.l.b16 %v2426
    %v2807 = vunpack.c.h.b16 %v2426
    %v2808 = vunpack.c.l.b16 %v2427
    %v2809 = vunpack.c.h.b16 %v2427
    %v2810 = vunpack.c.l.b16 %v2428
    %v2811 = vunpack.c.h.b16 %v2428
    %v2812 = vunpack.c.l.b16 %v2429
    %v2813 = vunpack.c.h.b16 %v2429
    %v2814 = vunpack.c.l.b16 %v2430
    %v2815 = vunpack.c.h.b16 %v2430
    %v2816 = vunpack.c.l.b16 %v2431
    %v2817 = vunpack.c.h.b16 %v2431
    %v2818 = vunpack.c.l.b16 %v2432
    %v2819 = vunpack.c.h.b16 %v2432
    %v2820 = vunpack.c.l.b16 %v2433
    %v2821 = vunpack.c.h.b16 %v2433
    %v2822 = vunpack.c.l.b16 %v2434
    %v2823 = vunpack.c.h.b16 %v2434
    %v2824 = vunpack.c.l.b16 %v2435
    %v2825 = vunpack.c.h.b16 %v2435
    %v2826 = vunpack.c.l.b16 %v2436
    %v2827 = vunpack.c.h.b16 %v2436
    %v2828 = vunpack.c.l.b16 %v2437
    %v2829 = vunpack.c.h.b16 %v2437
    %v2830 = vunpack.c.l.b16 %v2438
    %v2831 = vunpack.c.h.b16 %v2438
    %v2832 = vunpack.c.l.b16 %v2439
    %v2833 = vunpack.c.h.b16 %v2439
    %v2834 = vunpack.c.l.b16 %v2440
    %v2835 = vunpack.c.h.b16 %v2440
    %v2836 = vunpack.c.l.b16 %v2441
    %v2837 = vunpack.c.h.b16 %v2441
    %v2838 = vunpack.c.l.b16 %v2442
    %v2839 = vunpack.c.h.b16 %v2442
    %v2840 = vunpack.c.l.b16 %v2443
    %v2841 = vunpack.c.h.b16 %v2443
    %v2842 = vunpack.c.l.b16 %v2444
    %v2843 = vunpack.c.h.b16 %v2444
    %v2844 = vunpack.c.l.b16 %v2445
    %v2845 = vunpack.c.h.b16 %v2445
    %v2846 = vunpack.c.l.b16 %v2446
    %v2847 = vunpack.c.h.b16 %v2446
    %v2848 = vunpack.c.l.b16 %v2447
    %v2849 = vunpack.c.h.b16 %v2447
    %v2850 = vunpack.c.l.b16 %v2448
    %v2851 = vunpack.c.h.b16 %v2448
    %v2852 = vunpack.c.l.b16 %v2449
    %v2853 = vunpack.c.h.b16 %v2449
    %v2854 = vunpack.c.l.b16 %v2450
    %v2855 = vunpack.c.h.b16 %v2450
    %v2856 = vunpack.c.l.b16 %v2451
    %v2857 = vunpack.c.h.b16 %v2451
    %v2858 = vpack.c.b16 %v2606, %v2602
    %v2859 = vpack.c.b16 %v2607, %v2603
    %v2860 = vpack.c.b16 %v2608, %v2604
    %v2861 = vpack.c.b16 %v2609, %v2605
    %v2862 = vpack.c.b16 %v2614, %v2610
    %v2863 = vpack.c.b16 %v2615, %v2611
    %v2864 = vpack.c.b16 %v2616, %v2612
    %v2865 = vpack.c.b16 %v2617, %v2613
    %v2866 = vpack.c.b16 %v2622, %v2618
    %v2867 = vpack.c.b16 %v2623, %v2619
    %v2868 = vpack.c.b16 %v2624, %v2620
    %v2869 = vpack.c.b16 %v2625, %v2621
    %v2870 = vpack.c.b16 %v2630, %v2626
    %v2871 = vpack.c.b16 %v2631, %v2627
    %v2872 = vpack.c.b16 %v2632, %v2628
    %v2873 = vpack.c.b16 %v2633, %v2629
    %v2874 = vpack.c.b16 %v2638, %v2634
    %v2875 = vpack.c.b16 %v2639, %v2635
    %v2876 = vpack.c.b16 %v2640, %v2636
    %v2877 = vpack.c.b16 %v2641, %v2637
    %v2878 = vpack.c.b16 %v2646, %v2642
    %v2879 = vpack.c.b16 %v2647, %v2643
    %v2880 = vpack.c.b16 %v2648, %v2644
    %v2881 = vpack.c.b16 %v2649, %v2645
    %v2882 = vpack.c.b16 %v2654, %v2650
    %v2883 = vpack.c.b16 %v2655, %v2651
    %v2884 = vpack.c.b16 %v2656, %v2652
    %v2885 = vpack.c.b16 %v2657, %v2653
    %v2886 = vpack.c.b16 %v2662, %v2658
    %v2887 = vpack.c.b16 %v2663, %v2659
    %v2888 = vpack.c.b16 %v2664, %v2660
    %v2889 = vpack.c.b16 %v2665, %v2661
    %v2890 = vpack.c.b16 %v2670, %v2666
    %v2891 = vpack.c.b16 %v2671, %v2667
    %v2892 = vpack.c.b16 %v2672, %v2668
    %v2893 = vpack.c.b16 %v2673, %v2669
    %v2894 = vpack.c.b16 %v2678, %v2674
    %v2895 = vpack.c.b16 %v2679, %v2675
    %v2896 = vpack.c.b16 %v2680, %v2676
    %v2897 = vpack.c.b16 %v2681, %v2677
    %v2898 = vpack.c.b16 %v2686, %v2682
    %v2899 = vpack.c.b16 %v2687, %v2683
    %v2900 = vpack.c.b16 %v2688, %v2684
    %v2901 = vpack.c.b16 %v2689, %v2685
    %v2902 = vpack.c.b16 %v2694, %v2690
    %v2903 = vpack.c.b16 %v2695, %v2691
    %v2904 = vpack.c.b16 %v2696, %v2692
    %v2905 = vpack.c.b16 %v2697, %v2693
    %v2906 = vpack.c.b16 %v2702, %v2698
    %v2907 = vpack.c.b16 %v2703, %v2699
    %v2908 = vpack.c.b16 %v2704, %v2700
    %v2909 = vpack.c.b16 %v2705, %v2701
    %v2910 = vpack.c.b16 %v2710, %v2706
    %v2911 = vpack.c.b16 %v2711, %v2707
    %v2912 = vpack.c.b16 %v2712, %v2708
    %v2913 = vpack.c.b16 %v2713, %v2709
    %v2914 = vpack.c.b16 %v2718, %v2714
    %v2915 = vpack.c.b16 %v2719, %v2715
    %v2916 = vpack.c.b16 %v2720, %v2716
    %v2917 = vpack.c.b16 %v2721, %v2717
    %v2918 = vpack.c.b16 %v2726, %v2722
    %v2919 = vpack.c.b16 %v2727, %v2723
    %v2920 = vpack.c.b16 %v2728, %v2724
    %v2921 = vpack.c.b16 %v2729, %v2725
    %v2922 = vpack.c.b16 %v2734, %v2730
    %v2923 = vpack.c.b16 %v2735, %v2731
    %v2924 = vpack.c.b16 %v2736, %v2732
    %v2925 = vpack.c.b16 %v2737, %v2733
    %v2926 = vpack.c.b16 %v2742, %v2738
    %v2927 = vpack.c.b16 %v2743, %v2739
    %v2928 = vpack.c.b16 %v2744, %v2740
    %v2929 = vpack.c.b16 %v2745, %v2741
    %v2930 = vpack.c.b16 %v2750, %v2746
    %v2931 = vpack.c.b16 %v2751, %v2747
    %v2932 = vpack.c.b16 %v2752, %v2748
    %v2933 = vpack.c.b16 %v2753, %v2749
    %v2934 = vpack.c.b16 %v2758, %v2754
    %v2935 = vpack.c.b16 %v2759, %v2755
    %v2936 = vpack.c.b16 %v2760, %v2756
    %v2937 = vpack.c.b16 %v2761, %v2757
    %v2938 = vpack.c.b16 %v2766, %v2762
    %v2939 = vpack.c.b16 %v2767, %v2763
    %v2940 = vpack.c.b16 %v2768, %v2764
    %v2941 = vpack.c.b16 %v2769, %v2765
    %v2942 = vpack.c.b16 %v2774, %v2770
    %v2943 = vpack.c.b16 %v2775, %v2771
    %v2944 = vpack.c.b16 %v2776, %v2772
    %v2945 = vpack.c.b16 %v2777, %v2773
    %v2946 = vpack.c.b16 %v2782, %v2778
    %v2947 = vpack.c.b16 %v2783, %v2779
    %v2948 = vpack.c.b16 %v2784, %v2780
    %v2949 = vpack.c.b16 %v2785, %v2781
    %v2950 = vpack.c.b16 %v2790, %v2786
    %v2951 = vpack.c.b16 %v2791, %v2787
    %v2952 = vpack.c.b16 %v2792, %v2788
    %v2953 = vpack.c.b16 %v2793, %v2789
    %v2954 = vpack.c.b16 %v2798, %v2794
    %v2955 = vpack.c.b16 %v2799, %v2795
    %v2956 = vpack.c.b16 %v2800, %v2796
    %v2957 = vpack.c.b16 %v2801, %v2797
    %v2958 = vpack.c.b16 %v2806, %v2802
    %v2959 = vpack.c.b16 %v2807, %v2803
    %v2960 = vpack.c.b16 %v2808, %v2804
    %v2961 = vpack.c.b16 %v2809, %v2805
    %v2962 = vpack.c.b16 %v2814, %v2810
    %v2963 = vpack.c.b16 %v2815, %v2811
    %v2964 = vpack.c.b16 %v2816, %v2812
    %v2965 = vpack.c.b16 %v2817, %v2813
    %v2966 = vpack.c.b16 %v2822, %v2818
    %v2967 = vpack.c.b16 %v2823, %v2819
    %v2968 = vpack.c.b16 %v2824, %v2820
    %v2969 = vpack.c.b16 %v2825, %v2821
    %v2970 = vpack.c.b16 %v2830, %v2826
    %v2971 = vpack.c.b16 %v2831, %v2827
    %v2972 = vpack.c.b16 %v2832, %v2828
    %v2973 = vpack.c.b16 %v2833, %v2829
    %v2974 = vpack.c.b16 %v2838, %v2834
    %v2975 = vpack.c.b16 %v2839, %v2835
    %v2976 = vpack.c.b16 %v2840, %v2836
    %v2977 = vpack.c.b16 %v2841, %v2837
    %v2978 = vpack.c.b16 %v2846, %v2842
    %v2979 = vpack.c.b16 %v2847, %v2843
    %v2980 = vpack.c.b16 %v2848, %v2844
    %v2981 = vpack.c.b16 %v2849, %v2845
    %v2982 = vpack.c.b16 %v2854, %v2850
    %v2983 = vpack.c.b16 %v2855, %v2851
    %v2984 = vpack.c.b16 %v2856, %v2852
    %v2985 = vpack.c.b16 %v2857, %v2853
    %3114 = vmatprep.subr.bf16.mxu0 %v2887
    %3115 = vmatpush1.bf16.msra.mxu0 %v2886
    %3116 = vmatprep.subr.bf16.mxu0 %v2883
    %3117 = vmatpush1.bf16.msra.mxu0 %v2882
    %3118 = vmatprep.subr.bf16.mxu0 %v2879
    %3119 = vmatpush1.bf16.msra.mxu0 %v2878
    %3120 = vmatprep.subr.bf16.mxu0 %v2875
    %3121 = vmatpush1.bf16.msra.mxu0 %v2874
    %3122 = vmatprep.subr.bf16.mxu0 %v2871
    %3123 = vmatpush1.bf16.msra.mxu0 %v2870
    %3124 = vmatprep.subr.bf16.mxu0 %v2867
    %3125 = vmatpush1.bf16.msra.mxu0 %v2866
    %3126 = vmatprep.subr.bf16.mxu0 %v2863
    %3127 = vmatpush1.bf16.msra.mxu0 %v2862
    %3128 = vmatprep.subr.bf16.mxu0 %v2859
    %3129 = vmatpush1.bf16.msra.mxu0 %v2858
    %3130 = vmatprep.subr.bf16.mxu0 %v2919
    %3131 = vmatpush2.bf16.msra.mxu0 %v2918
    %3132 = vmatprep.subr.bf16.mxu0 %v2915
    %3133 = vmatpush2.bf16.msra.mxu0 %v2914
    %3134 = vmatprep.subr.bf16.mxu0 %v2911
    %3135 = vmatpush2.bf16.msra.mxu0 %v2910
    %3136 = vmatprep.subr.bf16.mxu0 %v2907
    %3137 = vmatpush2.bf16.msra.mxu0 %v2906
    %3138 = vmatprep.subr.bf16.mxu0 %v2903
    %3139 = vmatpush2.bf16.msra.mxu0 %v2902
    %3140 = vmatprep.subr.bf16.mxu0 %v2899
    %3141 = vmatpush2.bf16.msra.mxu0 %v2898
    %3142 = vmatprep.subr.bf16.mxu0 %v2895
    %3143 = vmatpush2.bf16.msra.mxu0 %v2894
    %3144 = vmatprep.subr.bf16.mxu0 %v2891
    %3145 = vmatpush2.bf16.msra.mxu0 %v2890
    %3146 = vmatprep.mubr.bf16.mxu0 %v2321
    %3147 = vmatmul.mubr.bf16.gmra.mxu0 %v2320
    %v3148 = vpop.f32.mrf.mxu0
    %v3149 = vadd.f32 %v2457, %v3148
    %v3150 = vpop.f32.mrf.mxu0
    %v3151 = vadd.f32 %v2461, %v3150
    %v3152 = vpop.f32.mrf.mxu0
    %v3153 = vpop.f32.mrf.mxu0
    %3154 = vdwg.mxu0
    %3155 = vmatprep.subr.bf16.mxu0 %v2951
    %3156 = vmatpush1.bf16.msra.mxu0 %v2950
    %3157 = vmatprep.subr.bf16.mxu0 %v2947
    %3158 = vmatpush1.bf16.msra.mxu0 %v2946
    %3159 = vmatprep.subr.bf16.mxu0 %v2943
    %3160 = vmatpush1.bf16.msra.mxu0 %v2942
    %3161 = vmatprep.subr.bf16.mxu0 %v2939
    %3162 = vmatpush1.bf16.msra.mxu0 %v2938
    %3163 = vmatprep.subr.bf16.mxu0 %v2935
    %3164 = vmatpush1.bf16.msra.mxu0 %v2934
    %3165 = vmatprep.subr.bf16.mxu0 %v2931
    %3166 = vmatpush1.bf16.msra.mxu0 %v2930
    %3167 = vmatprep.subr.bf16.mxu0 %v2927
    %3168 = vmatpush1.bf16.msra.mxu0 %v2926
    %3169 = vmatprep.subr.bf16.mxu0 %v2923
    %3170 = vmatpush1.bf16.msra.mxu0 %v2922
    %3171 = vmatprep.subr.bf16.mxu0 %v2983
    %3172 = vmatpush2.bf16.msra.mxu0 %v2982
    %3173 = vmatprep.subr.bf16.mxu0 %v2979
    %3174 = vmatpush2.bf16.msra.mxu0 %v2978
    %3175 = vmatprep.subr.bf16.mxu0 %v2975
    %3176 = vmatpush2.bf16.msra.mxu0 %v2974
    %3177 = vmatprep.subr.bf16.mxu0 %v2971
    %3178 = vmatpush2.bf16.msra.mxu0 %v2970
    %3179 = vmatprep.subr.bf16.mxu0 %v2967
    %3180 = vmatpush2.bf16.msra.mxu0 %v2966
    %3181 = vmatprep.subr.bf16.mxu0 %v2963
    %3182 = vmatpush2.bf16.msra.mxu0 %v2962
    %3183 = vmatprep.subr.bf16.mxu0 %v2959
    %3184 = vmatpush2.bf16.msra.mxu0 %v2958
    %3185 = vmatprep.subr.bf16.mxu0 %v2955
    %3186 = vmatpush2.bf16.msra.mxu0 %v2954
    %3187 = vmatprep.mubr.bf16.mxu0 %v2323
    %3188 = vmatmul.mubr.bf16.gmra.mxu0 %v2322
    %v3189 = vpop.f32.mrf.mxu0
    %v3190 = vadd.f32 %v3149, %v3189
    %v3191 = vpop.f32.mrf.mxu0
    %v3192 = vadd.f32 %v3151, %v3191
    %v3193 = vpop.f32.mrf.mxu0
    %v3194 = vpop.f32.mrf.mxu0
    %3195 = vdwg.mxu0
    %3196 = vmatprep.subr.bf16.mxu0 %v2889
    %3197 = vmatpush1.bf16.msra.mxu0 %v2888
    %3198 = vmatprep.subr.bf16.mxu0 %v2885
    %3199 = vmatpush1.bf16.msra.mxu0 %v2884
    %3200 = vmatprep.subr.bf16.mxu0 %v2881
    %3201 = vmatpush1.bf16.msra.mxu0 %v2880
    %3202 = vmatprep.subr.bf16.mxu0 %v2877
    %3203 = vmatpush1.bf16.msra.mxu0 %v2876
    %3204 = vmatprep.subr.bf16.mxu0 %v2873
    %3205 = vmatpush1.bf16.msra.mxu0 %v2872
    %3206 = vmatprep.subr.bf16.mxu0 %v2869
    %3207 = vmatpush1.bf16.msra.mxu0 %v2868
    %3208 = vmatprep.subr.bf16.mxu0 %v2865
    %3209 = vmatpush1.bf16.msra.mxu0 %v2864
    %3210 = vmatprep.subr.bf16.mxu0 %v2861
    %3211 = vmatpush1.bf16.msra.mxu0 %v2860
    %3212 = vmatprep.subr.bf16.mxu0 %v2921
    %3213 = vmatpush2.bf16.msra.mxu0 %v2920
    %3214 = vmatprep.subr.bf16.mxu0 %v2917
    %3215 = vmatpush2.bf16.msra.mxu0 %v2916
    %3216 = vmatprep.subr.bf16.mxu0 %v2913
    %3217 = vmatpush2.bf16.msra.mxu0 %v2912
    %3218 = vmatprep.subr.bf16.mxu0 %v2909
    %3219 = vmatpush2.bf16.msra.mxu0 %v2908
    %3220 = vmatprep.subr.bf16.mxu0 %v2905
    %3221 = vmatpush2.bf16.msra.mxu0 %v2904
    %3222 = vmatprep.subr.bf16.mxu0 %v2901
    %3223 = vmatpush2.bf16.msra.mxu0 %v2900
    %3224 = vmatprep.subr.bf16.mxu0 %v2897
    %3225 = vmatpush2.bf16.msra.mxu0 %v2896
    %3226 = vmatprep.subr.bf16.mxu0 %v2893
    %3227 = vmatpush2.bf16.msra.mxu0 %v2892
    %3228 = vmatprep.mubr.bf16.mxu0 %v2321
    %3229 = vmatmul.mubr.bf16.gmra.mxu0 %v2320
    %v3230 = vpop.f32.mrf.mxu0
    %v3231 = vadd.f32 %v2465, %v3230
    %v3232 = vpop.f32.mrf.mxu0
    %v3233 = vadd.f32 %v2469, %v3232
    %v3234 = vpop.f32.mrf.mxu0
    %v3235 = vpop.f32.mrf.mxu0
    %3236 = vdwg.mxu0
    %3237 = vmatprep.subr.bf16.mxu0 %v2953
    %3238 = vmatpush1.bf16.msra.mxu0 %v2952
    %3239 = vmatprep.subr.bf16.mxu0 %v2949
    %3240 = vmatpush1.bf16.msra.mxu0 %v2948
    %3241 = vmatprep.subr.bf16.mxu0 %v2945
    %3242 = vmatpush1.bf16.msra.mxu0 %v2944
    %3243 = vmatprep.subr.bf16.mxu0 %v2941
    %3244 = vmatpush1.bf16.msra.mxu0 %v2940
    %3245 = vmatprep.subr.bf16.mxu0 %v2937
    %3246 = vmatpush1.bf16.msra.mxu0 %v2936
    %3247 = vmatprep.subr.bf16.mxu0 %v2933
    %3248 = vmatpush1.bf16.msra.mxu0 %v2932
    %3249 = vmatprep.subr.bf16.mxu0 %v2929
    %3250 = vmatpush1.bf16.msra.mxu0 %v2928
    %3251 = vmatprep.subr.bf16.mxu0 %v2925
    %3252 = vmatpush1.bf16.msra.mxu0 %v2924
    %3253 = vmatprep.subr.bf16.mxu0 %v2985
    %3254 = vmatpush2.bf16.msra.mxu0 %v2984
    %3255 = vmatprep.subr.bf16.mxu0 %v2981
    %3256 = vmatpush2.bf16.msra.mxu0 %v2980
    %3257 = vmatprep.subr.bf16.mxu0 %v2977
    %3258 = vmatpush2.bf16.msra.mxu0 %v2976
    %3259 = vmatprep.subr.bf16.mxu0 %v2973
    %3260 = vmatpush2.bf16.msra.mxu0 %v2972
    %3261 = vmatprep.subr.bf16.mxu0 %v2969
    %3262 = vmatpush2.bf16.msra.mxu0 %v2968
    %3263 = vmatprep.subr.bf16.mxu0 %v2965
    %3264 = vmatpush2.bf16.msra.mxu0 %v2964
    %3265 = vmatprep.subr.bf16.mxu0 %v2961
    %3266 = vmatpush2.bf16.msra.mxu0 %v2960
    %3267 = vmatprep.subr.bf16.mxu0 %v2957
    %3268 = vmatpush2.bf16.msra.mxu0 %v2956
    %3269 = vmatprep.mubr.bf16.mxu0 %v2323
    %3270 = vmatmul.mubr.bf16.gmra.mxu0 %v2322
    %v3271 = vpop.f32.mrf.mxu0
    %v3272 = vadd.f32 %v3231, %v3271
    %v3273 = vpop.f32.mrf.mxu0
    %v3274 = vadd.f32 %v3233, %v3273
    %v3275 = vpop.f32.mrf.mxu0
    %v3276 = vpop.f32.mrf.mxu0
    %3277 = vdwg.mxu0
    %v3278 = vmax.f32 %v3190, 0.0
    %v3279 = vmax.f32 %v3192, 0.0
    %v3280 = vmax.f32 %v3272, 0.0
    %v3281 = vmax.f32 %v3274, 0.0
    %v3282 = vpack.c.bf16 %v3278, %v3278
    %v3283 = vpack.c.bf16 %v3279, %v3279
    %v3284 = vpack.c.bf16 %v3280, %v3280
    %v3285 = vpack.c.bf16 %v3281, %v3281
    %v3286 = vld [vmem:[%s5] sm:$0xf]
    %v3287 = vld [vmem:[%s5 + $0x4] sm:$0xf]
    %v3288 = vld [vmem:[%s5 + $0x8] sm:$0xf]
    %v3289 = vld [vmem:[%s5 + $0xc] sm:$0xf]
    %v3290 = vld [vmem:[%s5 + $0x10] sm:$0xf]
    %v3291 = vld [vmem:[%s5 + $0x14] sm:$0xf]
    %v3292 = vld [vmem:[%s5 + $0x18] sm:$0xf]
    %v3293 = vld [vmem:[%s5 + $0x1c] sm:$0xf]
    %v3294 = vld [vmem:[%s5 + $0x20] sm:$0xf]
    %v3295 = vld [vmem:[%s5 + $0x24] sm:$0xf]
    %v3296 = vld [vmem:[%s5 + $0x28] sm:$0xf]
    %v3297 = vld [vmem:[%s5 + $0x2c] sm:$0xf]
    %v3298 = vld [vmem:[%s5 + $0x30] sm:$0xf]
    %v3299 = vld [vmem:[%s5 + $0x34] sm:$0xf]
    %v3300 = vld [vmem:[%s5 + $0x38] sm:$0xf]
    %v3301 = vld [vmem:[%s5 + $0x3c] sm:$0xf]
    %v3302 = vld [vmem:[%s5 + $0x40] sm:$0xf]
    %v3303 = vld [vmem:[%s5 + $0x44] sm:$0xf]
    %v3304 = vld [vmem:[%s5 + $0x48] sm:$0xf]
    %v3305 = vld [vmem:[%s5 + $0x4c] sm:$0xf]
    %v3306 = vld [vmem:[%s5 + $0x50] sm:$0xf]
    %v3307 = vld [vmem:[%s5 + $0x54] sm:$0xf]
    %v3308 = vld [vmem:[%s5 + $0x58] sm:$0xf]
    %v3309 = vld [vmem:[%s5 + $0x5c] sm:$0xf]
    %v3310 = vld [vmem:[%s5 + $0x60] sm:$0xf]
    %v3311 = vld [vmem:[%s5 + $0x64] sm:$0xf]
    %v3312 = vld [vmem:[%s5 + $0x68] sm:$0xf]
    %v3313 = vld [vmem:[%s5 + $0x6c] sm:$0xf]
    %v3314 = vld [vmem:[%s5 + $0x70] sm:$0xf]
    %v3315 = vld [vmem:[%s5 + $0x74] sm:$0xf]
    %v3316 = vld [vmem:[%s5 + $0x78] sm:$0xf]
    %v3317 = vld [vmem:[%s5 + $0x7c] sm:$0xf]
    %v3318 = vld [vmem:[%s5 + $0x80] sm:$0xf]
    %v3319 = vld [vmem:[%s5 + $0x84] sm:$0xf]
    %v3320 = vld [vmem:[%s5 + $0x88] sm:$0xf]
    %v3321 = vld [vmem:[%s5 + $0x8c] sm:$0xf]
    %v3322 = vld [vmem:[%s5 + $0x90] sm:$0xf]
    %v3323 = vld [vmem:[%s5 + $0x94] sm:$0xf]
    %v3324 = vld [vmem:[%s5 + $0x98] sm:$0xf]
    %v3325 = vld [vmem:[%s5 + $0x9c] sm:$0xf]
    %v3326 = vld [vmem:[%s5 + $0xa0] sm:$0xf]
    %v3327 = vld [vmem:[%s5 + $0xa4] sm:$0xf]
    %v3328 = vld [vmem:[%s5 + $0xa8] sm:$0xf]
    %v3329 = vld [vmem:[%s5 + $0xac] sm:$0xf]
    %v3330 = vld [vmem:[%s5 + $0xb0] sm:$0xf]
    %v3331 = vld [vmem:[%s5 + $0xb4] sm:$0xf]
    %v3332 = vld [vmem:[%s5 + $0xb8] sm:$0xf]
    %v3333 = vld [vmem:[%s5 + $0xbc] sm:$0xf]
    %v3334 = vld [vmem:[%s5 + $0xc0] sm:$0xf]
    %v3335 = vld [vmem:[%s5 + $0xc4] sm:$0xf]
    %v3336 = vld [vmem:[%s5 + $0xc8] sm:$0xf]
    %v3337 = vld [vmem:[%s5 + $0xcc] sm:$0xf]
    %v3338 = vld [vmem:[%s5 + $0xd0] sm:$0xf]
    %v3339 = vld [vmem:[%s5 + $0xd4] sm:$0xf]
    %v3340 = vld [vmem:[%s5 + $0xd8] sm:$0xf]
    %v3341 = vld [vmem:[%s5 + $0xdc] sm:$0xf]
    %v3342 = vld [vmem:[%s5 + $0xe0] sm:$0xf]
    %v3343 = vld [vmem:[%s5 + $0xe4] sm:$0xf]
    %v3344 = vld [vmem:[%s5 + $0xe8] sm:$0xf]
    %v3345 = vld [vmem:[%s5 + $0xec] sm:$0xf]
    %v3346 = vld [vmem:[%s5 + $0xf0] sm:$0xf]
    %v3347 = vld [vmem:[%s5 + $0xf4] sm:$0xf]
    %v3348 = vld [vmem:[%s5 + $0xf8] sm:$0xf]
    %v3349 = vld [vmem:[%s5 + $0xfc] sm:$0xf]
    %v3350 = vld [vmem:[%s6] sm:$0x1]
    %v3352 = vlaneseq
    %v3353 = vshrl.u32 %v3352, 7
    %v3354 = vsub.s32 0, %v3353
    %v3355 = vrot.slane %v3350, %v3354
    %v3421 = vunpack.c.l.b16 %v3286
    %v3422 = vunpack.c.l.b16 %v3287
    %v3423 = vunpack.c.l.b16 %v3288
    %v3424 = vunpack.c.l.b16 %v3289
    %v3425 = vunpack.c.l.b16 %v3290
    %v3426 = vunpack.c.l.b16 %v3291
    %v3427 = vunpack.c.l.b16 %v3292
    %v3428 = vunpack.c.l.b16 %v3293
    %v3429 = vunpack.c.l.b16 %v3294
    %v3430 = vunpack.c.l.b16 %v3295
    %v3431 = vunpack.c.l.b16 %v3296
    %v3432 = vunpack.c.l.b16 %v3297
    %v3433 = vunpack.c.l.b16 %v3298
    %v3434 = vunpack.c.l.b16 %v3299
    %v3435 = vunpack.c.l.b16 %v3300
    %v3436 = vunpack.c.l.b16 %v3301
    %v3437 = vunpack.c.l.b16 %v3302
    %v3438 = vunpack.c.l.b16 %v3303
    %v3439 = vunpack.c.l.b16 %v3304
    %v3440 = vunpack.c.l.b16 %v3305
    %v3441 = vunpack.c.l.b16 %v3306
    %v3442 = vunpack.c.l.b16 %v3307
    %v3443 = vunpack.c.l.b16 %v3308
    %v3444 = vunpack.c.l.b16 %v3309
    %v3445 = vunpack.c.l.b16 %v3310
    %v3446 = vunpack.c.l.b16 %v3311
    %v3447 = vunpack.c.l.b16 %v3312
    %v3448 = vunpack.c.l.b16 %v3313
    %v3449 = vunpack.c.l.b16 %v3314
    %v3450 = vunpack.c.l.b16 %v3315
    %v3451 = vunpack.c.l.b16 %v3316
    %v3452 = vunpack.c.l.b16 %v3317
    %v3453 = vunpack.c.l.b16 %v3318
    %v3454 = vunpack.c.l.b16 %v3319
    %v3455 = vunpack.c.l.b16 %v3320
    %v3456 = vunpack.c.l.b16 %v3321
    %v3457 = vunpack.c.l.b16 %v3322
    %v3458 = vunpack.c.l.b16 %v3323
    %v3459 = vunpack.c.l.b16 %v3324
    %v3460 = vunpack.c.l.b16 %v3325
    %v3461 = vunpack.c.l.b16 %v3326
    %v3462 = vunpack.c.l.b16 %v3327
    %v3463 = vunpack.c.l.b16 %v3328
    %v3464 = vunpack.c.l.b16 %v3329
    %v3465 = vunpack.c.l.b16 %v3330
    %v3466 = vunpack.c.l.b16 %v3331
    %v3467 = vunpack.c.l.b16 %v3332
    %v3468 = vunpack.c.l.b16 %v3333
    %v3469 = vunpack.c.l.b16 %v3334
    %v3470 = vunpack.c.l.b16 %v3335
    %v3471 = vunpack.c.l.b16 %v3336
    %v3472 = vunpack.c.l.b16 %v3337
    %v3473 = vunpack.c.l.b16 %v3338
    %v3474 = vunpack.c.l.b16 %v3339
    %v3475 = vunpack.c.l.b16 %v3340
    %v3476 = vunpack.c.l.b16 %v3341
    %v3477 = vunpack.c.l.b16 %v3342
    %v3478 = vunpack.c.l.b16 %v3343
    %v3479 = vunpack.c.l.b16 %v3344
    %v3480 = vunpack.c.l.b16 %v3345
    %v3481 = vunpack.c.l.b16 %v3346
    %v3482 = vunpack.c.l.b16 %v3347
    %v3483 = vunpack.c.l.b16 %v3348
    %v3484 = vunpack.c.l.b16 %v3349
    %v3485 = vpack.c.b16 %v3422, %v3421
    %v3486 = vpack.c.b16 %v3424, %v3423
    %v3487 = vpack.c.b16 %v3426, %v3425
    %v3488 = vpack.c.b16 %v3428, %v3427
    %v3489 = vpack.c.b16 %v3430, %v3429
    %v3490 = vpack.c.b16 %v3432, %v3431
    %v3491 = vpack.c.b16 %v3434, %v3433
    %v3492 = vpack.c.b16 %v3436, %v3435
    %v3493 = vpack.c.b16 %v3438, %v3437
    %v3494 = vpack.c.b16 %v3440, %v3439
    %v3495 = vpack.c.b16 %v3442, %v3441
    %v3496 = vpack.c.b16 %v3444, %v3443
    %v3497 = vpack.c.b16 %v3446, %v3445
    %v3498 = vpack.c.b16 %v3448, %v3447
    %v3499 = vpack.c.b16 %v3450, %v3449
    %v3500 = vpack.c.b16 %v3452, %v3451
    %v3501 = vpack.c.b16 %v3454, %v3453
    %v3502 = vpack.c.b16 %v3456, %v3455
    %v3503 = vpack.c.b16 %v3458, %v3457
    %v3504 = vpack.c.b16 %v3460, %v3459
    %v3505 = vpack.c.b16 %v3462, %v3461
    %v3506 = vpack.c.b16 %v3464, %v3463
    %v3507 = vpack.c.b16 %v3466, %v3465
    %v3508 = vpack.c.b16 %v3468, %v3467
    %v3509 = vpack.c.b16 %v3470, %v3469
    %v3510 = vpack.c.b16 %v3472, %v3471
    %v3511 = vpack.c.b16 %v3474, %v3473
    %v3512 = vpack.c.b16 %v3476, %v3475
    %v3513 = vpack.c.b16 %v3478, %v3477
    %v3514 = vpack.c.b16 %v3480, %v3479
    %v3515 = vpack.c.b16 %v3482, %v3481
    %v3516 = vpack.c.b16 %v3484, %v3483
    %3549 = vmatprep.subr.bf16.mxu0 0
    %3550 = vmatpush1.bf16.msra.mxu0 %v3492
    %3551 = vmatprep.subr.bf16.mxu0 0
    %3552 = vmatpush1.bf16.msra.mxu0 %v3491
    %3553 = vmatprep.subr.bf16.mxu0 0
    %3554 = vmatpush1.bf16.msra.mxu0 %v3490
    %3555 = vmatprep.subr.bf16.mxu0 0
    %3556 = vmatpush1.bf16.msra.mxu0 %v3489
    %3557 = vmatprep.subr.bf16.mxu0 0
    %3558 = vmatpush1.bf16.msra.mxu0 %v3488
    %3559 = vmatprep.subr.bf16.mxu0 0
    %3560 = vmatpush1.bf16.msra.mxu0 %v3487
    %3561 = vmatprep.subr.bf16.mxu0 0
    %3562 = vmatpush1.bf16.msra.mxu0 %v3486
    %3563 = vmatprep.subr.bf16.mxu0 0
    %3564 = vmatpush1.bf16.msra.mxu0 %v3485
    %3565 = vmatprep.subr.bf16.mxu0 0
    %3566 = vmatpush2.bf16.msra.mxu0 %v3500
    %3567 = vmatprep.subr.bf16.mxu0 0
    %3568 = vmatpush2.bf16.msra.mxu0 %v3499
    %3569 = vmatprep.subr.bf16.mxu0 0
    %3570 = vmatpush2.bf16.msra.mxu0 %v3498
    %3571 = vmatprep.subr.bf16.mxu0 0
    %3572 = vmatpush2.bf16.msra.mxu0 %v3497
    %3573 = vmatprep.subr.bf16.mxu0 0
    %3574 = vmatpush2.bf16.msra.mxu0 %v3496
    %3575 = vmatprep.subr.bf16.mxu0 0
    %3576 = vmatpush2.bf16.msra.mxu0 %v3495
    %3577 = vmatprep.subr.bf16.mxu0 0
    %3578 = vmatpush2.bf16.msra.mxu0 %v3494
    %3579 = vmatprep.subr.bf16.mxu0 0
    %3580 = vmatpush2.bf16.msra.mxu0 %v3493
    %3581 = vmatprep.mubr.bf16.mxu0 %v3283
    %3582 = vmatmul.mubr.bf16.gmra.mxu0 %v3282
    %v3583 = vpop.f32.mrf.mxu0
    %v3584 = vadd.f32 %v3355, %v3583
    %v3585 = vpop.f32.mrf.mxu0
    %v3586 = vpop.f32.mrf.mxu0
    %v3587 = vpop.f32.mrf.mxu0
    %3588 = vdwg.mxu0
    %3589 = vmatprep.subr.bf16.mxu0 0
    %3590 = vmatpush1.bf16.msra.mxu0 %v3508
    %3591 = vmatprep.subr.bf16.mxu0 0
    %3592 = vmatpush1.bf16.msra.mxu0 %v3507
    %3593 = vmatprep.subr.bf16.mxu0 0
    %3594 = vmatpush1.bf16.msra.mxu0 %v3506
    %3595 = vmatprep.subr.bf16.mxu0 0
    %3596 = vmatpush1.bf16.msra.mxu0 %v3505
    %3597 = vmatprep.subr.bf16.mxu0 0
    %3598 = vmatpush1.bf16.msra.mxu0 %v3504
    %3599 = vmatprep.subr.bf16.mxu0 0
    %3600 = vmatpush1.bf16.msra.mxu0 %v3503
    %3601 = vmatprep.subr.bf16.mxu0 0
    %3602 = vmatpush1.bf16.msra.mxu0 %v3502
    %3603 = vmatprep.subr.bf16.mxu0 0
    %3604 = vmatpush1.bf16.msra.mxu0 %v3501
    %3605 = vmatprep.subr.bf16.mxu0 0
    %3606 = vmatpush2.bf16.msra.mxu0 %v3516
    %3607 = vmatprep.subr.bf16.mxu0 0
    %3608 = vmatpush2.bf16.msra.mxu0 %v3515
    %3609 = vmatprep.subr.bf16.mxu0 0
    %3610 = vmatpush2.bf16.msra.mxu0 %v3514
    %3611 = vmatprep.subr.bf16.mxu0 0
    %3612 = vmatpush2.bf16.msra.mxu0 %v3513
    %3613 = vmatprep.subr.bf16.mxu0 0
    %3614 = vmatpush2.bf16.msra.mxu0 %v3512
    %3615 = vmatprep.subr.bf16.mxu0 0
    %3616 = vmatpush2.bf16.msra.mxu0 %v3511
    %3617 = vmatprep.subr.bf16.mxu0 0
    %3618 = vmatpush2.bf16.msra.mxu0 %v3510
    %3619 = vmatprep.subr.bf16.mxu0 0
    %3620 = vmatpush2.bf16.msra.mxu0 %v3509
    %3621 = vmatprep.mubr.bf16.mxu0 %v3285
    %3622 = vmatmul.mubr.bf16.gmra.mxu0 %v3284
    %v3623 = vpop.f32.mrf.mxu0
    %v3624 = vadd.f32 %v3584, %v3623
    %v3625 = vpop.f32.mrf.mxu0
    %v3626 = vpop.f32.mrf.mxu0
    %v3627 = vpop.f32.mrf.mxu0
    %3628 = vdwg.mxu0
    %3629 = vst [vmem:[%s7] sm:$0xff] %v3624
    // Predicated region
    $region34: #{forward.3} parent=1 // pred_check
      _
    $region35: #{forward.3} parent=1 // pred_check_branch
      %3631 = sbr.rel (0) target = $region37
    $region36: #{forward.3} parent=1 // pred_region
      _
    $region37: #{forward.3} parent=1 // pred_fallthru
      _
    // Predicated region
    $region38: #{forward.3} parent=1 // pred_check
      _
    $region39: #{forward.3} parent=1 // pred_check_branch
      %3633 = sbr.rel (0) target = $region41
    $region40: #{forward.3} parent=1 // pred_region
      _
    $region41: #{forward.3} parent=1 // pred_fallthru
      _
    %3634 = vsyncpa [#allocation3], 1

// kernel: forward.2
$region0: #{forward.2}
  #allocation0 [shape = 'u32[]', space=smem, size = 0x4, offset = 0x4, fixed_abs, tag = 'smem constant byte address 0x4 - core index']
  #allocation1 [shape = 'u32[144,128]{1,0:T(1,128)}', space=vmem, size = 0x12000, scoped, tag = 'internal scratch']
  #allocation2 [shape = 'bf16[48,807]{1,0:T(8,128)(2,1)}', space=vmem, size = 0x15000, scoped, tag = 'scratch operand']
  #allocation3 [shape = 'bf16[324,141]{1,0:T(8,128)(2,1)}', space=vmem, size = 0x29000, scoped, tag = 'scratch operand']
  %s0 = inlined_call_operand.vmem [shape: bf16[2,3,900], index: 0, kind: input, shape index: {}]
  %s1 = inlined_call_operand.hbm [shape: bf16[36,48], index: 1, kind: input, shape index: {}]
  %s2 = inlined_call_operand.vmem [shape: f32[36,1], index: 2, kind: input, shape index: {}]
  %s3 = inlined_call_operand.vmem [shape: bf16[745,169], index: 3, kind: input, shape index: {}]
  %s4 = inlined_call_operand.hbm [shape: bf16[48,324], index: 4, kind: input, shape index: {}]
  %s5 = inlined_call_operand.vmem [shape: f32[48,1], index: 5, kind: input, shape index: {}]
  %s6 = inlined_call_operand.vmem [shape: bf16[113,25], index: 6, kind: input, shape index: {}]
  %s7 = inlined_call_operand.vmem [shape: bf16[2,48,25], index: 7, kind: output, shape index: {}]
  %s8 = sld [smem:[#allocation0]]
  $region69: #{forward.2} parent=0
    _
  %s10 = ssub.s32 1, %s8
  %s11 = scalar_select 0, %s10, %s8
  $region1: #{forward.2} parent=0
    #allocation4 [shape = 'u8[10240]{0}', space=vmem, size = 0x2800, scoped, tag = 'input window, operand 1, single buffered']
    #allocation5 [shape = 's32[2]{0}', space=sflag, size = 0x8, scoped, tag = 'scoped memory for forward.2']
    #allocation6 [shape = 'u8[36864]{0}', space=vmem, size = 0x9000, scoped, tag = 'input window, operand 4, single buffered']
    #allocation7 [shape = 's32[1]{0}', space=sflag, size = 0x4, scoped, tag = 'scoped memory for forward.2']
    %12 = vsyncpa [#allocation5], 0
    %13 = vsyncpa [#allocation7], 0
    loop: start=0, step=1, limit=4
    $region2: #{forward.2} parent=1 // loop_pre_header
      _
    $region3: #{forward.2} parent=1 // loop_header
      %s15 = sphi 0, %s19
      %p16 = scmp.ge.s32.totalorder %s15, 4
      %s25 = sphi 0, %s27
      %s28 = sphi 0, %s25
      %s29 = sphi 0, %s28
      %s45 = sphi 0, %s29
      %s49 = sphi 0, %s49
      %s51 = sphi 0, %s49
      %s52 = sphi 0, %s51
      %s66 = sphi 0, %s52
      %s70 = sphi 0, %s70
      %s72 = sphi 0, %s70
      %s73 = sphi 0, %s72
      %s87 = sphi 0, %s73
      %s91 = sphi 0, %s91
      %s93 = sphi 0, %s91
      %s94 = sphi 0, %s93
      %s108 = sphi 0, %s94
      %s112 = sphi 0, %s112
      %s114 = sphi 0, %s112
      %s115 = sphi 0, %s114
      %s129 = sphi 0, %s115
      %s133 = sphi 0, %s133
      %s135 = sphi 0, %s133
      %s136 = sphi 0, %s135
      %s150 = sphi 0, %s136
      %s154 = sphi 0, %s154
      %s156 = sphi 0, %s154
      %s157 = sphi 0, %s156
      %s171 = sphi 0, %s157
      %s177 = sphi 0, %s179
      %s180 = sphi 0, %s177
      %s181 = sphi 0, %s180
      %s197 = sphi 0, %s181
    $region4: #{forward.2} parent=1 // loop_header_branch
      %18 = sbr.rel (%p16) target = $region8
    $region5: #{forward.2} parent=1 // loop_body
      %s20 = ssub.s32 %s15, 1
      %s21 = ssub.s32 %s15, 2
      %s22 = sadd.s32 %s15, 1
      %s23 = ssub.s32 %s15, %s22
      %p24 = scmp.eq.s32.totalorder %s23, 0
      %s26 = sadd.s32 %s25, 1
      %s27 = scalar_select %p24, %s25, %s26
      %p30 = pneg %p24
      %p31 = scmp.eq.s32.totalorder %s15, 1
      %p32 = por %p30, %p31
      %p33 = scmp.ne.s32.totalorder %s25, %s28
      %p34 = scmp.eq.s32.totalorder %s15, 0
      %p35 = por %p33, %p34
      %p36 = scmp.ne.s32.totalorder %s25, %s28
      %p37 = scmp.eq.s32.totalorder %s20, 1
      %p38 = por %p36, %p37
      %p39 = scmp.ne.s32.totalorder %s28, %s29
      %p40 = scmp.eq.s32.totalorder %s20, 0
      %p41 = por %p39, %p40
      %p42 = scmp.ne.s32.totalorder %s28, %s29
      %p43 = scmp.eq.s32.totalorder %s21, 1
      %p44 = por %p42, %p43
      %p46 = scmp.ne.s32.totalorder %s29, %s45
      %p47 = scmp.eq.s32.totalorder %s21, 0
      %p48 = por %p46, %p47
      %s50 = sadd.s32 %s49, 1
      %p53 = scmp.eq.s32.totalorder %s15, 1
      %p54 = scmp.ne.s32.totalorder %s49, %s51
      %p55 = scmp.eq.s32.totalorder %s15, 0
      %p56 = por %p54, %p55
      %p57 = scmp.ne.s32.totalorder %s49, %s51
      %p58 = scmp.eq.s32.totalorder %s20, 1
      %p59 = por %p57, %p58
      %p60 = scmp.ne.s32.totalorder %s51, %s52
      %p61 = scmp.eq.s32.totalorder %s20, 0
      %p62 = por %p60, %p61
      %p63 = scmp.ne.s32.totalorder %s51, %s52
      %p64 = scmp.eq.s32.totalorder %s21, 1
      %p65 = por %p63, %p64
      %p67 = scmp.ne.s32.totalorder %s52, %s66
      %p68 = scmp.eq.s32.totalorder %s21, 0
      %p69 = por %p67, %p68
      %s71 = sadd.s32 %s70, 1
      %p74 = scmp.eq.s32.totalorder %s15, 1
      %p75 = scmp.ne.s32.totalorder %s70, %s72
      %p76 = scmp.eq.s32.totalorder %s15, 0
      %p77 = por %p75, %p76
      %p78 = scmp.ne.s32.totalorder %s70, %s72
      %p79 = scmp.eq.s32.totalorder %s20, 1
      %p80 = por %p78, %p79
      %p81 = scmp.ne.s32.totalorder %s72, %s73
      %p82 = scmp.eq.s32.totalorder %s20, 0
      %p83 = por %p81, %p82
      %p84 = scmp.ne.s32.totalorder %s72, %s73
      %p85 = scmp.eq.s32.totalorder %s21, 1
      %p86 = por %p84, %p85
      %p88 = scmp.ne.s32.totalorder %s73, %s87
      %p89 = scmp.eq.s32.totalorder %s21, 0
      %p90 = por %p88, %p89
      %s92 = sadd.s32 %s91, 1
      %p95 = scmp.eq.s32.totalorder %s15, 1
      %p96 = scmp.ne.s32.totalorder %s91, %s93
      %p97 = scmp.eq.s32.totalorder %s15, 0
      %p98 = por %p96, %p97
      %p99 = scmp.ne.s32.totalorder %s91, %s93
      %p100 = scmp.eq.s32.totalorder %s20, 1
      %p101 = por %p99, %p100
      %p102 = scmp.ne.s32.totalorder %s93, %s94
      %p103 = scmp.eq.s32.totalorder %s20, 0
      %p104 = por %p102, %p103
      %p105 = scmp.ne.s32.totalorder %s93, %s94
      %p106 = scmp.eq.s32.totalorder %s21, 1
      %p107 = por %p105, %p106
      %p109 = scmp.ne.s32.totalorder %s94, %s108
      %p110 = scmp.eq.s32.totalorder %s21, 0
      %p111 = por %p109, %p110
      %s113 = sadd.s32 %s112, 1
      %p116 = scmp.eq.s32.totalorder %s15, 1
      %p117 = scmp.ne.s32.totalorder %s112, %s114
      %p118 = scmp.eq.s32.totalorder %s15, 0
      %p119 = por %p117, %p118
      %p120 = scmp.ne.s32.totalorder %s112, %s114
      %p121 = scmp.eq.s32.totalorder %s20, 1
      %p122 = por %p120, %p121
      %p123 = scmp.ne.s32.totalorder %s114, %s115
      %p124 = scmp.eq.s32.totalorder %s20, 0
      %p125 = por %p123, %p124
      %p126 = scmp.ne.s32.totalorder %s114, %s115
      %p127 = scmp.eq.s32.totalorder %s21, 1
      %p128 = por %p126, %p127
      %p130 = scmp.ne.s32.totalorder %s115, %s129
      %p131 = scmp.eq.s32.totalorder %s21, 0
      %p132 = por %p130, %p131
      %s134 = sadd.s32 %s133, 1
      %p137 = scmp.eq.s32.totalorder %s15, 1
      %p138 = scmp.ne.s32.totalorder %s133, %s135
      %p139 = scmp.eq.s32.totalorder %s15, 0
      %p140 = por %p138, %p139
      %p141 = scmp.ne.s32.totalorder %s133, %s135
      %p142 = scmp.eq.s32.totalorder %s20, 1
      %p143 = por %p141, %p142
      %p144 = scmp.ne.s32.totalorder %s135, %s136
      %p145 = scmp.eq.s32.totalorder %s20, 0
      %p146 = por %p144, %p145
      %p147 = scmp.ne.s32.totalorder %s135, %s136
      %p148 = scmp.eq.s32.totalorder %s21, 1
      %p149 = por %p147, %p148
      %p151 = scmp.ne.s32.totalorder %s136, %s150
      %p152 = scmp.eq.s32.totalorder %s21, 0
      %p153 = por %p151, %p152
      %s155 = sadd.s32 %s154, 1
      %p158 = scmp.eq.s32.totalorder %s15, 1
      %p159 = scmp.ne.s32.totalorder %s154, %s156
      %p160 = scmp.eq.s32.totalorder %s15, 0
      %p161 = por %p159, %p160
      %p162 = scmp.ne.s32.totalorder %s154, %s156
      %p163 = scmp.eq.s32.totalorder %s20, 1
      %p164 = por %p162, %p163
      %p165 = scmp.ne.s32.totalorder %s156, %s157
      %p166 = scmp.eq.s32.totalorder %s20, 0
      %p167 = por %p165, %p166
      %p168 = scmp.ne.s32.totalorder %s156, %s157
      %p169 = scmp.eq.s32.totalorder %s21, 1
      %p170 = por %p168, %p169
      %p172 = scmp.ne.s32.totalorder %s157, %s171
      %p173 = scmp.eq.s32.totalorder %s21, 0
      %p174 = por %p172, %p173
      %s175 = ssub.s32 %s15, %s22
      %p176 = scmp.eq.s32.totalorder %s175, 0
      %s178 = sadd.s32 %s177, 1
      %s179 = scalar_select %p176, %s177, %s178
      %p182 = pneg %p176
      %p183 = scmp.eq.s32.totalorder %s15, 1
      %p184 = por %p182, %p183
      %p185 = scmp.ne.s32.totalorder %s177, %s180
      %p186 = scmp.eq.s32.totalorder %s15, 0
      %p187 = por %p185, %p186
      %p188 = scmp.ne.s32.totalorder %s177, %s180
      %p189 = scmp.eq.s32.totalorder %s20, 1
      %p190 = por %p188, %p189
      %p191 = scmp.ne.s32.totalorder %s180, %s181
      %p192 = scmp.eq.s32.totalorder %s20, 0
      %p193 = por %p191, %p192
      %p194 = scmp.ne.s32.totalorder %s180, %s181
      %p195 = scmp.eq.s32.totalorder %s21, 1
      %p196 = por %p194, %p195
      %p198 = scmp.ne.s32.totalorder %s181, %s197
      %p199 = scmp.eq.s32.totalorder %s21, 0
      %p200 = por %p198, %p199
      %p201 = scmp.le.s32.totalorder 1, %s15
      %p202 = scmp.lt.s32.totalorder %s15, 3
      %p203 = pnand %p201, %p202
      %p204 = pneg %p203
      // Predicated region
      $region9: #{forward.2} parent=5 // pred_check
        _
      $region10: #{forward.2} parent=5 // pred_check_branch
        %206 = sbr.rel (%p203) target = $region12
      $region11: #{forward.2} parent=5 // pred_region
        %s207 = ssub.s32 %s15, 1
        // Predicated region
        $region13: #{forward.2} parent=11 // pred_check
          %p208 = pneg %p62
        $region14: #{forward.2} parent=11 // pred_check_branch
          %210 = sbr.rel (%p208) target = $region16
        $region15: #{forward.2} parent=11 // pred_region
          %s212 = ssub.s32 320, 320
          %213 = vsyncadd [#allocation5], %s212
          %s214 = sshll.u32 [#allocation4], 4
          %s215 = int_to_ptr.vmem [resolvable:$true] %s214
          %220 = dma.hbm_to_vmem [thread:$0]  %s1, 320, %s215, [#allocation5], 64, 64, 4
        $region16: #{forward.2} parent=11 // pred_fallthru
          _
        // Predicated region
        $region17: #{forward.2} parent=11 // pred_check
          %p221 = pneg %p83
        $region18: #{forward.2} parent=11 // pred_check_branch
          %223 = sbr.rel (%p221) target = $region20
        $region19: #{forward.2} parent=11 // pred_region
          _
        $region20: #{forward.2} parent=11 // pred_fallthru
          _
        // Predicated region
        $region21: #{forward.2} parent=11 // pred_check
          %p224 = pneg %p104
        $region22: #{forward.2} parent=11 // pred_check_branch
          %226 = sbr.rel (%p224) target = $region24
        $region23: #{forward.2} parent=11 // pred_region
          _
        $region24: #{forward.2} parent=11 // pred_fallthru
          _
        // Predicated region
        $region25: #{forward.2} parent=11 // pred_check
          %p227 = pneg %p125
        $region26: #{forward.2} parent=11 // pred_check_branch
          %229 = sbr.rel (%p227) target = $region28
        $region27: #{forward.2} parent=11 // pred_region
          %s231 = ssub.s32 1152, 1152
          %232 = vsyncadd [#allocation7], %s231
          %s233 = sshll.u32 [#allocation6], 4
          %s234 = int_to_ptr.vmem [resolvable:$true] %s233
          %239 = dma.hbm_to_vmem [thread:$0]  %s4, 1152, %s234, [#allocation7], 192, 192, 12
        $region28: #{forward.2} parent=11 // pred_fallthru
          _
        // Predicated region
        $region29: #{forward.2} parent=11 // pred_check
          %p240 = pneg %p146
        $region30: #{forward.2} parent=11 // pred_check_branch
          %242 = sbr.rel (%p240) target = $region32
        $region31: #{forward.2} parent=11 // pred_region
          _
        $region32: #{forward.2} parent=11 // pred_fallthru
          _
        // Predicated region
        $region33: #{forward.2} parent=11 // pred_check
          %p243 = pneg %p167
        $region34: #{forward.2} parent=11 // pred_check_branch
          %245 = sbr.rel (%p243) target = $region36
        $region35: #{forward.2} parent=11 // pred_region
          _
        $region36: #{forward.2} parent=11 // pred_fallthru
          _
      $region12: #{forward.2} parent=5 // pred_fallthru
        _
      %p246 = scmp.lt.s32.totalorder %s15, 2
      // Predicated region
      $region37: #{forward.2} parent=5 // pred_check
        %p247 = pneg %p246
      $region38: #{forward.2} parent=5 // pred_check_branch
        %249 = sbr.rel (%p247) target = $region40
      $region39: #{forward.2} parent=5 // pred_region
        // Predicated region
        $region41: #{forward.2} parent=39 // pred_check
          %p250 = pneg %p35
        $region42: #{forward.2} parent=39 // pred_check_branch
          %252 = sbr.rel (%p250) target = $region44
        $region43: #{forward.2} parent=39 // pred_region
          %p253 = scmp.lt.s32.totalorder %s15, 1
          %s254 = scalar_select %p253, %s15, 1
          %s255 = smul.addr %s254, 8
          %s256 = smul.addr %s255, 2
          %s257 = scalar_lea.vmem %s0, %s256
        $region44: #{forward.2} parent=39 // pred_fallthru
          _
      $region40: #{forward.2} parent=5 // pred_fallthru
        _
      %p258 = scmp.le.s32.totalorder 1, %s15
      %p259 = scmp.lt.s32.totalorder %s15, 3
      %p260 = pnand %p258, %p259
      %p261 = pneg %p260
      // Predicated region
      $region45: #{forward.2} parent=5 // pred_check
        _
      $region46: #{forward.2} parent=5 // pred_check_branch
        %263 = sbr.rel (%p260) target = $region48
      $region47: #{forward.2} parent=5 // pred_region
        %s264 = ssub.s32 %s15, 1
        // Predicated region
        $region49: #{forward.2} parent=47 // pred_check
          %p265 = pneg %p62
        $region50: #{forward.2} parent=47 // pred_check_branch
          %267 = sbr.rel (%p265) target = $region52
        $region51: #{forward.2} parent=47 // pred_region
          %268 = dma.done [#allocation5], 320
        $region52: #{forward.2} parent=47 // pred_fallthru
          _
        // Predicated region
        $region53: #{forward.2} parent=47 // pred_check
          %p269 = pneg %p125
        $region54: #{forward.2} parent=47 // pred_check_branch
          %271 = sbr.rel (%p269) target = $region56
        $region55: #{forward.2} parent=47 // pred_region
          %272 = dma.done [#allocation7], 1152
        $region56: #{forward.2} parent=47 // pred_fallthru
          _
        %p273 = scmp.lt.s32.totalorder %s20, 1
        %s274 = scalar_select %p273, %s20, 1
        %s275 = smul.addr %s274, 8
        %s276 = smul.addr %s275, 2
        %s277 = scalar_lea.vmem %s0, %s276
        %p278 = pneg %p41
        %p279 = pneg %p38
        %p280 = pneg %p62
        %p281 = pneg %p59
        %p282 = pneg %p83
        %p283 = pneg %p80
        %p284 = pneg %p104
        %p285 = pneg %p101
        %p286 = pneg %p125
        %p287 = pneg %p122
        %p288 = pneg %p146
        %p289 = pneg %p143
        %p290 = pneg %p167
        %p291 = pneg %p164
        %p292 = pneg %p193
        %p293 = pneg %p190
        %p294 = scmp.lt.s32.totalorder %s20, 1
        %s295 = scalar_select %p294, %s20, 1
        %s296 = smul.addr %s295, 6
        %s297 = smul.addr %s296, 4
        %s298 = scalar_lea.vmem %s7, %s297
        %p299 = scmp.lt.s32.totalorder %s20, 1
        %s300 = scalar_select %p299, %s20, 1
        %s301 = smul.addr %s300, 8
        %s302 = smul.addr %s301, 2
        %s303 = scalar_lea.vmem %s0, %s302
        %p304 = scmp.lt.s32.totalorder %s20, 1
        %s305 = scalar_select %p304, %s20, 1
        %s306 = smul.addr %s305, 6
        %s307 = smul.addr %s306, 4
        %s308 = scalar_lea.vmem %s7, %s307
        %v310 = vld [vmem:[#allocation4] sm:$0xf]
        %v311 = vld [vmem:[#allocation4 + $0x4] sm:$0xf]
        %v312 = vld [vmem:[#allocation4 + $0x8] sm:$0xf]
        %v313 = vld [vmem:[#allocation4 + $0xc] sm:$0xf]
        %v314 = vld [vmem:[#allocation4 + $0x10] sm:$0x3]
        %v315 = vld [vmem:[%s2] sm:$0xff]
        %v316 = vld [vmem:[%s2 + $0x8] sm:$0xff]
        %v317 = vld [vmem:[%s2 + $0x10] sm:$0xff]
        %v318 = vld [vmem:[%s2 + $0x18] sm:$0xff]
        %v319 = vld [vmem:[%s2 + $0x20] sm:$0xf]
        %v320 = vld [vmem:[%s3] sm:$0xff]
        %v321 = vld [vmem:[%s3 + $0x8] sm:$0xff]
        %v322 = vld [vmem:[%s3 + $0x10] sm:$0xff]
        %v323 = vld [vmem:[%s3 + $0x18] sm:$0xff]
        %v324 = vld [vmem:[%s3 + $0x20] sm:$0xff]
        %v325 = vld [vmem:[%s3 + $0x28] sm:$0xff]
        %v326 = vld [vmem:[%s3 + $0x30] sm:$0xff]
        %v327 = vld [vmem:[%s3 + $0x38] sm:$0xff]
        %v328 = vld [vmem:[%s3 + $0x40] sm:$0xff]
        %v329 = vld [vmem:[%s3 + $0x48] sm:$0xff]
        %v330 = vld [vmem:[%s3 + $0x50] sm:$0xff]
        %v331 = vld [vmem:[%s3 + $0x58] sm:$0xff]
        %v332 = vld [vmem:[%s3 + $0x60] sm:$0xff]
        %v333 = vld [vmem:[%s3 + $0x68] sm:$0xff]
        %v334 = vld [vmem:[%s3 + $0x70] sm:$0xff]
        %v335 = vld [vmem:[%s3 + $0x78] sm:$0xff]
        %v336 = vld [vmem:[%s3 + $0x80] sm:$0xff]
        %v337 = vld [vmem:[%s3 + $0x88] sm:$0xff]
        %v338 = vld [vmem:[%s3 + $0x90] sm:$0xff]
        %v339 = vld [vmem:[%s3 + $0x98] sm:$0xff]
        %v340 = vld [vmem:[%s3 + $0xa0] sm:$0xff]
        %v341 = vld [vmem:[%s3 + $0xa8] sm:$0xff]
        %v342 = vld [vmem:[%s3 + $0xb0] sm:$0xff]
        %v343 = vld [vmem:[%s3 + $0xb8] sm:$0xff]
        %v344 = vld [vmem:[%s3 + $0xc0] sm:$0xff]
        %v345 = vld [vmem:[%s3 + $0xc8] sm:$0xff]
        %v346 = vld [vmem:[%s3 + $0xd0] sm:$0xff]
        %v347 = vld [vmem:[%s3 + $0xd8] sm:$0xff]
        %v348 = vld [vmem:[%s3 + $0xe0] sm:$0xff]
        %v349 = vld [vmem:[%s3 + $0xe8] sm:$0xff]
        %v350 = vld [vmem:[%s3 + $0xf0] sm:$0xff]
        %v351 = vld [vmem:[%s3 + $0xf8] sm:$0xff]
        %v352 = vld [vmem:[%s3 + $0x100] sm:$0xff]
        %v353 = vld [vmem:[%s3 + $0x108] sm:$0xff]
        %v354 = vld [vmem:[%s3 + $0x110] sm:$0xff]
        %v355 = vld [vmem:[%s3 + $0x118] sm:$0xff]
        %v356 = vld [vmem:[%s3 + $0x120] sm:$0xff]
        %v357 = vld [vmem:[%s3 + $0x128] sm:$0xff]
        %v358 = vld [vmem:[%s3 + $0x130] sm:$0xff]
        %v359 = vld [vmem:[%s3 + $0x138] sm:$0xff]
        %v360 = vld [vmem:[%s3 + $0x140] sm:$0xff]
        %v361 = vld [vmem:[%s3 + $0x148] sm:$0xff]
        %v362 = vld [vmem:[%s3 + $0x150] sm:$0xff]
        %v363 = vld [vmem:[%s3 + $0x158] sm:$0xff]
        %v364 = vld [vmem:[%s3 + $0x160] sm:$0xff]
        %v365 = vld [vmem:[%s3 + $0x168] sm:$0xff]
        %v366 = vld [vmem:[%s3 + $0x170] sm:$0xff]
        %v367 = vld [vmem:[%s3 + $0x178] sm:$0xff]
        %v368 = vld [vmem:[%s3 + $0x180] sm:$0xff]
        %v369 = vld [vmem:[%s3 + $0x188] sm:$0xff]
        %v370 = vld [vmem:[%s3 + $0x190] sm:$0xff]
        %v371 = vld [vmem:[%s3 + $0x198] sm:$0xff]
        %v372 = vld [vmem:[%s3 + $0x1a0] sm:$0xff]
        %v373 = vld [vmem:[%s3 + $0x1a8] sm:$0xff]
        %v374 = vld [vmem:[%s3 + $0x1b0] sm:$0xff]
        %v375 = vld [vmem:[%s3 + $0x1b8] sm:$0xff]
        %v376 = vld [vmem:[%s3 + $0x1c0] sm:$0xff]
        %v377 = vld [vmem:[%s3 + $0x1c8] sm:$0xff]
        %v378 = vld [vmem:[%s3 + $0x1d0] sm:$0xff]
        %v379 = vld [vmem:[%s3 + $0x1d8] sm:$0xff]
        %v380 = vld [vmem:[%s3 + $0x1e0] sm:$0xff]
        %v381 = vld [vmem:[%s3 + $0x1e8] sm:$0xff]
        %v382 = vld [vmem:[%s3 + $0x1f0] sm:$0xff]
        %v383 = vld [vmem:[%s3 + $0x1f8] sm:$0xff]
        %v384 = vld [vmem:[%s3 + $0x200] sm:$0xff]
        %v385 = vld [vmem:[%s3 + $0x208] sm:$0xff]
        %v386 = vld [vmem:[%s3 + $0x210] sm:$0xff]
        %v387 = vld [vmem:[%s3 + $0x218] sm:$0xff]
        %v388 = vld [vmem:[%s3 + $0x220] sm:$0xff]
        %v389 = vld [vmem:[%s3 + $0x228] sm:$0xff]
        %v390 = vld [vmem:[%s3 + $0x230] sm:$0xff]
        %v391 = vld [vmem:[%s3 + $0x238] sm:$0xff]
        %v392 = vld [vmem:[%s3 + $0x240] sm:$0xff]
        %v393 = vld [vmem:[%s3 + $0x248] sm:$0xff]
        %v394 = vld [vmem:[%s3 + $0x250] sm:$0xff]
        %v395 = vld [vmem:[%s3 + $0x258] sm:$0xff]
        %v396 = vld [vmem:[%s3 + $0x260] sm:$0xff]
        %v397 = vld [vmem:[%s3 + $0x268] sm:$0xff]
        %v398 = vld [vmem:[%s3 + $0x270] sm:$0xff]
        %v399 = vld [vmem:[%s3 + $0x278] sm:$0xff]
        %v400 = vld [vmem:[%s3 + $0x280] sm:$0xff]
        %v401 = vld [vmem:[%s3 + $0x288] sm:$0xff]
        %v402 = vld [vmem:[%s3 + $0x290] sm:$0xff]
        %v403 = vld [vmem:[%s3 + $0x298] sm:$0xff]
        %v404 = vld [vmem:[%s3 + $0x2a0] sm:$0xff]
        %v405 = vld [vmem:[%s3 + $0x2a8] sm:$0xff]
        %v406 = vld [vmem:[%s3 + $0x2b0] sm:$0xff]
        %v407 = vld [vmem:[%s3 + $0x2b8] sm:$0xff]
        %v408 = vld [vmem:[%s3 + $0x2c0] sm:$0xff]
        %v409 = vld [vmem:[%s3 + $0x2c8] sm:$0xff]
        %v410 = vld [vmem:[%s3 + $0x2d0] sm:$0xff]
        %v411 = vld [vmem:[%s3 + $0x2d8] sm:$0xff]
        %v412 = vld [vmem:[%s3 + $0x2e0] sm:$0xff]
        %v413 = vld [vmem:[%s3 + $0x2e8] sm:$0x11]
        %v414 = vld [vmem:[#allocation6] sm:$0xff]
        %v415 = vld [vmem:[#allocation6 + $0x8] sm:$0xf]
        %v416 = vld [vmem:[#allocation6 + $0xc] sm:$0xff]
        %v417 = vld [vmem:[#allocation6 + $0x14] sm:$0xf]
        %v418 = vld [vmem:[#allocation6 + $0x18] sm:$0xff]
        %v419 = vld [vmem:[#allocation6 + $0x20] sm:$0xf]
        %v420 = vld [vmem:[#allocation6 + $0x24] sm:$0xff]
        %v421 = vld [vmem:[#allocation6 + $0x2c] sm:$0xf]
        %v422 = vld [vmem:[#allocation6 + $0x30] sm:$0xff]
        %v423 = vld [vmem:[#allocation6 + $0x38] sm:$0xf]
        %v424 = vld [vmem:[#allocation6 + $0x3c] sm:$0xff]
        %v425 = vld [vmem:[#allocation6 + $0x44] sm:$0xf]
        %v426 = vld [vmem:[%s5] sm:$0xff]
        %v427 = vld [vmem:[%s5 + $0x8] sm:$0xff]
        %v428 = vld [vmem:[%s5 + $0x10] sm:$0xff]
        %v429 = vld [vmem:[%s5 + $0x18] sm:$0xff]
        %v430 = vld [vmem:[%s5 + $0x20] sm:$0xff]
        %v431 = vld [vmem:[%s5 + $0x28] sm:$0xff]
        %v432 = vld [vmem:[%s6] sm:$0xf]
        %v433 = vld [vmem:[%s6 + $0x4] sm:$0xf]
        %v434 = vld [vmem:[%s6 + $0x8] sm:$0xf]
        %v435 = vld [vmem:[%s6 + $0xc] sm:$0xf]
        %v436 = vld [vmem:[%s6 + $0x10] sm:$0xf]
        %v437 = vld [vmem:[%s6 + $0x14] sm:$0xf]
        %v438 = vld [vmem:[%s6 + $0x18] sm:$0xf]
        %v439 = vld [vmem:[%s6 + $0x1c] sm:$0xf]
        %v440 = vld [vmem:[%s6 + $0x20] sm:$0xf]
        %v441 = vld [vmem:[%s6 + $0x24] sm:$0xf]
        %v442 = vld [vmem:[%s6 + $0x28] sm:$0xf]
        %v443 = vld [vmem:[%s6 + $0x2c] sm:$0xf]
        %v444 = vld [vmem:[%s6 + $0x30] sm:$0xf]
        %v445 = vld [vmem:[%s6 + $0x34] sm:$0xf]
        %v446 = vld [vmem:[%s6 + $0x38] sm:$0x1]
        %v447 = vld [vmem:[%s303] sm:$0xff]
        %v448 = vld [vmem:[%s303 + $0x8] sm:$0x3f]
        %v451 = vcombine.high %v447, %v447
        %v453 = vunpack.c.l.s4 1983009808
        %v454 = vunpack.c.0.s8 %v453
        %v455 = vlaneseq
        %v456 = vshrl.u32 %v455, 7
        %v457 = vsub.s32 %v454, %v456
        %v458 = vrot.slane %v447, %v457
        %v460 = vunpack.c.l.s4 1983009808
        %v461 = vunpack.c.0.s8 %v460
        %v462 = vlaneseq
        %v463 = vshrl.u32 %v462, 7
        %v464 = vsub.s32 %v461, %v463
        %v465 = vrot.slane %v451, %v464
        %v466 = vcombine.high %v448, %v448
        %v468 = vunpack.c.l.s4 1983009808
        %v469 = vunpack.c.0.s8 %v468
        %v470 = vlaneseq
        %v471 = vshrl.u32 %v470, 7
        %v472 = vsub.s32 %v469, %v471
        %v473 = vrot.slane %v448, %v472
        %v475 = vunpack.c.l.s4 1983009808
        %v476 = vunpack.c.0.s8 %v475
        %v477 = vlaneseq
        %v478 = vshrl.u32 %v477, 7
        %v479 = vsub.s32 %v476, %v478
        %v480 = vrot.slane %v466, %v479
        %vm485 = vcmask 1041408
        %vm486 = vsmask.f32 1280
        %vm487 = vmand %vm485, %vm486
        %vm488 = vcmask 1045508
        %vm489 = vsmask.f32 5376
        %vm490 = vmand %vm488, %vm489
        %vm491 = vmor %vm490, %vm487
        %v492 = vld [vmem:[#allocation2] sm:$0x33]
        %v493 = vsel %vm491, %v458, %v492
        %494 = vst [vmem:[#allocation2] sm:$0x33] %v493
        %v495 = vld [vmem:[#allocation2 + $0x8] sm:$0x33]
        %v496 = vsel %vm491, %v465, %v495
        %497 = vst [vmem:[#allocation2 + $0x8] sm:$0x33] %v496
        %v498 = vld [vmem:[#allocation2 + $0x10] sm:$0x33]
        %v499 = vsel %vm491, %v473, %v498
        %500 = vst [vmem:[#allocation2 + $0x10] sm:$0x33] %v499
        %vm501 = vcmask 312320
        %vm502 = vmand %vm501, %vm486
        %v503 = vld [vmem:[#allocation2 + $0x18] sm:$0x3]
        %v504 = vsel %vm502, %v480, %v503
        %505 = vst [vmem:[#allocation2 + $0x18] sm:$0x3] %v504
        %v506 = vld [vmem:[%s303] sm:$0xff]
        %v507 = vld [vmem:[%s303 + $0x8] sm:$0x3f]
        %v510 = vcombine.high %v506, %v506
        %v512 = vunpack.c.l.s4 1983009808
        %v513 = vunpack.c.0.s8 %v512
        %v514 = vlaneseq
        %v515 = vshrl.u32 %v514, 7
        %v516 = vsub.s32 %v513, %v515
        %v517 = vrot.slane %v506, %v516
        %v519 = vunpack.c.l.s4 1983009808
        %v520 = vunpack.c.0.s8 %v519
        %v521 = vlaneseq
        %v522 = vshrl.u32 %v521, 7
        %v523 = vsub.s32 %v520, %v522
        %v524 = vrot.slane %v510, %v523
        %v525 = vcombine.high %v507, %v507
        %v527 = vunpack.c.l.s4 1983009808
        %v528 = vunpack.c.0.s8 %v527
        %v529 = vlaneseq
        %v530 = vshrl.u32 %v529, 7
        %v531 = vsub.s32 %v528, %v530
        %v532 = vrot.slane %v507, %v531
        %v534 = vunpack.c.l.s4 1983009808
        %v535 = vunpack.c.0.s8 %v534
        %v536 = vlaneseq
        %v537 = vshrl.u32 %v536, 7
        %v538 = vsub.s32 %v535, %v537
        %v539 = vrot.slane %v525, %v538
        %v541 = vshrl.u32 %v517, 16
        %v543 = vrot.slane %v541, 6
        %v544 = vshll.u32 %v517, 16
        %v546 = vrot.slane %v544, 7
        %v547 = vor.u32 %v543, %v546
        %v549 = vshrl.u32 %v524, 16
        %v551 = vrot.slane %v549, 6
        %v552 = vshll.u32 %v524, 16
        %v554 = vrot.slane %v552, 7
        %v555 = vor.u32 %v551, %v554
        %v557 = vshrl.u32 %v532, 16
        %v559 = vrot.slane %v557, 6
        %v560 = vshll.u32 %v532, 16
        %v562 = vrot.slane %v560, 7
        %v563 = vor.u32 %v559, %v562
        %v565 = vshrl.u32 %v539, 16
        %v567 = vrot.slane %v565, 6
        %v568 = vshll.u32 %v539, 16
        %v570 = vrot.slane %v568, 7
        %v571 = vor.u32 %v567, %v570
        %572 = vrot.lane.b32.xlu0 %v547, 127
        %v573 = vpop.permute.xlu0 %572
        %574 = vrot.lane.b32.xlu0 %v555, 127
        %v575 = vpop.permute.xlu0 %574
        %576 = vrot.lane.b32.xlu0 %v563, 127
        %v577 = vpop.permute.xlu0 %576
        %578 = vrot.lane.b32.xlu0 %v571, 127
        %v579 = vpop.permute.xlu0 %578
        %v580 = vrot.slane %v573, 4
        %v581 = vrot.slane %v575, 4
        %v582 = vrot.slane %v577, 4
        %v583 = vrot.slane %v579, 4
        %vm584 = vcmask 1043456
        %v585 = vsel %vm584, %v580, %v581
        %vm586 = vcmask 1039360
        %v587 = vsel %vm586, %v573, %v585
        %v588 = vsel %vm584, %v581, %v582
        %v589 = vsel %vm586, %v575, %v588
        %v590 = vsel %vm584, %v582, %v583
        %v591 = vsel %vm586, %v577, %v590
        %vm596 = vcmask 1042433
        %vm597 = vsmask.f32 7942
        %vm598 = vmand %vm596, %vm597
        %vm599 = vcmask 1046533
        %vm600 = vsmask.f32 7958
        %vm601 = vmand %vm599, %vm600
        %vm602 = vmor %vm601, %vm598
        %v603 = vld [vmem:[#allocation2] sm:$0x66]
        %v604 = vsel %vm602, %v587, %v603
        %605 = vst [vmem:[#allocation2] sm:$0x66] %v604
        %v606 = vld [vmem:[#allocation2 + $0x8] sm:$0x66]
        %v607 = vsel %vm602, %v589, %v606
        %608 = vst [vmem:[#allocation2 + $0x8] sm:$0x66] %v607
        %v609 = vld [vmem:[#allocation2 + $0x10] sm:$0x66]
        %v610 = vsel %vm602, %v591, %v609
        %611 = vst [vmem:[#allocation2 + $0x10] sm:$0x66] %v610
        %vm612 = vcmask 313345
        %vm613 = vmand %vm612, %vm597
        %v614 = vld [vmem:[#allocation2 + $0x18] sm:$0x6]
        %v615 = vsel %vm613, %v579, %v614
        %616 = vst [vmem:[#allocation2 + $0x18] sm:$0x6] %v615
        %v617 = vld [vmem:[%s303] sm:$0xff]
        %v618 = vld [vmem:[%s303 + $0x8] sm:$0x3f]
        %v621 = vcombine.high %v617, %v617
        %v623 = vunpack.c.l.s4 1983009808
        %v624 = vunpack.c.0.s8 %v623
        %v625 = vlaneseq
        %v626 = vshrl.u32 %v625, 7
        %v627 = vsub.s32 %v624, %v626
        %v628 = vrot.slane %v617, %v627
        %v630 = vunpack.c.l.s4 1983009808
        %v631 = vunpack.c.0.s8 %v630
        %v632 = vlaneseq
        %v633 = vshrl.u32 %v632, 7
        %v634 = vsub.s32 %v631, %v633
        %v635 = vrot.slane %v621, %v634
        %v636 = vcombine.high %v618, %v618
        %v638 = vunpack.c.l.s4 1983009808
        %v639 = vunpack.c.0.s8 %v638
        %v640 = vlaneseq
        %v641 = vshrl.u32 %v640, 7
        %v642 = vsub.s32 %v639, %v641
        %v643 = vrot.slane %v618, %v642
        %v645 = vunpack.c.l.s4 1983009808
        %v646 = vunpack.c.0.s8 %v645
        %v647 = vlaneseq
        %v648 = vshrl.u32 %v647, 7
        %v649 = vsub.s32 %v646, %v648
        %v650 = vrot.slane %v636, %v649
        %v651 = vrot.slane %v628, 5
        %v652 = vrot.slane %v635, 5
        %v653 = vrot.slane %v643, 5
        %v654 = vrot.slane %v650, 5
        %v655 = vrot.slane %v651, 4
        %v656 = vrot.slane %v652, 4
        %v657 = vrot.slane %v653, 4
        %v658 = vrot.slane %v654, 4
        %659 = vrot.lane.b32.xlu0 %v651, 126
        %v660 = vpop.permute.xlu0 %659
        %661 = vrot.lane.b32.xlu0 %v652, 126
        %v662 = vpop.permute.xlu0 %661
        %663 = vrot.lane.b32.xlu0 %v653, 126
        %v664 = vpop.permute.xlu0 %663
        %665 = vrot.lane.b32.xlu0 %v654, 126
        %v666 = vpop.permute.xlu0 %665
        %667 = vrot.lane.b32.xlu0 %v655, 126
        %v668 = vpop.permute.xlu0 %667
        %669 = vrot.lane.b32.xlu0 %v656, 126
        %v670 = vpop.permute.xlu0 %669
        %671 = vrot.lane.b32.xlu0 %v657, 126
        %v672 = vpop.permute.xlu0 %671
        %673 = vrot.lane.b32.xlu0 %v658, 126
        %v674 = vpop.permute.xlu0 %673
        %v675 = vrot.slane %v660, 4
        %v676 = vrot.slane %v662, 4
        %v677 = vrot.slane %v664, 4
        %v678 = vrot.slane %v666, 4
        %v679 = vrot.slane %v668, 4
        %v680 = vrot.slane %v670, 4
        %v681 = vrot.slane %v672, 4
        %v682 = vrot.slane %v674, 4
        %v683 = vsel %vm584, %v675, %v676
        %vm684 = vcmask 1031168
        %v685 = vsel %vm684, %v660, %v683
        %v686 = vsel %vm584, %v676, %v677
        %v687 = vsel %vm684, %v662, %v686
        %v688 = vsel %vm584, %v677, %v678
        %v689 = vsel %vm684, %v664, %v688
        %v690 = vsel %vm584, %v679, %v680
        %v691 = vsel %vm684, %v668, %v690
        %v692 = vsel %vm584, %v680, %v681
        %v693 = vsel %vm684, %v670, %v692
        %v694 = vsel %vm584, %v681, %v682
        %v695 = vsel %vm684, %v672, %v694
        %704 = vst [vmem:[#allocation2] sm:$0x88] %v685
        %705 = vst [vmem:[#allocation2 + $0x8] sm:$0x88] %v687
        %706 = vst [vmem:[#allocation2 + $0x10] sm:$0x88] %v689
        %vm707 = vcmask 314371
        %708 = vst.msk [vmem:[#allocation2 + $0x18] sm:$0x8] %vm707, %v666
        %vm709 = vcmask 1040384
        %vm710 = vsmask.f32 256
        %vm711 = vmand %vm709, %vm710
        %vm712 = vcmask 1044484
        %vm713 = vsmask.f32 4352
        %vm714 = vmand %vm712, %vm713
        %vm715 = vmor %vm714, %vm711
        %v716 = vld [vmem:[#allocation2 + $0x1c] sm:$0x11]
        %v717 = vsel %vm715, %v691, %v716
        %718 = vst [vmem:[#allocation2 + $0x1c] sm:$0x11] %v717
        %v719 = vld [vmem:[#allocation2 + $0x24] sm:$0x11]
        %v720 = vsel %vm715, %v693, %v719
        %721 = vst [vmem:[#allocation2 + $0x24] sm:$0x11] %v720
        %v722 = vld [vmem:[#allocation2 + $0x2c] sm:$0x11]
        %v723 = vsel %vm715, %v695, %v722
        %724 = vst [vmem:[#allocation2 + $0x2c] sm:$0x11] %v723
        %vm725 = vcmask 311296
        %vm726 = vmand %vm725, %vm710
        %v727 = vld [vmem:[#allocation2 + $0x34] sm:$0x1]
        %v728 = vsel %vm726, %v674, %v727
        %729 = vst [vmem:[#allocation2 + $0x34] sm:$0x1] %v728
        %v730 = vld [vmem:[%s303] sm:$0xff]
        %v731 = vld [vmem:[%s303 + $0x8] sm:$0x3f]
        %v734 = vcombine.high %v730, %v730
        %v736 = vunpack.c.l.s4 1983009808
        %v737 = vunpack.c.0.s8 %v736
        %v738 = vlaneseq
        %v739 = vshrl.u32 %v738, 7
        %v740 = vsub.s32 %v737, %v739
        %v741 = vrot.slane %v730, %v740
        %v743 = vunpack.c.l.s4 1983009808
        %v744 = vunpack.c.0.s8 %v743
        %v745 = vlaneseq
        %v746 = vshrl.u32 %v745, 7
        %v747 = vsub.s32 %v744, %v746
        %v748 = vrot.slane %v734, %v747
        %v749 = vcombine.high %v731, %v731
        %v751 = vunpack.c.l.s4 1983009808
        %v752 = vunpack.c.0.s8 %v751
        %v753 = vlaneseq
        %v754 = vshrl.u32 %v753, 7
        %v755 = vsub.s32 %v752, %v754
        %v756 = vrot.slane %v731, %v755
        %v758 = vunpack.c.l.s4 1983009808
        %v759 = vunpack.c.0.s8 %v758
        %v760 = vlaneseq
        %v761 = vshrl.u32 %v760, 7
        %v762 = vsub.s32 %v759, %v761
        %v763 = vrot.slane %v749, %v762
        %v765 = vshrl.u32 %v741, 16
        %v767 = vrot.slane %v765, 7
        %v768 = vshll.u32 %v741, 16
        %v770 = vor.u32 %v767, %v768
        %v772 = vshrl.u32 %v748, 16
        %v774 = vrot.slane %v772, 7
        %v775 = vshll.u32 %v748, 16
        %v777 = vor.u32 %v774, %v775
        %v779 = vshrl.u32 %v756, 16
        %v781 = vrot.slane %v779, 7
        %v782 = vshll.u32 %v756, 16
        %v784 = vor.u32 %v781, %v782
        %v786 = vshrl.u32 %v763, 16
        %v788 = vrot.slane %v786, 7
        %v789 = vshll.u32 %v763, 16
        %v791 = vor.u32 %v788, %v789
        %792 = vrot.lane.b32.xlu0 %v770, 125
        %v793 = vpop.permute.xlu0 %792
        %794 = vrot.lane.b32.xlu0 %v777, 125
        %v795 = vpop.permute.xlu0 %794
        %796 = vrot.lane.b32.xlu0 %v784, 125
        %v797 = vpop.permute.xlu0 %796
        %798 = vrot.lane.b32.xlu0 %v791, 125
        %v799 = vpop.permute.xlu0 %798
        %v800 = vrot.slane %v793, 4
        %v801 = vrot.slane %v795, 4
        %v802 = vrot.slane %v797, 4
        %v803 = vrot.slane %v799, 4
        %v804 = vsel %vm584, %v800, %v801
        %vm805 = vcmask 1022976
        %v806 = vsel %vm805, %v793, %v804
        %v807 = vsel %vm584, %v801, %v802
        %v808 = vsel %vm805, %v795, %v807
        %v809 = vsel %vm584, %v802, %v803
        %v810 = vsel %vm805, %v797, %v809
        %vm815 = vsmask.f32 7938
        %vm816 = vmand %vm485, %vm815
        %vm817 = vsmask.f32 7954
        %vm818 = vmand %vm488, %vm817
        %vm819 = vmor %vm818, %vm816
        %v820 = vld [vmem:[#allocation2 + $0x1c] sm:$0x33]
        %v821 = vsel %vm819, %v806, %v820
        %822 = vst [vmem:[#allocation2 + $0x1c] sm:$0x33] %v821
        %v823 = vld [vmem:[#allocation2 + $0x24] sm:$0x33]
        %v824 = vsel %vm819, %v808, %v823
        %825 = vst [vmem:[#allocation2 + $0x24] sm:$0x33] %v824
        %v826 = vld [vmem:[#allocation2 + $0x2c] sm:$0x33]
        %v827 = vsel %vm819, %v810, %v826
        %828 = vst [vmem:[#allocation2 + $0x2c] sm:$0x33] %v827
        %vm829 = vmand %vm501, %vm815
        %v830 = vld [vmem:[#allocation2 + $0x34] sm:$0x3]
        %v831 = vsel %vm829, %v799, %v830
        %832 = vst [vmem:[#allocation2 + $0x34] sm:$0x3] %v831
        %v833 = vld [vmem:[%s303] sm:$0xff]
        %v834 = vld [vmem:[%s303 + $0x8] sm:$0x3f]
        %v837 = vcombine.low %v833, %v833
        %v839 = vunpack.c.l.s4 1983009808
        %v840 = vunpack.c.0.s8 %v839
        %v841 = vlaneseq
        %v842 = vshrl.u32 %v841, 7
        %v843 = vsub.s32 %v840, %v842
        %v844 = vrot.slane %v837, %v843
        %v846 = vunpack.c.l.s4 1983009808
        %v847 = vunpack.c.0.s8 %v846
        %v848 = vlaneseq
        %v849 = vshrl.u32 %v848, 7
        %v850 = vsub.s32 %v847, %v849
        %v851 = vrot.slane %v833, %v850
        %v852 = vcombine.low %v834, %v834
        %v854 = vunpack.c.l.s4 1983009808
        %v855 = vunpack.c.0.s8 %v854
        %v856 = vlaneseq
        %v857 = vshrl.u32 %v856, 7
        %v858 = vsub.s32 %v855, %v857
        %v859 = vrot.slane %v852, %v858
        %v861 = vunpack.c.l.s4 1983009808
        %v862 = vunpack.c.0.s8 %v861
        %v863 = vlaneseq
        %v864 = vshrl.u32 %v863, 7
        %v865 = vsub.s32 %v862, %v864
        %v866 = vrot.slane %v834, %v865
        %867 = vrot.lane.b32.xlu0 %v844, 98
        %v868 = vpop.permute.xlu0 %867
        %869 = vrot.lane.b32.xlu0 %v851, 98
        %v870 = vpop.permute.xlu0 %869
        %871 = vrot.lane.b32.xlu0 %v859, 98
        %v872 = vpop.permute.xlu0 %871
        %873 = vrot.lane.b32.xlu0 %v866, 98
        %v874 = vpop.permute.xlu0 %873
        %v875 = vrot.slane %v868, 4
        %v876 = vrot.slane %v870, 4
        %v877 = vrot.slane %v872, 4
        %v878 = vrot.slane %v874, 4
        %v879 = vsel %vm584, %v875, %v876
        %vm880 = vcmask 801792
        %v881 = vsel %vm880, %v868, %v879
        %v882 = vsel %vm584, %v876, %v877
        %v883 = vsel %vm880, %v870, %v882
        %v884 = vsel %vm584, %v877, %v878
        %v885 = vsel %vm880, %v872, %v884
        %vm890 = vcmask 1043458
        %vm891 = vsmask.f32 3328
        %vm892 = vmand %vm890, %vm891
        %vm893 = vcmask 1047558
        %vm894 = vsmask.f32 7424
        %vm895 = vmand %vm893, %vm894
        %vm896 = vmor %vm895, %vm892
        %v897 = vld [vmem:[#allocation2 + $0x1c] sm:$0xcc]
        %v898 = vsel %vm896, %v881, %v897
        %899 = vst [vmem:[#allocation2 + $0x1c] sm:$0xcc] %v898
        %v900 = vld [vmem:[#allocation2 + $0x24] sm:$0xcc]
        %v901 = vsel %vm896, %v883, %v900
        %902 = vst [vmem:[#allocation2 + $0x24] sm:$0xcc] %v901
        %v903 = vld [vmem:[#allocation2 + $0x2c] sm:$0xcc]
        %v904 = vsel %vm896, %v885, %v903
        %905 = vst [vmem:[#allocation2 + $0x2c] sm:$0xcc] %v904
        %vm906 = vcmask 314370
        %vm907 = vmand %vm906, %vm891
        %v908 = vld [vmem:[#allocation2 + $0x34] sm:$0xc]
        %v909 = vsel %vm907, %v874, %v908
        %910 = vst [vmem:[#allocation2 + $0x34] sm:$0xc] %v909
        %v911 = vld [vmem:[%s303] sm:$0xff]
        %v912 = vld [vmem:[%s303 + $0x8] sm:$0x3f]
        %v915 = vcombine.high %v911, %v911
        %v917 = vunpack.c.l.s4 1983009808
        %v918 = vunpack.c.0.s8 %v917
        %v919 = vlaneseq
        %v920 = vshrl.u32 %v919, 7
        %v921 = vsub.s32 %v918, %v920
        %v922 = vrot.slane %v911, %v921
        %v924 = vunpack.c.l.s4 1983009808
        %v925 = vunpack.c.0.s8 %v924
        %v926 = vlaneseq
        %v927 = vshrl.u32 %v926, 7
        %v928 = vsub.s32 %v925, %v927
        %v929 = vrot.slane %v915, %v928
        %v930 = vcombine.high %v912, %v912
        %v932 = vunpack.c.l.s4 1983009808
        %v933 = vunpack.c.0.s8 %v932
        %v934 = vlaneseq
        %v935 = vshrl.u32 %v934, 7
        %v936 = vsub.s32 %v933, %v935
        %v937 = vrot.slane %v912, %v936
        %v939 = vunpack.c.l.s4 1983009808
        %v940 = vunpack.c.0.s8 %v939
        %v941 = vlaneseq
        %v942 = vshrl.u32 %v941, 7
        %v943 = vsub.s32 %v940, %v942
        %v944 = vrot.slane %v930, %v943
        %v946 = vshll.u32 %v922, 16
        %v948 = vrot.slane %v946, 5
        %v950 = vshll.u32 %v929, 16
        %v952 = vrot.slane %v950, 5
        %v954 = vshll.u32 %v937, 16
        %v956 = vrot.slane %v954, 5
        %v958 = vshll.u32 %v944, 16
        %v960 = vrot.slane %v958, 5
        %v961 = vshrl.u32 %v922, 16
        %v963 = vrot.slane %v961, 4
        %v964 = vor.u32 %v963, %v948
        %v965 = vrot.slane %v964, 4
        %v966 = vshrl.u32 %v929, 16
        %v968 = vrot.slane %v966, 4
        %v969 = vor.u32 %v968, %v952
        %v970 = vrot.slane %v969, 4
        %v971 = vshrl.u32 %v937, 16
        %v973 = vrot.slane %v971, 4
        %v974 = vor.u32 %v973, %v956
        %v975 = vrot.slane %v974, 4
        %v976 = vshrl.u32 %v944, 16
        %v978 = vrot.slane %v976, 4
        %v979 = vor.u32 %v978, %v960
        %v980 = vrot.slane %v979, 4
        %981 = vrot.lane.b32.xlu0 %v948, 97
        %v982 = vpop.permute.xlu0 %981
        %983 = vrot.lane.b32.xlu0 %v952, 97
        %v984 = vpop.permute.xlu0 %983
        %985 = vrot.lane.b32.xlu0 %v956, 97
        %v986 = vpop.permute.xlu0 %985
        %987 = vrot.lane.b32.xlu0 %v960, 97
        %v988 = vpop.permute.xlu0 %987
        %989 = vrot.lane.b32.xlu0 %v965, 97
        %v990 = vpop.permute.xlu0 %989
        %991 = vrot.lane.b32.xlu0 %v970, 97
        %v992 = vpop.permute.xlu0 %991
        %993 = vrot.lane.b32.xlu0 %v975, 97
        %v994 = vpop.permute.xlu0 %993
        %995 = vrot.lane.b32.xlu0 %v980, 97
        %v996 = vpop.permute.xlu0 %995
        %v997 = vrot.slane %v982, 4
        %v998 = vrot.slane %v984, 4
        %v999 = vrot.slane %v986, 4
        %v1000 = vrot.slane %v988, 4
        %v1001 = vrot.slane %v990, 4
        %v1002 = vrot.slane %v992, 4
        %v1003 = vrot.slane %v994, 4
        %v1004 = vrot.slane %v996, 4
        %v1005 = vsel %vm584, %v997, %v998
        %vm1006 = vcmask 793600
        %v1007 = vsel %vm1006, %v982, %v1005
        %v1008 = vsel %vm584, %v998, %v999
        %v1009 = vsel %vm1006, %v984, %v1008
        %v1010 = vsel %vm584, %v999, %v1000
        %v1011 = vsel %vm1006, %v986, %v1010
        %v1012 = vsel %vm584, %v1001, %v1002
        %v1013 = vsel %vm1006, %v990, %v1012
        %v1014 = vsel %vm584, %v1002, %v1003
        %v1015 = vsel %vm1006, %v992, %v1014
        %v1016 = vsel %vm584, %v1003, %v1004
        %v1017 = vsel %vm1006, %v994, %v1016
        %vm1026 = vcmask 1043459
        %vm1027 = vsmask.f32 7950
        %vm1028 = vmand %vm1026, %vm1027
        %vm1029 = vcmask 1047559
        %vm1030 = vsmask.f32 7966
        %vm1031 = vmand %vm1029, %vm1030
        %vm1032 = vmor %vm1031, %vm1028
        %v1033 = vld [vmem:[#allocation2 + $0x1c] sm:$0x88]
        %v1034 = vsel %vm1032, %v1007, %v1033
        %1035 = vst [vmem:[#allocation2 + $0x1c] sm:$0x88] %v1034
        %v1036 = vld [vmem:[#allocation2 + $0x24] sm:$0x88]
        %v1037 = vsel %vm1032, %v1009, %v1036
        %1038 = vst [vmem:[#allocation2 + $0x24] sm:$0x88] %v1037
        %v1039 = vld [vmem:[#allocation2 + $0x2c] sm:$0x88]
        %v1040 = vsel %vm1032, %v1011, %v1039
        %1041 = vst [vmem:[#allocation2 + $0x2c] sm:$0x88] %v1040
        %vm1042 = vcmask 314371
        %vm1043 = vmand %vm1042, %vm1027
        %v1044 = vld [vmem:[#allocation2 + $0x34] sm:$0x8]
        %v1045 = vsel %vm1043, %v988, %v1044
        %1046 = vst [vmem:[#allocation2 + $0x34] sm:$0x8] %v1045
        %1047 = vst [vmem:[#allocation2 + $0x38] sm:$0x11] %v1013
        %1048 = vst [vmem:[#allocation2 + $0x40] sm:$0x11] %v1015
        %1049 = vst [vmem:[#allocation2 + $0x48] sm:$0x11] %v1017
        %vm1050 = vcmask 311296
        %1051 = vst.msk [vmem:[#allocation2 + $0x50] sm:$0x1] %vm1050, %v996
        %v1052 = vld [vmem:[%s303] sm:$0xff]
        %v1053 = vld [vmem:[%s303 + $0x8] sm:$0x3f]
        %v1056 = vcombine.high %v1052, %v1052
        %v1058 = vunpack.c.l.s4 1983009808
        %v1059 = vunpack.c.0.s8 %v1058
        %v1060 = vlaneseq
        %v1061 = vshrl.u32 %v1060, 7
        %v1062 = vsub.s32 %v1059, %v1061
        %v1063 = vrot.slane %v1052, %v1062
        %v1065 = vunpack.c.l.s4 1983009808
        %v1066 = vunpack.c.0.s8 %v1065
        %v1067 = vlaneseq
        %v1068 = vshrl.u32 %v1067, 7
        %v1069 = vsub.s32 %v1066, %v1068
        %v1070 = vrot.slane %v1056, %v1069
        %v1071 = vcombine.high %v1053, %v1053
        %v1073 = vunpack.c.l.s4 1983009808
        %v1074 = vunpack.c.0.s8 %v1073
        %v1075 = vlaneseq
        %v1076 = vshrl.u32 %v1075, 7
        %v1077 = vsub.s32 %v1074, %v1076
        %v1078 = vrot.slane %v1053, %v1077
        %v1080 = vunpack.c.l.s4 1983009808
        %v1081 = vunpack.c.0.s8 %v1080
        %v1082 = vlaneseq
        %v1083 = vshrl.u32 %v1082, 7
        %v1084 = vsub.s32 %v1081, %v1083
        %v1085 = vrot.slane %v1071, %v1084
        %v1086 = vrot.slane %v1063, 7
        %v1087 = vrot.slane %v1070, 7
        %v1088 = vrot.slane %v1078, 7
        %v1089 = vrot.slane %v1085, 7
        %1090 = vrot.lane.b32.xlu0 %v1086, 96
        %v1091 = vpop.permute.xlu0 %1090
        %1092 = vrot.lane.b32.xlu0 %v1087, 96
        %v1093 = vpop.permute.xlu0 %1092
        %1094 = vrot.lane.b32.xlu0 %v1088, 96
        %v1095 = vpop.permute.xlu0 %1094
        %1096 = vrot.lane.b32.xlu0 %v1089, 96
        %v1097 = vpop.permute.xlu0 %1096
        %v1098 = vrot.slane %v1091, 4
        %v1099 = vrot.slane %v1093, 4
        %v1100 = vrot.slane %v1095, 4
        %v1101 = vrot.slane %v1097, 4
        %v1102 = vsel %vm584, %v1098, %v1099
        %vm1103 = vcmask 785408
        %v1104 = vsel %vm1103, %v1091, %v1102
        %v1105 = vsel %vm584, %v1099, %v1100
        %v1106 = vsel %vm1103, %v1093, %v1105
        %v1107 = vsel %vm584, %v1100, %v1101
        %v1108 = vsel %vm1103, %v1095, %v1107
        %vm1113 = vsmask.f32 2304
        %vm1114 = vmand %vm596, %vm1113
        %vm1115 = vsmask.f32 6400
        %vm1116 = vmand %vm599, %vm1115
        %vm1117 = vmor %vm1116, %vm1114
        %v1118 = vld [vmem:[#allocation2 + $0x38] sm:$0x66]
        %v1119 = vsel %vm1117, %v1104, %v1118
        %1120 = vst [vmem:[#allocation2 + $0x38] sm:$0x66] %v1119
        %v1121 = vld [vmem:[#allocation2 + $0x40] sm:$0x66]
        %v1122 = vsel %vm1117, %v1106, %v1121
        %1123 = vst [vmem:[#allocation2 + $0x40] sm:$0x66] %v1122
        %v1124 = vld [vmem:[#allocation2 + $0x48] sm:$0x66]
        %v1125 = vsel %vm1117, %v1108, %v1124
        %1126 = vst [vmem:[#allocation2 + $0x48] sm:$0x66] %v1125
        %vm1127 = vmand %vm612, %vm1113
        %v1128 = vld [vmem:[#allocation2 + $0x50] sm:$0x6]
        %v1129 = vsel %vm1127, %v1097, %v1128
        %1130 = vst [vmem:[#allocation2 + $0x50] sm:$0x6] %v1129
        %v1131 = vld [vmem:[%s303] sm:$0xff]
        %v1132 = vld [vmem:[%s303 + $0x8] sm:$0x3f]
        %v1135 = vcombine.high %v1131, %v1131
        %v1137 = vunpack.c.l.s4 1983009808
        %v1138 = vunpack.c.0.s8 %v1137
        %v1139 = vlaneseq
        %v1140 = vshrl.u32 %v1139, 7
        %v1141 = vsub.s32 %v1138, %v1140
        %v1142 = vrot.slane %v1131, %v1141
        %v1144 = vunpack.c.l.s4 1983009808
        %v1145 = vunpack.c.0.s8 %v1144
        %v1146 = vlaneseq
        %v1147 = vshrl.u32 %v1146, 7
        %v1148 = vsub.s32 %v1145, %v1147
        %v1149 = vrot.slane %v1135, %v1148
        %v1150 = vcombine.high %v1132, %v1132
        %v1152 = vunpack.c.l.s4 1983009808
        %v1153 = vunpack.c.0.s8 %v1152
        %v1154 = vlaneseq
        %v1155 = vshrl.u32 %v1154, 7
        %v1156 = vsub.s32 %v1153, %v1155
        %v1157 = vrot.slane %v1132, %v1156
        %v1159 = vunpack.c.l.s4 1983009808
        %v1160 = vunpack.c.0.s8 %v1159
        %v1161 = vlaneseq
        %v1162 = vshrl.u32 %v1161, 7
        %v1163 = vsub.s32 %v1160, %v1162
        %v1164 = vrot.slane %v1150, %v1163
        %v1166 = vshrl.u32 %v1142, 16
        %v1168 = vrot.slane %v1166, 5
        %v1169 = vshll.u32 %v1142, 16
        %v1171 = vrot.slane %v1169, 6
        %v1172 = vor.u32 %v1168, %v1171
        %v1174 = vshrl.u32 %v1149, 16
        %v1176 = vrot.slane %v1174, 5
        %v1177 = vshll.u32 %v1149, 16
        %v1179 = vrot.slane %v1177, 6
        %v1180 = vor.u32 %v1176, %v1179
        %v1182 = vshrl.u32 %v1157, 16
        %v1184 = vrot.slane %v1182, 5
        %v1185 = vshll.u32 %v1157, 16
        %v1187 = vrot.slane %v1185, 6
        %v1188 = vor.u32 %v1184, %v1187
        %v1190 = vshrl.u32 %v1164, 16
        %v1192 = vrot.slane %v1190, 5
        %v1193 = vshll.u32 %v1164, 16
        %v1195 = vrot.slane %v1193, 6
        %v1196 = vor.u32 %v1192, %v1195
        %1197 = vrot.lane.b32.xlu0 %v1172, 95
        %v1198 = vpop.permute.xlu0 %1197
        %1199 = vrot.lane.b32.xlu0 %v1180, 95
        %v1200 = vpop.permute.xlu0 %1199
        %1201 = vrot.lane.b32.xlu0 %v1188, 95
        %v1202 = vpop.permute.xlu0 %1201
        %1203 = vrot.lane.b32.xlu0 %v1196, 95
        %v1204 = vpop.permute.xlu0 %1203
        %v1205 = vrot.slane %v1198, 4
        %v1206 = vrot.slane %v1200, 4
        %v1207 = vrot.slane %v1202, 4
        %v1208 = vrot.slane %v1204, 4
        %v1209 = vsel %vm584, %v1205, %v1206
        %vm1210 = vcmask 777216
        %v1211 = vsel %vm1210, %v1198, %v1209
        %v1212 = vsel %vm584, %v1206, %v1207
        %v1213 = vsel %vm1210, %v1200, %v1212
        %v1214 = vsel %vm584, %v1207, %v1208
        %v1215 = vsel %vm1210, %v1202, %v1214
        %vm1220 = vsmask.f32 7946
        %vm1221 = vmand %vm890, %vm1220
        %vm1222 = vsmask.f32 7962
        %vm1223 = vmand %vm893, %vm1222
        %vm1224 = vmor %vm1223, %vm1221
        %v1225 = vld [vmem:[#allocation2 + $0x38] sm:$0xcc]
        %v1226 = vsel %vm1224, %v1211, %v1225
        %1227 = vst [vmem:[#allocation2 + $0x38] sm:$0xcc] %v1226
        %v1228 = vld [vmem:[#allocation2 + $0x40] sm:$0xcc]
        %v1229 = vsel %vm1224, %v1213, %v1228
        %1230 = vst [vmem:[#allocation2 + $0x40] sm:$0xcc] %v1229
        %v1231 = vld [vmem:[#allocation2 + $0x48] sm:$0xcc]
        %v1232 = vsel %vm1224, %v1215, %v1231
        %1233 = vst [vmem:[#allocation2 + $0x48] sm:$0xcc] %v1232
        %vm1234 = vmand %vm906, %vm1220
        %v1235 = vld [vmem:[#allocation2 + $0x50] sm:$0xc]
        %v1236 = vsel %vm1234, %v1204, %v1235
        %1237 = vst [vmem:[#allocation2 + $0x50] sm:$0xc] %v1236
        %v1238 = vld [vmem:[%s303] sm:$0xff]
        %v1239 = vld [vmem:[%s303 + $0x8] sm:$0x3f]
        %v1242 = vcombine.high %v1238, %v1238
        %v1244 = vunpack.c.l.s4 1983009808
        %v1245 = vunpack.c.0.s8 %v1244
        %v1246 = vlaneseq
        %v1247 = vshrl.u32 %v1246, 7
        %v1248 = vsub.s32 %v1245, %v1247
        %v1249 = vrot.slane %v1238, %v1248
        %v1251 = vunpack.c.l.s4 1983009808
        %v1252 = vunpack.c.0.s8 %v1251
        %v1253 = vlaneseq
        %v1254 = vshrl.u32 %v1253, 7
        %v1255 = vsub.s32 %v1252, %v1254
        %v1256 = vrot.slane %v1242, %v1255
        %v1257 = vcombine.high %v1239, %v1239
        %v1259 = vunpack.c.l.s4 1983009808
        %v1260 = vunpack.c.0.s8 %v1259
        %v1261 = vlaneseq
        %v1262 = vshrl.u32 %v1261, 7
        %v1263 = vsub.s32 %v1260, %v1262
        %v1264 = vrot.slane %v1239, %v1263
        %v1266 = vunpack.c.l.s4 1983009808
        %v1267 = vunpack.c.0.s8 %v1266
        %v1268 = vlaneseq
        %v1269 = vshrl.u32 %v1268, 7
        %v1270 = vsub.s32 %v1267, %v1269
        %v1271 = vrot.slane %v1257, %v1270
        %1272 = vrot.lane.b32.xlu0 %v1249, 68
        %v1273 = vpop.permute.xlu0 %1272
        %1274 = vrot.lane.b32.xlu0 %v1256, 68
        %v1275 = vpop.permute.xlu0 %1274
        %1276 = vrot.lane.b32.xlu0 %v1264, 68
        %v1277 = vpop.permute.xlu0 %1276
        %1278 = vrot.lane.b32.xlu0 %v1271, 68
        %v1279 = vpop.permute.xlu0 %1278
        %v1280 = vrot.slane %v1273, 4
        %v1281 = vrot.slane %v1275, 4
        %v1282 = vrot.slane %v1277, 4
        %v1283 = vrot.slane %v1279, 4
        %v1284 = vsel %vm584, %v1280, %v1281
        %vm1285 = vcmask 556032
        %v1286 = vsel %vm1285, %v1273, %v1284
        %v1287 = vsel %vm584, %v1281, %v1282
        %v1288 = vsel %vm1285, %v1275, %v1287
        %v1289 = vsel %vm584, %v1282, %v1283
        %v1290 = vsel %vm1285, %v1277, %v1289
        %v1295 = vld [vmem:[#allocation2 + $0x54] sm:$0x33]
        %v1296 = vsel %vm491, %v1286, %v1295
        %1297 = vst [vmem:[#allocation2 + $0x54] sm:$0x33] %v1296
        %v1298 = vld [vmem:[#allocation2 + $0x5c] sm:$0x33]
        %v1299 = vsel %vm491, %v1288, %v1298
        %1300 = vst [vmem:[#allocation2 + $0x5c] sm:$0x33] %v1299
        %v1301 = vld [vmem:[#allocation2 + $0x64] sm:$0x33]
        %v1302 = vsel %vm491, %v1290, %v1301
        %1303 = vst [vmem:[#allocation2 + $0x64] sm:$0x33] %v1302
        %v1304 = vld [vmem:[#allocation2 + $0x6c] sm:$0x3]
        %v1305 = vsel %vm502, %v1279, %v1304
        %1306 = vst [vmem:[#allocation2 + $0x6c] sm:$0x3] %v1305
        %v1307 = vld [vmem:[%s303] sm:$0xff]
        %v1308 = vld [vmem:[%s303 + $0x8] sm:$0x3f]
        %v1311 = vcombine.high %v1307, %v1307
        %v1313 = vunpack.c.l.s4 1983009808
        %v1314 = vunpack.c.0.s8 %v1313
        %v1315 = vlaneseq
        %v1316 = vshrl.u32 %v1315, 7
        %v1317 = vsub.s32 %v1314, %v1316
        %v1318 = vrot.slane %v1307, %v1317
        %v1320 = vunpack.c.l.s4 1983009808
        %v1321 = vunpack.c.0.s8 %v1320
        %v1322 = vlaneseq
        %v1323 = vshrl.u32 %v1322, 7
        %v1324 = vsub.s32 %v1321, %v1323
        %v1325 = vrot.slane %v1311, %v1324
        %v1326 = vcombine.high %v1308, %v1308
        %v1328 = vunpack.c.l.s4 1983009808
        %v1329 = vunpack.c.0.s8 %v1328
        %v1330 = vlaneseq
        %v1331 = vshrl.u32 %v1330, 7
        %v1332 = vsub.s32 %v1329, %v1331
        %v1333 = vrot.slane %v1308, %v1332
        %v1335 = vunpack.c.l.s4 1983009808
        %v1336 = vunpack.c.0.s8 %v1335
        %v1337 = vlaneseq
        %v1338 = vshrl.u32 %v1337, 7
        %v1339 = vsub.s32 %v1336, %v1338
        %v1340 = vrot.slane %v1326, %v1339
        %v1342 = vshrl.u32 %v1318, 16
        %v1344 = vrot.slane %v1342, 6
        %v1345 = vshll.u32 %v1318, 16
        %v1347 = vrot.slane %v1345, 7
        %v1348 = vor.u32 %v1344, %v1347
        %v1350 = vshrl.u32 %v1325, 16
        %v1352 = vrot.slane %v1350, 6
        %v1353 = vshll.u32 %v1325, 16
        %v1355 = vrot.slane %v1353, 7
        %v1356 = vor.u32 %v1352, %v1355
        %v1358 = vshrl.u32 %v1333, 16
        %v1360 = vrot.slane %v1358, 6
        %v1361 = vshll.u32 %v1333, 16
        %v1363 = vrot.slane %v1361, 7
        %v1364 = vor.u32 %v1360, %v1363
        %v1366 = vshrl.u32 %v1340, 16
        %v1368 = vrot.slane %v1366, 6
        %v1369 = vshll.u32 %v1340, 16
        %v1371 = vrot.slane %v1369, 7
        %v1372 = vor.u32 %v1368, %v1371
        %1373 = vrot.lane.b32.xlu0 %v1348, 67
        %v1374 = vpop.permute.xlu0 %1373
        %1375 = vrot.lane.b32.xlu0 %v1356, 67
        %v1376 = vpop.permute.xlu0 %1375
        %1377 = vrot.lane.b32.xlu0 %v1364, 67
        %v1378 = vpop.permute.xlu0 %1377
        %1379 = vrot.lane.b32.xlu0 %v1372, 67
        %v1380 = vpop.permute.xlu0 %1379
        %v1381 = vrot.slane %v1374, 4
        %v1382 = vrot.slane %v1376, 4
        %v1383 = vrot.slane %v1378, 4
        %v1384 = vrot.slane %v1380, 4
        %v1385 = vsel %vm584, %v1381, %v1382
        %vm1386 = vcmask 547840
        %v1387 = vsel %vm1386, %v1374, %v1385
        %v1388 = vsel %vm584, %v1382, %v1383
        %v1389 = vsel %vm1386, %v1376, %v1388
        %v1390 = vsel %vm584, %v1383, %v1384
        %v1391 = vsel %vm1386, %v1378, %v1390
        %v1396 = vld [vmem:[#allocation2 + $0x54] sm:$0x66]
        %v1397 = vsel %vm602, %v1387, %v1396
        %1398 = vst [vmem:[#allocation2 + $0x54] sm:$0x66] %v1397
        %v1399 = vld [vmem:[#allocation2 + $0x5c] sm:$0x66]
        %v1400 = vsel %vm602, %v1389, %v1399
        %1401 = vst [vmem:[#allocation2 + $0x5c] sm:$0x66] %v1400
        %v1402 = vld [vmem:[#allocation2 + $0x64] sm:$0x66]
        %v1403 = vsel %vm602, %v1391, %v1402
        %1404 = vst [vmem:[#allocation2 + $0x64] sm:$0x66] %v1403
        %v1405 = vld [vmem:[#allocation2 + $0x6c] sm:$0x6]
        %v1406 = vsel %vm613, %v1380, %v1405
        %1407 = vst [vmem:[#allocation2 + $0x6c] sm:$0x6] %v1406
        %v1408 = vld [vmem:[%s303] sm:$0xff]
        %v1409 = vld [vmem:[%s303 + $0x8] sm:$0x3f]
        %v1412 = vcombine.high %v1408, %v1408
        %v1414 = vunpack.c.l.s4 1983009808
        %v1415 = vunpack.c.0.s8 %v1414
        %v1416 = vlaneseq
        %v1417 = vshrl.u32 %v1416, 7
        %v1418 = vsub.s32 %v1415, %v1417
        %v1419 = vrot.slane %v1408, %v1418
        %v1421 = vunpack.c.l.s4 1983009808
        %v1422 = vunpack.c.0.s8 %v1421
        %v1423 = vlaneseq
        %v1424 = vshrl.u32 %v1423, 7
        %v1425 = vsub.s32 %v1422, %v1424
        %v1426 = vrot.slane %v1412, %v1425
        %v1427 = vcombine.high %v1409, %v1409
        %v1429 = vunpack.c.l.s4 1983009808
        %v1430 = vunpack.c.0.s8 %v1429
        %v1431 = vlaneseq
        %v1432 = vshrl.u32 %v1431, 7
        %v1433 = vsub.s32 %v1430, %v1432
        %v1434 = vrot.slane %v1409, %v1433
        %v1436 = vunpack.c.l.s4 1983009808
        %v1437 = vunpack.c.0.s8 %v1436
        %v1438 = vlaneseq
        %v1439 = vshrl.u32 %v1438, 7
        %v1440 = vsub.s32 %v1437, %v1439
        %v1441 = vrot.slane %v1427, %v1440
        %v1442 = vrot.slane %v1419, 5
        %v1443 = vrot.slane %v1426, 5
        %v1444 = vrot.slane %v1434, 5
        %v1445 = vrot.slane %v1441, 5
        %v1446 = vrot.slane %v1442, 4
        %v1447 = vrot.slane %v1443, 4
        %v1448 = vrot.slane %v1444, 4
        %v1449 = vrot.slane %v1445, 4
        %1450 = vrot.lane.b32.xlu0 %v1442, 66
        %v1451 = vpop.permute.xlu0 %1450
        %1452 = vrot.lane.b32.xlu0 %v1443, 66
        %v1453 = vpop.permute.xlu0 %1452
        %1454 = vrot.lane.b32.xlu0 %v1444, 66
        %v1455 = vpop.permute.xlu0 %1454
        %1456 = vrot.lane.b32.xlu0 %v1445, 66
        %v1457 = vpop.permute.xlu0 %1456
        %1458 = vrot.lane.b32.xlu0 %v1446, 66
        %v1459 = vpop.permute.xlu0 %1458
        %1460 = vrot.lane.b32.xlu0 %v1447, 66
        %v1461 = vpop.permute.xlu0 %1460
        %1462 = vrot.lane.b32.xlu0 %v1448, 66
        %v1463 = vpop.permute.xlu0 %1462
        %1464 = vrot.lane.b32.xlu0 %v1449, 66
        %v1465 = vpop.permute.xlu0 %1464
        %v1466 = vrot.slane %v1451, 4
        %v1467 = vrot.slane %v1453, 4
        %v1468 = vrot.slane %v1455, 4
        %v1469 = vrot.slane %v1457, 4
        %v1470 = vrot.slane %v1459, 4
        %v1471 = vrot.slane %v1461, 4
        %v1472 = vrot.slane %v1463, 4
        %v1473 = vrot.slane %v1465, 4
        %v1474 = vsel %vm584, %v1466, %v1467
        %vm1475 = vcmask 539648
        %v1476 = vsel %vm1475, %v1451, %v1474
        %v1477 = vsel %vm584, %v1467, %v1468
        %v1478 = vsel %vm1475, %v1453, %v1477
        %v1479 = vsel %vm584, %v1468, %v1469
        %v1480 = vsel %vm1475, %v1455, %v1479
        %v1481 = vsel %vm584, %v1470, %v1471
        %v1482 = vsel %vm1475, %v1459, %v1481
        %v1483 = vsel %vm584, %v1471, %v1472
        %v1484 = vsel %vm1475, %v1461, %v1483
        %v1485 = vsel %vm584, %v1472, %v1473
        %v1486 = vsel %vm1475, %v1463, %v1485
        %1495 = vst [vmem:[#allocation2 + $0x54] sm:$0x88] %v1476
        %1496 = vst [vmem:[#allocation2 + $0x5c] sm:$0x88] %v1478
        %1497 = vst [vmem:[#allocation2 + $0x64] sm:$0x88] %v1480
        %1498 = vst.msk [vmem:[#allocation2 + $0x6c] sm:$0x8] %vm707, %v1457
        %v1499 = vld [vmem:[#allocation2 + $0x70] sm:$0x11]
        %v1500 = vsel %vm715, %v1482, %v1499
        %1501 = vst [vmem:[#allocation2 + $0x70] sm:$0x11] %v1500
        %v1502 = vld [vmem:[#allocation2 + $0x78] sm:$0x11]
        %v1503 = vsel %vm715, %v1484, %v1502
        %1504 = vst [vmem:[#allocation2 + $0x78] sm:$0x11] %v1503
        %v1505 = vld [vmem:[#allocation2 + $0x80] sm:$0x11]
        %v1506 = vsel %vm715, %v1486, %v1505
        %1507 = vst [vmem:[#allocation2 + $0x80] sm:$0x11] %v1506
        %v1508 = vld [vmem:[#allocation2 + $0x88] sm:$0x1]
        %v1509 = vsel %vm726, %v1465, %v1508
        %1510 = vst [vmem:[#allocation2 + $0x88] sm:$0x1] %v1509
        %v1511 = vld [vmem:[%s303] sm:$0xff]
        %v1512 = vld [vmem:[%s303 + $0x8] sm:$0x3f]
        %v1515 = vcombine.high %v1511, %v1511
        %v1517 = vunpack.c.l.s4 1983009808
        %v1518 = vunpack.c.0.s8 %v1517
        %v1519 = vlaneseq
        %v1520 = vshrl.u32 %v1519, 7
        %v1521 = vsub.s32 %v1518, %v1520
        %v1522 = vrot.slane %v1511, %v1521
        %v1524 = vunpack.c.l.s4 1983009808
        %v1525 = vunpack.c.0.s8 %v1524
        %v1526 = vlaneseq
        %v1527 = vshrl.u32 %v1526, 7
        %v1528 = vsub.s32 %v1525, %v1527
        %v1529 = vrot.slane %v1515, %v1528
        %v1530 = vcombine.high %v1512, %v1512
        %v1532 = vunpack.c.l.s4 1983009808
        %v1533 = vunpack.c.0.s8 %v1532
        %v1534 = vlaneseq
        %v1535 = vshrl.u32 %v1534, 7
        %v1536 = vsub.s32 %v1533, %v1535
        %v1537 = vrot.slane %v1512, %v1536
        %v1539 = vunpack.c.l.s4 1983009808
        %v1540 = vunpack.c.0.s8 %v1539
        %v1541 = vlaneseq
        %v1542 = vshrl.u32 %v1541, 7
        %v1543 = vsub.s32 %v1540, %v1542
        %v1544 = vrot.slane %v1530, %v1543
        %v1546 = vshrl.u32 %v1522, 16
        %v1548 = vrot.slane %v1546, 7
        %v1549 = vshll.u32 %v1522, 16
        %v1551 = vor.u32 %v1548, %v1549
        %v1553 = vshrl.u32 %v1529, 16
        %v1555 = vrot.slane %v1553, 7
        %v1556 = vshll.u32 %v1529, 16
        %v1558 = vor.u32 %v1555, %v1556
        %v1560 = vshrl.u32 %v1537, 16
        %v1562 = vrot.slane %v1560, 7
        %v1563 = vshll.u32 %v1537, 16
        %v1565 = vor.u32 %v1562, %v1563
        %v1567 = vshrl.u32 %v1544, 16
        %v1569 = vrot.slane %v1567, 7
        %v1570 = vshll.u32 %v1544, 16
        %v1572 = vor.u32 %v1569, %v1570
        %1573 = vrot.lane.b32.xlu0 %v1551, 65
        %v1574 = vpop.permute.xlu0 %1573
        %1575 = vrot.lane.b32.xlu0 %v1558, 65
        %v1576 = vpop.permute.xlu0 %1575
        %1577 = vrot.lane.b32.xlu0 %v1565, 65
        %v1578 = vpop.permute.xlu0 %1577
        %1579 = vrot.lane.b32.xlu0 %v1572, 65
        %v1580 = vpop.permute.xlu0 %1579
        %v1581 = vrot.slane %v1574, 4
        %v1582 = vrot.slane %v1576, 4
        %v1583 = vrot.slane %v1578, 4
        %v1584 = vrot.slane %v1580, 4
        %v1585 = vsel %vm584, %v1581, %v1582
        %vm1586 = vcmask 531456
        %v1587 = vsel %vm1586, %v1574, %v1585
        %v1588 = vsel %vm584, %v1582, %v1583
        %v1589 = vsel %vm1586, %v1576, %v1588
        %v1590 = vsel %vm584, %v1583, %v1584
        %v1591 = vsel %vm1586, %v1578, %v1590
        %v1596 = vld [vmem:[#allocation2 + $0x70] sm:$0x33]
        %v1597 = vsel %vm819, %v1587, %v1596
        %1598 = vst [vmem:[#allocation2 + $0x70] sm:$0x33] %v1597
        %v1599 = vld [vmem:[#allocation2 + $0x78] sm:$0x33]
        %v1600 = vsel %vm819, %v1589, %v1599
        %1601 = vst [vmem:[#allocation2 + $0x78] sm:$0x33] %v1600
        %v1602 = vld [vmem:[#allocation2 + $0x80] sm:$0x33]
        %v1603 = vsel %vm819, %v1591, %v1602
        %1604 = vst [vmem:[#allocation2 + $0x80] sm:$0x33] %v1603
        %v1605 = vld [vmem:[#allocation2 + $0x88] sm:$0x3]
        %v1606 = vsel %vm829, %v1580, %v1605
        %1607 = vst [vmem:[#allocation2 + $0x88] sm:$0x3] %v1606
        %v1608 = vld [vmem:[%s303] sm:$0xff]
        %v1609 = vld [vmem:[%s303 + $0x8] sm:$0xff]
        %v1612 = vcombine.low %v1608, %v1608
        %v1614 = vunpack.c.l.s4 1983009808
        %v1615 = vunpack.c.0.s8 %v1614
        %v1616 = vlaneseq
        %v1617 = vshrl.u32 %v1616, 7
        %v1618 = vsub.s32 %v1615, %v1617
        %v1619 = vrot.slane %v1612, %v1618
        %v1621 = vunpack.c.l.s4 1983009808
        %v1622 = vunpack.c.0.s8 %v1621
        %v1623 = vlaneseq
        %v1624 = vshrl.u32 %v1623, 7
        %v1625 = vsub.s32 %v1622, %v1624
        %v1626 = vrot.slane %v1608, %v1625
        %v1627 = vcombine.low %v1609, %v1609
        %v1629 = vunpack.c.l.s4 1983009808
        %v1630 = vunpack.c.0.s8 %v1629
        %v1631 = vlaneseq
        %v1632 = vshrl.u32 %v1631, 7
        %v1633 = vsub.s32 %v1630, %v1632
        %v1634 = vrot.slane %v1627, %v1633
        %v1636 = vunpack.c.l.s4 1983009808
        %v1637 = vunpack.c.0.s8 %v1636
        %v1638 = vlaneseq
        %v1639 = vshrl.u32 %v1638, 7
        %v1640 = vsub.s32 %v1637, %v1639
        %v1641 = vrot.slane %v1609, %v1640
        %1642 = vrot.lane.b32.xlu0 %v1619, 38
        %v1643 = vpop.permute.xlu0 %1642
        %1644 = vrot.lane.b32.xlu0 %v1626, 38
        %v1645 = vpop.permute.xlu0 %1644
        %1646 = vrot.lane.b32.xlu0 %v1634, 38
        %v1647 = vpop.permute.xlu0 %1646
        %1648 = vrot.lane.b32.xlu0 %v1641, 38
        %v1649 = vpop.permute.xlu0 %1648
        %v1650 = vrot.slane %v1643, 4
        %v1651 = vrot.slane %v1645, 4
        %v1652 = vrot.slane %v1647, 4
        %v1653 = vrot.slane %v1649, 4
        %v1654 = vsel %vm584, %v1650, %v1651
        %vm1655 = vcmask 310272
        %v1656 = vsel %vm1655, %v1643, %v1654
        %v1657 = vsel %vm584, %v1651, %v1652
        %v1658 = vsel %vm1655, %v1645, %v1657
        %v1659 = vsel %vm584, %v1652, %v1653
        %v1660 = vsel %vm1655, %v1647, %v1659
        %v1661 = vsel %vm1655, %v1649, %v1653
        %v1666 = vld [vmem:[#allocation2 + $0x70] sm:$0xcc]
        %v1667 = vsel %vm896, %v1656, %v1666
        %1668 = vst [vmem:[#allocation2 + $0x70] sm:$0xcc] %v1667
        %v1669 = vld [vmem:[#allocation2 + $0x78] sm:$0xcc]
        %v1670 = vsel %vm896, %v1658, %v1669
        %1671 = vst [vmem:[#allocation2 + $0x78] sm:$0xcc] %v1670
        %v1672 = vld [vmem:[#allocation2 + $0x80] sm:$0xcc]
        %v1673 = vsel %vm896, %v1660, %v1672
        %1674 = vst [vmem:[#allocation2 + $0x80] sm:$0xcc] %v1673
        %v1675 = vld [vmem:[#allocation2 + $0x88] sm:$0xc]
        %v1676 = vsel %vm907, %v1661, %v1675
        %1677 = vst [vmem:[#allocation2 + $0x88] sm:$0xc] %v1676
        %v1678 = vld [vmem:[%s303] sm:$0xff]
        %v1679 = vld [vmem:[%s303 + $0x8] sm:$0xff]
        %v1682 = vcombine.high %v1678, %v1678
        %v1684 = vunpack.c.l.s4 1983009808
        %v1685 = vunpack.c.0.s8 %v1684
        %v1686 = vlaneseq
        %v1687 = vshrl.u32 %v1686, 7
        %v1688 = vsub.s32 %v1685, %v1687
        %v1689 = vrot.slane %v1678, %v1688
        %v1691 = vunpack.c.l.s4 1983009808
        %v1692 = vunpack.c.0.s8 %v1691
        %v1693 = vlaneseq
        %v1694 = vshrl.u32 %v1693, 7
        %v1695 = vsub.s32 %v1692, %v1694
        %v1696 = vrot.slane %v1682, %v1695
        %v1697 = vcombine.high %v1679, %v1679
        %v1699 = vunpack.c.l.s4 1983009808
        %v1700 = vunpack.c.0.s8 %v1699
        %v1701 = vlaneseq
        %v1702 = vshrl.u32 %v1701, 7
        %v1703 = vsub.s32 %v1700, %v1702
        %v1704 = vrot.slane %v1679, %v1703
        %v1706 = vunpack.c.l.s4 1983009808
        %v1707 = vunpack.c.0.s8 %v1706
        %v1708 = vlaneseq
        %v1709 = vshrl.u32 %v1708, 7
        %v1710 = vsub.s32 %v1707, %v1709
        %v1711 = vrot.slane %v1697, %v1710
        %v1713 = vshll.u32 %v1689, 16
        %v1715 = vrot.slane %v1713, 5
        %v1717 = vshll.u32 %v1696, 16
        %v1719 = vrot.slane %v1717, 5
        %v1721 = vshll.u32 %v1704, 16
        %v1723 = vrot.slane %v1721, 5
        %v1725 = vshll.u32 %v1711, 16
        %v1727 = vrot.slane %v1725, 5
        %v1728 = vshrl.u32 %v1689, 16
        %v1730 = vrot.slane %v1728, 4
        %v1731 = vor.u32 %v1730, %v1715
        %v1732 = vrot.slane %v1731, 4
        %v1733 = vshrl.u32 %v1696, 16
        %v1735 = vrot.slane %v1733, 4
        %v1736 = vor.u32 %v1735, %v1719
        %v1737 = vrot.slane %v1736, 4
        %v1738 = vshrl.u32 %v1704, 16
        %v1740 = vrot.slane %v1738, 4
        %v1741 = vor.u32 %v1740, %v1723
        %v1742 = vrot.slane %v1741, 4
        %v1743 = vshrl.u32 %v1711, 16
        %v1745 = vrot.slane %v1743, 4
        %v1746 = vor.u32 %v1745, %v1727
        %v1747 = vrot.slane %v1746, 4
        %1748 = vrot.lane.b32.xlu0 %v1715, 37
        %v1749 = vpop.permute.xlu0 %1748
        %1750 = vrot.lane.b32.xlu0 %v1719, 37
        %v1751 = vpop.permute.xlu0 %1750
        %1752 = vrot.lane.b32.xlu0 %v1723, 37
        %v1753 = vpop.permute.xlu0 %1752
        %1754 = vrot.lane.b32.xlu0 %v1727, 37
        %v1755 = vpop.permute.xlu0 %1754
        %1756 = vrot.lane.b32.xlu0 %v1732, 37
        %v1757 = vpop.permute.xlu0 %1756
        %1758 = vrot.lane.b32.xlu0 %v1737, 37
        %v1759 = vpop.permute.xlu0 %1758
        %1760 = vrot.lane.b32.xlu0 %v1742, 37
        %v1761 = vpop.permute.xlu0 %1760
        %1762 = vrot.lane.b32.xlu0 %v1747, 37
        %v1763 = vpop.permute.xlu0 %1762
        %v1764 = vrot.slane %v1749, 4
        %v1765 = vrot.slane %v1751, 4
        %v1766 = vrot.slane %v1753, 4
        %v1767 = vrot.slane %v1755, 4
        %v1768 = vrot.slane %v1757, 4
        %v1769 = vrot.slane %v1759, 4
        %v1770 = vrot.slane %v1761, 4
        %v1771 = vrot.slane %v1763, 4
        %v1772 = vsel %vm584, %v1764, %v1765
        %vm1773 = vcmask 302080
        %v1774 = vsel %vm1773, %v1749, %v1772
        %v1775 = vsel %vm584, %v1765, %v1766
        %v1776 = vsel %vm1773, %v1751, %v1775
        %v1777 = vsel %vm584, %v1766, %v1767
        %v1778 = vsel %vm1773, %v1753, %v1777
        %v1779 = vsel %vm1773, %v1755, %v1767
        %v1780 = vsel %vm584, %v1768, %v1769
        %v1781 = vsel %vm1773, %v1757, %v1780
        %v1782 = vsel %vm584, %v1769, %v1770
        %v1783 = vsel %vm1773, %v1759, %v1782
        %v1784 = vsel %vm584, %v1770, %v1771
        %v1785 = vsel %vm1773, %v1761, %v1784
        %v1786 = vsel %vm1773, %v1763, %v1771
        %v1795 = vld [vmem:[#allocation2 + $0x70] sm:$0x88]
        %v1796 = vsel %vm1032, %v1774, %v1795
        %1797 = vst [vmem:[#allocation2 + $0x70] sm:$0x88] %v1796
        %v1798 = vld [vmem:[#allocation2 + $0x78] sm:$0x88]
        %v1799 = vsel %vm1032, %v1776, %v1798
        %1800 = vst [vmem:[#allocation2 + $0x78] sm:$0x88] %v1799
        %v1801 = vld [vmem:[#allocation2 + $0x80] sm:$0x88]
        %v1802 = vsel %vm1032, %v1778, %v1801
        %1803 = vst [vmem:[#allocation2 + $0x80] sm:$0x88] %v1802
        %v1804 = vld [vmem:[#allocation2 + $0x88] sm:$0x8]
        %v1805 = vsel %vm1043, %v1779, %v1804
        %1806 = vst [vmem:[#allocation2 + $0x88] sm:$0x8] %v1805
        %1807 = vst [vmem:[#allocation2 + $0x8c] sm:$0x11] %v1781
        %1808 = vst [vmem:[#allocation2 + $0x94] sm:$0x11] %v1783
        %1809 = vst [vmem:[#allocation2 + $0x9c] sm:$0x11] %v1785
        %1810 = vst.msk [vmem:[#allocation2 + $0xa4] sm:$0x1] %vm1050, %v1786
        %v1811 = vld [vmem:[%s303] sm:$0xff]
        %v1812 = vld [vmem:[%s303 + $0x8] sm:$0xff]
        %v1815 = vcombine.high %v1811, %v1811
        %v1817 = vunpack.c.l.s4 1983009808
        %v1818 = vunpack.c.0.s8 %v1817
        %v1819 = vlaneseq
        %v1820 = vshrl.u32 %v1819, 7
        %v1821 = vsub.s32 %v1818, %v1820
        %v1822 = vrot.slane %v1811, %v1821
        %v1824 = vunpack.c.l.s4 1983009808
        %v1825 = vunpack.c.0.s8 %v1824
        %v1826 = vlaneseq
        %v1827 = vshrl.u32 %v1826, 7
        %v1828 = vsub.s32 %v1825, %v1827
        %v1829 = vrot.slane %v1815, %v1828
        %v1830 = vcombine.high %v1812, %v1812
        %v1832 = vunpack.c.l.s4 1983009808
        %v1833 = vunpack.c.0.s8 %v1832
        %v1834 = vlaneseq
        %v1835 = vshrl.u32 %v1834, 7
        %v1836 = vsub.s32 %v1833, %v1835
        %v1837 = vrot.slane %v1812, %v1836
        %v1839 = vunpack.c.l.s4 1983009808
        %v1840 = vunpack.c.0.s8 %v1839
        %v1841 = vlaneseq
        %v1842 = vshrl.u32 %v1841, 7
        %v1843 = vsub.s32 %v1840, %v1842
        %v1844 = vrot.slane %v1830, %v1843
        %v1845 = vrot.slane %v1822, 7
        %v1846 = vrot.slane %v1829, 7
        %v1847 = vrot.slane %v1837, 7
        %v1848 = vrot.slane %v1844, 7
        %1849 = vrot.lane.b32.xlu0 %v1845, 36
        %v1850 = vpop.permute.xlu0 %1849
        %1851 = vrot.lane.b32.xlu0 %v1846, 36
        %v1852 = vpop.permute.xlu0 %1851
        %1853 = vrot.lane.b32.xlu0 %v1847, 36
        %v1854 = vpop.permute.xlu0 %1853
        %1855 = vrot.lane.b32.xlu0 %v1848, 36
        %v1856 = vpop.permute.xlu0 %1855
        %v1857 = vrot.slane %v1850, 4
        %v1858 = vrot.slane %v1852, 4
        %v1859 = vrot.slane %v1854, 4
        %v1860 = vrot.slane %v1856, 4
        %v1861 = vsel %vm584, %v1857, %v1858
        %vm1862 = vcmask 293888
        %v1863 = vsel %vm1862, %v1850, %v1861
        %v1864 = vsel %vm584, %v1858, %v1859
        %v1865 = vsel %vm1862, %v1852, %v1864
        %v1866 = vsel %vm584, %v1859, %v1860
        %v1867 = vsel %vm1862, %v1854, %v1866
        %v1868 = vsel %vm1862, %v1856, %v1860
        %v1873 = vld [vmem:[#allocation2 + $0x8c] sm:$0x66]
        %v1874 = vsel %vm1117, %v1863, %v1873
        %1875 = vst [vmem:[#allocation2 + $0x8c] sm:$0x66] %v1874
        %v1876 = vld [vmem:[#allocation2 + $0x94] sm:$0x66]
        %v1877 = vsel %vm1117, %v1865, %v1876
        %1878 = vst [vmem:[#allocation2 + $0x94] sm:$0x66] %v1877
        %v1879 = vld [vmem:[#allocation2 + $0x9c] sm:$0x66]
        %v1880 = vsel %vm1117, %v1867, %v1879
        %1881 = vst [vmem:[#allocation2 + $0x9c] sm:$0x66] %v1880
        %v1882 = vld [vmem:[#allocation2 + $0xa4] sm:$0x6]
        %v1883 = vsel %vm1127, %v1868, %v1882
        %1884 = vst [vmem:[#allocation2 + $0xa4] sm:$0x6] %v1883
        %v1885 = vld [vmem:[%s303] sm:$0xff]
        %v1886 = vld [vmem:[%s303 + $0x8] sm:$0xff]
        %v1889 = vcombine.high %v1885, %v1885
        %v1891 = vunpack.c.l.s4 1983009808
        %v1892 = vunpack.c.0.s8 %v1891
        %v1893 = vlaneseq
        %v1894 = vshrl.u32 %v1893, 7
        %v1895 = vsub.s32 %v1892, %v1894
        %v1896 = vrot.slane %v1885, %v1895
        %v1898 = vunpack.c.l.s4 1983009808
        %v1899 = vunpack.c.0.s8 %v1898
        %v1900 = vlaneseq
        %v1901 = vshrl.u32 %v1900, 7
        %v1902 = vsub.s32 %v1899, %v1901
        %v1903 = vrot.slane %v1889, %v1902
        %v1904 = vcombine.high %v1886, %v1886
        %v1906 = vunpack.c.l.s4 1983009808
        %v1907 = vunpack.c.0.s8 %v1906
        %v1908 = vlaneseq
        %v1909 = vshrl.u32 %v1908, 7
        %v1910 = vsub.s32 %v1907, %v1909
        %v1911 = vrot.slane %v1886, %v1910
        %v1913 = vunpack.c.l.s4 1983009808
        %v1914 = vunpack.c.0.s8 %v1913
        %v1915 = vlaneseq
        %v1916 = vshrl.u32 %v1915, 7
        %v1917 = vsub.s32 %v1914, %v1916
        %v1918 = vrot.slane %v1904, %v1917
        %v1920 = vshrl.u32 %v1896, 16
        %v1922 = vrot.slane %v1920, 5
        %v1923 = vshll.u32 %v1896, 16
        %v1925 = vrot.slane %v1923, 6
        %v1926 = vor.u32 %v1922, %v1925
        %v1928 = vshrl.u32 %v1903, 16
        %v1930 = vrot.slane %v1928, 5
        %v1931 = vshll.u32 %v1903, 16
        %v1933 = vrot.slane %v1931, 6
        %v1934 = vor.u32 %v1930, %v1933
        %v1936 = vshrl.u32 %v1911, 16
        %v1938 = vrot.slane %v1936, 5
        %v1939 = vshll.u32 %v1911, 16
        %v1941 = vrot.slane %v1939, 6
        %v1942 = vor.u32 %v1938, %v1941
        %v1944 = vshrl.u32 %v1918, 16
        %v1946 = vrot.slane %v1944, 5
        %v1947 = vshll.u32 %v1918, 16
        %v1949 = vrot.slane %v1947, 6
        %v1950 = vor.u32 %v1946, %v1949
        %1951 = vrot.lane.b32.xlu0 %v1926, 35
        %v1952 = vpop.permute.xlu0 %1951
        %1953 = vrot.lane.b32.xlu0 %v1934, 35
        %v1954 = vpop.permute.xlu0 %1953
        %1955 = vrot.lane.b32.xlu0 %v1942, 35
        %v1956 = vpop.permute.xlu0 %1955
        %1957 = vrot.lane.b32.xlu0 %v1950, 35
        %v1958 = vpop.permute.xlu0 %1957
        %v1959 = vrot.slane %v1952, 4
        %v1960 = vrot.slane %v1954, 4
        %v1961 = vrot.slane %v1956, 4
        %v1962 = vrot.slane %v1958, 4
        %v1963 = vsel %vm584, %v1959, %v1960
        %vm1964 = vcmask 285696
        %v1965 = vsel %vm1964, %v1952, %v1963
        %v1966 = vsel %vm584, %v1960, %v1961
        %v1967 = vsel %vm1964, %v1954, %v1966
        %v1968 = vsel %vm584, %v1961, %v1962
        %v1969 = vsel %vm1964, %v1956, %v1968
        %v1970 = vsel %vm1964, %v1958, %v1962
        %v1975 = vld [vmem:[#allocation2 + $0x8c] sm:$0xcc]
        %v1976 = vsel %vm1224, %v1965, %v1975
        %1977 = vst [vmem:[#allocation2 + $0x8c] sm:$0xcc] %v1976
        %v1978 = vld [vmem:[#allocation2 + $0x94] sm:$0xcc]
        %v1979 = vsel %vm1224, %v1967, %v1978
        %1980 = vst [vmem:[#allocation2 + $0x94] sm:$0xcc] %v1979
        %v1981 = vld [vmem:[#allocation2 + $0x9c] sm:$0xcc]
        %v1982 = vsel %vm1224, %v1969, %v1981
        %1983 = vst [vmem:[#allocation2 + $0x9c] sm:$0xcc] %v1982
        %v1984 = vld [vmem:[#allocation2 + $0xa4] sm:$0xc]
        %v1985 = vsel %vm1234, %v1970, %v1984
        %1986 = vst [vmem:[#allocation2 + $0xa4] sm:$0xc] %v1985
        %v1987 = vld [vmem:[#allocation2] sm:$0xff]
        %v1988 = vld [vmem:[#allocation2 + $0x8] sm:$0xff]
        %v1989 = vld [vmem:[#allocation2 + $0x10] sm:$0xff]
        %v1990 = vld [vmem:[#allocation2 + $0x18] sm:$0xf]
        %v1991 = vld [vmem:[#allocation2 + $0x1c] sm:$0xff]
        %v1992 = vld [vmem:[#allocation2 + $0x24] sm:$0xff]
        %v1993 = vld [vmem:[#allocation2 + $0x2c] sm:$0xff]
        %v1994 = vld [vmem:[#allocation2 + $0x34] sm:$0xf]
        %v1995 = vld [vmem:[#allocation2 + $0x38] sm:$0xff]
        %v1996 = vld [vmem:[#allocation2 + $0x40] sm:$0xff]
        %v1997 = vld [vmem:[#allocation2 + $0x48] sm:$0xff]
        %v1998 = vld [vmem:[#allocation2 + $0x50] sm:$0xf]
        %v1999 = vld [vmem:[#allocation2 + $0x54] sm:$0xff]
        %v2000 = vld [vmem:[#allocation2 + $0x5c] sm:$0xff]
        %v2001 = vld [vmem:[#allocation2 + $0x64] sm:$0xff]
        %v2002 = vld [vmem:[#allocation2 + $0x6c] sm:$0xf]
        %v2003 = vld [vmem:[#allocation2 + $0x70] sm:$0xff]
        %v2004 = vld [vmem:[#allocation2 + $0x78] sm:$0xff]
        %v2005 = vld [vmem:[#allocation2 + $0x80] sm:$0xff]
        %v2006 = vld [vmem:[#allocation2 + $0x88] sm:$0xf]
        %v2007 = vld [vmem:[#allocation2 + $0x8c] sm:$0xff]
        %v2008 = vld [vmem:[#allocation2 + $0x94] sm:$0xff]
        %v2009 = vld [vmem:[#allocation2 + $0x9c] sm:$0xff]
        %v2010 = vld [vmem:[#allocation2 + $0xa4] sm:$0xf]
        %2012 = vset.pattern.permute.xlu0 0
        %2013 = vperm.xlu0 %2012, %v315
        %v2014 = vpop.permute.xlu0 %2013
        %2017 = vset.pattern.permute.xlu0 0
        %2018 = vperm.xlu0 %2017, %v316
        %v2019 = vpop.permute.xlu0 %2018
        %2022 = vset.pattern.permute.xlu0 0
        %2023 = vperm.xlu0 %2022, %v317
        %v2024 = vpop.permute.xlu0 %2023
        %2027 = vset.pattern.permute.xlu0 0
        %2028 = vperm.xlu0 %2027, %v318
        %v2029 = vpop.permute.xlu0 %2028
        %2032 = vset.pattern.permute.xlu0 0
        %2033 = vperm.xlu0 %2032, %v319
        %v2034 = vpop.permute.xlu0 %2033
        %v2041 = vunpack.c.l.b16 %v310
        %v2042 = vunpack.c.l.b16 %v311
        %v2043 = vunpack.c.l.b16 %v312
        %v2044 = vunpack.c.l.b16 %v313
        %v2045 = vunpack.c.l.b16 %v314
        %v2046 = vpack.c.b16 %v2042, %v2041
        %v2047 = vpack.c.b16 %v2044, %v2043
        %v2048 = vpack.c.b16 %v2045, %v2045
        %v2073 = vunpack.c.l.b16 %v1987
        %v2074 = vunpack.c.h.b16 %v1987
        %v2075 = vunpack.c.l.b16 %v1988
        %v2076 = vunpack.c.h.b16 %v1988
        %v2077 = vunpack.c.l.b16 %v1989
        %v2078 = vunpack.c.h.b16 %v1989
        %v2079 = vunpack.c.l.b16 %v1990
        %v2080 = vunpack.c.l.b16 %v1991
        %v2081 = vunpack.c.h.b16 %v1991
        %v2082 = vunpack.c.l.b16 %v1992
        %v2083 = vunpack.c.h.b16 %v1992
        %v2084 = vunpack.c.l.b16 %v1993
        %v2085 = vunpack.c.h.b16 %v1993
        %v2086 = vunpack.c.l.b16 %v1994
        %v2087 = vunpack.c.l.b16 %v1995
        %v2088 = vunpack.c.h.b16 %v1995
        %v2089 = vunpack.c.l.b16 %v1996
        %v2090 = vunpack.c.h.b16 %v1996
        %v2091 = vunpack.c.l.b16 %v1997
        %v2092 = vunpack.c.h.b16 %v1997
        %v2093 = vunpack.c.l.b16 %v1998
        %v2094 = vunpack.c.l.b16 %v1999
        %v2095 = vunpack.c.h.b16 %v1999
        %v2096 = vunpack.c.l.b16 %v2000
        %v2097 = vunpack.c.h.b16 %v2000
        %v2098 = vunpack.c.l.b16 %v2001
        %v2099 = vunpack.c.h.b16 %v2001
        %v2100 = vunpack.c.l.b16 %v2002
        %v2101 = vunpack.c.l.b16 %v2003
        %v2102 = vunpack.c.h.b16 %v2003
        %v2103 = vunpack.c.l.b16 %v2004
        %v2104 = vunpack.c.h.b16 %v2004
        %v2105 = vunpack.c.l.b16 %v2005
        %v2106 = vunpack.c.h.b16 %v2005
        %v2107 = vunpack.c.l.b16 %v2006
        %v2108 = vunpack.c.l.b16 %v2007
        %v2109 = vunpack.c.h.b16 %v2007
        %v2110 = vunpack.c.l.b16 %v2008
        %v2111 = vunpack.c.h.b16 %v2008
        %v2112 = vunpack.c.l.b16 %v2009
        %v2113 = vunpack.c.h.b16 %v2009
        %v2114 = vunpack.c.l.b16 %v2010
        %v2115 = vpack.c.b16 %v2080, %v2073
        %v2116 = vpack.c.b16 %v2081, %v2074
        %v2117 = vpack.c.b16 %v2082, %v2075
        %v2118 = vpack.c.b16 %v2083, %v2076
        %v2119 = vpack.c.b16 %v2084, %v2077
        %v2120 = vpack.c.b16 %v2085, %v2078
        %v2121 = vpack.c.b16 %v2086, %v2079
        %v2122 = vpack.c.b16 %v2094, %v2087
        %v2123 = vpack.c.b16 %v2095, %v2088
        %v2124 = vpack.c.b16 %v2096, %v2089
        %v2125 = vpack.c.b16 %v2097, %v2090
        %v2126 = vpack.c.b16 %v2098, %v2091
        %v2127 = vpack.c.b16 %v2099, %v2092
        %v2128 = vpack.c.b16 %v2100, %v2093
        %v2129 = vpack.c.b16 %v2108, %v2101
        %v2130 = vpack.c.b16 %v2109, %v2102
        %v2131 = vpack.c.b16 %v2110, %v2103
        %v2132 = vpack.c.b16 %v2111, %v2104
        %v2133 = vpack.c.b16 %v2112, %v2105
        %v2134 = vpack.c.b16 %v2113, %v2106
        %v2135 = vpack.c.b16 %v2114, %v2107
        %vm2157 = vcmask 392192
        %v2159 = vsel %vm2157, %v2046, 0
        %v2162 = vsel %vm2157, %v2047, 0
        %v2165 = vsel %vm2157, %v2048, 0
        %2167 = vmatprep.subr.bf16.mxu0 0
        %2168 = vmatpush1.bf16.msra.mxu0 0
        %2169 = vmatprep.subr.bf16.mxu0 0
        %2170 = vmatpush1.bf16.msra.mxu0 0
        %2171 = vmatprep.subr.bf16.mxu0 0
        %2172 = vmatpush1.bf16.msra.mxu0 0
        %2173 = vmatprep.subr.bf16.mxu0 0
        %2174 = vmatpush1.bf16.msra.mxu0 0
        %2175 = vmatprep.subr.bf16.mxu0 0
        %2176 = vmatpush1.bf16.msra.mxu0 0
        %2177 = vmatprep.subr.bf16.mxu0 %v2130
        %2178 = vmatpush1.bf16.msra.mxu0 %v2129
        %2179 = vmatprep.subr.bf16.mxu0 %v2123
        %2180 = vmatpush1.bf16.msra.mxu0 %v2122
        %2181 = vmatprep.subr.bf16.mxu0 %v2116
        %2182 = vmatpush1.bf16.msra.mxu0 %v2115
        %2183 = vmatprep.subr.bf16.mxu0 0
        %2184 = vmatpush2.bf16.msra.mxu0 0
        %2185 = vmatprep.subr.bf16.mxu0 0
        %2186 = vmatpush2.bf16.msra.mxu0 0
        %2187 = vmatprep.subr.bf16.mxu0 0
        %2188 = vmatpush2.bf16.msra.mxu0 0
        %2189 = vmatprep.subr.bf16.mxu0 0
        %2190 = vmatpush2.bf16.msra.mxu0 0
        %2191 = vmatprep.subr.bf16.mxu0 0
        %2192 = vmatpush2.bf16.msra.mxu0 0
        %2193 = vmatprep.subr.bf16.mxu0 0
        %2194 = vmatpush2.bf16.msra.mxu0 0
        %2195 = vmatprep.subr.bf16.mxu0 0
        %2196 = vmatpush2.bf16.msra.mxu0 0
        %2197 = vmatprep.subr.bf16.mxu0 0
        %2198 = vmatpush2.bf16.msra.mxu0 0
        %2199 = vmatprep.mubr.bf16.mxu0 0
        %2200 = vmatmul.mubr.bf16.gmra.mxu0 %v2159
        %v2201 = vpop.f32.mrf.mxu0
        %v2202 = vadd.f32 %v2014, %v2201
        %v2203 = vpop.f32.mrf.mxu0
        %v2204 = vadd.f32 %v2014, %v2203
        %v2205 = vpop.f32.mrf.mxu0
        %v2206 = vadd.f32 %v2019, %v2205
        %v2207 = vpop.f32.mrf.mxu0
        %v2208 = vadd.f32 %v2019, %v2207
        %2209 = vmatprep.mubr.bf16.mxu0 0
        %2210 = vmatmul.mubr.bf16.gmra.mxu0 %v2162
        %v2211 = vpop.f32.mrf.mxu0
        %v2212 = vadd.f32 %v2024, %v2211
        %v2213 = vpop.f32.mrf.mxu0
        %v2214 = vadd.f32 %v2024, %v2213
        %v2215 = vpop.f32.mrf.mxu0
        %v2216 = vadd.f32 %v2029, %v2215
        %v2217 = vpop.f32.mrf.mxu0
        %v2218 = vadd.f32 %v2029, %v2217
        %2219 = vmatprep.mubr.bf16.mxu0 0
        %2220 = vmatmul.mubr.bf16.gmra.mxu0 %v2165
        %v2221 = vpop.f32.mrf.mxu0
        %v2222 = vadd.f32 %v2034, %v2221
        %v2223 = vpop.f32.mrf.mxu0
        %v2224 = vadd.f32 %v2034, %v2223
        %v2225 = vpop.f32.mrf.mxu0
        %v2226 = vpop.f32.mrf.mxu0
        %2227 = vdwg.mxu0
        %2228 = vmatprep.subr.bf16.mxu0 0
        %2229 = vmatpush1.bf16.msra.mxu0 0
        %2230 = vmatprep.subr.bf16.mxu0 0
        %2231 = vmatpush1.bf16.msra.mxu0 0
        %2232 = vmatprep.subr.bf16.mxu0 0
        %2233 = vmatpush1.bf16.msra.mxu0 0
        %2234 = vmatprep.subr.bf16.mxu0 0
        %2235 = vmatpush1.bf16.msra.mxu0 0
        %2236 = vmatprep.subr.bf16.mxu0 0
        %2237 = vmatpush1.bf16.msra.mxu0 0
        %2238 = vmatprep.subr.bf16.mxu0 %v2132
        %2239 = vmatpush1.bf16.msra.mxu0 %v2131
        %2240 = vmatprep.subr.bf16.mxu0 %v2125
        %2241 = vmatpush1.bf16.msra.mxu0 %v2124
        %2242 = vmatprep.subr.bf16.mxu0 %v2118
        %2243 = vmatpush1.bf16.msra.mxu0 %v2117
        %2244 = vmatprep.subr.bf16.mxu0 0
        %2245 = vmatpush2.bf16.msra.mxu0 0
        %2246 = vmatprep.subr.bf16.mxu0 0
        %2247 = vmatpush2.bf16.msra.mxu0 0
        %2248 = vmatprep.subr.bf16.mxu0 0
        %2249 = vmatpush2.bf16.msra.mxu0 0
        %2250 = vmatprep.subr.bf16.mxu0 0
        %2251 = vmatpush2.bf16.msra.mxu0 0
        %2252 = vmatprep.subr.bf16.mxu0 0
        %2253 = vmatpush2.bf16.msra.mxu0 0
        %2254 = vmatprep.subr.bf16.mxu0 0
        %2255 = vmatpush2.bf16.msra.mxu0 0
        %2256 = vmatprep.subr.bf16.mxu0 0
        %2257 = vmatpush2.bf16.msra.mxu0 0
        %2258 = vmatprep.subr.bf16.mxu0 0
        %2259 = vmatpush2.bf16.msra.mxu0 0
        %2260 = vmatprep.mubr.bf16.mxu0 0
        %2261 = vmatmul.mubr.bf16.gmra.mxu0 %v2159
        %v2262 = vpop.f32.mrf.mxu0
        %v2263 = vadd.f32 %v2014, %v2262
        %v2264 = vpop.f32.mrf.mxu0
        %v2265 = vadd.f32 %v2014, %v2264
        %v2266 = vpop.f32.mrf.mxu0
        %v2267 = vadd.f32 %v2019, %v2266
        %v2268 = vpop.f32.mrf.mxu0
        %v2269 = vadd.f32 %v2019, %v2268
        %2270 = vmatprep.mubr.bf16.mxu0 0
        %2271 = vmatmul.mubr.bf16.gmra.mxu0 %v2162
        %v2272 = vpop.f32.mrf.mxu0
        %v2273 = vadd.f32 %v2024, %v2272
        %v2274 = vpop.f32.mrf.mxu0
        %v2275 = vadd.f32 %v2024, %v2274
        %v2276 = vpop.f32.mrf.mxu0
        %v2277 = vadd.f32 %v2029, %v2276
        %v2278 = vpop.f32.mrf.mxu0
        %v2279 = vadd.f32 %v2029, %v2278
        %2280 = vmatprep.mubr.bf16.mxu0 0
        %2281 = vmatmul.mubr.bf16.gmra.mxu0 %v2165
        %v2282 = vpop.f32.mrf.mxu0
        %v2283 = vadd.f32 %v2034, %v2282
        %v2284 = vpop.f32.mrf.mxu0
        %v2285 = vadd.f32 %v2034, %v2284
        %v2286 = vpop.f32.mrf.mxu0
        %v2287 = vpop.f32.mrf.mxu0
        %2288 = vdwg.mxu0
        %2289 = vmatprep.subr.bf16.mxu0 0
        %2290 = vmatpush1.bf16.msra.mxu0 0
        %2291 = vmatprep.subr.bf16.mxu0 0
        %2292 = vmatpush1.bf16.msra.mxu0 0
        %2293 = vmatprep.subr.bf16.mxu0 0
        %2294 = vmatpush1.bf16.msra.mxu0 0
        %2295 = vmatprep.subr.bf16.mxu0 0
        %2296 = vmatpush1.bf16.msra.mxu0 0
        %2297 = vmatprep.subr.bf16.mxu0 0
        %2298 = vmatpush1.bf16.msra.mxu0 0
        %2299 = vmatprep.subr.bf16.mxu0 %v2134
        %2300 = vmatpush1.bf16.msra.mxu0 %v2133
        %2301 = vmatprep.subr.bf16.mxu0 %v2127
        %2302 = vmatpush1.bf16.msra.mxu0 %v2126
        %2303 = vmatprep.subr.bf16.mxu0 %v2120
        %2304 = vmatpush1.bf16.msra.mxu0 %v2119
        %2305 = vmatprep.subr.bf16.mxu0 0
        %2306 = vmatpush2.bf16.msra.mxu0 0
        %2307 = vmatprep.subr.bf16.mxu0 0
        %2308 = vmatpush2.bf16.msra.mxu0 0
        %2309 = vmatprep.subr.bf16.mxu0 0
        %2310 = vmatpush2.bf16.msra.mxu0 0
        %2311 = vmatprep.subr.bf16.mxu0 0
        %2312 = vmatpush2.bf16.msra.mxu0 0
        %2313 = vmatprep.subr.bf16.mxu0 0
        %2314 = vmatpush2.bf16.msra.mxu0 0
        %2315 = vmatprep.subr.bf16.mxu0 0
        %2316 = vmatpush2.bf16.msra.mxu0 0
        %2317 = vmatprep.subr.bf16.mxu0 0
        %2318 = vmatpush2.bf16.msra.mxu0 0
        %2319 = vmatprep.subr.bf16.mxu0 0
        %2320 = vmatpush2.bf16.msra.mxu0 0
        %2321 = vmatprep.mubr.bf16.mxu0 0
        %2322 = vmatmul.mubr.bf16.gmra.mxu0 %v2159
        %v2323 = vpop.f32.mrf.mxu0
        %v2324 = vadd.f32 %v2014, %v2323
        %v2325 = vpop.f32.mrf.mxu0
        %v2326 = vadd.f32 %v2014, %v2325
        %v2327 = vpop.f32.mrf.mxu0
        %v2328 = vadd.f32 %v2019, %v2327
        %v2329 = vpop.f32.mrf.mxu0
        %v2330 = vadd.f32 %v2019, %v2329
        %2331 = vmatprep.mubr.bf16.mxu0 0
        %2332 = vmatmul.mubr.bf16.gmra.mxu0 %v2162
        %v2333 = vpop.f32.mrf.mxu0
        %v2334 = vadd.f32 %v2024, %v2333
        %v2335 = vpop.f32.mrf.mxu0
        %v2336 = vadd.f32 %v2024, %v2335
        %v2337 = vpop.f32.mrf.mxu0
        %v2338 = vadd.f32 %v2029, %v2337
        %v2339 = vpop.f32.mrf.mxu0
        %v2340 = vadd.f32 %v2029, %v2339
        %2341 = vmatprep.mubr.bf16.mxu0 0
        %2342 = vmatmul.mubr.bf16.gmra.mxu0 %v2165
        %v2343 = vpop.f32.mrf.mxu0
        %v2344 = vadd.f32 %v2034, %v2343
        %v2345 = vpop.f32.mrf.mxu0
        %v2346 = vadd.f32 %v2034, %v2345
        %v2347 = vpop.f32.mrf.mxu0
        %v2348 = vpop.f32.mrf.mxu0
        %2349 = vdwg.mxu0
        %2350 = vmatprep.subr.bf16.mxu0 0
        %2351 = vmatpush1.bf16.msra.mxu0 0
        %2352 = vmatprep.subr.bf16.mxu0 0
        %2353 = vmatpush1.bf16.msra.mxu0 0
        %2354 = vmatprep.subr.bf16.mxu0 0
        %2355 = vmatpush1.bf16.msra.mxu0 0
        %2356 = vmatprep.subr.bf16.mxu0 0
        %2357 = vmatpush1.bf16.msra.mxu0 0
        %2358 = vmatprep.subr.bf16.mxu0 0
        %2359 = vmatpush1.bf16.msra.mxu0 0
        %2360 = vmatprep.subr.bf16.mxu0 0
        %2361 = vmatpush1.bf16.msra.mxu0 %v2135
        %2362 = vmatprep.subr.bf16.mxu0 0
        %2363 = vmatpush1.bf16.msra.mxu0 %v2128
        %2364 = vmatprep.subr.bf16.mxu0 0
        %2365 = vmatpush1.bf16.msra.mxu0 %v2121
        %2366 = vmatprep.subr.bf16.mxu0 0
        %2367 = vmatpush2.bf16.msra.mxu0 0
        %2368 = vmatprep.subr.bf16.mxu0 0
        %2369 = vmatpush2.bf16.msra.mxu0 0
        %2370 = vmatprep.subr.bf16.mxu0 0
        %2371 = vmatpush2.bf16.msra.mxu0 0
        %2372 = vmatprep.subr.bf16.mxu0 0
        %2373 = vmatpush2.bf16.msra.mxu0 0
        %2374 = vmatprep.subr.bf16.mxu0 0
        %2375 = vmatpush2.bf16.msra.mxu0 0
        %2376 = vmatprep.subr.bf16.mxu0 0
        %2377 = vmatpush2.bf16.msra.mxu0 0
        %2378 = vmatprep.subr.bf16.mxu0 0
        %2379 = vmatpush2.bf16.msra.mxu0 0
        %2380 = vmatprep.subr.bf16.mxu0 0
        %2381 = vmatpush2.bf16.msra.mxu0 0
        %2382 = vmatprep.mubr.bf16.mxu0 0
        %2383 = vmatmul.mubr.bf16.gmra.mxu0 %v2159
        %v2384 = vpop.f32.mrf.mxu0
        %v2385 = vadd.f32 %v2014, %v2384
        %v2386 = vpop.f32.mrf.mxu0
        %v2387 = vpop.f32.mrf.mxu0
        %v2388 = vadd.f32 %v2019, %v2387
        %v2389 = vpop.f32.mrf.mxu0
        %2390 = vmatprep.mubr.bf16.mxu0 0
        %2391 = vmatmul.mubr.bf16.gmra.mxu0 %v2162
        %v2392 = vpop.f32.mrf.mxu0
        %v2393 = vadd.f32 %v2024, %v2392
        %v2394 = vpop.f32.mrf.mxu0
        %v2395 = vpop.f32.mrf.mxu0
        %v2396 = vadd.f32 %v2029, %v2395
        %v2397 = vpop.f32.mrf.mxu0
        %2398 = vmatprep.mubr.bf16.mxu0 0
        %2399 = vmatmul.mubr.bf16.gmra.mxu0 %v2165
        %v2400 = vpop.f32.mrf.mxu0
        %v2401 = vadd.f32 %v2034, %v2400
        %v2402 = vpop.f32.mrf.mxu0
        %v2403 = vpop.f32.mrf.mxu0
        %v2404 = vpop.f32.mrf.mxu0
        %2405 = vdwg.mxu0
        %v2406 = vmax.f32 %v2202, 0.0
        %v2407 = vmax.f32 %v2204, 0.0
        %v2408 = vmax.f32 %v2263, 0.0
        %v2409 = vmax.f32 %v2265, 0.0
        %v2410 = vmax.f32 %v2324, 0.0
        %v2411 = vmax.f32 %v2326, 0.0
        %v2412 = vmax.f32 %v2385, 0.0
        %v2413 = vmax.f32 %v2206, 0.0
        %v2414 = vmax.f32 %v2208, 0.0
        %v2415 = vmax.f32 %v2267, 0.0
        %v2416 = vmax.f32 %v2269, 0.0
        %v2417 = vmax.f32 %v2328, 0.0
        %v2418 = vmax.f32 %v2330, 0.0
        %v2419 = vmax.f32 %v2388, 0.0
        %v2420 = vmax.f32 %v2212, 0.0
        %v2421 = vmax.f32 %v2214, 0.0
        %v2422 = vmax.f32 %v2273, 0.0
        %v2423 = vmax.f32 %v2275, 0.0
        %v2424 = vmax.f32 %v2334, 0.0
        %v2425 = vmax.f32 %v2336, 0.0
        %v2426 = vmax.f32 %v2393, 0.0
        %v2427 = vmax.f32 %v2216, 0.0
        %v2428 = vmax.f32 %v2218, 0.0
        %v2429 = vmax.f32 %v2277, 0.0
        %v2430 = vmax.f32 %v2279, 0.0
        %v2431 = vmax.f32 %v2338, 0.0
        %v2432 = vmax.f32 %v2340, 0.0
        %v2433 = vmax.f32 %v2396, 0.0
        %v2434 = vmax.f32 %v2222, 0.0
        %v2435 = vmax.f32 %v2224, 0.0
        %v2436 = vmax.f32 %v2283, 0.0
        %v2437 = vmax.f32 %v2285, 0.0
        %v2438 = vmax.f32 %v2344, 0.0
        %v2439 = vmax.f32 %v2346, 0.0
        %v2440 = vmax.f32 %v2401, 0.0
        %v2441 = vpack.c.bf16 %v2413, %v2406
        %v2442 = vpack.c.bf16 %v2414, %v2407
        %v2443 = vpack.c.bf16 %v2415, %v2408
        %v2444 = vpack.c.bf16 %v2416, %v2409
        %v2445 = vpack.c.bf16 %v2417, %v2410
        %v2446 = vpack.c.bf16 %v2418, %v2411
        %v2447 = vpack.c.bf16 %v2419, %v2412
        %v2448 = vpack.c.bf16 %v2427, %v2420
        %v2449 = vpack.c.bf16 %v2428, %v2421
        %v2450 = vpack.c.bf16 %v2429, %v2422
        %v2451 = vpack.c.bf16 %v2430, %v2423
        %v2452 = vpack.c.bf16 %v2431, %v2424
        %v2453 = vpack.c.bf16 %v2432, %v2425
        %v2454 = vpack.c.bf16 %v2433, %v2426
        %v2455 = vpack.c.bf16 %v2434, %v2434
        %v2456 = vpack.c.bf16 %v2435, %v2435
        %v2457 = vpack.c.bf16 %v2436, %v2436
        %v2458 = vpack.c.bf16 %v2437, %v2437
        %v2459 = vpack.c.bf16 %v2438, %v2438
        %v2460 = vpack.c.bf16 %v2439, %v2439
        %v2461 = vpack.c.bf16 %v2440, %v2440
        %2480 = vrot.lane.b32.xlu0 %v2441, 127
        %v2481 = vpop.permute.xlu0 %2480
        %2482 = vrot.lane.b32.xlu0 %v2442, 127
        %v2483 = vpop.permute.xlu0 %2482
        %2484 = vrot.lane.b32.xlu0 %v2443, 127
        %v2485 = vpop.permute.xlu0 %2484
        %2486 = vrot.lane.b32.xlu0 %v2444, 127
        %v2487 = vpop.permute.xlu0 %2486
        %2488 = vrot.lane.b32.xlu0 %v2445, 127
        %v2489 = vpop.permute.xlu0 %2488
        %2490 = vrot.lane.b32.xlu0 %v2446, 127
        %v2491 = vpop.permute.xlu0 %2490
        %2492 = vrot.lane.b32.xlu0 %v2448, 127
        %v2493 = vpop.permute.xlu0 %2492
        %2494 = vrot.lane.b32.xlu0 %v2449, 127
        %v2495 = vpop.permute.xlu0 %2494
        %2496 = vrot.lane.b32.xlu0 %v2450, 127
        %v2497 = vpop.permute.xlu0 %2496
        %2498 = vrot.lane.b32.xlu0 %v2451, 127
        %v2499 = vpop.permute.xlu0 %2498
        %2500 = vrot.lane.b32.xlu0 %v2452, 127
        %v2501 = vpop.permute.xlu0 %2500
        %2502 = vrot.lane.b32.xlu0 %v2453, 127
        %v2503 = vpop.permute.xlu0 %2502
        %2504 = vrot.lane.b32.xlu0 %v2455, 127
        %v2505 = vpop.permute.xlu0 %2504
        %2506 = vrot.lane.b32.xlu0 %v2456, 127
        %v2507 = vpop.permute.xlu0 %2506
        %2508 = vrot.lane.b32.xlu0 %v2457, 127
        %v2509 = vpop.permute.xlu0 %2508
        %2510 = vrot.lane.b32.xlu0 %v2458, 127
        %v2511 = vpop.permute.xlu0 %2510
        %2512 = vrot.lane.b32.xlu0 %v2459, 127
        %v2513 = vpop.permute.xlu0 %2512
        %2514 = vrot.lane.b32.xlu0 %v2460, 127
        %v2515 = vpop.permute.xlu0 %2514
        %v2516 = vsel %vm586, %v2481, %v2483
        %v2517 = vsel %vm586, %v2483, %v2485
        %v2518 = vsel %vm586, %v2485, %v2487
        %v2519 = vsel %vm586, %v2487, %v2489
        %v2520 = vsel %vm586, %v2489, %v2491
        %v2521 = vsel %vm586, %v2493, %v2495
        %v2522 = vsel %vm586, %v2495, %v2497
        %v2523 = vsel %vm586, %v2497, %v2499
        %v2524 = vsel %vm586, %v2499, %v2501
        %v2525 = vsel %vm586, %v2501, %v2503
        %v2526 = vsel %vm586, %v2505, %v2507
        %v2527 = vsel %vm586, %v2507, %v2509
        %v2528 = vsel %vm586, %v2509, %v2511
        %v2529 = vsel %vm586, %v2511, %v2513
        %v2530 = vsel %vm586, %v2513, %v2515
        %v2549 = vmax.bf16 %v2441, %v2516
        %v2550 = vmax.bf16 %v2442, %v2517
        %v2551 = vmax.bf16 %v2443, %v2518
        %v2552 = vmax.bf16 %v2444, %v2519
        %v2553 = vmax.bf16 %v2445, %v2520
        %v2554 = vmax.bf16 %v2446, %v2491
        %v2555 = vmax.bf16 %v2448, %v2521
        %v2556 = vmax.bf16 %v2449, %v2522
        %v2557 = vmax.bf16 %v2450, %v2523
        %v2558 = vmax.bf16 %v2451, %v2524
        %v2559 = vmax.bf16 %v2452, %v2525
        %v2560 = vmax.bf16 %v2453, %v2503
        %v2561 = vmax.bf16 %v2455, %v2526
        %v2562 = vmax.bf16 %v2456, %v2527
        %v2563 = vmax.bf16 %v2457, %v2528
        %v2564 = vmax.bf16 %v2458, %v2529
        %v2565 = vmax.bf16 %v2459, %v2530
        %v2566 = vmax.bf16 %v2460, %v2515
        %2570 = vrot.lane.b32.xlu0 %v2447, 127
        %v2571 = vpop.permute.xlu0 %2570
        %2572 = vrot.lane.b32.xlu0 %v2454, 127
        %v2573 = vpop.permute.xlu0 %2572
        %2574 = vrot.lane.b32.xlu0 %v2461, 127
        %v2575 = vpop.permute.xlu0 %2574
        %v2576 = vsel %vm586, %v2491, %v2571
        %v2577 = vsel %vm586, %v2503, %v2573
        %v2578 = vsel %vm586, %v2515, %v2575
        %v2585 = vmax.bf16 %v2446, %v2576
        %v2586 = vmax.bf16 %v2447, %v2571
        %v2587 = vmax.bf16 %v2453, %v2577
        %v2588 = vmax.bf16 %v2454, %v2573
        %v2589 = vmax.bf16 %v2460, %v2578
        %v2590 = vmax.bf16 %v2461, %v2575
        %2612 = vrot.lane.b32.xlu0 %v2549, 98
        %v2613 = vpop.permute.xlu0 %2612
        %2614 = vrot.lane.b32.xlu0 %v2550, 98
        %v2615 = vpop.permute.xlu0 %2614
        %2616 = vrot.lane.b32.xlu0 %v2551, 98
        %v2617 = vpop.permute.xlu0 %2616
        %2618 = vrot.lane.b32.xlu0 %v2552, 98
        %v2619 = vpop.permute.xlu0 %2618
        %2620 = vrot.lane.b32.xlu0 %v2553, 98
        %v2621 = vpop.permute.xlu0 %2620
        %2622 = vrot.lane.b32.xlu0 %v2585, 98
        %v2623 = vpop.permute.xlu0 %2622
        %2624 = vrot.lane.b32.xlu0 %v2586, 98
        %v2625 = vpop.permute.xlu0 %2624
        %2626 = vrot.lane.b32.xlu0 %v2555, 98
        %v2627 = vpop.permute.xlu0 %2626
        %2628 = vrot.lane.b32.xlu0 %v2556, 98
        %v2629 = vpop.permute.xlu0 %2628
        %2630 = vrot.lane.b32.xlu0 %v2557, 98
        %v2631 = vpop.permute.xlu0 %2630
        %2632 = vrot.lane.b32.xlu0 %v2558, 98
        %v2633 = vpop.permute.xlu0 %2632
        %2634 = vrot.lane.b32.xlu0 %v2559, 98
        %v2635 = vpop.permute.xlu0 %2634
        %2636 = vrot.lane.b32.xlu0 %v2587, 98
        %v2637 = vpop.permute.xlu0 %2636
        %2638 = vrot.lane.b32.xlu0 %v2588, 98
        %v2639 = vpop.permute.xlu0 %2638
        %2640 = vrot.lane.b32.xlu0 %v2561, 98
        %v2641 = vpop.permute.xlu0 %2640
        %2642 = vrot.lane.b32.xlu0 %v2562, 98
        %v2643 = vpop.permute.xlu0 %2642
        %2644 = vrot.lane.b32.xlu0 %v2563, 98
        %v2645 = vpop.permute.xlu0 %2644
        %2646 = vrot.lane.b32.xlu0 %v2564, 98
        %v2647 = vpop.permute.xlu0 %2646
        %2648 = vrot.lane.b32.xlu0 %v2565, 98
        %v2649 = vpop.permute.xlu0 %2648
        %2650 = vrot.lane.b32.xlu0 %v2589, 98
        %v2651 = vpop.permute.xlu0 %2650
        %2652 = vrot.lane.b32.xlu0 %v2590, 98
        %v2653 = vpop.permute.xlu0 %2652
        %v2654 = vsel %vm880, %v2613, %v2615
        %v2655 = vsel %vm880, %v2615, %v2617
        %v2656 = vsel %vm880, %v2617, %v2619
        %v2657 = vsel %vm880, %v2619, %v2621
        %v2658 = vsel %vm880, %v2621, %v2623
        %v2659 = vsel %vm880, %v2623, %v2625
        %v2660 = vsel %vm880, %v2627, %v2629
        %v2661 = vsel %vm880, %v2629, %v2631
        %v2662 = vsel %vm880, %v2631, %v2633
        %v2663 = vsel %vm880, %v2633, %v2635
        %v2664 = vsel %vm880, %v2635, %v2637
        %v2665 = vsel %vm880, %v2637, %v2639
        %v2666 = vsel %vm880, %v2641, %v2643
        %v2667 = vsel %vm880, %v2643, %v2645
        %v2668 = vsel %vm880, %v2645, %v2647
        %v2669 = vsel %vm880, %v2647, %v2649
        %v2670 = vsel %vm880, %v2649, %v2651
        %v2671 = vsel %vm880, %v2651, %v2653
        %v2690 = vmax.bf16 %v2549, %v2654
        %v2691 = vmax.bf16 %v2550, %v2655
        %v2692 = vmax.bf16 %v2551, %v2656
        %v2693 = vmax.bf16 %v2552, %v2657
        %v2694 = vmax.bf16 %v2553, %v2658
        %v2695 = vmax.bf16 %v2554, %v2659
        %v2696 = vmax.bf16 %v2555, %v2660
        %v2697 = vmax.bf16 %v2556, %v2661
        %v2698 = vmax.bf16 %v2557, %v2662
        %v2699 = vmax.bf16 %v2558, %v2663
        %v2700 = vmax.bf16 %v2559, %v2664
        %v2701 = vmax.bf16 %v2560, %v2665
        %v2702 = vmax.bf16 %v2561, %v2666
        %v2703 = vmax.bf16 %v2562, %v2667
        %v2704 = vmax.bf16 %v2563, %v2668
        %v2705 = vmax.bf16 %v2564, %v2669
        %v2706 = vmax.bf16 %v2565, %v2670
        %v2707 = vmax.bf16 %v2566, %v2671
        %v2802 = vunpack.c.l.b16 %v320
        %v2803 = vunpack.c.h.b16 %v320
        %v2804 = vunpack.c.l.b16 %v321
        %v2805 = vunpack.c.h.b16 %v321
        %v2806 = vunpack.c.l.b16 %v322
        %v2807 = vunpack.c.h.b16 %v322
        %v2808 = vunpack.c.l.b16 %v323
        %v2809 = vunpack.c.h.b16 %v323
        %v2810 = vunpack.c.l.b16 %v324
        %v2811 = vunpack.c.h.b16 %v324
        %v2812 = vunpack.c.l.b16 %v325
        %v2813 = vunpack.c.h.b16 %v325
        %v2814 = vunpack.c.l.b16 %v326
        %v2815 = vunpack.c.h.b16 %v326
        %v2816 = vunpack.c.l.b16 %v327
        %v2817 = vunpack.c.h.b16 %v327
        %v2818 = vunpack.c.l.b16 %v328
        %v2819 = vunpack.c.h.b16 %v328
        %v2820 = vunpack.c.l.b16 %v329
        %v2821 = vunpack.c.h.b16 %v329
        %v2822 = vunpack.c.l.b16 %v330
        %v2823 = vunpack.c.h.b16 %v330
        %v2824 = vunpack.c.l.b16 %v331
        %v2825 = vunpack.c.h.b16 %v331
        %v2826 = vunpack.c.l.b16 %v332
        %v2827 = vunpack.c.h.b16 %v332
        %v2828 = vunpack.c.l.b16 %v333
        %v2829 = vunpack.c.h.b16 %v333
        %v2830 = vunpack.c.l.b16 %v334
        %v2831 = vunpack.c.h.b16 %v334
        %v2832 = vunpack.c.l.b16 %v335
        %v2833 = vunpack.c.h.b16 %v335
        %v2834 = vunpack.c.l.b16 %v336
        %v2835 = vunpack.c.h.b16 %v336
        %v2836 = vunpack.c.l.b16 %v337
        %v2837 = vunpack.c.h.b16 %v337
        %v2838 = vunpack.c.l.b16 %v338
        %v2839 = vunpack.c.h.b16 %v338
        %v2840 = vunpack.c.l.b16 %v339
        %v2841 = vunpack.c.h.b16 %v339
        %v2842 = vunpack.c.l.b16 %v340
        %v2843 = vunpack.c.h.b16 %v340
        %v2844 = vunpack.c.l.b16 %v341
        %v2845 = vunpack.c.h.b16 %v341
        %v2846 = vunpack.c.l.b16 %v342
        %v2847 = vunpack.c.h.b16 %v342
        %v2848 = vunpack.c.l.b16 %v343
        %v2849 = vunpack.c.h.b16 %v343
        %v2850 = vunpack.c.l.b16 %v344
        %v2851 = vunpack.c.h.b16 %v344
        %v2852 = vunpack.c.l.b16 %v345
        %v2853 = vunpack.c.h.b16 %v345
        %v2854 = vunpack.c.l.b16 %v346
        %v2855 = vunpack.c.h.b16 %v346
        %v2856 = vunpack.c.l.b16 %v347
        %v2857 = vunpack.c.h.b16 %v347
        %v2858 = vunpack.c.l.b16 %v348
        %v2859 = vunpack.c.h.b16 %v348
        %v2860 = vunpack.c.l.b16 %v349
        %v2861 = vunpack.c.h.b16 %v349
        %v2862 = vunpack.c.l.b16 %v350
        %v2863 = vunpack.c.h.b16 %v350
        %v2864 = vunpack.c.l.b16 %v351
        %v2865 = vunpack.c.h.b16 %v351
        %v2866 = vunpack.c.l.b16 %v352
        %v2867 = vunpack.c.h.b16 %v352
        %v2868 = vunpack.c.l.b16 %v353
        %v2869 = vunpack.c.h.b16 %v353
        %v2870 = vunpack.c.l.b16 %v354
        %v2871 = vunpack.c.h.b16 %v354
        %v2872 = vunpack.c.l.b16 %v355
        %v2873 = vunpack.c.h.b16 %v355
        %v2874 = vunpack.c.l.b16 %v356
        %v2875 = vunpack.c.h.b16 %v356
        %v2876 = vunpack.c.l.b16 %v357
        %v2877 = vunpack.c.h.b16 %v357
        %v2878 = vunpack.c.l.b16 %v358
        %v2879 = vunpack.c.h.b16 %v358
        %v2880 = vunpack.c.l.b16 %v359
        %v2881 = vunpack.c.h.b16 %v359
        %v2882 = vunpack.c.l.b16 %v360
        %v2883 = vunpack.c.h.b16 %v360
        %v2884 = vunpack.c.l.b16 %v361
        %v2885 = vunpack.c.h.b16 %v361
        %v2886 = vunpack.c.l.b16 %v362
        %v2887 = vunpack.c.h.b16 %v362
        %v2888 = vunpack.c.l.b16 %v363
        %v2889 = vunpack.c.h.b16 %v363
        %v2890 = vunpack.c.l.b16 %v364
        %v2891 = vunpack.c.h.b16 %v364
        %v2892 = vunpack.c.l.b16 %v365
        %v2893 = vunpack.c.h.b16 %v365
        %v2894 = vunpack.c.l.b16 %v366
        %v2895 = vunpack.c.h.b16 %v366
        %v2896 = vunpack.c.l.b16 %v367
        %v2897 = vunpack.c.h.b16 %v367
        %v2898 = vunpack.c.l.b16 %v368
        %v2899 = vunpack.c.h.b16 %v368
        %v2900 = vunpack.c.l.b16 %v369
        %v2901 = vunpack.c.h.b16 %v369
        %v2902 = vunpack.c.l.b16 %v370
        %v2903 = vunpack.c.h.b16 %v370
        %v2904 = vunpack.c.l.b16 %v371
        %v2905 = vunpack.c.h.b16 %v371
        %v2906 = vunpack.c.l.b16 %v372
        %v2907 = vunpack.c.h.b16 %v372
        %v2908 = vunpack.c.l.b16 %v373
        %v2909 = vunpack.c.h.b16 %v373
        %v2910 = vunpack.c.l.b16 %v374
        %v2911 = vunpack.c.h.b16 %v374
        %v2912 = vunpack.c.l.b16 %v375
        %v2913 = vunpack.c.h.b16 %v375
        %v2914 = vunpack.c.l.b16 %v376
        %v2915 = vunpack.c.h.b16 %v376
        %v2916 = vunpack.c.l.b16 %v377
        %v2917 = vunpack.c.h.b16 %v377
        %v2918 = vunpack.c.l.b16 %v378
        %v2919 = vunpack.c.h.b16 %v378
        %v2920 = vunpack.c.l.b16 %v379
        %v2921 = vunpack.c.h.b16 %v379
        %v2922 = vunpack.c.l.b16 %v380
        %v2923 = vunpack.c.h.b16 %v380
        %v2924 = vunpack.c.l.b16 %v381
        %v2925 = vunpack.c.h.b16 %v381
        %v2926 = vunpack.c.l.b16 %v382
        %v2927 = vunpack.c.h.b16 %v382
        %v2928 = vunpack.c.l.b16 %v383
        %v2929 = vunpack.c.h.b16 %v383
        %v2930 = vunpack.c.l.b16 %v384
        %v2931 = vunpack.c.h.b16 %v384
        %v2932 = vunpack.c.l.b16 %v385
        %v2933 = vunpack.c.h.b16 %v385
        %v2934 = vunpack.c.l.b16 %v386
        %v2935 = vunpack.c.h.b16 %v386
        %v2936 = vunpack.c.l.b16 %v387
        %v2937 = vunpack.c.h.b16 %v387
        %v2938 = vunpack.c.l.b16 %v388
        %v2939 = vunpack.c.h.b16 %v388
        %v2940 = vunpack.c.l.b16 %v389
        %v2941 = vunpack.c.h.b16 %v389
        %v2942 = vunpack.c.l.b16 %v390
        %v2943 = vunpack.c.h.b16 %v390
        %v2944 = vunpack.c.l.b16 %v391
        %v2945 = vunpack.c.h.b16 %v391
        %v2946 = vunpack.c.l.b16 %v392
        %v2947 = vunpack.c.h.b16 %v392
        %v2948 = vunpack.c.l.b16 %v393
        %v2949 = vunpack.c.h.b16 %v393
        %v2950 = vunpack.c.l.b16 %v394
        %v2951 = vunpack.c.h.b16 %v394
        %v2952 = vunpack.c.l.b16 %v395
        %v2953 = vunpack.c.h.b16 %v395
        %v2954 = vunpack.c.l.b16 %v396
        %v2955 = vunpack.c.h.b16 %v396
        %v2956 = vunpack.c.l.b16 %v397
        %v2957 = vunpack.c.h.b16 %v397
        %v2958 = vunpack.c.l.b16 %v398
        %v2959 = vunpack.c.h.b16 %v398
        %v2960 = vunpack.c.l.b16 %v399
        %v2961 = vunpack.c.h.b16 %v399
        %v2962 = vunpack.c.l.b16 %v400
        %v2963 = vunpack.c.h.b16 %v400
        %v2964 = vunpack.c.l.b16 %v401
        %v2965 = vunpack.c.h.b16 %v401
        %v2966 = vunpack.c.l.b16 %v402
        %v2967 = vunpack.c.h.b16 %v402
        %v2968 = vunpack.c.l.b16 %v403
        %v2969 = vunpack.c.h.b16 %v403
        %v2970 = vunpack.c.l.b16 %v404
        %v2971 = vunpack.c.h.b16 %v404
        %v2972 = vunpack.c.l.b16 %v405
        %v2973 = vunpack.c.h.b16 %v405
        %v2974 = vunpack.c.l.b16 %v406
        %v2975 = vunpack.c.h.b16 %v406
        %v2976 = vunpack.c.l.b16 %v407
        %v2977 = vunpack.c.h.b16 %v407
        %v2978 = vunpack.c.l.b16 %v408
        %v2979 = vunpack.c.h.b16 %v408
        %v2980 = vunpack.c.l.b16 %v409
        %v2981 = vunpack.c.h.b16 %v409
        %v2982 = vunpack.c.l.b16 %v410
        %v2983 = vunpack.c.h.b16 %v410
        %v2984 = vunpack.c.l.b16 %v411
        %v2985 = vunpack.c.h.b16 %v411
        %v2986 = vunpack.c.l.b16 %v412
        %v2987 = vunpack.c.h.b16 %v412
        %v2988 = vunpack.c.l.b16 %v413
        %v2989 = vunpack.c.h.b16 %v413
        %v2990 = vpack.c.b16 %v2804, %v2802
        %v2991 = vpack.c.b16 %v2805, %v2803
        %v2992 = vpack.c.b16 %v2808, %v2806
        %v2993 = vpack.c.b16 %v2809, %v2807
        %v2994 = vpack.c.b16 %v2812, %v2810
        %v2995 = vpack.c.b16 %v2813, %v2811
        %v2996 = vpack.c.b16 %v2816, %v2814
        %v2997 = vpack.c.b16 %v2817, %v2815
        %v2998 = vpack.c.b16 %v2820, %v2818
        %v2999 = vpack.c.b16 %v2821, %v2819
        %v3000 = vpack.c.b16 %v2824, %v2822
        %v3001 = vpack.c.b16 %v2825, %v2823
        %v3002 = vpack.c.b16 %v2828, %v2826
        %v3003 = vpack.c.b16 %v2829, %v2827
        %v3004 = vpack.c.b16 %v2832, %v2830
        %v3005 = vpack.c.b16 %v2833, %v2831
        %v3006 = vpack.c.b16 %v2836, %v2834
        %v3007 = vpack.c.b16 %v2837, %v2835
        %v3008 = vpack.c.b16 %v2840, %v2838
        %v3009 = vpack.c.b16 %v2841, %v2839
        %v3010 = vpack.c.b16 %v2844, %v2842
        %v3011 = vpack.c.b16 %v2845, %v2843
        %v3012 = vpack.c.b16 %v2848, %v2846
        %v3013 = vpack.c.b16 %v2849, %v2847
        %v3014 = vpack.c.b16 %v2852, %v2850
        %v3015 = vpack.c.b16 %v2853, %v2851
        %v3016 = vpack.c.b16 %v2856, %v2854
        %v3017 = vpack.c.b16 %v2857, %v2855
        %v3018 = vpack.c.b16 %v2860, %v2858
        %v3019 = vpack.c.b16 %v2861, %v2859
        %v3020 = vpack.c.b16 %v2864, %v2862
        %v3021 = vpack.c.b16 %v2865, %v2863
        %v3022 = vpack.c.b16 %v2868, %v2866
        %v3023 = vpack.c.b16 %v2869, %v2867
        %v3024 = vpack.c.b16 %v2872, %v2870
        %v3025 = vpack.c.b16 %v2873, %v2871
        %v3026 = vpack.c.b16 %v2876, %v2874
        %v3027 = vpack.c.b16 %v2877, %v2875
        %v3028 = vpack.c.b16 %v2880, %v2878
        %v3029 = vpack.c.b16 %v2881, %v2879
        %v3030 = vpack.c.b16 %v2884, %v2882
        %v3031 = vpack.c.b16 %v2885, %v2883
        %v3032 = vpack.c.b16 %v2888, %v2886
        %v3033 = vpack.c.b16 %v2889, %v2887
        %v3034 = vpack.c.b16 %v2892, %v2890
        %v3035 = vpack.c.b16 %v2893, %v2891
        %v3036 = vpack.c.b16 %v2896, %v2894
        %v3037 = vpack.c.b16 %v2897, %v2895
        %v3038 = vpack.c.b16 %v2900, %v2898
        %v3039 = vpack.c.b16 %v2901, %v2899
        %v3040 = vpack.c.b16 %v2904, %v2902
        %v3041 = vpack.c.b16 %v2905, %v2903
        %v3042 = vpack.c.b16 %v2908, %v2906
        %v3043 = vpack.c.b16 %v2909, %v2907
        %v3044 = vpack.c.b16 %v2912, %v2910
        %v3045 = vpack.c.b16 %v2913, %v2911
        %v3046 = vpack.c.b16 %v2916, %v2914
        %v3047 = vpack.c.b16 %v2917, %v2915
        %v3048 = vpack.c.b16 %v2920, %v2918
        %v3049 = vpack.c.b16 %v2921, %v2919
        %v3050 = vpack.c.b16 %v2924, %v2922
        %v3051 = vpack.c.b16 %v2925, %v2923
        %v3052 = vpack.c.b16 %v2928, %v2926
        %v3053 = vpack.c.b16 %v2929, %v2927
        %v3054 = vpack.c.b16 %v2932, %v2930
        %v3055 = vpack.c.b16 %v2933, %v2931
        %v3056 = vpack.c.b16 %v2936, %v2934
        %v3057 = vpack.c.b16 %v2937, %v2935
        %v3058 = vpack.c.b16 %v2940, %v2938
        %v3059 = vpack.c.b16 %v2941, %v2939
        %v3060 = vpack.c.b16 %v2944, %v2942
        %v3061 = vpack.c.b16 %v2945, %v2943
        %v3062 = vpack.c.b16 %v2948, %v2946
        %v3063 = vpack.c.b16 %v2949, %v2947
        %v3064 = vpack.c.b16 %v2952, %v2950
        %v3065 = vpack.c.b16 %v2953, %v2951
        %v3066 = vpack.c.b16 %v2956, %v2954
        %v3067 = vpack.c.b16 %v2957, %v2955
        %v3068 = vpack.c.b16 %v2960, %v2958
        %v3069 = vpack.c.b16 %v2961, %v2959
        %v3070 = vpack.c.b16 %v2964, %v2962
        %v3071 = vpack.c.b16 %v2965, %v2963
        %v3072 = vpack.c.b16 %v2968, %v2966
        %v3073 = vpack.c.b16 %v2969, %v2967
        %v3074 = vpack.c.b16 %v2972, %v2970
        %v3075 = vpack.c.b16 %v2973, %v2971
        %v3076 = vpack.c.b16 %v2976, %v2974
        %v3077 = vpack.c.b16 %v2977, %v2975
        %v3078 = vpack.c.b16 %v2980, %v2978
        %v3079 = vpack.c.b16 %v2981, %v2979
        %v3080 = vpack.c.b16 %v2984, %v2982
        %v3081 = vpack.c.b16 %v2985, %v2983
        %v3082 = vpack.c.b16 %v2988, %v2986
        %v3083 = vpack.c.b16 %v2989, %v2987
        %vm3176 = vcmask 859136
        %v3178 = vsel %vm3176, %v2695, 0
        %v3181 = vsel %vm3176, %v2701, 0
        %v3184 = vsel %vm3176, %v2707, 0
        %vm3186 = vcmask 1043456
        %vm3187 = vcmask 1044480
        %v3188 = vsel %vm3186, 4294967295, 65535
        %v3189 = vsel %vm3187, %v3188, 0
        %v3191 = vand.u32 %v3082, %v3189
        %v3194 = vand.u32 %v3083, %v3189
        %3196 = vmatprep.subr.bf16.mxu0 %v3005
        %3197 = vmatpush1.bf16.msra.mxu0 %v3004
        %3198 = vmatprep.subr.bf16.mxu0 %v3003
        %3199 = vmatpush1.bf16.msra.mxu0 %v3002
        %3200 = vmatprep.subr.bf16.mxu0 %v3001
        %3201 = vmatpush1.bf16.msra.mxu0 %v3000
        %3202 = vmatprep.subr.bf16.mxu0 %v2999
        %3203 = vmatpush1.bf16.msra.mxu0 %v2998
        %3204 = vmatprep.subr.bf16.mxu0 %v2997
        %3205 = vmatpush1.bf16.msra.mxu0 %v2996
        %3206 = vmatprep.subr.bf16.mxu0 %v2995
        %3207 = vmatpush1.bf16.msra.mxu0 %v2994
        %3208 = vmatprep.subr.bf16.mxu0 %v2993
        %3209 = vmatpush1.bf16.msra.mxu0 %v2992
        %3210 = vmatprep.subr.bf16.mxu0 %v2991
        %3211 = vmatpush1.bf16.msra.mxu0 %v2990
        %3212 = vmatprep.subr.bf16.mxu0 %v3021
        %3213 = vmatpush2.bf16.msra.mxu0 %v3020
        %3214 = vmatprep.subr.bf16.mxu0 %v3019
        %3215 = vmatpush2.bf16.msra.mxu0 %v3018
        %3216 = vmatprep.subr.bf16.mxu0 %v3017
        %3217 = vmatpush2.bf16.msra.mxu0 %v3016
        %3218 = vmatprep.subr.bf16.mxu0 %v3015
        %3219 = vmatpush2.bf16.msra.mxu0 %v3014
        %3220 = vmatprep.subr.bf16.mxu0 %v3013
        %3221 = vmatpush2.bf16.msra.mxu0 %v3012
        %3222 = vmatprep.subr.bf16.mxu0 %v3011
        %3223 = vmatpush2.bf16.msra.mxu0 %v3010
        %3224 = vmatprep.subr.bf16.mxu0 %v3009
        %3225 = vmatpush2.bf16.msra.mxu0 %v3008
        %3226 = vmatprep.subr.bf16.mxu0 %v3007
        %3227 = vmatpush2.bf16.msra.mxu0 %v3006
        %3228 = vmatprep.mubr.bf16.mxu0 %v2691
        %3229 = vmatmul.mubr.bf16.gmra.mxu0 %v2690
        %v3230 = vpop.f32.mrf.mxu0
        %v3231 = vadd.f32 0.0, %v3230
        %v3232 = vpop.f32.mrf.mxu0
        %v3233 = vadd.f32 0.0, %v3232
        %v3234 = vpop.f32.mrf.mxu0
        %v3235 = vadd.f32 0.0, %v3234
        %v3236 = vpop.f32.mrf.mxu0
        %v3237 = vadd.f32 0.0, %v3236
        %3238 = vmatprep.mubr.bf16.mxu0 %v2697
        %3239 = vmatmul.mubr.bf16.gmra.mxu0 %v2696
        %v3240 = vpop.f32.mrf.mxu0
        %v3241 = vadd.f32 0.0, %v3240
        %v3242 = vpop.f32.mrf.mxu0
        %v3243 = vadd.f32 0.0, %v3242
        %v3244 = vpop.f32.mrf.mxu0
        %v3245 = vadd.f32 0.0, %v3244
        %v3246 = vpop.f32.mrf.mxu0
        %v3247 = vadd.f32 0.0, %v3246
        %3248 = vmatprep.mubr.bf16.mxu0 %v2703
        %3249 = vmatmul.mubr.bf16.gmra.mxu0 %v2702
        %v3250 = vpop.f32.mrf.mxu0
        %v3251 = vadd.f32 0.0, %v3250
        %v3252 = vpop.f32.mrf.mxu0
        %v3253 = vadd.f32 0.0, %v3252
        %v3254 = vpop.f32.mrf.mxu0
        %v3255 = vpop.f32.mrf.mxu0
        %3256 = vdwg.mxu0
        %3257 = vmatprep.subr.bf16.mxu0 %v3037
        %3258 = vmatpush1.bf16.msra.mxu0 %v3036
        %3259 = vmatprep.subr.bf16.mxu0 %v3035
        %3260 = vmatpush1.bf16.msra.mxu0 %v3034
        %3261 = vmatprep.subr.bf16.mxu0 %v3033
        %3262 = vmatpush1.bf16.msra.mxu0 %v3032
        %3263 = vmatprep.subr.bf16.mxu0 %v3031
        %3264 = vmatpush1.bf16.msra.mxu0 %v3030
        %3265 = vmatprep.subr.bf16.mxu0 %v3029
        %3266 = vmatpush1.bf16.msra.mxu0 %v3028
        %3267 = vmatprep.subr.bf16.mxu0 %v3027
        %3268 = vmatpush1.bf16.msra.mxu0 %v3026
        %3269 = vmatprep.subr.bf16.mxu0 %v3025
        %3270 = vmatpush1.bf16.msra.mxu0 %v3024
        %3271 = vmatprep.subr.bf16.mxu0 %v3023
        %3272 = vmatpush1.bf16.msra.mxu0 %v3022
        %3273 = vmatprep.subr.bf16.mxu0 %v3053
        %3274 = vmatpush2.bf16.msra.mxu0 %v3052
        %3275 = vmatprep.subr.bf16.mxu0 %v3051
        %3276 = vmatpush2.bf16.msra.mxu0 %v3050
        %3277 = vmatprep.subr.bf16.mxu0 %v3049
        %3278 = vmatpush2.bf16.msra.mxu0 %v3048
        %3279 = vmatprep.subr.bf16.mxu0 %v3047
        %3280 = vmatpush2.bf16.msra.mxu0 %v3046
        %3281 = vmatprep.subr.bf16.mxu0 %v3045
        %3282 = vmatpush2.bf16.msra.mxu0 %v3044
        %3283 = vmatprep.subr.bf16.mxu0 %v3043
        %3284 = vmatpush2.bf16.msra.mxu0 %v3042
        %3285 = vmatprep.subr.bf16.mxu0 %v3041
        %3286 = vmatpush2.bf16.msra.mxu0 %v3040
        %3287 = vmatprep.subr.bf16.mxu0 %v3039
        %3288 = vmatpush2.bf16.msra.mxu0 %v3038
        %3289 = vmatprep.mubr.bf16.mxu0 %v2693
        %3290 = vmatmul.mubr.bf16.gmra.mxu0 %v2692
        %v3291 = vpop.f32.mrf.mxu0
        %v3292 = vadd.f32 %v3231, %v3291
        %v3293 = vpop.f32.mrf.mxu0
        %v3294 = vadd.f32 %v3233, %v3293
        %v3295 = vpop.f32.mrf.mxu0
        %v3296 = vadd.f32 %v3235, %v3295
        %v3297 = vpop.f32.mrf.mxu0
        %v3298 = vadd.f32 %v3237, %v3297
        %3299 = vmatprep.mubr.bf16.mxu0 %v2699
        %3300 = vmatmul.mubr.bf16.gmra.mxu0 %v2698
        %v3301 = vpop.f32.mrf.mxu0
        %v3302 = vadd.f32 %v3241, %v3301
        %v3303 = vpop.f32.mrf.mxu0
        %v3304 = vadd.f32 %v3243, %v3303
        %v3305 = vpop.f32.mrf.mxu0
        %v3306 = vadd.f32 %v3245, %v3305
        %v3307 = vpop.f32.mrf.mxu0
        %v3308 = vadd.f32 %v3247, %v3307
        %3309 = vmatprep.mubr.bf16.mxu0 %v2705
        %3310 = vmatmul.mubr.bf16.gmra.mxu0 %v2704
        %v3311 = vpop.f32.mrf.mxu0
        %v3312 = vadd.f32 %v3251, %v3311
        %v3313 = vpop.f32.mrf.mxu0
        %v3314 = vadd.f32 %v3253, %v3313
        %v3315 = vpop.f32.mrf.mxu0
        %v3316 = vpop.f32.mrf.mxu0
        %3317 = vdwg.mxu0
        %3318 = vmatprep.subr.bf16.mxu0 %v3069
        %3319 = vmatpush1.bf16.msra.mxu0 %v3068
        %3320 = vmatprep.subr.bf16.mxu0 %v3067
        %3321 = vmatpush1.bf16.msra.mxu0 %v3066
        %3322 = vmatprep.subr.bf16.mxu0 %v3065
        %3323 = vmatpush1.bf16.msra.mxu0 %v3064
        %3324 = vmatprep.subr.bf16.mxu0 %v3063
        %3325 = vmatpush1.bf16.msra.mxu0 %v3062
        %3326 = vmatprep.subr.bf16.mxu0 %v3061
        %3327 = vmatpush1.bf16.msra.mxu0 %v3060
        %3328 = vmatprep.subr.bf16.mxu0 %v3059
        %3329 = vmatpush1.bf16.msra.mxu0 %v3058
        %3330 = vmatprep.subr.bf16.mxu0 %v3057
        %3331 = vmatpush1.bf16.msra.mxu0 %v3056
        %3332 = vmatprep.subr.bf16.mxu0 %v3055
        %3333 = vmatpush1.bf16.msra.mxu0 %v3054
        %3334 = vmatprep.subr.bf16.mxu0 0
        %3335 = vmatpush2.bf16.msra.mxu0 0
        %3336 = vmatprep.subr.bf16.mxu0 %v3194
        %3337 = vmatpush2.bf16.msra.mxu0 %v3191
        %3338 = vmatprep.subr.bf16.mxu0 %v3081
        %3339 = vmatpush2.bf16.msra.mxu0 %v3080
        %3340 = vmatprep.subr.bf16.mxu0 %v3079
        %3341 = vmatpush2.bf16.msra.mxu0 %v3078
        %3342 = vmatprep.subr.bf16.mxu0 %v3077
        %3343 = vmatpush2.bf16.msra.mxu0 %v3076
        %3344 = vmatprep.subr.bf16.mxu0 %v3075
        %3345 = vmatpush2.bf16.msra.mxu0 %v3074
        %3346 = vmatprep.subr.bf16.mxu0 %v3073
        %3347 = vmatpush2.bf16.msra.mxu0 %v3072
        %3348 = vmatprep.subr.bf16.mxu0 %v3071
        %3349 = vmatpush2.bf16.msra.mxu0 %v3070
        %3350 = vmatprep.mubr.bf16.mxu0 %v3178
        %3351 = vmatmul.mubr.bf16.gmra.mxu0 %v2694
        %v3352 = vpop.f32.mrf.mxu0
        %v3353 = vadd.f32 %v3292, %v3352
        %v3354 = vpop.f32.mrf.mxu0
        %v3355 = vadd.f32 %v3294, %v3354
        %v3356 = vpop.f32.mrf.mxu0
        %v3357 = vadd.f32 %v3296, %v3356
        %v3358 = vpop.f32.mrf.mxu0
        %v3359 = vadd.f32 %v3298, %v3358
        %3360 = vmatprep.mubr.bf16.mxu0 %v3181
        %3361 = vmatmul.mubr.bf16.gmra.mxu0 %v2700
        %v3362 = vpop.f32.mrf.mxu0
        %v3363 = vadd.f32 %v3302, %v3362
        %v3364 = vpop.f32.mrf.mxu0
        %v3365 = vadd.f32 %v3304, %v3364
        %v3366 = vpop.f32.mrf.mxu0
        %v3367 = vadd.f32 %v3306, %v3366
        %v3368 = vpop.f32.mrf.mxu0
        %v3369 = vadd.f32 %v3308, %v3368
        %3370 = vmatprep.mubr.bf16.mxu0 %v3184
        %3371 = vmatmul.mubr.bf16.gmra.mxu0 %v2706
        %v3372 = vpop.f32.mrf.mxu0
        %v3373 = vadd.f32 %v3312, %v3372
        %v3374 = vpop.f32.mrf.mxu0
        %v3375 = vadd.f32 %v3314, %v3374
        %v3376 = vpop.f32.mrf.mxu0
        %v3377 = vpop.f32.mrf.mxu0
        %3378 = vdwg.mxu0
        %v3379 = vpack.c.bf16 %v3357, %v3353
        %v3380 = vpack.c.bf16 %v3359, %v3355
        %v3381 = vpack.c.bf16 %v3367, %v3363
        %v3382 = vpack.c.bf16 %v3369, %v3365
        %v3383 = vpack.c.bf16 %v3373, %v3373
        %v3384 = vpack.c.bf16 %v3375, %v3375
        %v3391 = vunpack.c.l.b16 %v3379
        %v3392 = vunpack.c.l.b16 %v3380
        %v3393 = vunpack.c.h.b16 %v3379
        %v3394 = vunpack.c.h.b16 %v3380
        %v3395 = vunpack.c.l.b16 %v3381
        %v3396 = vunpack.c.l.b16 %v3382
        %v3397 = vunpack.c.h.b16 %v3381
        %v3398 = vunpack.c.h.b16 %v3382
        %v3399 = vunpack.c.l.b16 %v3383
        %v3400 = vunpack.c.l.b16 %v3384
        %v3401 = vpack.c.b16 %v3392, %v3391
        %v3402 = vpack.c.b16 %v3394, %v3393
        %v3403 = vpack.c.b16 %v3396, %v3395
        %v3404 = vpack.c.b16 %v3398, %v3397
        %v3405 = vpack.c.b16 %v3400, %v3399
        %vm3411 = vcmask 105476
        %vm3412 = vmor %vm3411, %vm3186
        %3413 = vst.msk [vmem:[#allocation3] sm:$0xff] %vm3412, %v3401
        %3414 = vst.msk [vmem:[#allocation3 + $0x8] sm:$0xff] %vm3412, %v3402
        %3415 = vst.msk [vmem:[#allocation3 + $0x10] sm:$0xff] %vm3412, %v3403
        %3416 = vst.msk [vmem:[#allocation3 + $0x18] sm:$0xff] %vm3412, %v3404
        %vm3417 = vcmask 1041408
        %vm3418 = vcmask 103428
        %vm3419 = vmor %vm3418, %vm3417
        %3420 = vst.msk [vmem:[#allocation3 + $0x20] sm:$0x33] %vm3419, %v3405
        %vm3421 = vmor %vm485, %vm488
        %v3422 = vrot.slane %v3401, 6
        %v3423 = vrot.slane %v3422, 4
        %v3424 = vrot.slane %v3402, 6
        %v3425 = vsel %vm3421, %v3423, %v3424
        %v3426 = vrot.slane %v3424, 4
        %v3427 = vrot.slane %v3403, 6
        %v3428 = vsel %vm3421, %v3426, %v3427
        %v3429 = vrot.slane %v3427, 4
        %v3430 = vrot.slane %v3404, 6
        %v3431 = vsel %vm3421, %v3429, %v3430
        %v3432 = vrot.slane %v3430, 4
        %v3433 = vrot.slane %v3405, 6
        %v3434 = vsel %vm3421, %v3432, %v3433
        %3435 = vrot.lane.b32.xlu0 %v3422, 127
        %v3436 = vpop.permute.xlu0 %3435
        %3437 = vrot.lane.b32.xlu0 %v3425, 127
        %v3438 = vpop.permute.xlu0 %3437
        %3439 = vrot.lane.b32.xlu0 %v3428, 127
        %v3440 = vpop.permute.xlu0 %3439
        %3441 = vrot.lane.b32.xlu0 %v3431, 127
        %v3442 = vpop.permute.xlu0 %3441
        %3443 = vrot.lane.b32.xlu0 %v3434, 127
        %v3444 = vpop.permute.xlu0 %3443
        %v3445 = vrot.slane %v3436, 4
        %v3446 = vrot.slane %v3438, 4
        %v3447 = vrot.slane %v3440, 4
        %v3448 = vrot.slane %v3442, 4
        %v3449 = vrot.slane %v3444, 4
        %v3450 = vsel %vm586, %v3436, %v3445
        %v3451 = vsel %vm586, %v3438, %v3446
        %v3452 = vsel %vm586, %v3440, %v3447
        %v3453 = vsel %vm586, %v3442, %v3448
        %v3454 = vsel %vm586, %v3444, %v3449
        %vm3460 = vcmask 1043458
        %vm3461 = vcmask 105478
        %vm3462 = vmor %vm3461, %vm3460
        %3463 = vst.msk [vmem:[#allocation3 + $0x20] sm:$0xcc] %vm3462, %v3450
        %3464 = vst.msk [vmem:[#allocation3 + $0x28] sm:$0xff] %vm3412, %v3451
        %3465 = vst.msk [vmem:[#allocation3 + $0x30] sm:$0xff] %vm3412, %v3452
        %3466 = vst.msk [vmem:[#allocation3 + $0x38] sm:$0xff] %vm3412, %v3453
        %3467 = vst.msk [vmem:[#allocation3 + $0x40] sm:$0xff] %vm3412, %v3454
        %3468 = vrot.lane.b32.xlu0 %v3401, 126
        %v3469 = vpop.permute.xlu0 %3468
        %3470 = vrot.lane.b32.xlu0 %v3402, 126
        %v3471 = vpop.permute.xlu0 %3470
        %3472 = vrot.lane.b32.xlu0 %v3403, 126
        %v3473 = vpop.permute.xlu0 %3472
        %3474 = vrot.lane.b32.xlu0 %v3404, 126
        %v3475 = vpop.permute.xlu0 %3474
        %3476 = vrot.lane.b32.xlu0 %v3405, 126
        %v3477 = vpop.permute.xlu0 %3476
        %v3478 = vrot.slane %v3469, 4
        %v3479 = vrot.slane %v3471, 4
        %v3480 = vrot.slane %v3473, 4
        %v3481 = vrot.slane %v3475, 4
        %v3482 = vrot.slane %v3477, 4
        %v3483 = vsel %vm684, %v3469, %v3478
        %v3484 = vsel %vm684, %v3471, %v3479
        %v3485 = vsel %vm684, %v3473, %v3480
        %v3486 = vsel %vm684, %v3475, %v3481
        %v3487 = vsel %vm684, %v3477, %v3482
        %3493 = vst.msk [vmem:[#allocation3 + $0x48] sm:$0xff] %vm3412, %v3483
        %3494 = vst.msk [vmem:[#allocation3 + $0x50] sm:$0xff] %vm3412, %v3484
        %3495 = vst.msk [vmem:[#allocation3 + $0x58] sm:$0xff] %vm3412, %v3485
        %3496 = vst.msk [vmem:[#allocation3 + $0x60] sm:$0xff] %vm3412, %v3486
        %3497 = vst.msk [vmem:[#allocation3 + $0x68] sm:$0x33] %vm3419, %v3487
        %3498 = vrot.lane.b32.xlu0 %v3422, 115
        %v3499 = vpop.permute.xlu0 %3498
        %3500 = vrot.lane.b32.xlu0 %v3425, 115
        %v3501 = vpop.permute.xlu0 %3500
        %3502 = vrot.lane.b32.xlu0 %v3428, 115
        %v3503 = vpop.permute.xlu0 %3502
        %3504 = vrot.lane.b32.xlu0 %v3431, 115
        %v3505 = vpop.permute.xlu0 %3504
        %3506 = vrot.lane.b32.xlu0 %v3434, 115
        %v3507 = vpop.permute.xlu0 %3506
        %v3508 = vrot.slane %v3499, 4
        %v3509 = vrot.slane %v3501, 4
        %v3510 = vrot.slane %v3503, 4
        %v3511 = vrot.slane %v3505, 4
        %v3512 = vrot.slane %v3507, 4
        %vm3513 = vcmask 941056
        %v3514 = vsel %vm3513, %v3499, %v3508
        %v3515 = vsel %vm3513, %v3501, %v3509
        %v3516 = vsel %vm3513, %v3503, %v3510
        %v3517 = vsel %vm3513, %v3505, %v3511
        %v3518 = vsel %vm3513, %v3507, %v3512
        %3524 = vst.msk [vmem:[#allocation3 + $0x68] sm:$0xcc] %vm3462, %v3514
        %3525 = vst.msk [vmem:[#allocation3 + $0x70] sm:$0xff] %vm3412, %v3515
        %3526 = vst.msk [vmem:[#allocation3 + $0x78] sm:$0xff] %vm3412, %v3516
        %3527 = vst.msk [vmem:[#allocation3 + $0x80] sm:$0xff] %vm3412, %v3517
        %3528 = vst.msk [vmem:[#allocation3 + $0x88] sm:$0xff] %vm3412, %v3518
        %3529 = vrot.lane.b32.xlu0 %v3401, 114
        %v3530 = vpop.permute.xlu0 %3529
        %3531 = vrot.lane.b32.xlu0 %v3402, 114
        %v3532 = vpop.permute.xlu0 %3531
        %3533 = vrot.lane.b32.xlu0 %v3403, 114
        %v3534 = vpop.permute.xlu0 %3533
        %3535 = vrot.lane.b32.xlu0 %v3404, 114
        %v3536 = vpop.permute.xlu0 %3535
        %3537 = vrot.lane.b32.xlu0 %v3405, 114
        %v3538 = vpop.permute.xlu0 %3537
        %v3539 = vrot.slane %v3530, 4
        %v3540 = vrot.slane %v3532, 4
        %v3541 = vrot.slane %v3534, 4
        %v3542 = vrot.slane %v3536, 4
        %v3543 = vrot.slane %v3538, 4
        %vm3544 = vcmask 932864
        %v3545 = vsel %vm3544, %v3530, %v3539
        %v3546 = vsel %vm3544, %v3532, %v3540
        %v3547 = vsel %vm3544, %v3534, %v3541
        %v3548 = vsel %vm3544, %v3536, %v3542
        %v3549 = vsel %vm3544, %v3538, %v3543
        %3555 = vst.msk [vmem:[#allocation3 + $0x90] sm:$0xff] %vm3412, %v3545
        %3556 = vst.msk [vmem:[#allocation3 + $0x98] sm:$0xff] %vm3412, %v3546
        %3557 = vst.msk [vmem:[#allocation3 + $0xa0] sm:$0xff] %vm3412, %v3547
        %3558 = vst.msk [vmem:[#allocation3 + $0xa8] sm:$0xff] %vm3412, %v3548
        %3559 = vst.msk [vmem:[#allocation3 + $0xb0] sm:$0x33] %vm3419, %v3549
        %3560 = vrot.lane.b32.xlu0 %v3422, 113
        %v3561 = vpop.permute.xlu0 %3560
        %3562 = vrot.lane.b32.xlu0 %v3425, 113
        %v3563 = vpop.permute.xlu0 %3562
        %3564 = vrot.lane.b32.xlu0 %v3428, 113
        %v3565 = vpop.permute.xlu0 %3564
        %3566 = vrot.lane.b32.xlu0 %v3431, 113
        %v3567 = vpop.permute.xlu0 %3566
        %3568 = vrot.lane.b32.xlu0 %v3434, 113
        %v3569 = vpop.permute.xlu0 %3568
        %v3570 = vrot.slane %v3561, 4
        %v3571 = vrot.slane %v3563, 4
        %v3572 = vrot.slane %v3565, 4
        %v3573 = vrot.slane %v3567, 4
        %v3574 = vrot.slane %v3569, 4
        %vm3575 = vcmask 924672
        %v3576 = vsel %vm3575, %v3561, %v3570
        %v3577 = vsel %vm3575, %v3563, %v3571
        %v3578 = vsel %vm3575, %v3565, %v3572
        %v3579 = vsel %vm3575, %v3567, %v3573
        %v3580 = vsel %vm3575, %v3569, %v3574
        %3586 = vst.msk [vmem:[#allocation3 + $0xb0] sm:$0xcc] %vm3462, %v3576
        %3587 = vst.msk [vmem:[#allocation3 + $0xb8] sm:$0xff] %vm3412, %v3577
        %3588 = vst.msk [vmem:[#allocation3 + $0xc0] sm:$0xff] %vm3412, %v3578
        %3589 = vst.msk [vmem:[#allocation3 + $0xc8] sm:$0xff] %vm3412, %v3579
        %3590 = vst.msk [vmem:[#allocation3 + $0xd0] sm:$0xff] %vm3412, %v3580
        %3591 = vrot.lane.b32.xlu0 %v3401, 102
        %v3592 = vpop.permute.xlu0 %3591
        %3593 = vrot.lane.b32.xlu0 %v3402, 102
        %v3594 = vpop.permute.xlu0 %3593
        %3595 = vrot.lane.b32.xlu0 %v3403, 102
        %v3596 = vpop.permute.xlu0 %3595
        %3597 = vrot.lane.b32.xlu0 %v3404, 102
        %v3598 = vpop.permute.xlu0 %3597
        %3599 = vrot.lane.b32.xlu0 %v3405, 102
        %v3600 = vpop.permute.xlu0 %3599
        %v3601 = vrot.slane %v3592, 4
        %v3602 = vrot.slane %v3594, 4
        %v3603 = vrot.slane %v3596, 4
        %v3604 = vrot.slane %v3598, 4
        %v3605 = vrot.slane %v3600, 4
        %vm3606 = vcmask 834560
        %v3607 = vsel %vm3606, %v3592, %v3601
        %v3608 = vsel %vm3606, %v3594, %v3602
        %v3609 = vsel %vm3606, %v3596, %v3603
        %v3610 = vsel %vm3606, %v3598, %v3604
        %v3611 = vsel %vm3606, %v3600, %v3605
        %3617 = vst.msk [vmem:[#allocation3 + $0xd8] sm:$0xff] %vm3412, %v3607
        %3618 = vst.msk [vmem:[#allocation3 + $0xe0] sm:$0xff] %vm3412, %v3608
        %3619 = vst.msk [vmem:[#allocation3 + $0xe8] sm:$0xff] %vm3412, %v3609
        %3620 = vst.msk [vmem:[#allocation3 + $0xf0] sm:$0xff] %vm3412, %v3610
        %3621 = vst.msk [vmem:[#allocation3 + $0xf8] sm:$0x33] %vm3419, %v3611
        %3622 = vrot.lane.b32.xlu0 %v3422, 101
        %v3623 = vpop.permute.xlu0 %3622
        %3624 = vrot.lane.b32.xlu0 %v3425, 101
        %v3625 = vpop.permute.xlu0 %3624
        %3626 = vrot.lane.b32.xlu0 %v3428, 101
        %v3627 = vpop.permute.xlu0 %3626
        %3628 = vrot.lane.b32.xlu0 %v3431, 101
        %v3629 = vpop.permute.xlu0 %3628
        %3630 = vrot.lane.b32.xlu0 %v3434, 101
        %v3631 = vpop.permute.xlu0 %3630
        %v3632 = vrot.slane %v3623, 4
        %v3633 = vrot.slane %v3625, 4
        %v3634 = vrot.slane %v3627, 4
        %v3635 = vrot.slane %v3629, 4
        %v3636 = vrot.slane %v3631, 4
        %vm3637 = vcmask 826368
        %v3638 = vsel %vm3637, %v3623, %v3632
        %v3639 = vsel %vm3637, %v3625, %v3633
        %v3640 = vsel %vm3637, %v3627, %v3634
        %v3641 = vsel %vm3637, %v3629, %v3635
        %v3642 = vsel %vm3637, %v3631, %v3636
        %3648 = vst.msk [vmem:[#allocation3 + $0xf8] sm:$0xcc] %vm3462, %v3638
        %3649 = vst.msk [vmem:[#allocation3 + $0x100] sm:$0xff] %vm3412, %v3639
        %3650 = vst.msk [vmem:[#allocation3 + $0x108] sm:$0xff] %vm3412, %v3640
        %3651 = vst.msk [vmem:[#allocation3 + $0x110] sm:$0xff] %vm3412, %v3641
        %3652 = vst.msk [vmem:[#allocation3 + $0x118] sm:$0xff] %vm3412, %v3642
        %3653 = vrot.lane.b32.xlu0 %v3401, 100
        %v3654 = vpop.permute.xlu0 %3653
        %3655 = vrot.lane.b32.xlu0 %v3402, 100
        %v3656 = vpop.permute.xlu0 %3655
        %3657 = vrot.lane.b32.xlu0 %v3403, 100
        %v3658 = vpop.permute.xlu0 %3657
        %3659 = vrot.lane.b32.xlu0 %v3404, 100
        %v3660 = vpop.permute.xlu0 %3659
        %3661 = vrot.lane.b32.xlu0 %v3405, 100
        %v3662 = vpop.permute.xlu0 %3661
        %v3663 = vrot.slane %v3654, 4
        %v3664 = vrot.slane %v3656, 4
        %v3665 = vrot.slane %v3658, 4
        %v3666 = vrot.slane %v3660, 4
        %v3667 = vrot.slane %v3662, 4
        %vm3668 = vcmask 818176
        %v3669 = vsel %vm3668, %v3654, %v3663
        %v3670 = vsel %vm3668, %v3656, %v3664
        %v3671 = vsel %vm3668, %v3658, %v3665
        %v3672 = vsel %vm3668, %v3660, %v3666
        %v3673 = vsel %vm3668, %v3662, %v3667
        %3679 = vst.msk [vmem:[#allocation3 + $0x120] sm:$0xff] %vm3412, %v3669
        %3680 = vst.msk [vmem:[#allocation3 + $0x128] sm:$0xff] %vm3412, %v3670
        %3681 = vst.msk [vmem:[#allocation3 + $0x130] sm:$0xff] %vm3412, %v3671
        %3682 = vst.msk [vmem:[#allocation3 + $0x138] sm:$0xff] %vm3412, %v3672
        %3683 = vst.msk [vmem:[#allocation3 + $0x140] sm:$0x33] %vm3419, %v3673
        %v3684 = vld [vmem:[#allocation3] sm:$0xff]
        %v3685 = vld [vmem:[#allocation3 + $0x8] sm:$0xff]
        %v3686 = vld [vmem:[#allocation3 + $0x10] sm:$0xff]
        %v3687 = vld [vmem:[#allocation3 + $0x18] sm:$0xff]
        %v3688 = vld [vmem:[#allocation3 + $0x20] sm:$0xff]
        %v3689 = vld [vmem:[#allocation3 + $0x28] sm:$0xff]
        %v3690 = vld [vmem:[#allocation3 + $0x30] sm:$0xff]
        %v3691 = vld [vmem:[#allocation3 + $0x38] sm:$0xff]
        %v3692 = vld [vmem:[#allocation3 + $0x40] sm:$0xff]
        %v3693 = vld [vmem:[#allocation3 + $0x48] sm:$0xff]
        %v3694 = vld [vmem:[#allocation3 + $0x50] sm:$0xff]
        %v3695 = vld [vmem:[#allocation3 + $0x58] sm:$0xff]
        %v3696 = vld [vmem:[#allocation3 + $0x60] sm:$0xff]
        %v3697 = vld [vmem:[#allocation3 + $0x68] sm:$0xff]
        %v3698 = vld [vmem:[#allocation3 + $0x70] sm:$0xff]
        %v3699 = vld [vmem:[#allocation3 + $0x78] sm:$0xff]
        %v3700 = vld [vmem:[#allocation3 + $0x80] sm:$0xff]
        %v3701 = vld [vmem:[#allocation3 + $0x88] sm:$0xff]
        %v3702 = vld [vmem:[#allocation3 + $0x90] sm:$0xff]
        %v3703 = vld [vmem:[#allocation3 + $0x98] sm:$0xff]
        %v3704 = vld [vmem:[#allocation3 + $0xa0] sm:$0xff]
        %v3705 = vld [vmem:[#allocation3 + $0xa8] sm:$0xff]
        %v3706 = vld [vmem:[#allocation3 + $0xb0] sm:$0xff]
        %v3707 = vld [vmem:[#allocation3 + $0xb8] sm:$0xff]
        %v3708 = vld [vmem:[#allocation3 + $0xc0] sm:$0xff]
        %v3709 = vld [vmem:[#allocation3 + $0xc8] sm:$0xff]
        %v3710 = vld [vmem:[#allocation3 + $0xd0] sm:$0xff]
        %v3711 = vld [vmem:[#allocation3 + $0xd8] sm:$0xff]
        %v3712 = vld [vmem:[#allocation3 + $0xe0] sm:$0xff]
        %v3713 = vld [vmem:[#allocation3 + $0xe8] sm:$0xff]
        %v3714 = vld [vmem:[#allocation3 + $0xf0] sm:$0xff]
        %v3715 = vld [vmem:[#allocation3 + $0xf8] sm:$0xff]
        %v3716 = vld [vmem:[#allocation3 + $0x100] sm:$0xff]
        %v3717 = vld [vmem:[#allocation3 + $0x108] sm:$0xff]
        %v3718 = vld [vmem:[#allocation3 + $0x110] sm:$0xff]
        %v3719 = vld [vmem:[#allocation3 + $0x118] sm:$0xff]
        %v3720 = vld [vmem:[#allocation3 + $0x120] sm:$0xff]
        %v3721 = vld [vmem:[#allocation3 + $0x128] sm:$0xff]
        %v3722 = vld [vmem:[#allocation3 + $0x130] sm:$0xff]
        %v3723 = vld [vmem:[#allocation3 + $0x138] sm:$0xff]
        %v3724 = vld [vmem:[#allocation3 + $0x140] sm:$0x33]
        %3726 = vset.pattern.permute.xlu0 0
        %3727 = vperm.xlu0 %3726, %v426
        %v3728 = vpop.permute.xlu0 %3727
        %3731 = vset.pattern.permute.xlu0 0
        %3732 = vperm.xlu0 %3731, %v427
        %v3733 = vpop.permute.xlu0 %3732
        %3736 = vset.pattern.permute.xlu0 0
        %3737 = vperm.xlu0 %3736, %v428
        %v3738 = vpop.permute.xlu0 %3737
        %3741 = vset.pattern.permute.xlu0 0
        %3742 = vperm.xlu0 %3741, %v429
        %v3743 = vpop.permute.xlu0 %3742
        %3746 = vset.pattern.permute.xlu0 0
        %3747 = vperm.xlu0 %3746, %v430
        %v3748 = vpop.permute.xlu0 %3747
        %3751 = vset.pattern.permute.xlu0 0
        %3752 = vperm.xlu0 %3751, %v431
        %v3753 = vpop.permute.xlu0 %3752
        %v3767 = vunpack.c.l.b16 %v414
        %v3768 = vunpack.c.h.b16 %v414
        %v3769 = vunpack.c.l.b16 %v415
        %v3770 = vunpack.c.l.b16 %v416
        %v3771 = vunpack.c.h.b16 %v416
        %v3772 = vunpack.c.l.b16 %v417
        %v3773 = vunpack.c.l.b16 %v418
        %v3774 = vunpack.c.h.b16 %v418
        %v3775 = vunpack.c.l.b16 %v419
        %v3776 = vunpack.c.l.b16 %v420
        %v3777 = vunpack.c.h.b16 %v420
        %v3778 = vunpack.c.l.b16 %v421
        %v3779 = vunpack.c.l.b16 %v422
        %v3780 = vunpack.c.h.b16 %v422
        %v3781 = vunpack.c.l.b16 %v423
        %v3782 = vunpack.c.l.b16 %v424
        %v3783 = vunpack.c.h.b16 %v424
        %v3784 = vunpack.c.l.b16 %v425
        %v3785 = vpack.c.b16 %v3770, %v3767
        %v3786 = vpack.c.b16 %v3771, %v3768
        %v3787 = vpack.c.b16 %v3772, %v3769
        %v3788 = vpack.c.b16 %v3776, %v3773
        %v3789 = vpack.c.b16 %v3777, %v3774
        %v3790 = vpack.c.b16 %v3778, %v3775
        %v3791 = vpack.c.b16 %v3782, %v3779
        %v3792 = vpack.c.b16 %v3783, %v3780
        %v3793 = vpack.c.b16 %v3784, %v3781
        %v3841 = vunpack.c.l.b16 %v3684
        %v3842 = vunpack.c.h.b16 %v3684
        %v3843 = vunpack.c.l.b16 %v3685
        %v3844 = vunpack.c.h.b16 %v3685
        %v3845 = vunpack.c.l.b16 %v3686
        %v3846 = vunpack.c.h.b16 %v3686
        %v3847 = vunpack.c.l.b16 %v3687
        %v3848 = vunpack.c.h.b16 %v3687
        %v3849 = vunpack.c.l.b16 %v3688
        %v3850 = vunpack.c.h.b16 %v3688
        %v3851 = vunpack.c.l.b16 %v3689
        %v3852 = vunpack.c.h.b16 %v3689
        %v3853 = vunpack.c.l.b16 %v3690
        %v3854 = vunpack.c.h.b16 %v3690
        %v3855 = vunpack.c.l.b16 %v3691
        %v3856 = vunpack.c.h.b16 %v3691
        %v3857 = vunpack.c.l.b16 %v3692
        %v3858 = vunpack.c.h.b16 %v3692
        %v3859 = vunpack.c.l.b16 %v3693
        %v3860 = vunpack.c.h.b16 %v3693
        %v3861 = vunpack.c.l.b16 %v3694
        %v3862 = vunpack.c.h.b16 %v3694
        %v3863 = vunpack.c.l.b16 %v3695
        %v3864 = vunpack.c.h.b16 %v3695
        %v3865 = vunpack.c.l.b16 %v3696
        %v3866 = vunpack.c.h.b16 %v3696
        %v3867 = vunpack.c.l.b16 %v3697
        %v3868 = vunpack.c.h.b16 %v3697
        %v3869 = vunpack.c.l.b16 %v3698
        %v3870 = vunpack.c.h.b16 %v3698
        %v3871 = vunpack.c.l.b16 %v3699
        %v3872 = vunpack.c.h.b16 %v3699
        %v3873 = vunpack.c.l.b16 %v3700
        %v3874 = vunpack.c.h.b16 %v3700
        %v3875 = vunpack.c.l.b16 %v3701
        %v3876 = vunpack.c.h.b16 %v3701
        %v3877 = vunpack.c.l.b16 %v3702
        %v3878 = vunpack.c.h.b16 %v3702
        %v3879 = vunpack.c.l.b16 %v3703
        %v3880 = vunpack.c.h.b16 %v3703
        %v3881 = vunpack.c.l.b16 %v3704
        %v3882 = vunpack.c.h.b16 %v3704
        %v3883 = vunpack.c.l.b16 %v3705
        %v3884 = vunpack.c.h.b16 %v3705
        %v3885 = vunpack.c.l.b16 %v3706
        %v3886 = vunpack.c.h.b16 %v3706
        %v3887 = vunpack.c.l.b16 %v3707
        %v3888 = vunpack.c.h.b16 %v3707
        %v3889 = vunpack.c.l.b16 %v3708
        %v3890 = vunpack.c.h.b16 %v3708
        %v3891 = vunpack.c.l.b16 %v3709
        %v3892 = vunpack.c.h.b16 %v3709
        %v3893 = vunpack.c.l.b16 %v3710
        %v3894 = vunpack.c.h.b16 %v3710
        %v3895 = vunpack.c.l.b16 %v3711
        %v3896 = vunpack.c.h.b16 %v3711
        %v3897 = vunpack.c.l.b16 %v3712
        %v3898 = vunpack.c.h.b16 %v3712
        %v3899 = vunpack.c.l.b16 %v3713
        %v3900 = vunpack.c.h.b16 %v3713
        %v3901 = vunpack.c.l.b16 %v3714
        %v3902 = vunpack.c.h.b16 %v3714
        %v3903 = vunpack.c.l.b16 %v3715
        %v3904 = vunpack.c.h.b16 %v3715
        %v3905 = vunpack.c.l.b16 %v3716
        %v3906 = vunpack.c.h.b16 %v3716
        %v3907 = vunpack.c.l.b16 %v3717
        %v3908 = vunpack.c.h.b16 %v3717
        %v3909 = vunpack.c.l.b16 %v3718
        %v3910 = vunpack.c.h.b16 %v3718
        %v3911 = vunpack.c.l.b16 %v3719
        %v3912 = vunpack.c.h.b16 %v3719
        %v3913 = vunpack.c.l.b16 %v3720
        %v3914 = vunpack.c.h.b16 %v3720
        %v3915 = vunpack.c.l.b16 %v3721
        %v3916 = vunpack.c.h.b16 %v3721
        %v3917 = vunpack.c.l.b16 %v3722
        %v3918 = vunpack.c.h.b16 %v3722
        %v3919 = vunpack.c.l.b16 %v3723
        %v3920 = vunpack.c.h.b16 %v3723
        %v3921 = vunpack.c.l.b16 %v3724
        %v3922 = vunpack.c.h.b16 %v3724
        %v3923 = vpack.c.b16 %v3843, %v3841
        %v3924 = vpack.c.b16 %v3844, %v3842
        %v3925 = vpack.c.b16 %v3847, %v3845
        %v3926 = vpack.c.b16 %v3848, %v3846
        %v3927 = vpack.c.b16 %v3851, %v3849
        %v3928 = vpack.c.b16 %v3852, %v3850
        %v3929 = vpack.c.b16 %v3855, %v3853
        %v3930 = vpack.c.b16 %v3856, %v3854
        %v3931 = vpack.c.b16 %v3859, %v3857
        %v3932 = vpack.c.b16 %v3860, %v3858
        %v3933 = vpack.c.b16 %v3863, %v3861
        %v3934 = vpack.c.b16 %v3864, %v3862
        %v3935 = vpack.c.b16 %v3867, %v3865
        %v3936 = vpack.c.b16 %v3868, %v3866
        %v3937 = vpack.c.b16 %v3871, %v3869
        %v3938 = vpack.c.b16 %v3872, %v3870
        %v3939 = vpack.c.b16 %v3875, %v3873
        %v3940 = vpack.c.b16 %v3876, %v3874
        %v3941 = vpack.c.b16 %v3879, %v3877
        %v3942 = vpack.c.b16 %v3880, %v3878
        %v3943 = vpack.c.b16 %v3883, %v3881
        %v3944 = vpack.c.b16 %v3884, %v3882
        %v3945 = vpack.c.b16 %v3887, %v3885
        %v3946 = vpack.c.b16 %v3888, %v3886
        %v3947 = vpack.c.b16 %v3891, %v3889
        %v3948 = vpack.c.b16 %v3892, %v3890
        %v3949 = vpack.c.b16 %v3895, %v3893
        %v3950 = vpack.c.b16 %v3896, %v3894
        %v3951 = vpack.c.b16 %v3899, %v3897
        %v3952 = vpack.c.b16 %v3900, %v3898
        %v3953 = vpack.c.b16 %v3903, %v3901
        %v3954 = vpack.c.b16 %v3904, %v3902
        %v3955 = vpack.c.b16 %v3907, %v3905
        %v3956 = vpack.c.b16 %v3908, %v3906
        %v3957 = vpack.c.b16 %v3911, %v3909
        %v3958 = vpack.c.b16 %v3912, %v3910
        %v3959 = vpack.c.b16 %v3915, %v3913
        %v3960 = vpack.c.b16 %v3916, %v3914
        %v3961 = vpack.c.b16 %v3919, %v3917
        %v3962 = vpack.c.b16 %v3920, %v3918
        %v3963 = vpack.c.b16 %v3921, %v3921
        %v3964 = vpack.c.b16 %v3922, %v3922
        %vm4005 = vcmask 556032
        %v4007 = vsel %vm4005, %v3787, 0
        %v4010 = vsel %vm4005, %v3790, 0
        %v4013 = vsel %vm4005, %v3793, 0
        %v4016 = vsel %vm3417, %v3963, 0
        %v4019 = vsel %vm3417, %v3964, 0
        %4021 = vmatprep.subr.bf16.mxu0 %v3938
        %4022 = vmatpush1.bf16.msra.mxu0 %v3937
        %4023 = vmatprep.subr.bf16.mxu0 %v3936
        %4024 = vmatpush1.bf16.msra.mxu0 %v3935
        %4025 = vmatprep.subr.bf16.mxu0 %v3934
        %4026 = vmatpush1.bf16.msra.mxu0 %v3933
        %4027 = vmatprep.subr.bf16.mxu0 %v3932
        %4028 = vmatpush1.bf16.msra.mxu0 %v3931
        %4029 = vmatprep.subr.bf16.mxu0 %v3930
        %4030 = vmatpush1.bf16.msra.mxu0 %v3929
        %4031 = vmatprep.subr.bf16.mxu0 %v3928
        %4032 = vmatpush1.bf16.msra.mxu0 %v3927
        %4033 = vmatprep.subr.bf16.mxu0 %v3926
        %4034 = vmatpush1.bf16.msra.mxu0 %v3925
        %4035 = vmatprep.subr.bf16.mxu0 %v3924
        %4036 = vmatpush1.bf16.msra.mxu0 %v3923
        %4037 = vmatprep.subr.bf16.mxu0 %v3954
        %4038 = vmatpush2.bf16.msra.mxu0 %v3953
        %4039 = vmatprep.subr.bf16.mxu0 %v3952
        %4040 = vmatpush2.bf16.msra.mxu0 %v3951
        %4041 = vmatprep.subr.bf16.mxu0 %v3950
        %4042 = vmatpush2.bf16.msra.mxu0 %v3949
        %4043 = vmatprep.subr.bf16.mxu0 %v3948
        %4044 = vmatpush2.bf16.msra.mxu0 %v3947
        %4045 = vmatprep.subr.bf16.mxu0 %v3946
        %4046 = vmatpush2.bf16.msra.mxu0 %v3945
        %4047 = vmatprep.subr.bf16.mxu0 %v3944
        %4048 = vmatpush2.bf16.msra.mxu0 %v3943
        %4049 = vmatprep.subr.bf16.mxu0 %v3942
        %4050 = vmatpush2.bf16.msra.mxu0 %v3941
        %4051 = vmatprep.subr.bf16.mxu0 %v3940
        %4052 = vmatpush2.bf16.msra.mxu0 %v3939
        %4053 = vmatprep.mubr.bf16.mxu0 %v3786
        %4054 = vmatmul.mubr.bf16.gmra.mxu0 %v3785
        %v4055 = vpop.f32.mrf.mxu0
        %v4056 = vadd.f32 %v3728, %v4055
        %v4057 = vpop.f32.mrf.mxu0
        %v4058 = vpop.f32.mrf.mxu0
        %v4059 = vadd.f32 %v3733, %v4058
        %v4060 = vpop.f32.mrf.mxu0
        %4061 = vmatprep.mubr.bf16.mxu0 %v3789
        %4062 = vmatmul.mubr.bf16.gmra.mxu0 %v3788
        %v4063 = vpop.f32.mrf.mxu0
        %v4064 = vadd.f32 %v3738, %v4063
        %v4065 = vpop.f32.mrf.mxu0
        %v4066 = vpop.f32.mrf.mxu0
        %v4067 = vadd.f32 %v3743, %v4066
        %v4068 = vpop.f32.mrf.mxu0
        %4069 = vmatprep.mubr.bf16.mxu0 %v3792
        %4070 = vmatmul.mubr.bf16.gmra.mxu0 %v3791
        %v4071 = vpop.f32.mrf.mxu0
        %v4072 = vadd.f32 %v3748, %v4071
        %v4073 = vpop.f32.mrf.mxu0
        %v4074 = vpop.f32.mrf.mxu0
        %v4075 = vadd.f32 %v3753, %v4074
        %v4076 = vpop.f32.mrf.mxu0
        %4077 = vdwg.mxu0
        %4078 = vmatprep.subr.bf16.mxu0 0
        %4079 = vmatpush1.bf16.msra.mxu0 0
        %4080 = vmatprep.subr.bf16.mxu0 0
        %4081 = vmatpush1.bf16.msra.mxu0 0
        %4082 = vmatprep.subr.bf16.mxu0 0
        %4083 = vmatpush1.bf16.msra.mxu0 0
        %4084 = vmatprep.subr.bf16.mxu0 %v4019
        %4085 = vmatpush1.bf16.msra.mxu0 %v4016
        %4086 = vmatprep.subr.bf16.mxu0 %v3962
        %4087 = vmatpush1.bf16.msra.mxu0 %v3961
        %4088 = vmatprep.subr.bf16.mxu0 %v3960
        %4089 = vmatpush1.bf16.msra.mxu0 %v3959
        %4090 = vmatprep.subr.bf16.mxu0 %v3958
        %4091 = vmatpush1.bf16.msra.mxu0 %v3957
        %4092 = vmatprep.subr.bf16.mxu0 %v3956
        %4093 = vmatpush1.bf16.msra.mxu0 %v3955
        %4094 = vmatprep.subr.bf16.mxu0 0
        %4095 = vmatpush2.bf16.msra.mxu0 0
        %4096 = vmatprep.subr.bf16.mxu0 0
        %4097 = vmatpush2.bf16.msra.mxu0 0
        %4098 = vmatprep.subr.bf16.mxu0 0
        %4099 = vmatpush2.bf16.msra.mxu0 0
        %4100 = vmatprep.subr.bf16.mxu0 0
        %4101 = vmatpush2.bf16.msra.mxu0 0
        %4102 = vmatprep.subr.bf16.mxu0 0
        %4103 = vmatpush2.bf16.msra.mxu0 0
        %4104 = vmatprep.subr.bf16.mxu0 0
        %4105 = vmatpush2.bf16.msra.mxu0 0
        %4106 = vmatprep.subr.bf16.mxu0 0
        %4107 = vmatpush2.bf16.msra.mxu0 0
        %4108 = vmatprep.subr.bf16.mxu0 0
        %4109 = vmatpush2.bf16.msra.mxu0 0
        %4110 = vmatprep.mubr.bf16.mxu0 0
        %4111 = vmatmul.mubr.bf16.gmra.mxu0 %v4007
        %v4112 = vpop.f32.mrf.mxu0
        %v4113 = vadd.f32 %v4056, %v4112
        %v4114 = vpop.f32.mrf.mxu0
        %v4115 = vpop.f32.mrf.mxu0
        %v4116 = vadd.f32 %v4059, %v4115
        %v4117 = vpop.f32.mrf.mxu0
        %4118 = vmatprep.mubr.bf16.mxu0 0
        %4119 = vmatmul.mubr.bf16.gmra.mxu0 %v4010
        %v4120 = vpop.f32.mrf.mxu0
        %v4121 = vadd.f32 %v4064, %v4120
        %v4122 = vpop.f32.mrf.mxu0
        %v4123 = vpop.f32.mrf.mxu0
        %v4124 = vadd.f32 %v4067, %v4123
        %v4125 = vpop.f32.mrf.mxu0
        %4126 = vmatprep.mubr.bf16.mxu0 0
        %4127 = vmatmul.mubr.bf16.gmra.mxu0 %v4013
        %v4128 = vpop.f32.mrf.mxu0
        %v4129 = vadd.f32 %v4072, %v4128
        %v4130 = vpop.f32.mrf.mxu0
        %v4131 = vpop.f32.mrf.mxu0
        %v4132 = vadd.f32 %v4075, %v4131
        %v4133 = vpop.f32.mrf.mxu0
        %4134 = vdwg.mxu0
        %v4135 = vmax.f32 %v4113, 0.0
        %v4136 = vmax.f32 %v4116, 0.0
        %v4137 = vmax.f32 %v4121, 0.0
        %v4138 = vmax.f32 %v4124, 0.0
        %v4139 = vmax.f32 %v4129, 0.0
        %v4140 = vmax.f32 %v4132, 0.0
        %v4141 = vpack.c.bf16 %v4136, %v4135
        %v4142 = vpack.c.bf16 %v4138, %v4137
        %v4143 = vpack.c.bf16 %v4140, %v4139
        %4147 = vrot.lane.b32.xlu0 %v4141, 127
        %v4148 = vpop.permute.xlu0 %4147
        %4149 = vrot.lane.b32.xlu0 %v4142, 127
        %v4150 = vpop.permute.xlu0 %4149
        %4151 = vrot.lane.b32.xlu0 %v4143, 127
        %v4152 = vpop.permute.xlu0 %4151
        %v4156 = vmax.bf16 %v4141, %v4148
        %v4157 = vmax.bf16 %v4142, %v4150
        %v4158 = vmax.bf16 %v4143, %v4152
        %4162 = vrot.lane.b32.xlu0 %v4156, 115
        %v4163 = vpop.permute.xlu0 %4162
        %4164 = vrot.lane.b32.xlu0 %v4157, 115
        %v4165 = vpop.permute.xlu0 %4164
        %4166 = vrot.lane.b32.xlu0 %v4158, 115
        %v4167 = vpop.permute.xlu0 %4166
        %v4171 = vmax.bf16 %v4156, %v4163
        %v4172 = vmax.bf16 %v4157, %v4165
        %v4173 = vmax.bf16 %v4158, %v4167
        %v4189 = vunpack.c.l.b16 %v432
        %v4190 = vunpack.c.l.b16 %v433
        %v4191 = vunpack.c.l.b16 %v434
        %v4192 = vunpack.c.l.b16 %v435
        %v4193 = vunpack.c.l.b16 %v436
        %v4194 = vunpack.c.l.b16 %v437
        %v4195 = vunpack.c.l.b16 %v438
        %v4196 = vunpack.c.l.b16 %v439
        %v4197 = vunpack.c.l.b16 %v440
        %v4198 = vunpack.c.l.b16 %v441
        %v4199 = vunpack.c.l.b16 %v442
        %v4200 = vunpack.c.l.b16 %v443
        %v4201 = vunpack.c.l.b16 %v444
        %v4202 = vunpack.c.l.b16 %v445
        %v4203 = vunpack.c.l.b16 %v446
        %v4204 = vpack.c.b16 %v4190, %v4189
        %v4205 = vpack.c.b16 %v4192, %v4191
        %v4206 = vpack.c.b16 %v4194, %v4193
        %v4207 = vpack.c.b16 %v4196, %v4195
        %v4208 = vpack.c.b16 %v4198, %v4197
        %v4209 = vpack.c.b16 %v4200, %v4199
        %v4210 = vpack.c.b16 %v4202, %v4201
        %v4211 = vpack.c.b16 %v4203, %v4203
        %vm4219 = vcmask 924672
        %v4221 = vsel %vm4219, %v4171, 0
        %v4224 = vsel %vm4219, %v4172, 0
        %v4227 = vsel %vm4219, %v4173, 0
        %vm4229 = vcmask 1040384
        %v4230 = vsel 0, 4294967295, 65535
        %v4231 = vsel %vm4229, %v4230, 0
        %v4233 = vand.u32 %v4211, %v4231
        %4235 = vmatprep.subr.bf16.mxu0 0
        %4236 = vmatpush1.bf16.msra.mxu0 %v4233
        %4237 = vmatprep.subr.bf16.mxu0 0
        %4238 = vmatpush1.bf16.msra.mxu0 %v4210
        %4239 = vmatprep.subr.bf16.mxu0 0
        %4240 = vmatpush1.bf16.msra.mxu0 %v4209
        %4241 = vmatprep.subr.bf16.mxu0 0
        %4242 = vmatpush1.bf16.msra.mxu0 %v4208
        %4243 = vmatprep.subr.bf16.mxu0 0
        %4244 = vmatpush1.bf16.msra.mxu0 %v4207
        %4245 = vmatprep.subr.bf16.mxu0 0
        %4246 = vmatpush1.bf16.msra.mxu0 %v4206
        %4247 = vmatprep.subr.bf16.mxu0 0
        %4248 = vmatpush1.bf16.msra.mxu0 %v4205
        %4249 = vmatprep.subr.bf16.mxu0 0
        %4250 = vmatpush1.bf16.msra.mxu0 %v4204
        %4251 = vmatprep.subr.bf16.mxu0 0
        %4252 = vmatpush2.bf16.msra.mxu0 0
        %4253 = vmatprep.subr.bf16.mxu0 0
        %4254 = vmatpush2.bf16.msra.mxu0 0
        %4255 = vmatprep.subr.bf16.mxu0 0
        %4256 = vmatpush2.bf16.msra.mxu0 0
        %4257 = vmatprep.subr.bf16.mxu0 0
        %4258 = vmatpush2.bf16.msra.mxu0 0
        %4259 = vmatprep.subr.bf16.mxu0 0
        %4260 = vmatpush2.bf16.msra.mxu0 0
        %4261 = vmatprep.subr.bf16.mxu0 0
        %4262 = vmatpush2.bf16.msra.mxu0 0
        %4263 = vmatprep.subr.bf16.mxu0 0
        %4264 = vmatpush2.bf16.msra.mxu0 0
        %4265 = vmatprep.subr.bf16.mxu0 0
        %4266 = vmatpush2.bf16.msra.mxu0 0
        %4267 = vmatprep.mubr.bf16.mxu0 0
        %4268 = vmatmul.mubr.bf16.gmra.mxu0 %v4221
        %v4269 = vpop.f32.mrf.mxu0
        %v4270 = vadd.f32 0.0, %v4269
        %v4271 = vpop.f32.mrf.mxu0
        %v4272 = vpop.f32.mrf.mxu0
        %v4273 = vadd.f32 0.0, %v4272
        %v4274 = vpop.f32.mrf.mxu0
        %4275 = vmatprep.mubr.bf16.mxu0 0
        %4276 = vmatmul.mubr.bf16.gmra.mxu0 %v4224
        %v4277 = vpop.f32.mrf.mxu0
        %v4278 = vadd.f32 0.0, %v4277
        %v4279 = vpop.f32.mrf.mxu0
        %v4280 = vpop.f32.mrf.mxu0
        %v4281 = vadd.f32 0.0, %v4280
        %v4282 = vpop.f32.mrf.mxu0
        %4283 = vmatprep.mubr.bf16.mxu0 0
        %4284 = vmatmul.mubr.bf16.gmra.mxu0 %v4227
        %v4285 = vpop.f32.mrf.mxu0
        %v4286 = vadd.f32 0.0, %v4285
        %v4287 = vpop.f32.mrf.mxu0
        %v4288 = vpop.f32.mrf.mxu0
        %v4289 = vadd.f32 0.0, %v4288
        %v4290 = vpop.f32.mrf.mxu0
        %4291 = vdwg.mxu0
        %v4292 = vpack.c.bf16 %v4273, %v4270
        %v4293 = vpack.c.bf16 %v4281, %v4278
        %v4294 = vpack.c.bf16 %v4289, %v4286
        %v4298 = vunpack.c.l.b16 %v4292
        %v4299 = vunpack.c.h.b16 %v4292
        %v4300 = vunpack.c.l.b16 %v4293
        %v4301 = vunpack.c.h.b16 %v4293
        %v4302 = vunpack.c.l.b16 %v4294
        %v4303 = vunpack.c.h.b16 %v4294
        %v4304 = vpack.c.b16 %v4298, %v4298
        %v4305 = vpack.c.b16 %v4299, %v4299
        %v4306 = vpack.c.b16 %v4300, %v4300
        %v4307 = vpack.c.b16 %v4301, %v4301
        %v4308 = vpack.c.b16 %v4302, %v4302
        %v4309 = vpack.c.b16 %v4303, %v4303
        %vm4316 = vcmask 199680
        %4317 = vst.msk [vmem:[%s308] sm:$0xf] %vm4316, %v4304
        %4318 = vst.msk [vmem:[%s308 + $0x4] sm:$0xf] %vm4316, %v4305
        %4319 = vst.msk [vmem:[%s308 + $0x8] sm:$0xf] %vm4316, %v4306
        %4320 = vst.msk [vmem:[%s308 + $0xc] sm:$0xf] %vm4316, %v4307
        %4321 = vst.msk [vmem:[%s308 + $0x10] sm:$0xf] %vm4316, %v4308
        %4322 = vst.msk [vmem:[%s308 + $0x14] sm:$0xf] %vm4316, %v4309
        %p4323 = scmp.lt.s32.totalorder %s20, 1
        %s4324 = scalar_select %p4323, %s20, 1
        %s4325 = smul.addr %s4324, 6
        %s4326 = smul.addr %s4325, 4
        %s4327 = scalar_lea.vmem %s7, %s4326
        // Predicated region
        $region57: #{forward.2} parent=47 // pred_check
          %p4328 = pneg %p190
        $region58: #{forward.2} parent=47 // pred_check_branch
          %4330 = sbr.rel (%p4328) target = $region60
        $region59: #{forward.2} parent=47 // pred_region
          _
        $region60: #{forward.2} parent=47 // pred_fallthru
          _
      $region48: #{forward.2} parent=5 // pred_fallthru
        _
      %p4331 = scmp.le.s32.totalorder 2, %s15
      // Predicated region
      $region61: #{forward.2} parent=5 // pred_check
        %p4332 = pneg %p4331
      $region62: #{forward.2} parent=5 // pred_check_branch
        %4334 = sbr.rel (%p4332) target = $region64
      $region63: #{forward.2} parent=5 // pred_region
        %s4335 = ssub.s32 %s15, 2
        // Predicated region
        $region65: #{forward.2} parent=63 // pred_check
          %p4336 = pneg %p196
        $region66: #{forward.2} parent=63 // pred_check_branch
          %4338 = sbr.rel (%p4336) target = $region68
        $region67: #{forward.2} parent=63 // pred_region
          %p4339 = scmp.lt.s32.totalorder %s21, 1
          %s4340 = scalar_select %p4339, %s21, 1
          %s4341 = smul.addr %s4340, 6
          %s4342 = smul.addr %s4341, 4
          %s4343 = scalar_lea.vmem %s7, %s4342
        $region68: #{forward.2} parent=63 // pred_fallthru
          _
      $region64: #{forward.2} parent=5 // pred_fallthru
        _
    $region6: #{forward.2} parent=1 // loop_footer
      %s19 = sadd.s32 1, %s15
    $region7: #{forward.2} parent=1 // loop_footer_branch
      %14 = sbr.rel target = $region3
    $region8: #{forward.2} parent=1 // loop_exit
      _
    %4344 = vsyncpa [#allocation5], 1
    %s4345 = scalar_lea.sflag [#allocation5], 1
    %4346 = vsyncpa %s4345, 1
    %4347 = vsyncpa [#allocation7], 1

</llo_original>
